<compile_context>
chip_gen: v5e
topology: v5e:2x2
jax: 0.10.0
libtpu: 0.0.40
codegen_flags: <defaults>
</compile_context>

<pallas_src>
import functools
from math import sqrt

import numpy as np
import jax
import jax.numpy as jnp
from jax import lax
from jax.experimental import pallas as pl
from jax.experimental.pallas import tpu as pltpu


NUM_BLOCKS = 20
MID_CH = 64
IN_CH = 3


def _conv3x3(load_cols, w, b, H, W, cin, cout, relu):
    """3x3 / stride-1 / pad-1 conv on one zero-padded image, ky-stacked single matmul.

    load_cols(kx) -> (H+2, W, cin) bf16 column-shifted slab of the padded activation.
    w : (3*cin, 3*cout) bf16, w[kx*cin+ci, ky*cout+co] = w_conv[ky, kx, ci, co]
    b : (1, cout) f32
    Returns (H, W, cout) f32 (post-bias, optional ReLU).
    """
    # kx-im2col, built ONCE per layer: L[r, x, kx*cin+ci] = a_pad[r, x+kx, ci]
    L = jnp.concatenate([load_cols(0), load_cols(1), load_cols(2)], axis=-1)   # (H+2, W, 3cin)
    # One MXU matmul per layer: M=(H+2)*W, K=3*cin, N=3*cout (ky slabs stacked along N).
    P = jnp.dot(L.reshape((H + 2) * W, 3 * cin), w,
                preferred_element_type=jnp.float32)
    P = P.reshape(H + 2, W, 3 * cout)
    # Combine the three ky slabs with row-shifted adds (VPU), then bias / ReLU.
    out = (P[0:H, :, 0:cout]
           + P[1:H + 1, :, cout:2 * cout]
           + P[2:H + 2, :, 2 * cout:3 * cout]
           + b[None].astype(jnp.float32))
    if relu:
        out = jnp.maximum(out, 0.0)
    return out


def _make_edsr_kernel(H, W, num_blocks, mid_ch, in_ch):
    bf16 = jnp.bfloat16

    def kernel(x_ref, w_in_ref, b_in_ref, w_mid_ref, b_mid_ref,
               w_out_ref, b_out_ref, o_ref, act_ref):
        # act_ref: (2, H+2, W+2, mid_ch) bf16 ping-pong padded activation scratch.
        # Zero ONLY the four 1-pixel halo border strips (interior is fully overwritten
        # every layer; halo is never written, so it stays zero for all 21 resident layers).
        z_row = jnp.zeros((2, 1, W + 2, mid_ch), dtype=bf16)
        z_col = jnp.zeros((2, H + 2, 1, mid_ch), dtype=bf16)
        act_ref[:, 0:1, :, :] = z_row
        act_ref[:, H + 1:H + 2, :, :] = z_row
        act_ref[:, :, 0:1, :] = z_col
        act_ref[:, :, W + 1:W + 2, :] = z_col

        # ---- input conv: in_ch -> mid_ch, ReLU (halo comes from the wrapper's zero pad) ----
        out = _conv3x3(lambda kx: x_ref[0, :, kx:kx + W, :].astype(bf16),
                       w_in_ref[...], b_in_ref[...], H, W, in_ch, mid_ch, relu=True)
        act_ref[0, 1:H + 1, 1:W + 1, :] = out.astype(bf16)

        # ---- num_blocks x (conv 64->64 + ReLU); activation stays resident in VMEM ----
        def one_layer(l, src, dst):
            wl = w_mid_ref[l]                      # (3*mid, 3*mid) bf16, dynamic index
            bl = b_mid_ref[l]                      # (1, mid) f32, dynamic index
            y = _conv3x3(lambda kx, s=src: act_ref[s, :, kx:kx + W, :],
                         wl, bl, H, W, mid_ch, mid_ch, relu=True)
            act_ref[dst, 1:H + 1, 1:W + 1, :] = y.astype(bf16)

        def pair_body(i, carry):
            one_layer(2 * i, 0, 1)                 # even layer: buf0 -> buf1
            one_layer(2 * i + 1, 1, 0)             # odd  layer: buf1 -> buf0
            return carry

        lax.fori_loop(0, num_blocks // 2, pair_body, 0)
        final_src = 0
        if num_blocks % 2 == 1:                    # static (compile-time) remainder handling
            one_layer(num_blocks - 1, 0, 1)
            final_src = 1

        # ---- output conv: mid_ch -> in_ch, no ReLU, + global residual ----
        out = _conv3x3(lambda kx, s=final_src: act_ref[s, :, kx:kx + W, :],
                       w_out_ref[...], b_out_ref[...], H, W, mid_ch, in_ch, relu=False)
        residual = x_ref[0, 1:H + 1, 1:W + 1, :].astype(jnp.float32)
        o_ref[0] = (out + residual).astype(o_ref.dtype)

    return kernel


def _estimate_vmem_bytes(H, W, C, num_blocks, mid_ch):
    lane = lambda c: -(-c // 128) * 128
    blk_in = (H + 2) * (W + 2) * lane(C) * 4 * 2                 # double-buffered input block
    blk_out = H * W * lane(C) * 4 * 2                            # double-buffered output block
    wts = (9 * lane(3 * mid_ch)
           + num_blocks * (3 * mid_ch) * lane(3 * mid_ch)
           + (3 * mid_ch) * lane(9)) * 2 * 2                     # bf16, double-buffered
    biases = (lane(mid_ch) * (num_blocks + 1) + lane(C)) * 4 * 2
    scratch = 2 * (H + 2) * (W + 2) * lane(mid_ch) * 2           # bf16 ping-pong activation
    transient = (H + 2) * W * lane(3 * mid_ch) * (2 + 4 + 4)     # im2col bf16 + P f32 + slack
    return blk_in + blk_out + wts + biases + scratch + transient


def edsr_forward(params, x_nchw):
    """Forward pass matching EDSR.forward. Input/output are NCHW float32."""
    # TODO(synk): review #1 - drop these transposes and present lane-dense NCHW blocks once
    # the in-kernel C=3 channel relayout is validated (see header).
    x = jnp.transpose(x_nchw, (0, 2, 3, 1))                      # NCHW -> NHWC
    N, H, W, C = x.shape
    # Single spatial pad for the whole network (in-kernel VMEM halo handles the rest).
    xp = jnp.pad(x, ((0, 0), (1, 1), (1, 1), (0, 0)))

    w_in, b_in = params["input"]
    w_mid, b_mid = params["blocks"]
    w_out, b_out = params["output"]
    num_blocks = int(w_mid.shape[0])
    mid_ch = int(w_mid.shape[-1]) // 3

    kernel = _make_edsr_kernel(H, W, num_blocks, mid_ch, C)

    flops = 2 * N * H * W * 9 * (C * mid_ch + num_blocks * mid_ch * mid_ch + mid_ch * C)
    bytes_accessed = (xp.size * 4 + N * H * W * C * 4
                      + (w_in.size + w_mid.size + w_out.size) * 2
                      + (b_in.size + b_mid.size + b_out.size) * 4)

    est = _estimate_vmem_bytes(H, W, C, num_blocks, mid_ch)
    vmem_limit = int(min(max(2 * est, 32 * 2**20), 48 * 2**20))

    out_nhwc = pl.pallas_call(
        kernel,
        out_shape=jax.ShapeDtypeStruct((N, H, W, C), x.dtype),
        grid_spec=pltpu.PrefetchScalarGridSpec(
            num_scalar_prefetch=0,
            grid=(N,),
            in_specs=[
                pl.BlockSpec((1, H + 2, W + 2, C), lambda n: (n, 0, 0, 0)),
                pl.BlockSpec(w_in.shape, lambda n: (0, 0)),
                pl.BlockSpec(b_in.shape, lambda n: (0, 0)),
                pl.BlockSpec(w_mid.shape, lambda n: (0, 0, 0)),
                pl.BlockSpec(b_mid.shape, lambda n: (0, 0, 0)),
                pl.BlockSpec(w_out.shape, lambda n: (0, 0)),
                pl.BlockSpec(b_out.shape, lambda n: (0, 0)),
            ],
            out_specs=pl.BlockSpec((1, H, W, C), lambda n: (n, 0, 0, 0)),
            scratch_shapes=[pltpu.VMEM((2, H + 2, W + 2, mid_ch), jnp.bfloat16)],
        ),
        compiler_params=pltpu.CompilerParams(
            dimension_semantics=("parallel",),      # shard batch across TCs (v7x megacore)
            vmem_limit_bytes=vmem_limit,
        ),
        cost_estimate=pl.CostEstimate(
            flops=flops, transcendentals=0, bytes_accessed=bytes_accessed),
    )(xp, w_in, b_in, w_mid, b_mid, w_out, b_out)

    return jnp.transpose(out_nhwc, (0, 3, 1, 2))                 # NHWC -> NCHW


def init_edsr_params(key, num_blocks=NUM_BLOCKS, mid_ch=MID_CH, in_ch=IN_CH):
    """Matches the PyTorch init: conv weight ~ N(0, sqrt(2/(3*3*Cout))), default bias
    U(-1/sqrt(fan_in), 1/sqrt(fan_in)).  Weights are packed into the fused kernel's
    ky-stacked layout: w_packed[kx*Cin + ci, ky*Cout + co] = w[ky, kx, ci, co] (bf16)."""
    def conv_params(k, cin, cout):
        kw, kb = jax.random.split(k)
        std = sqrt(2.0 / (3 * 3 * cout))
        w = jax.random.normal(kw, (3, 3, cin, cout), dtype=jnp.float32) * std  # (ky,kx,ci,co)
        bound = 1.0 / sqrt(cin * 9)
        b = jax.random.uniform(kb, (cout,), dtype=jnp.float32,
                               minval=-bound, maxval=bound)
        w_packed = jnp.transpose(w, (1, 2, 0, 3)).reshape(3 * cin, 3 * cout)
        return w_packed.astype(jnp.bfloat16), b

    keys = jax.random.split(key, num_blocks + 2)
    w_in, b_in = conv_params(keys[0], in_ch, mid_ch)
    mids = [conv_params(keys[1 + i], mid_ch, mid_ch) for i in range(num_blocks)]
    w_mid = jnp.stack([w for w, _ in mids])                       # (L, 3*mid, 3*mid)
    b_mid = jnp.stack([b for _, b in mids]).reshape(num_blocks, 1, mid_ch)
    w_out, b_out = conv_params(keys[-1], mid_ch, in_ch)

    return {
        "input": (w_in, b_in.reshape(1, mid_ch)),
        "blocks": (w_mid, b_mid),
        "output": (w_out, b_out.reshape(1, in_ch)),
    }


# ------------- pure-JAX reference (same bf16 rounding points as the kernel) -------------
def _ref_conv(a, w_packed, b):
    cin = w_packed.shape[0] // 3
    cout = w_packed.shape[1] // 3
    # unpack (kx*cin+ci, ky*cout+co) -> HWIO (ky, kx, ci, co)
    w = (w_packed.astype(jnp.float32)
         .reshape(3, cin, 3, cout).transpose(2, 0, 1, 3))
    y = lax.conv_general_dilated(a, w, window_strides=(1, 1), padding="SAME",
                                 dimension_numbers=("NHWC", "HWIO", "NHWC"),
                                 precision=lax.Precision.HIGHEST)
    return y + b.reshape(1, 1, 1, cout).astype(jnp.float32)


def edsr_reference(params, x_nchw):
    bf = lambda a: a.astype(jnp.bfloat16).astype(jnp.float32)
    x = jnp.transpose(x_nchw, (0, 2, 3, 1)).astype(jnp.float32)
    w_in, b_in = params["input"]
    w_mid, b_mid = params["blocks"]
    w_out, b_out = params["output"]
    h = jnp.maximum(_ref_conv(bf(x), w_in, b_in[0]), 0.0)
    for l in range(w_mid.shape[0]):
        h = jnp.maximum(_ref_conv(bf(h), w_mid[l], b_mid[l, 0]), 0.0)
    y = _ref_conv(bf(h), w_out, b_out[0]) + x
    return jnp.transpose(y, (0, 3, 1, 2))


if __name__ == "__main__":
    key = jax.random.PRNGKey(0)
    k_params, k_x = jax.random.split(key)

    params = init_edsr_params(k_params)
    x = jax.random.normal(k_x, (2, 3, 16, 16), dtype=jnp.float32)   # NCHW, like PyTorch

    fwd = jax.jit(functools.partial(edsr_forward, params))
    out = fwd(x)
    jax.block_until_ready(out)

    assert out.shape == x.shape and out.dtype == jnp.float32
    assert bool(jnp.all(jnp.isfinite(out)))

    ref = jax.jit(functools.partial(edsr_reference, params))(x)
    np.testing.assert_allclose(np.asarray(out), np.asarray(ref), rtol=5e-2, atol=5e-2)

    print("KERNEL_OK")
</pallas_src>

<mosaic_0001>
module attributes {stable_mosaic.version = 11 : i64} {
  func.func @kernel(%arg0: i32, %arg1: memref<1x18x18x3xf32, #tpu.memory_space<vmem>>, %arg2: memref<9x192xbf16, #tpu.memory_space<vmem>>, %arg3: memref<1x64xf32, #tpu.memory_space<vmem>>, %arg4: memref<20x192x192xbf16, #tpu.memory_space<vmem>>, %arg5: memref<20x1x64xf32, #tpu.memory_space<vmem>>, %arg6: memref<192x9xbf16, #tpu.memory_space<vmem>>, %arg7: memref<1x3xf32, #tpu.memory_space<vmem>>, %arg8: memref<1x16x16x3xf32, #tpu.memory_space<vmem>>, %arg9: memref<2x18x18x64xbf16, #tpu.memory_space<vmem>>) attributes {dimension_semantics = [#tpu.dimension_semantics<parallel>], iteration_bounds = array<i64: 2>, scalar_prefetch = 0 : i64, scratch_operands = 1 : i64, tpu.core_type = #tpu.core_type<tc>, window_params = [{transform_indices = @transform_0, window_bounds = array<i64: 1, 18, 18, 3>}, {pipeline_mode = #tpu.pipeline_mode<synchronous>, transform_indices = @transform_1, window_bounds = array<i64: 9, 192>}, {pipeline_mode = #tpu.pipeline_mode<synchronous>, transform_indices = @transform_2, window_bounds = array<i64: 1, 64>}, {pipeline_mode = #tpu.pipeline_mode<synchronous>, transform_indices = @transform_3, window_bounds = array<i64: 20, 192, 192>}, {pipeline_mode = #tpu.pipeline_mode<synchronous>, transform_indices = @transform_4, window_bounds = array<i64: 20, 1, 64>}, {pipeline_mode = #tpu.pipeline_mode<synchronous>, transform_indices = @transform_5, window_bounds = array<i64: 192, 9>}, {pipeline_mode = #tpu.pipeline_mode<synchronous>, transform_indices = @transform_6, window_bounds = array<i64: 1, 3>}, {transform_indices = @transform_7, window_bounds = array<i64: 1, 16, 16, 3>}]} {
    %cst = arith.constant 0.000000e+00 : bf16
    %0 = vector.broadcast %cst : bf16 to vector<2x1x18x64xbf16>
    %cst_0 = arith.constant 0.000000e+00 : bf16
    %1 = vector.broadcast %cst_0 : bf16 to vector<2x18x1x64xbf16>
    %c0 = arith.constant 0 : index
    %c0_1 = arith.constant 0 : index
    %c0_2 = arith.constant 0 : index
    %c0_3 = arith.constant 0 : index
    %2 = vector.load %arg9[%c0, %c0_1, %c0_2, %c0_3] : memref<2x18x18x64xbf16, #tpu.memory_space<vmem>>, vector<2x1x18x64xbf16>
    tpu.vector_store %arg9[%c0, %c0_1, %c0_2, %c0_3], %0 {strides = array<i32>} : memref<2x18x18x64xbf16, #tpu.memory_space<vmem>>, vector<2x1x18x64xbf16>,
    %c0_4 = arith.constant 0 : index
    %c17 = arith.constant 17 : index
    %c0_5 = arith.constant 0 : index
    %c0_6 = arith.constant 0 : index
    %3 = vector.load %arg9[%c0_4, %c17, %c0_5, %c0_6] : memref<2x18x18x64xbf16, #tpu.memory_space<vmem>>, vector<2x1x18x64xbf16>
    tpu.vector_store %arg9[%c0_4, %c17, %c0_5, %c0_6], %0 {strides = array<i32>} : memref<2x18x18x64xbf16, #tpu.memory_space<vmem>>, vector<2x1x18x64xbf16>,
    %c0_7 = arith.constant 0 : index
    %c0_8 = arith.constant 0 : index
    %c0_9 = arith.constant 0 : index
    %c0_10 = arith.constant 0 : index
    %4 = vector.load %arg9[%c0_7, %c0_8, %c0_9, %c0_10] : memref<2x18x18x64xbf16, #tpu.memory_space<vmem>>, vector<2x18x1x64xbf16>
    tpu.vector_store %arg9[%c0_7, %c0_8, %c0_9, %c0_10], %1 {strides = array<i32>} : memref<2x18x18x64xbf16, #tpu.memory_space<vmem>>, vector<2x18x1x64xbf16>,
    %c0_11 = arith.constant 0 : index
    %c0_12 = arith.constant 0 : index
    %c17_13 = arith.constant 17 : index
    %c0_14 = arith.constant 0 : index
    %5 = vector.load %arg9[%c0_11, %c0_12, %c17_13, %c0_14] : memref<2x18x18x64xbf16, #tpu.memory_space<vmem>>, vector<2x18x1x64xbf16>
    tpu.vector_store %arg9[%c0_11, %c0_12, %c17_13, %c0_14], %1 {strides = array<i32>} : memref<2x18x18x64xbf16, #tpu.memory_space<vmem>>, vector<2x18x1x64xbf16>,
    %c0_15 = arith.constant 0 : index
    %c0_16 = arith.constant 0 : index
    %6 = vector.load %arg2[%c0_15, %c0_16] : memref<9x192xbf16, #tpu.memory_space<vmem>>, vector<9x192xbf16>
    %c0_17 = arith.constant 0 : index
    %c0_18 = arith.constant 0 : index
    %7 = vector.load %arg3[%c0_17, %c0_18] : memref<1x64xf32, #tpu.memory_space<vmem>>, vector<1x64xf32>
    %c0_19 = arith.constant 0 : index
    %c0_20 = arith.constant 0 : index
    %c0_21 = arith.constant 0 : index
    %c0_22 = arith.constant 0 : index
    %8 = vector.load %arg1[%c0_19, %c0_20, %c0_21, %c0_22] : memref<1x18x18x3xf32, #tpu.memory_space<vmem>>, vector<1x18x16x3xf32>
    %9 = vector.shape_cast %8 : vector<1x18x16x3xf32> to vector<18x16x3xf32>
    %10 = arith.truncf %9 : vector<18x16x3xf32> to vector<18x16x3xbf16>
    %c0_23 = arith.constant 0 : index
    %c0_24 = arith.constant 0 : index
    %c1 = arith.constant 1 : index
    %c0_25 = arith.constant 0 : index
    %11 = vector.load %arg1[%c0_23, %c0_24, %c1, %c0_25] : memref<1x18x18x3xf32, #tpu.memory_space<vmem>>, vector<1x18x16x3xf32>
    %12 = vector.shape_cast %11 : vector<1x18x16x3xf32> to vector<18x16x3xf32>
    %13 = arith.truncf %12 : vector<18x16x3xf32> to vector<18x16x3xbf16>
    %c0_26 = arith.constant 0 : index
    %c0_27 = arith.constant 0 : index
    %c2 = arith.constant 2 : index
    %c0_28 = arith.constant 0 : index
    %14 = vector.load %arg1[%c0_26, %c0_27, %c2, %c0_28] : memref<1x18x18x3xf32, #tpu.memory_space<vmem>>, vector<1x18x16x3xf32>
    %15 = vector.shape_cast %14 : vector<1x18x16x3xf32> to vector<18x16x3xf32>
    %16 = arith.truncf %15 : vector<18x16x3xf32> to vector<18x16x3xbf16>
    %17 = tpu.concatenate %10, %13, %16 in 2 : vector<18x16x3xbf16>, vector<18x16x3xbf16>, vector<18x16x3xbf16> -> vector<18x16x9xbf16>
    %18 = vector.shape_cast %17 : vector<18x16x9xbf16> to vector<288x9xbf16>
    %cst_29 = arith.constant dense<0.000000e+00> : vector<288x192xf32>
    %19 = tpu.matmul %18, %6, %cst_29 {dimension_numbers = #tpu.dot_dimension_numbers<[1], [0], [0], [1], [0, 0, 1, 1], [], []>} : vector<288x9xbf16>, vector<9x192xbf16>, vector<288x192xf32> -> vector<288x192xf32>
    %20 = vector.shape_cast %19 : vector<288x192xf32> to vector<18x16x192xf32>
    %21 = vector.extract_strided_slice %20 {offsets = [0, 0, 0], sizes = [16, 16, 64], strides = [1, 1, 1]} : vector<18x16x192xf32> to vector<16x16x64xf32>
    %22 = vector.extract_strided_slice %20 {offsets = [1, 0, 64], sizes = [16, 16, 64], strides = [1, 1, 1]} : vector<18x16x192xf32> to vector<16x16x64xf32>
    %23 = arith.addf %21, %22 : vector<16x16x64xf32>
    %24 = vector.extract_strided_slice %20 {offsets = [2, 0, 128], sizes = [16, 16, 64], strides = [1, 1, 1]} : vector<18x16x192xf32> to vector<16x16x64xf32>
    %25 = arith.addf %23, %24 : vector<16x16x64xf32>
    %26 = vector.shape_cast %7 : vector<1x64xf32> to vector<1x1x64xf32>
    %27 = vector.broadcast %26 : vector<1x1x64xf32> to vector<16x16x64xf32>
    %28 = arith.addf %25, %27 : vector<16x16x64xf32>
    %cst_30 = arith.constant 0.000000e+00 : f32
    %29 = vector.broadcast %cst_30 : f32 to vector<16x16x64xf32>
    %30 = arith.maximumf %28, %29 : vector<16x16x64xf32>
    %31 = arith.truncf %30 : vector<16x16x64xf32> to vector<16x16x64xbf16>
    %c0_31 = arith.constant 0 : index
    %c1_32 = arith.constant 1 : index
    %c1_33 = arith.constant 1 : index
    %c0_34 = arith.constant 0 : index
    %32 = vector.load %arg9[%c0_31, %c1_32, %c1_33, %c0_34] : memref<2x18x18x64xbf16, #tpu.memory_space<vmem>>, vector<1x16x16x64xbf16>
    %33 = vector.shape_cast %32 : vector<1x16x16x64xbf16> to vector<16x16x64xbf16>
    %34 = vector.shape_cast %31 : vector<16x16x64xbf16> to vector<1x16x16x64xbf16>
    tpu.vector_store %arg9[%c0_31, %c1_32, %c1_33, %c0_34], %34 {strides = array<i32>} : memref<2x18x18x64xbf16, #tpu.memory_space<vmem>>, vector<1x16x16x64xbf16>,
    %c0_i32 = arith.constant 0 : i32
    %c10_i32 = arith.constant 10 : i32
    %35 = arith.addi %c0_i32, %c10_i32 : i32
    %c1_i32 = arith.constant 1 : i32
    scf.for %arg10 = %c0_i32 to %35 step %c1_i32  : i32 {
      %c2_i32 = arith.constant 2 : i32
      %62 = arith.muli %c2_i32, %arg10 : i32
      %63 = arith.index_cast %62 : i32 to index
      %c0_61 = arith.constant 0 : index
      %c0_62 = arith.constant 0 : index
      %64 = vector.load %arg4[%63, %c0_61, %c0_62] : memref<20x192x192xbf16, #tpu.memory_space<vmem>>, vector<1x192x192xbf16>
      %65 = vector.shape_cast %64 : vector<1x192x192xbf16> to vector<192x192xbf16>
      %66 = arith.index_cast %62 : i32 to index
      %c0_63 = arith.constant 0 : index
      %c0_64 = arith.constant 0 : index
      %67 = vector.load %arg5[%66, %c0_63, %c0_64] : memref<20x1x64xf32, #tpu.memory_space<vmem>>, vector<1x1x64xf32>
      %68 = vector.shape_cast %67 : vector<1x1x64xf32> to vector<1x64xf32>
      %c0_65 = arith.constant 0 : index
      %c0_66 = arith.constant 0 : index
      %c0_67 = arith.constant 0 : index
      %c0_68 = arith.constant 0 : index
      %69 = vector.load %arg9[%c0_65, %c0_66, %c0_67, %c0_68] : memref<2x18x18x64xbf16, #tpu.memory_space<vmem>>, vector<1x18x16x64xbf16>
      %70 = vector.shape_cast %69 : vector<1x18x16x64xbf16> to vector<18x16x64xbf16>
      %c0_69 = arith.constant 0 : index
      %c0_70 = arith.constant 0 : index
      %c1_71 = arith.constant 1 : index
      %c0_72 = arith.constant 0 : index
      %71 = vector.load %arg9[%c0_69, %c0_70, %c1_71, %c0_72] : memref<2x18x18x64xbf16, #tpu.memory_space<vmem>>, vector<1x18x16x64xbf16>
      %72 = vector.shape_cast %71 : vector<1x18x16x64xbf16> to vector<18x16x64xbf16>
      %c0_73 = arith.constant 0 : index
      %c0_74 = arith.constant 0 : index
      %c2_75 = arith.constant 2 : index
      %c0_76 = arith.constant 0 : index
      %73 = vector.load %arg9[%c0_73, %c0_74, %c2_75, %c0_76] : memref<2x18x18x64xbf16, #tpu.memory_space<vmem>>, vector<1x18x16x64xbf16>
      %74 = vector.shape_cast %73 : vector<1x18x16x64xbf16> to vector<18x16x64xbf16>
      %75 = tpu.concatenate %70, %72, %74 in 2 : vector<18x16x64xbf16>, vector<18x16x64xbf16>, vector<18x16x64xbf16> -> vector<18x16x192xbf16>
      %76 = vector.shape_cast %75 : vector<18x16x192xbf16> to vector<288x192xbf16>
      %cst_77 = arith.constant dense<0.000000e+00> : vector<288x192xf32>
      %77 = tpu.matmul %76, %65, %cst_77 {dimension_numbers = #tpu.dot_dimension_numbers<[1], [0], [0], [1], [0, 0, 1, 1], [], []>} : vector<288x192xbf16>, vector<192x192xbf16>, vector<288x192xf32> -> vector<288x192xf32>
      %78 = vector.shape_cast %77 : vector<288x192xf32> to vector<18x16x192xf32>
      %79 = vector.extract_strided_slice %78 {offsets = [0, 0, 0], sizes = [16, 16, 64], strides = [1, 1, 1]} : vector<18x16x192xf32> to vector<16x16x64xf32>
      %80 = vector.extract_strided_slice %78 {offsets = [1, 0, 64], sizes = [16, 16, 64], strides = [1, 1, 1]} : vector<18x16x192xf32> to vector<16x16x64xf32>
      %81 = arith.addf %79, %80 : vector<16x16x64xf32>
      %82 = vector.extract_strided_slice %78 {offsets = [2, 0, 128], sizes = [16, 16, 64], strides = [1, 1, 1]} : vector<18x16x192xf32> to vector<16x16x64xf32>
      %83 = arith.addf %81, %82 : vector<16x16x64xf32>
      %84 = vector.shape_cast %68 : vector<1x64xf32> to vector<1x1x64xf32>
      %85 = vector.broadcast %84 : vector<1x1x64xf32> to vector<16x16x64xf32>
      %86 = arith.addf %83, %85 : vector<16x16x64xf32>
      %cst_78 = arith.constant 0.000000e+00 : f32
      %87 = vector.broadcast %cst_78 : f32 to vector<16x16x64xf32>
      %88 = arith.maximumf %86, %87 : vector<16x16x64xf32>
      %89 = arith.truncf %88 : vector<16x16x64xf32> to vector<16x16x64xbf16>
      %c1_79 = arith.constant 1 : index
      %c1_80 = arith.constant 1 : index
      %c1_81 = arith.constant 1 : index
      %c0_82 = arith.constant 0 : index
      %90 = vector.load %arg9[%c1_79, %c1_80, %c1_81, %c0_82] : memref<2x18x18x64xbf16, #tpu.memory_space<vmem>>, vector<1x16x16x64xbf16>
      %91 = vector.shape_cast %90 : vector<1x16x16x64xbf16> to vector<16x16x64xbf16>
      %92 = vector.shape_cast %89 : vector<16x16x64xbf16> to vector<1x16x16x64xbf16>
      tpu.vector_store %arg9[%c1_79, %c1_80, %c1_81, %c0_82], %92 {strides = array<i32>} : memref<2x18x18x64xbf16, #tpu.memory_space<vmem>>, vector<1x16x16x64xbf16>,
      %c2_i32_83 = arith.constant 2 : i32
      %93 = arith.muli %c2_i32_83, %arg10 : i32
      %c1_i32_84 = arith.constant 1 : i32
      %94 = arith.addi %93, %c1_i32_84 : i32
      %95 = arith.index_cast %94 : i32 to index
      %c0_85 = arith.constant 0 : index
      %c0_86 = arith.constant 0 : index
      %96 = vector.load %arg4[%95, %c0_85, %c0_86] : memref<20x192x192xbf16, #tpu.memory_space<vmem>>, vector<1x192x192xbf16>
      %97 = vector.shape_cast %96 : vector<1x192x192xbf16> to vector<192x192xbf16>
      %98 = arith.index_cast %94 : i32 to index
      %c0_87 = arith.constant 0 : index
      %c0_88 = arith.constant 0 : index
      %99 = vector.load %arg5[%98, %c0_87, %c0_88] : memref<20x1x64xf32, #tpu.memory_space<vmem>>, vector<1x1x64xf32>
      %100 = vector.shape_cast %99 : vector<1x1x64xf32> to vector<1x64xf32>
      %c1_89 = arith.constant 1 : index
      %c0_90 = arith.constant 0 : index
      %c0_91 = arith.constant 0 : index
      %c0_92 = arith.constant 0 : index
      %101 = vector.load %arg9[%c1_89, %c0_90, %c0_91, %c0_92] : memref<2x18x18x64xbf16, #tpu.memory_space<vmem>>, vector<1x18x16x64xbf16>
      %102 = vector.shape_cast %101 : vector<1x18x16x64xbf16> to vector<18x16x64xbf16>
      %c1_93 = arith.constant 1 : index
      %c0_94 = arith.constant 0 : index
      %c1_95 = arith.constant 1 : index
      %c0_96 = arith.constant 0 : index
      %103 = vector.load %arg9[%c1_93, %c0_94, %c1_95, %c0_96] : memref<2x18x18x64xbf16, #tpu.memory_space<vmem>>, vector<1x18x16x64xbf16>
      %104 = vector.shape_cast %103 : vector<1x18x16x64xbf16> to vector<18x16x64xbf16>
      %c1_97 = arith.constant 1 : index
      %c0_98 = arith.constant 0 : index
      %c2_99 = arith.constant 2 : index
      %c0_100 = arith.constant 0 : index
      %105 = vector.load %arg9[%c1_97, %c0_98, %c2_99, %c0_100] : memref<2x18x18x64xbf16, #tpu.memory_space<vmem>>, vector<1x18x16x64xbf16>
      %106 = vector.shape_cast %105 : vector<1x18x16x64xbf16> to vector<18x16x64xbf16>
      %107 = tpu.concatenate %102, %104, %106 in 2 : vector<18x16x64xbf16>, vector<18x16x64xbf16>, vector<18x16x64xbf16> -> vector<18x16x192xbf16>
      %108 = vector.shape_cast %107 : vector<18x16x192xbf16> to vector<288x192xbf16>
      %cst_101 = arith.constant dense<0.000000e+00> : vector<288x192xf32>
      %109 = tpu.matmul %108, %97, %cst_101 {dimension_numbers = #tpu.dot_dimension_numbers<[1], [0], [0], [1], [0, 0, 1, 1], [], []>} : vector<288x192xbf16>, vector<192x192xbf16>, vector<288x192xf32> -> vector<288x192xf32>
      %110 = vector.shape_cast %109 : vector<288x192xf32> to vector<18x16x192xf32>
      %111 = vector.extract_strided_slice %110 {offsets = [0, 0, 0], sizes = [16, 16, 64], strides = [1, 1, 1]} : vector<18x16x192xf32> to vector<16x16x64xf32>
      %112 = vector.extract_strided_slice %110 {offsets = [1, 0, 64], sizes = [16, 16, 64], strides = [1, 1, 1]} : vector<18x16x192xf32> to vector<16x16x64xf32>
      %113 = arith.addf %111, %112 : vector<16x16x64xf32>
      %114 = vector.extract_strided_slice %110 {offsets = [2, 0, 128], sizes = [16, 16, 64], strides = [1, 1, 1]} : vector<18x16x192xf32> to vector<16x16x64xf32>
      %115 = arith.addf %113, %114 : vector<16x16x64xf32>
      %116 = vector.shape_cast %100 : vector<1x64xf32> to vector<1x1x64xf32>
      %117 = vector.broadcast %116 : vector<1x1x64xf32> to vector<16x16x64xf32>
      %118 = arith.addf %115, %117 : vector<16x16x64xf32>
      %cst_102 = arith.constant 0.000000e+00 : f32
      %119 = vector.broadcast %cst_102 : f32 to vector<16x16x64xf32>
      %120 = arith.maximumf %118, %119 : vector<16x16x64xf32>
      %121 = arith.truncf %120 : vector<16x16x64xf32> to vector<16x16x64xbf16>
      %c0_103 = arith.constant 0 : index
      %c1_104 = arith.constant 1 : index
      %c1_105 = arith.constant 1 : index
      %c0_106 = arith.constant 0 : index
      %122 = vector.load %arg9[%c0_103, %c1_104, %c1_105, %c0_106] : memref<2x18x18x64xbf16, #tpu.memory_space<vmem>>, vector<1x16x16x64xbf16>
      %123 = vector.shape_cast %122 : vector<1x16x16x64xbf16> to vector<16x16x64xbf16>
      %124 = vector.shape_cast %121 : vector<16x16x64xbf16> to vector<1x16x16x64xbf16>
      tpu.vector_store %arg9[%c0_103, %c1_104, %c1_105, %c0_106], %124 {strides = array<i32>} : memref<2x18x18x64xbf16, #tpu.memory_space<vmem>>, vector<1x16x16x64xbf16>,
    }
    %c10_i32_35 = arith.constant 10 : i32
    %c0_36 = arith.constant 0 : index
    %c0_37 = arith.constant 0 : index
    %36 = vector.load %arg6[%c0_36, %c0_37] : memref<192x9xbf16, #tpu.memory_space<vmem>>, vector<192x9xbf16>
    %c0_38 = arith.constant 0 : index
    %c0_39 = arith.constant 0 : index
    %37 = vector.load %arg7[%c0_38, %c0_39] : memref<1x3xf32, #tpu.memory_space<vmem>>, vector<1x3xf32>
    %c0_40 = arith.constant 0 : index
    %c0_41 = arith.constant 0 : index
    %c0_42 = arith.constant 0 : index
    %c0_43 = arith.constant 0 : index
    %38 = vector.load %arg9[%c0_40, %c0_41, %c0_42, %c0_43] : memref<2x18x18x64xbf16, #tpu.memory_space<vmem>>, vector<1x18x16x64xbf16>
    %39 = vector.shape_cast %38 : vector<1x18x16x64xbf16> to vector<18x16x64xbf16>
    %c0_44 = arith.constant 0 : index
    %c0_45 = arith.constant 0 : index
    %c1_46 = arith.constant 1 : index
    %c0_47 = arith.constant 0 : index
    %40 = vector.load %arg9[%c0_44, %c0_45, %c1_46, %c0_47] : memref<2x18x18x64xbf16, #tpu.memory_space<vmem>>, vector<1x18x16x64xbf16>
    %41 = vector.shape_cast %40 : vector<1x18x16x64xbf16> to vector<18x16x64xbf16>
    %c0_48 = arith.constant 0 : index
    %c0_49 = arith.constant 0 : index
    %c2_50 = arith.constant 2 : index
    %c0_51 = arith.constant 0 : index
    %42 = vector.load %arg9[%c0_48, %c0_49, %c2_50, %c0_51] : memref<2x18x18x64xbf16, #tpu.memory_space<vmem>>, vector<1x18x16x64xbf16>
    %43 = vector.shape_cast %42 : vector<1x18x16x64xbf16> to vector<18x16x64xbf16>
    %44 = tpu.concatenate %39, %41, %43 in 2 : vector<18x16x64xbf16>, vector<18x16x64xbf16>, vector<18x16x64xbf16> -> vector<18x16x192xbf16>
    %45 = vector.shape_cast %44 : vector<18x16x192xbf16> to vector<288x192xbf16>
    %cst_52 = arith.constant dense<0.000000e+00> : vector<288x9xf32>
    %46 = tpu.matmul %45, %36, %cst_52 {dimension_numbers = #tpu.dot_dimension_numbers<[1], [0], [0], [1], [0, 0, 1, 1], [], []>} : vector<288x192xbf16>, vector<192x9xbf16>, vector<288x9xf32> -> vector<288x9xf32>
    %47 = vector.shape_cast %46 : vector<288x9xf32> to vector<18x16x9xf32>
    %48 = vector.extract_strided_slice %47 {offsets = [0, 0, 0], sizes = [16, 16, 3], strides = [1, 1, 1]} : vector<18x16x9xf32> to vector<16x16x3xf32>
    %49 = vector.extract_strided_slice %47 {offsets = [1, 0, 3], sizes = [16, 16, 3], strides = [1, 1, 1]} : vector<18x16x9xf32> to vector<16x16x3xf32>
    %50 = arith.addf %48, %49 : vector<16x16x3xf32>
    %51 = vector.extract_strided_slice %47 {offsets = [2, 0, 6], sizes = [16, 16, 3], strides = [1, 1, 1]} : vector<18x16x9xf32> to vector<16x16x3xf32>
    %52 = arith.addf %50, %51 : vector<16x16x3xf32>
    %53 = vector.shape_cast %37 : vector<1x3xf32> to vector<1x1x3xf32>
    %54 = vector.broadcast %53 : vector<1x1x3xf32> to vector<16x16x3xf32>
    %55 = arith.addf %52, %54 : vector<16x16x3xf32>
    %c0_53 = arith.constant 0 : index
    %c1_54 = arith.constant 1 : index
    %c1_55 = arith.constant 1 : index
    %c0_56 = arith.constant 0 : index
    %56 = vector.load %arg1[%c0_53, %c1_54, %c1_55, %c0_56] : memref<1x18x18x3xf32, #tpu.memory_space<vmem>>, vector<1x16x16x3xf32>
    %57 = vector.shape_cast %56 : vector<1x16x16x3xf32> to vector<16x16x3xf32>
    %58 = arith.addf %55, %57 : vector<16x16x3xf32>
    %c0_57 = arith.constant 0 : index
    %c0_58 = arith.constant 0 : index
    %c0_59 = arith.constant 0 : index
    %c0_60 = arith.constant 0 : index
    %59 = vector.load %arg8[%c0_57, %c0_58, %c0_59, %c0_60] : memref<1x16x16x3xf32, #tpu.memory_space<vmem>>, vector<1x16x16x3xf32>
    %60 = vector.shape_cast %59 : vector<1x16x16x3xf32> to vector<16x16x3xf32>
    %61 = vector.shape_cast %58 : vector<16x16x3xf32> to vector<1x16x16x3xf32>
    tpu.vector_store %arg8[%c0_57, %c0_58, %c0_59, %c0_60], %61 {strides = array<i32>} : memref<1x16x16x3xf32, #tpu.memory_space<vmem>>, vector<1x16x16x3xf32>,
    return
  }
  func.func @transform_0(%arg0: i32) -> (i32, i32, i32, i32) {
    %c0_i32 = arith.constant 0 : i32
    %c0_i32_0 = arith.constant 0 : i32
    %c0_i32_1 = arith.constant 0 : i32
    %c0_i32_2 = arith.constant 0 : i32
    return %arg0, %c0_i32, %c0_i32_0, %c0_i32_1 : i32, i32, i32, i32
  }
  func.func @transform_1(%arg0: i32) -> (i32, i32) {
    %c0_i32 = arith.constant 0 : i32
    %c0_i32_0 = arith.constant 0 : i32
    %c0_i32_1 = arith.constant 0 : i32
    return %c0_i32, %c0_i32_0 : i32, i32
  }
  func.func @transform_2(%arg0: i32) -> (i32, i32) {
    %c0_i32 = arith.constant 0 : i32
    %c0_i32_0 = arith.constant 0 : i32
    %c0_i32_1 = arith.constant 0 : i32
    return %c0_i32, %c0_i32_0 : i32, i32
  }
  func.func @transform_3(%arg0: i32) -> (i32, i32, i32) {
    %c0_i32 = arith.constant 0 : i32
    %c0_i32_0 = arith.constant 0 : i32
    %c0_i32_1 = arith.constant 0 : i32
    %c0_i32_2 = arith.constant 0 : i32
    return %c0_i32, %c0_i32_0, %c0_i32_1 : i32, i32, i32
  }
  func.func @transform_4(%arg0: i32) -> (i32, i32, i32) {
    %c0_i32 = arith.constant 0 : i32
    %c0_i32_0 = arith.constant 0 : i32
    %c0_i32_1 = arith.constant 0 : i32
    %c0_i32_2 = arith.constant 0 : i32
    return %c0_i32, %c0_i32_0, %c0_i32_1 : i32, i32, i32
  }
  func.func @transform_5(%arg0: i32) -> (i32, i32) {
    %c0_i32 = arith.constant 0 : i32
    %c0_i32_0 = arith.constant 0 : i32
    %c0_i32_1 = arith.constant 0 : i32
    return %c0_i32, %c0_i32_0 : i32, i32
  }
  func.func @transform_6(%arg0: i32) -> (i32, i32) {
    %c0_i32 = arith.constant 0 : i32
    %c0_i32_0 = arith.constant 0 : i32
    %c0_i32_1 = arith.constant 0 : i32
    return %c0_i32, %c0_i32_0 : i32, i32
  }
  func.func @transform_7(%arg0: i32) -> (i32, i32, i32, i32) {
    %c0_i32 = arith.constant 0 : i32
    %c0_i32_0 = arith.constant 0 : i32
    %c0_i32_1 = arith.constant 0 : i32
    %c0_i32_2 = arith.constant 0 : i32
    return %arg0, %c0_i32, %c0_i32_0, %c0_i32_1 : i32, i32, i32, i32
  }
}

</mosaic_0001>

<llo_original>
// kernel: edsr_forward.1
$region0: #{edsr_forward.1}
  #allocation0 [shape = 'u32[]', space=smem, size = 0x4, offset = 0x4, fixed_abs, tag = 'smem constant byte address 0x4 - core index']
  #allocation1 [shape = 'u32[72,128]{1,0:T(1,128)}', space=vmem, size = 0x9000, scoped, tag = 'internal scratch']
  #allocation2 [shape = 'bf16[2,18,18,64]{3,2,1,0:T(8,128)(2,1)}', space=vmem, size = 0x36000, scoped, tag = 'scratch operand']
  %s0 = inlined_call_operand.vmem [shape: f32[2,18,18,3], index: 0, kind: input, shape index: {}]
  %s1 = inlined_call_operand.hbm [shape: bf16[9,192], index: 1, kind: input, shape index: {}]
  %s2 = inlined_call_operand.hbm [shape: f32[1,64], index: 2, kind: input, shape index: {}]
  %s3 = inlined_call_operand.hbm [shape: bf16[20,192,192], index: 3, kind: input, shape index: {}]
  %s4 = inlined_call_operand.hbm [shape: f32[20,1,64], index: 4, kind: input, shape index: {}]
  %s5 = inlined_call_operand.hbm [shape: bf16[192,9], index: 5, kind: input, shape index: {}]
  %s6 = inlined_call_operand.hbm [shape: f32[1,3], index: 6, kind: input, shape index: {}]
  %s7 = inlined_call_operand.vmem [shape: f32[2,16,16,3], index: 7, kind: output, shape index: {}]
  %s8 = sld [smem:[#allocation0]]
  $region92: #{edsr_forward.1} parent=0
    _
  %s10 = ssub.s32 1, %s8
  %s11 = scalar_select 0, %s10, %s8
  $region1: #{edsr_forward.1} parent=0
    #allocation3 [shape = 'u8[8192]{0}', space=vmem, size = 0x2000, scoped, tag = 'input window, operand 1, single buffered']
    #allocation4 [shape = 's32[2]{0}', space=sflag, size = 0x8, scoped, tag = 'scoped memory for edsr_forward.1']
    #allocation5 [shape = 'u8[512]{0}', space=vmem, size = 0x400, scoped, tag = 'input window, operand 2, single buffered']
    #allocation6 [shape = 's32[1]{0}', space=sflag, size = 0x4, scoped, tag = 'scoped memory for edsr_forward.1']
    #allocation7 [shape = 'u8[1966080]{0}', space=vmem, size = 0x1e0000, scoped, tag = 'input window, operand 3, single buffered']
    #allocation8 [shape = 'u8[10240]{0}', space=vmem, size = 0x2800, scoped, tag = 'input window, operand 4, single buffered']
    #allocation9 [shape = 's32[1]{0}', space=sflag, size = 0x4, scoped, tag = 'scoped memory for edsr_forward.1']
    #allocation10 [shape = 'u8[49152]{0}', space=vmem, size = 0xc000, scoped, tag = 'input window, operand 5, single buffered']
    #allocation11 [shape = 'u8[512]{0}', space=vmem, size = 0x400, scoped, tag = 'input window, operand 6, single buffered']
    #allocation12 [shape = 's32[1]{0}', space=sflag, size = 0x4, scoped, tag = 'scoped memory for edsr_forward.1']
    %12 = vsyncpa [#allocation4], 0
    %13 = vsyncpa [#allocation6], 0
    %14 = vsyncpa [#allocation9], 0
    %15 = vsyncpa [#allocation12], 0
    loop: start=0, step=1, limit=4
    $region2: #{edsr_forward.1} parent=1 // loop_pre_header
      _
    $region3: #{edsr_forward.1} parent=1 // loop_header
      %s17 = sphi 0, %s21
      %p18 = scmp.ge.s32.totalorder %s17, 4
      %s27 = sphi 0, %s29
      %s30 = sphi 0, %s27
      %s31 = sphi 0, %s30
      %s47 = sphi 0, %s31
      %s51 = sphi 0, %s51
      %s53 = sphi 0, %s51
      %s54 = sphi 0, %s53
      %s68 = sphi 0, %s54
      %s72 = sphi 0, %s72
      %s74 = sphi 0, %s72
      %s75 = sphi 0, %s74
      %s89 = sphi 0, %s75
      %s93 = sphi 0, %s93
      %s95 = sphi 0, %s93
      %s96 = sphi 0, %s95
      %s110 = sphi 0, %s96
      %s114 = sphi 0, %s114
      %s116 = sphi 0, %s114
      %s117 = sphi 0, %s116
      %s131 = sphi 0, %s117
      %s135 = sphi 0, %s135
      %s137 = sphi 0, %s135
      %s138 = sphi 0, %s137
      %s152 = sphi 0, %s138
      %s156 = sphi 0, %s156
      %s158 = sphi 0, %s156
      %s159 = sphi 0, %s158
      %s173 = sphi 0, %s159
      %s179 = sphi 0, %s181
      %s182 = sphi 0, %s179
      %s183 = sphi 0, %s182
      %s199 = sphi 0, %s183
    $region4: #{edsr_forward.1} parent=1 // loop_header_branch
      %20 = sbr.rel (%p18) target = $region8
    $region5: #{edsr_forward.1} parent=1 // loop_body
      %s22 = ssub.s32 %s17, 1
      %s23 = ssub.s32 %s17, 2
      %s24 = sadd.s32 %s17, 1
      %s25 = ssub.s32 %s17, %s24
      %p26 = scmp.eq.s32.totalorder %s25, 0
      %s28 = sadd.s32 %s27, 1
      %s29 = scalar_select %p26, %s27, %s28
      %p32 = pneg %p26
      %p33 = scmp.eq.s32.totalorder %s17, 1
      %p34 = por %p32, %p33
      %p35 = scmp.ne.s32.totalorder %s27, %s30
      %p36 = scmp.eq.s32.totalorder %s17, 0
      %p37 = por %p35, %p36
      %p38 = scmp.ne.s32.totalorder %s27, %s30
      %p39 = scmp.eq.s32.totalorder %s22, 1
      %p40 = por %p38, %p39
      %p41 = scmp.ne.s32.totalorder %s30, %s31
      %p42 = scmp.eq.s32.totalorder %s22, 0
      %p43 = por %p41, %p42
      %p44 = scmp.ne.s32.totalorder %s30, %s31
      %p45 = scmp.eq.s32.totalorder %s23, 1
      %p46 = por %p44, %p45
      %p48 = scmp.ne.s32.totalorder %s31, %s47
      %p49 = scmp.eq.s32.totalorder %s23, 0
      %p50 = por %p48, %p49
      %s52 = sadd.s32 %s51, 1
      %p55 = scmp.eq.s32.totalorder %s17, 1
      %p56 = scmp.ne.s32.totalorder %s51, %s53
      %p57 = scmp.eq.s32.totalorder %s17, 0
      %p58 = por %p56, %p57
      %p59 = scmp.ne.s32.totalorder %s51, %s53
      %p60 = scmp.eq.s32.totalorder %s22, 1
      %p61 = por %p59, %p60
      %p62 = scmp.ne.s32.totalorder %s53, %s54
      %p63 = scmp.eq.s32.totalorder %s22, 0
      %p64 = por %p62, %p63
      %p65 = scmp.ne.s32.totalorder %s53, %s54
      %p66 = scmp.eq.s32.totalorder %s23, 1
      %p67 = por %p65, %p66
      %p69 = scmp.ne.s32.totalorder %s54, %s68
      %p70 = scmp.eq.s32.totalorder %s23, 0
      %p71 = por %p69, %p70
      %s73 = sadd.s32 %s72, 1
      %p76 = scmp.eq.s32.totalorder %s17, 1
      %p77 = scmp.ne.s32.totalorder %s72, %s74
      %p78 = scmp.eq.s32.totalorder %s17, 0
      %p79 = por %p77, %p78
      %p80 = scmp.ne.s32.totalorder %s72, %s74
      %p81 = scmp.eq.s32.totalorder %s22, 1
      %p82 = por %p80, %p81
      %p83 = scmp.ne.s32.totalorder %s74, %s75
      %p84 = scmp.eq.s32.totalorder %s22, 0
      %p85 = por %p83, %p84
      %p86 = scmp.ne.s32.totalorder %s74, %s75
      %p87 = scmp.eq.s32.totalorder %s23, 1
      %p88 = por %p86, %p87
      %p90 = scmp.ne.s32.totalorder %s75, %s89
      %p91 = scmp.eq.s32.totalorder %s23, 0
      %p92 = por %p90, %p91
      %s94 = sadd.s32 %s93, 1
      %p97 = scmp.eq.s32.totalorder %s17, 1
      %p98 = scmp.ne.s32.totalorder %s93, %s95
      %p99 = scmp.eq.s32.totalorder %s17, 0
      %p100 = por %p98, %p99
      %p101 = scmp.ne.s32.totalorder %s93, %s95
      %p102 = scmp.eq.s32.totalorder %s22, 1
      %p103 = por %p101, %p102
      %p104 = scmp.ne.s32.totalorder %s95, %s96
      %p105 = scmp.eq.s32.totalorder %s22, 0
      %p106 = por %p104, %p105
      %p107 = scmp.ne.s32.totalorder %s95, %s96
      %p108 = scmp.eq.s32.totalorder %s23, 1
      %p109 = por %p107, %p108
      %p111 = scmp.ne.s32.totalorder %s96, %s110
      %p112 = scmp.eq.s32.totalorder %s23, 0
      %p113 = por %p111, %p112
      %s115 = sadd.s32 %s114, 1
      %p118 = scmp.eq.s32.totalorder %s17, 1
      %p119 = scmp.ne.s32.totalorder %s114, %s116
      %p120 = scmp.eq.s32.totalorder %s17, 0
      %p121 = por %p119, %p120
      %p122 = scmp.ne.s32.totalorder %s114, %s116
      %p123 = scmp.eq.s32.totalorder %s22, 1
      %p124 = por %p122, %p123
      %p125 = scmp.ne.s32.totalorder %s116, %s117
      %p126 = scmp.eq.s32.totalorder %s22, 0
      %p127 = por %p125, %p126
      %p128 = scmp.ne.s32.totalorder %s116, %s117
      %p129 = scmp.eq.s32.totalorder %s23, 1
      %p130 = por %p128, %p129
      %p132 = scmp.ne.s32.totalorder %s117, %s131
      %p133 = scmp.eq.s32.totalorder %s23, 0
      %p134 = por %p132, %p133
      %s136 = sadd.s32 %s135, 1
      %p139 = scmp.eq.s32.totalorder %s17, 1
      %p140 = scmp.ne.s32.totalorder %s135, %s137
      %p141 = scmp.eq.s32.totalorder %s17, 0
      %p142 = por %p140, %p141
      %p143 = scmp.ne.s32.totalorder %s135, %s137
      %p144 = scmp.eq.s32.totalorder %s22, 1
      %p145 = por %p143, %p144
      %p146 = scmp.ne.s32.totalorder %s137, %s138
      %p147 = scmp.eq.s32.totalorder %s22, 0
      %p148 = por %p146, %p147
      %p149 = scmp.ne.s32.totalorder %s137, %s138
      %p150 = scmp.eq.s32.totalorder %s23, 1
      %p151 = por %p149, %p150
      %p153 = scmp.ne.s32.totalorder %s138, %s152
      %p154 = scmp.eq.s32.totalorder %s23, 0
      %p155 = por %p153, %p154
      %s157 = sadd.s32 %s156, 1
      %p160 = scmp.eq.s32.totalorder %s17, 1
      %p161 = scmp.ne.s32.totalorder %s156, %s158
      %p162 = scmp.eq.s32.totalorder %s17, 0
      %p163 = por %p161, %p162
      %p164 = scmp.ne.s32.totalorder %s156, %s158
      %p165 = scmp.eq.s32.totalorder %s22, 1
      %p166 = por %p164, %p165
      %p167 = scmp.ne.s32.totalorder %s158, %s159
      %p168 = scmp.eq.s32.totalorder %s22, 0
      %p169 = por %p167, %p168
      %p170 = scmp.ne.s32.totalorder %s158, %s159
      %p171 = scmp.eq.s32.totalorder %s23, 1
      %p172 = por %p170, %p171
      %p174 = scmp.ne.s32.totalorder %s159, %s173
      %p175 = scmp.eq.s32.totalorder %s23, 0
      %p176 = por %p174, %p175
      %s177 = ssub.s32 %s17, %s24
      %p178 = scmp.eq.s32.totalorder %s177, 0
      %s180 = sadd.s32 %s179, 1
      %s181 = scalar_select %p178, %s179, %s180
      %p184 = pneg %p178
      %p185 = scmp.eq.s32.totalorder %s17, 1
      %p186 = por %p184, %p185
      %p187 = scmp.ne.s32.totalorder %s179, %s182
      %p188 = scmp.eq.s32.totalorder %s17, 0
      %p189 = por %p187, %p188
      %p190 = scmp.ne.s32.totalorder %s179, %s182
      %p191 = scmp.eq.s32.totalorder %s22, 1
      %p192 = por %p190, %p191
      %p193 = scmp.ne.s32.totalorder %s182, %s183
      %p194 = scmp.eq.s32.totalorder %s22, 0
      %p195 = por %p193, %p194
      %p196 = scmp.ne.s32.totalorder %s182, %s183
      %p197 = scmp.eq.s32.totalorder %s23, 1
      %p198 = por %p196, %p197
      %p200 = scmp.ne.s32.totalorder %s183, %s199
      %p201 = scmp.eq.s32.totalorder %s23, 0
      %p202 = por %p200, %p201
      %p203 = scmp.le.s32.totalorder 1, %s17
      %p204 = scmp.lt.s32.totalorder %s17, 3
      %p205 = pnand %p203, %p204
      %p206 = pneg %p205
      // Predicated region
      $region9: #{edsr_forward.1} parent=5 // pred_check
        _
      $region10: #{edsr_forward.1} parent=5 // pred_check_branch
        %208 = sbr.rel (%p205) target = $region12
      $region11: #{edsr_forward.1} parent=5 // pred_region
        %s209 = ssub.s32 %s17, 1
        // Predicated region
        $region13: #{edsr_forward.1} parent=11 // pred_check
          %p210 = pneg %p64
        $region14: #{edsr_forward.1} parent=11 // pred_check_branch
          %212 = sbr.rel (%p210) target = $region16
        $region15: #{edsr_forward.1} parent=11 // pred_region
          %214 = vsyncadd [#allocation4], 0
          %s215 = sshll.u32 %s1, 4
          %s216 = int_to_ptr.hbm [resolvable:$true] %s215
          %s217 = sshll.u32 [#allocation3], 4
          %s218 = int_to_ptr.vmem [resolvable:$true] %s217
          %223 = dma.hbm_to_vmem [thread:$0]  %s216, 256, %s218, [#allocation4], 128, 128, 8
        $region16: #{edsr_forward.1} parent=11 // pred_fallthru
          _
        // Predicated region
        $region17: #{edsr_forward.1} parent=11 // pred_check
          %p224 = pneg %p85
        $region18: #{edsr_forward.1} parent=11 // pred_check_branch
          %226 = sbr.rel (%p224) target = $region20
        $region19: #{edsr_forward.1} parent=11 // pred_region
          %228 = vsyncadd [#allocation6], 0
          %s230 = sshll.u32 %s2, 4
          %s231 = int_to_ptr.hbm [resolvable:$true] %s230
          %s232 = sshll.u32 [#allocation5], 4
          %s233 = int_to_ptr.vmem [resolvable:$true] %s232
          %235 = dma.hbm_to_vmem [thread:$0]  %s231, 16, %s233, [#allocation6]
        $region20: #{edsr_forward.1} parent=11 // pred_fallthru
          _
        // Predicated region
        $region21: #{edsr_forward.1} parent=11 // pred_check
          %p236 = pneg %p106
        $region22: #{edsr_forward.1} parent=11 // pred_check_branch
          %238 = sbr.rel (%p236) target = $region24
        $region23: #{edsr_forward.1} parent=11 // pred_region
          %240 = vsyncadd [#allocation6], 0
          %s241 = sshll.u32 %s3, 4
          %s242 = int_to_ptr.hbm [resolvable:$true] %s241
          %s243 = sshll.u32 [#allocation7], 4
          %s244 = int_to_ptr.vmem [resolvable:$true] %s243
          %249 = dma.hbm_to_vmem [thread:$0]  %s242, 61440, %s244, [#allocation6], 128, 128, 8
        $region24: #{edsr_forward.1} parent=11 // pred_fallthru
          _
        // Predicated region
        $region25: #{edsr_forward.1} parent=11 // pred_check
          %p250 = pneg %p127
        $region26: #{edsr_forward.1} parent=11 // pred_check_branch
          %252 = sbr.rel (%p250) target = $region28
        $region27: #{edsr_forward.1} parent=11 // pred_region
          %254 = vsyncadd [#allocation9], 0
          %s255 = sshll.u32 %s4, 4
          %s256 = int_to_ptr.hbm [resolvable:$true] %s255
          %s257 = sshll.u32 [#allocation8], 4
          %s258 = int_to_ptr.vmem [resolvable:$true] %s257
          %263 = dma.hbm_to_vmem [thread:$0]  %s256, 320, %s258, [#allocation9], 16, 16, 1
        $region28: #{edsr_forward.1} parent=11 // pred_fallthru
          _
        // Predicated region
        $region29: #{edsr_forward.1} parent=11 // pred_check
          %p264 = pneg %p148
        $region30: #{edsr_forward.1} parent=11 // pred_check_branch
          %266 = sbr.rel (%p264) target = $region32
        $region31: #{edsr_forward.1} parent=11 // pred_region
          %268 = vsyncadd [#allocation9], 0
          %s269 = sshll.u32 %s5, 4
          %s270 = int_to_ptr.hbm [resolvable:$true] %s269
          %s271 = sshll.u32 [#allocation10], 4
          %s272 = int_to_ptr.vmem [resolvable:$true] %s271
          %277 = dma.hbm_to_vmem [thread:$0]  %s270, 1536, %s272, [#allocation9], 64, 64, 4
        $region32: #{edsr_forward.1} parent=11 // pred_fallthru
          _
        // Predicated region
        $region33: #{edsr_forward.1} parent=11 // pred_check
          %p278 = pneg %p169
        $region34: #{edsr_forward.1} parent=11 // pred_check_branch
          %280 = sbr.rel (%p278) target = $region36
        $region35: #{edsr_forward.1} parent=11 // pred_region
          %282 = vsyncadd [#allocation12], 0
          %s284 = sshll.u32 %s6, 4
          %s285 = int_to_ptr.hbm [resolvable:$true] %s284
          %s286 = sshll.u32 [#allocation11], 4
          %s287 = int_to_ptr.vmem [resolvable:$true] %s286
          %289 = dma.hbm_to_vmem [thread:$0]  %s285, 16, %s287, [#allocation12]
        $region36: #{edsr_forward.1} parent=11 // pred_fallthru
          _
      $region12: #{edsr_forward.1} parent=5 // pred_fallthru
        _
      %p290 = scmp.lt.s32.totalorder %s17, 2
      // Predicated region
      $region37: #{edsr_forward.1} parent=5 // pred_check
        %p291 = pneg %p290
      $region38: #{edsr_forward.1} parent=5 // pred_check_branch
        %293 = sbr.rel (%p291) target = $region40
      $region39: #{edsr_forward.1} parent=5 // pred_region
        // Predicated region
        $region41: #{edsr_forward.1} parent=39 // pred_check
          %p294 = pneg %p37
        $region42: #{edsr_forward.1} parent=39 // pred_check_branch
          %296 = sbr.rel (%p294) target = $region44
        $region43: #{edsr_forward.1} parent=39 // pred_region
          %p297 = scmp.lt.s32.totalorder %s17, 1
          %s298 = scalar_select %p297, %s17, 1
          %s299 = smul.addr %s298, 54
          %s300 = smul.addr %s299, 8
          %s301 = scalar_lea.vmem %s0, %s300
        $region44: #{edsr_forward.1} parent=39 // pred_fallthru
          _
      $region40: #{edsr_forward.1} parent=5 // pred_fallthru
        _
      %p302 = scmp.le.s32.totalorder 1, %s17
      %p303 = scmp.lt.s32.totalorder %s17, 3
      %p304 = pnand %p302, %p303
      %p305 = pneg %p304
      // Predicated region
      $region45: #{edsr_forward.1} parent=5 // pred_check
        _
      $region46: #{edsr_forward.1} parent=5 // pred_check_branch
        %307 = sbr.rel (%p304) target = $region48
      $region47: #{edsr_forward.1} parent=5 // pred_region
        %s308 = ssub.s32 %s17, 1
        // Predicated region
        $region49: #{edsr_forward.1} parent=47 // pred_check
          %p309 = pneg %p64
        $region50: #{edsr_forward.1} parent=47 // pred_check_branch
          %311 = sbr.rel (%p309) target = $region52
        $region51: #{edsr_forward.1} parent=47 // pred_region
          %313 = dma.done [#allocation4], 256
        $region52: #{edsr_forward.1} parent=47 // pred_fallthru
          _
        // Predicated region
        $region53: #{edsr_forward.1} parent=47 // pred_check
          %p314 = pneg %p85
        $region54: #{edsr_forward.1} parent=47 // pred_check_branch
          %316 = sbr.rel (%p314) target = $region56
        $region55: #{edsr_forward.1} parent=47 // pred_region
          %318 = dma.done [#allocation6], 16
        $region56: #{edsr_forward.1} parent=47 // pred_fallthru
          _
        // Predicated region
        $region57: #{edsr_forward.1} parent=47 // pred_check
          %p319 = pneg %p106
        $region58: #{edsr_forward.1} parent=47 // pred_check_branch
          %321 = sbr.rel (%p319) target = $region60
        $region59: #{edsr_forward.1} parent=47 // pred_region
          %323 = dma.done [#allocation6], 61440
        $region60: #{edsr_forward.1} parent=47 // pred_fallthru
          _
        // Predicated region
        $region61: #{edsr_forward.1} parent=47 // pred_check
          %p324 = pneg %p127
        $region62: #{edsr_forward.1} parent=47 // pred_check_branch
          %326 = sbr.rel (%p324) target = $region64
        $region63: #{edsr_forward.1} parent=47 // pred_region
          %328 = dma.done [#allocation9], 320
        $region64: #{edsr_forward.1} parent=47 // pred_fallthru
          _
        // Predicated region
        $region65: #{edsr_forward.1} parent=47 // pred_check
          %p329 = pneg %p148
        $region66: #{edsr_forward.1} parent=47 // pred_check_branch
          %331 = sbr.rel (%p329) target = $region68
        $region67: #{edsr_forward.1} parent=47 // pred_region
          %333 = dma.done [#allocation9], 1536
        $region68: #{edsr_forward.1} parent=47 // pred_fallthru
          _
        // Predicated region
        $region69: #{edsr_forward.1} parent=47 // pred_check
          %p334 = pneg %p169
        $region70: #{edsr_forward.1} parent=47 // pred_check_branch
          %336 = sbr.rel (%p334) target = $region72
        $region71: #{edsr_forward.1} parent=47 // pred_region
          %338 = dma.done [#allocation12], 16
        $region72: #{edsr_forward.1} parent=47 // pred_fallthru
          _
        %p339 = scmp.lt.s32.totalorder %s22, 1
        %s340 = scalar_select %p339, %s22, 1
        %s341 = smul.addr %s340, 54
        %s342 = smul.addr %s341, 8
        %s343 = scalar_lea.vmem %s0, %s342
        %p344 = pneg %p43
        %p345 = pneg %p40
        %p346 = pneg %p64
        %p347 = pneg %p61
        %p348 = pneg %p85
        %p349 = pneg %p82
        %p350 = pneg %p106
        %p351 = pneg %p103
        %p352 = pneg %p127
        %p353 = pneg %p124
        %p354 = pneg %p148
        %p355 = pneg %p145
        %p356 = pneg %p169
        %p357 = pneg %p166
        %p358 = pneg %p195
        %p359 = pneg %p192
        %p360 = scmp.lt.s32.totalorder %s22, 1
        %s361 = scalar_select %p360, %s22, 1
        %s362 = smul.addr %s361, 32
        %s363 = smul.addr %s362, 8
        %s364 = scalar_lea.vmem %s7, %s363
        %p365 = scmp.lt.s32.totalorder %s22, 1
        %s366 = scalar_select %p365, %s22, 1
        %s367 = smul.addr %s366, 54
        %s368 = smul.addr %s367, 8
        %s369 = scalar_lea.vmem %s0, %s368
        %p370 = scmp.lt.s32.totalorder %s22, 1
        %s371 = scalar_select %p370, %s22, 1
        %s372 = smul.addr %s371, 32
        %s373 = smul.addr %s372, 8
        %s374 = scalar_lea.vmem %s7, %s373
        %vm376 = vcmask 519168
        %377 = vst.msk [vmem:[#allocation2] sm:$0xf] %vm376, 0
        %378 = vst.msk [vmem:[#allocation2 + $0x4] sm:$0xf] %vm376, 0
        %vm379 = vcmask 516096
        %380 = vst.msk [vmem:[#allocation2 + $0x8] sm:$0x1] %vm379, 0
        %381 = vst.msk [vmem:[#allocation2 + $0xd8] sm:$0xf] %vm376, 0
        %382 = vst.msk [vmem:[#allocation2 + $0xdc] sm:$0xf] %vm376, 0
        %383 = vst.msk [vmem:[#allocation2 + $0xe0] sm:$0x1] %vm379, 0
        %s384 = scalar_lea.vmem [#allocation2], 204
        %385 = vst.msk [vmem:[%s384] sm:$0xf] %vm376, 0
        %386 = vst.msk [vmem:[%s384 + $0x4] sm:$0xf] %vm376, 0
        %387 = vst.msk [vmem:[%s384 + $0x8] sm:$0x1] %vm379, 0
        %388 = vst.msk [vmem:[%s384 + $0xd8] sm:$0xf] %vm376, 0
        %389 = vst.msk [vmem:[%s384 + $0xdc] sm:$0xf] %vm376, 0
        %390 = vst.msk [vmem:[%s384 + $0xe0] sm:$0x1] %vm379, 0
        %vm391 = vcmask 516096
        %vm392 = vsmask.f32 256
        %vm393 = vmand %vm391, %vm392
        %v394 = vld [vmem:[#allocation2] sm:$0x1]
        %v395 = vsel %vm393, 0, %v394
        %396 = vst [vmem:[#allocation2] sm:$0x1] %v395
        %v397 = vld [vmem:[#allocation2 + $0xc] sm:$0x1]
        %v398 = vsel %vm393, 0, %v397
        %399 = vst [vmem:[#allocation2 + $0xc] sm:$0x1] %v398
        %v400 = vld [vmem:[#allocation2 + $0x18] sm:$0x1]
        %v401 = vsel %vm393, 0, %v400
        %402 = vst [vmem:[#allocation2 + $0x18] sm:$0x1] %v401
        %v403 = vld [vmem:[#allocation2 + $0x24] sm:$0x1]
        %v404 = vsel %vm393, 0, %v403
        %405 = vst [vmem:[#allocation2 + $0x24] sm:$0x1] %v404
        %v406 = vld [vmem:[#allocation2 + $0x30] sm:$0x1]
        %v407 = vsel %vm393, 0, %v406
        %408 = vst [vmem:[#allocation2 + $0x30] sm:$0x1] %v407
        %v409 = vld [vmem:[#allocation2 + $0x3c] sm:$0x1]
        %v410 = vsel %vm393, 0, %v409
        %411 = vst [vmem:[#allocation2 + $0x3c] sm:$0x1] %v410
        %v412 = vld [vmem:[#allocation2 + $0x48] sm:$0x1]
        %v413 = vsel %vm393, 0, %v412
        %414 = vst [vmem:[#allocation2 + $0x48] sm:$0x1] %v413
        %v415 = vld [vmem:[#allocation2 + $0x54] sm:$0x1]
        %v416 = vsel %vm393, 0, %v415
        %417 = vst [vmem:[#allocation2 + $0x54] sm:$0x1] %v416
        %v418 = vld [vmem:[#allocation2 + $0x60] sm:$0x1]
        %v419 = vsel %vm393, 0, %v418
        %420 = vst [vmem:[#allocation2 + $0x60] sm:$0x1] %v419
        %v421 = vld [vmem:[#allocation2 + $0x6c] sm:$0x1]
        %v422 = vsel %vm393, 0, %v421
        %423 = vst [vmem:[#allocation2 + $0x6c] sm:$0x1] %v422
        %v424 = vld [vmem:[#allocation2 + $0x78] sm:$0x1]
        %v425 = vsel %vm393, 0, %v424
        %426 = vst [vmem:[#allocation2 + $0x78] sm:$0x1] %v425
        %v427 = vld [vmem:[#allocation2 + $0x84] sm:$0x1]
        %v428 = vsel %vm393, 0, %v427
        %429 = vst [vmem:[#allocation2 + $0x84] sm:$0x1] %v428
        %v430 = vld [vmem:[#allocation2 + $0x90] sm:$0x1]
        %v431 = vsel %vm393, 0, %v430
        %432 = vst [vmem:[#allocation2 + $0x90] sm:$0x1] %v431
        %v433 = vld [vmem:[#allocation2 + $0x9c] sm:$0x1]
        %v434 = vsel %vm393, 0, %v433
        %435 = vst [vmem:[#allocation2 + $0x9c] sm:$0x1] %v434
        %v436 = vld [vmem:[#allocation2 + $0xa8] sm:$0x1]
        %v437 = vsel %vm393, 0, %v436
        %438 = vst [vmem:[#allocation2 + $0xa8] sm:$0x1] %v437
        %v439 = vld [vmem:[#allocation2 + $0xb4] sm:$0x1]
        %v440 = vsel %vm393, 0, %v439
        %441 = vst [vmem:[#allocation2 + $0xb4] sm:$0x1] %v440
        %v442 = vld [vmem:[#allocation2 + $0xc0] sm:$0x1]
        %v443 = vsel %vm393, 0, %v442
        %444 = vst [vmem:[#allocation2 + $0xc0] sm:$0x1] %v443
        %v445 = vld [vmem:[#allocation2 + $0xcc] sm:$0x1]
        %v446 = vsel %vm393, 0, %v445
        %447 = vst [vmem:[#allocation2 + $0xcc] sm:$0x1] %v446
        %v448 = vld [vmem:[#allocation2 + $0xd8] sm:$0x1]
        %v449 = vsel %vm393, 0, %v448
        %450 = vst [vmem:[#allocation2 + $0xd8] sm:$0x1] %v449
        %v451 = vld [vmem:[#allocation2 + $0xe4] sm:$0x1]
        %v452 = vsel %vm393, 0, %v451
        %453 = vst [vmem:[#allocation2 + $0xe4] sm:$0x1] %v452
        %v454 = vld [vmem:[#allocation2 + $0xf0] sm:$0x1]
        %v455 = vsel %vm393, 0, %v454
        %456 = vst [vmem:[#allocation2 + $0xf0] sm:$0x1] %v455
        %v457 = vld [vmem:[#allocation2 + $0xfc] sm:$0x1]
        %v458 = vsel %vm393, 0, %v457
        %459 = vst [vmem:[#allocation2 + $0xfc] sm:$0x1] %v458
        %v460 = vld [vmem:[#allocation2 + $0x108] sm:$0x1]
        %v461 = vsel %vm393, 0, %v460
        %462 = vst [vmem:[#allocation2 + $0x108] sm:$0x1] %v461
        %v463 = vld [vmem:[#allocation2 + $0x114] sm:$0x1]
        %v464 = vsel %vm393, 0, %v463
        %465 = vst [vmem:[#allocation2 + $0x114] sm:$0x1] %v464
        %v466 = vld [vmem:[#allocation2 + $0x120] sm:$0x1]
        %v467 = vsel %vm393, 0, %v466
        %468 = vst [vmem:[#allocation2 + $0x120] sm:$0x1] %v467
        %v469 = vld [vmem:[#allocation2 + $0x12c] sm:$0x1]
        %v470 = vsel %vm393, 0, %v469
        %471 = vst [vmem:[#allocation2 + $0x12c] sm:$0x1] %v470
        %v472 = vld [vmem:[#allocation2 + $0x138] sm:$0x1]
        %v473 = vsel %vm393, 0, %v472
        %474 = vst [vmem:[#allocation2 + $0x138] sm:$0x1] %v473
        %v475 = vld [vmem:[#allocation2 + $0x144] sm:$0x1]
        %v476 = vsel %vm393, 0, %v475
        %477 = vst [vmem:[#allocation2 + $0x144] sm:$0x1] %v476
        %v478 = vld [vmem:[#allocation2 + $0x150] sm:$0x1]
        %v479 = vsel %vm393, 0, %v478
        %480 = vst [vmem:[#allocation2 + $0x150] sm:$0x1] %v479
        %v481 = vld [vmem:[#allocation2 + $0x15c] sm:$0x1]
        %v482 = vsel %vm393, 0, %v481
        %483 = vst [vmem:[#allocation2 + $0x15c] sm:$0x1] %v482
        %v484 = vld [vmem:[#allocation2 + $0x168] sm:$0x1]
        %v485 = vsel %vm393, 0, %v484
        %486 = vst [vmem:[#allocation2 + $0x168] sm:$0x1] %v485
        %v487 = vld [vmem:[#allocation2 + $0x174] sm:$0x1]
        %v488 = vsel %vm393, 0, %v487
        %489 = vst [vmem:[#allocation2 + $0x174] sm:$0x1] %v488
        %v490 = vld [vmem:[#allocation2 + $0x180] sm:$0x1]
        %v491 = vsel %vm393, 0, %v490
        %492 = vst [vmem:[#allocation2 + $0x180] sm:$0x1] %v491
        %v493 = vld [vmem:[#allocation2 + $0x18c] sm:$0x1]
        %v494 = vsel %vm393, 0, %v493
        %495 = vst [vmem:[#allocation2 + $0x18c] sm:$0x1] %v494
        %v496 = vld [vmem:[#allocation2 + $0x198] sm:$0x1]
        %v497 = vsel %vm393, 0, %v496
        %498 = vst [vmem:[#allocation2 + $0x198] sm:$0x1] %v497
        %v499 = vld [vmem:[#allocation2 + $0x1a4] sm:$0x1]
        %v500 = vsel %vm393, 0, %v499
        %501 = vst [vmem:[#allocation2 + $0x1a4] sm:$0x1] %v500
        %vm502 = vsmask.f32 7938
        %vm503 = vmand %vm391, %vm502
        %v504 = vld [vmem:[#allocation2 + $0x8] sm:$0x1]
        %v505 = vsel %vm503, 0, %v504
        %506 = vst [vmem:[#allocation2 + $0x8] sm:$0x1] %v505
        %v507 = vld [vmem:[#allocation2 + $0x14] sm:$0x1]
        %v508 = vsel %vm503, 0, %v507
        %509 = vst [vmem:[#allocation2 + $0x14] sm:$0x1] %v508
        %v510 = vld [vmem:[#allocation2 + $0x20] sm:$0x1]
        %v511 = vsel %vm503, 0, %v510
        %512 = vst [vmem:[#allocation2 + $0x20] sm:$0x1] %v511
        %v513 = vld [vmem:[#allocation2 + $0x2c] sm:$0x1]
        %v514 = vsel %vm503, 0, %v513
        %515 = vst [vmem:[#allocation2 + $0x2c] sm:$0x1] %v514
        %v516 = vld [vmem:[#allocation2 + $0x38] sm:$0x1]
        %v517 = vsel %vm503, 0, %v516
        %518 = vst [vmem:[#allocation2 + $0x38] sm:$0x1] %v517
        %v519 = vld [vmem:[#allocation2 + $0x44] sm:$0x1]
        %v520 = vsel %vm503, 0, %v519
        %521 = vst [vmem:[#allocation2 + $0x44] sm:$0x1] %v520
        %v522 = vld [vmem:[#allocation2 + $0x50] sm:$0x1]
        %v523 = vsel %vm503, 0, %v522
        %524 = vst [vmem:[#allocation2 + $0x50] sm:$0x1] %v523
        %v525 = vld [vmem:[#allocation2 + $0x5c] sm:$0x1]
        %v526 = vsel %vm503, 0, %v525
        %527 = vst [vmem:[#allocation2 + $0x5c] sm:$0x1] %v526
        %v528 = vld [vmem:[#allocation2 + $0x68] sm:$0x1]
        %v529 = vsel %vm503, 0, %v528
        %530 = vst [vmem:[#allocation2 + $0x68] sm:$0x1] %v529
        %v531 = vld [vmem:[#allocation2 + $0x74] sm:$0x1]
        %v532 = vsel %vm503, 0, %v531
        %533 = vst [vmem:[#allocation2 + $0x74] sm:$0x1] %v532
        %v534 = vld [vmem:[#allocation2 + $0x80] sm:$0x1]
        %v535 = vsel %vm503, 0, %v534
        %536 = vst [vmem:[#allocation2 + $0x80] sm:$0x1] %v535
        %v537 = vld [vmem:[#allocation2 + $0x8c] sm:$0x1]
        %v538 = vsel %vm503, 0, %v537
        %539 = vst [vmem:[#allocation2 + $0x8c] sm:$0x1] %v538
        %v540 = vld [vmem:[#allocation2 + $0x98] sm:$0x1]
        %v541 = vsel %vm503, 0, %v540
        %542 = vst [vmem:[#allocation2 + $0x98] sm:$0x1] %v541
        %v543 = vld [vmem:[#allocation2 + $0xa4] sm:$0x1]
        %v544 = vsel %vm503, 0, %v543
        %545 = vst [vmem:[#allocation2 + $0xa4] sm:$0x1] %v544
        %v546 = vld [vmem:[#allocation2 + $0xb0] sm:$0x1]
        %v547 = vsel %vm503, 0, %v546
        %548 = vst [vmem:[#allocation2 + $0xb0] sm:$0x1] %v547
        %v549 = vld [vmem:[#allocation2 + $0xbc] sm:$0x1]
        %v550 = vsel %vm503, 0, %v549
        %551 = vst [vmem:[#allocation2 + $0xbc] sm:$0x1] %v550
        %v552 = vld [vmem:[#allocation2 + $0xc8] sm:$0x1]
        %v553 = vsel %vm503, 0, %v552
        %554 = vst [vmem:[#allocation2 + $0xc8] sm:$0x1] %v553
        %v555 = vld [vmem:[#allocation2 + $0xd4] sm:$0x1]
        %v556 = vsel %vm503, 0, %v555
        %557 = vst [vmem:[#allocation2 + $0xd4] sm:$0x1] %v556
        %v558 = vld [vmem:[#allocation2 + $0xe0] sm:$0x1]
        %v559 = vsel %vm503, 0, %v558
        %560 = vst [vmem:[#allocation2 + $0xe0] sm:$0x1] %v559
        %v561 = vld [vmem:[#allocation2 + $0xec] sm:$0x1]
        %v562 = vsel %vm503, 0, %v561
        %563 = vst [vmem:[#allocation2 + $0xec] sm:$0x1] %v562
        %v564 = vld [vmem:[#allocation2 + $0xf8] sm:$0x1]
        %v565 = vsel %vm503, 0, %v564
        %566 = vst [vmem:[#allocation2 + $0xf8] sm:$0x1] %v565
        %v567 = vld [vmem:[#allocation2 + $0x104] sm:$0x1]
        %v568 = vsel %vm503, 0, %v567
        %569 = vst [vmem:[#allocation2 + $0x104] sm:$0x1] %v568
        %v570 = vld [vmem:[#allocation2 + $0x110] sm:$0x1]
        %v571 = vsel %vm503, 0, %v570
        %572 = vst [vmem:[#allocation2 + $0x110] sm:$0x1] %v571
        %v573 = vld [vmem:[#allocation2 + $0x11c] sm:$0x1]
        %v574 = vsel %vm503, 0, %v573
        %575 = vst [vmem:[#allocation2 + $0x11c] sm:$0x1] %v574
        %v576 = vld [vmem:[#allocation2 + $0x128] sm:$0x1]
        %v577 = vsel %vm503, 0, %v576
        %578 = vst [vmem:[#allocation2 + $0x128] sm:$0x1] %v577
        %v579 = vld [vmem:[#allocation2 + $0x134] sm:$0x1]
        %v580 = vsel %vm503, 0, %v579
        %581 = vst [vmem:[#allocation2 + $0x134] sm:$0x1] %v580
        %v582 = vld [vmem:[#allocation2 + $0x140] sm:$0x1]
        %v583 = vsel %vm503, 0, %v582
        %584 = vst [vmem:[#allocation2 + $0x140] sm:$0x1] %v583
        %v585 = vld [vmem:[#allocation2 + $0x14c] sm:$0x1]
        %v586 = vsel %vm503, 0, %v585
        %587 = vst [vmem:[#allocation2 + $0x14c] sm:$0x1] %v586
        %v588 = vld [vmem:[#allocation2 + $0x158] sm:$0x1]
        %v589 = vsel %vm503, 0, %v588
        %590 = vst [vmem:[#allocation2 + $0x158] sm:$0x1] %v589
        %v591 = vld [vmem:[#allocation2 + $0x164] sm:$0x1]
        %v592 = vsel %vm503, 0, %v591
        %593 = vst [vmem:[#allocation2 + $0x164] sm:$0x1] %v592
        %v594 = vld [vmem:[#allocation2 + $0x170] sm:$0x1]
        %v595 = vsel %vm503, 0, %v594
        %596 = vst [vmem:[#allocation2 + $0x170] sm:$0x1] %v595
        %v597 = vld [vmem:[#allocation2 + $0x17c] sm:$0x1]
        %v598 = vsel %vm503, 0, %v597
        %599 = vst [vmem:[#allocation2 + $0x17c] sm:$0x1] %v598
        %v600 = vld [vmem:[#allocation2 + $0x188] sm:$0x1]
        %v601 = vsel %vm503, 0, %v600
        %602 = vst [vmem:[#allocation2 + $0x188] sm:$0x1] %v601
        %v603 = vld [vmem:[#allocation2 + $0x194] sm:$0x1]
        %v604 = vsel %vm503, 0, %v603
        %605 = vst [vmem:[#allocation2 + $0x194] sm:$0x1] %v604
        %v606 = vld [vmem:[#allocation2 + $0x1a0] sm:$0x1]
        %v607 = vsel %vm503, 0, %v606
        %608 = vst [vmem:[#allocation2 + $0x1a0] sm:$0x1] %v607
        %v609 = vld [vmem:[#allocation2 + $0x1ac] sm:$0x1]
        %v610 = vsel %vm503, 0, %v609
        %611 = vst [vmem:[#allocation2 + $0x1ac] sm:$0x1] %v610
        %v612 = vld [vmem:[#allocation3] sm:$0xff]
        %v613 = vld [vmem:[#allocation3 + $0x8] sm:$0x11]
        %v614 = vld [vmem:[#allocation5] sm:$0x1]
        %v615 = vld [vmem:[%s369] sm:$0xff]
        %v616 = vld [vmem:[%s369 + $0x8] sm:$0xff]
        %v617 = vld [vmem:[%s369 + $0x18] sm:$0xff]
        %v618 = vld [vmem:[%s369 + $0x20] sm:$0xff]
        %v619 = vld [vmem:[%s369 + $0x30] sm:$0xff]
        %v620 = vld [vmem:[%s369 + $0x38] sm:$0xff]
        %v621 = vld [vmem:[%s369 + $0x48] sm:$0xff]
        %v622 = vld [vmem:[%s369 + $0x50] sm:$0xff]
        %v623 = vld [vmem:[%s369 + $0x60] sm:$0xff]
        %v624 = vld [vmem:[%s369 + $0x68] sm:$0xff]
        %v625 = vld [vmem:[%s369 + $0x78] sm:$0xff]
        %v626 = vld [vmem:[%s369 + $0x80] sm:$0xff]
        %v627 = vld [vmem:[%s369 + $0x90] sm:$0xff]
        %v628 = vld [vmem:[%s369 + $0x98] sm:$0xff]
        %v629 = vld [vmem:[%s369 + $0xa8] sm:$0xff]
        %v630 = vld [vmem:[%s369 + $0xb0] sm:$0xff]
        %v631 = vld [vmem:[%s369 + $0xc0] sm:$0xff]
        %v632 = vld [vmem:[%s369 + $0xc8] sm:$0xff]
        %v633 = vld [vmem:[%s369 + $0xd8] sm:$0xff]
        %v634 = vld [vmem:[%s369 + $0xe0] sm:$0xff]
        %v635 = vld [vmem:[%s369 + $0xf0] sm:$0xff]
        %v636 = vld [vmem:[%s369 + $0xf8] sm:$0xff]
        %v637 = vld [vmem:[%s369 + $0x108] sm:$0xff]
        %v638 = vld [vmem:[%s369 + $0x110] sm:$0xff]
        %v639 = vld [vmem:[%s369 + $0x120] sm:$0xff]
        %v640 = vld [vmem:[%s369 + $0x128] sm:$0xff]
        %v641 = vld [vmem:[%s369 + $0x138] sm:$0xff]
        %v642 = vld [vmem:[%s369 + $0x140] sm:$0xff]
        %v643 = vld [vmem:[%s369 + $0x150] sm:$0xff]
        %v644 = vld [vmem:[%s369 + $0x158] sm:$0xff]
        %v645 = vld [vmem:[%s369 + $0x168] sm:$0xff]
        %v646 = vld [vmem:[%s369 + $0x170] sm:$0xff]
        %v647 = vld [vmem:[%s369 + $0x180] sm:$0xff]
        %v648 = vld [vmem:[%s369 + $0x188] sm:$0xff]
        %v649 = vld [vmem:[%s369 + $0x198] sm:$0xff]
        %v650 = vld [vmem:[%s369 + $0x1a0] sm:$0xff]
        %v651 = vpack.c.bf16 %v615, %v615
        %v652 = vpack.c.bf16 %v616, %v616
        %v653 = vpack.c.bf16 %v617, %v617
        %v654 = vpack.c.bf16 %v618, %v618
        %v655 = vpack.c.bf16 %v619, %v619
        %v656 = vpack.c.bf16 %v620, %v620
        %v657 = vpack.c.bf16 %v621, %v621
        %v658 = vpack.c.bf16 %v622, %v622
        %v659 = vpack.c.bf16 %v623, %v623
        %v660 = vpack.c.bf16 %v624, %v624
        %v661 = vpack.c.bf16 %v625, %v625
        %v662 = vpack.c.bf16 %v626, %v626
        %v663 = vpack.c.bf16 %v627, %v627
        %v664 = vpack.c.bf16 %v628, %v628
        %v665 = vpack.c.bf16 %v629, %v629
        %v666 = vpack.c.bf16 %v630, %v630
        %v667 = vpack.c.bf16 %v631, %v631
        %v668 = vpack.c.bf16 %v632, %v632
        %v669 = vpack.c.bf16 %v633, %v633
        %v670 = vpack.c.bf16 %v634, %v634
        %v671 = vpack.c.bf16 %v635, %v635
        %v672 = vpack.c.bf16 %v636, %v636
        %v673 = vpack.c.bf16 %v637, %v637
        %v674 = vpack.c.bf16 %v638, %v638
        %v675 = vpack.c.bf16 %v639, %v639
        %v676 = vpack.c.bf16 %v640, %v640
        %v677 = vpack.c.bf16 %v641, %v641
        %v678 = vpack.c.bf16 %v642, %v642
        %v679 = vpack.c.bf16 %v643, %v643
        %v680 = vpack.c.bf16 %v644, %v644
        %v681 = vpack.c.bf16 %v645, %v645
        %v682 = vpack.c.bf16 %v646, %v646
        %v683 = vpack.c.bf16 %v647, %v647
        %v684 = vpack.c.bf16 %v648, %v648
        %v685 = vpack.c.bf16 %v649, %v649
        %v686 = vpack.c.bf16 %v650, %v650
        %v687 = vld [vmem:[%s369 + $0x1] sm:$0xff]
        %v688 = vld [vmem:[%s369 + $0x9] sm:$0xff]
        %v689 = vld [vmem:[%s369 + $0x19] sm:$0xff]
        %v690 = vld [vmem:[%s369 + $0x21] sm:$0xff]
        %v691 = vld [vmem:[%s369 + $0x31] sm:$0xff]
        %v692 = vld [vmem:[%s369 + $0x39] sm:$0xff]
        %v693 = vld [vmem:[%s369 + $0x49] sm:$0xff]
        %v694 = vld [vmem:[%s369 + $0x51] sm:$0xff]
        %v695 = vld [vmem:[%s369 + $0x61] sm:$0xff]
        %v696 = vld [vmem:[%s369 + $0x69] sm:$0xff]
        %v697 = vld [vmem:[%s369 + $0x79] sm:$0xff]
        %v698 = vld [vmem:[%s369 + $0x81] sm:$0xff]
        %v699 = vld [vmem:[%s369 + $0x91] sm:$0xff]
        %v700 = vld [vmem:[%s369 + $0x99] sm:$0xff]
        %v701 = vld [vmem:[%s369 + $0xa9] sm:$0xff]
        %v702 = vld [vmem:[%s369 + $0xb1] sm:$0xff]
        %v703 = vld [vmem:[%s369 + $0xc1] sm:$0xff]
        %v704 = vld [vmem:[%s369 + $0xc9] sm:$0xff]
        %v705 = vld [vmem:[%s369 + $0xd9] sm:$0xff]
        %v706 = vld [vmem:[%s369 + $0xe1] sm:$0xff]
        %v707 = vld [vmem:[%s369 + $0xf1] sm:$0xff]
        %v708 = vld [vmem:[%s369 + $0xf9] sm:$0xff]
        %v709 = vld [vmem:[%s369 + $0x109] sm:$0xff]
        %v710 = vld [vmem:[%s369 + $0x111] sm:$0xff]
        %v711 = vld [vmem:[%s369 + $0x121] sm:$0xff]
        %v712 = vld [vmem:[%s369 + $0x129] sm:$0xff]
        %v713 = vld [vmem:[%s369 + $0x139] sm:$0xff]
        %v714 = vld [vmem:[%s369 + $0x141] sm:$0xff]
        %v715 = vld [vmem:[%s369 + $0x151] sm:$0xff]
        %v716 = vld [vmem:[%s369 + $0x159] sm:$0xff]
        %v717 = vld [vmem:[%s369 + $0x169] sm:$0xff]
        %v718 = vld [vmem:[%s369 + $0x171] sm:$0xff]
        %v719 = vld [vmem:[%s369 + $0x181] sm:$0xff]
        %v720 = vld [vmem:[%s369 + $0x189] sm:$0xff]
        %v721 = vld [vmem:[%s369 + $0x199] sm:$0xff]
        %v722 = vld [vmem:[%s369 + $0x1a1] sm:$0xff]
        %v723 = vpack.c.bf16 %v687, %v687
        %v724 = vpack.c.bf16 %v688, %v688
        %v725 = vpack.c.bf16 %v689, %v689
        %v726 = vpack.c.bf16 %v690, %v690
        %v727 = vpack.c.bf16 %v691, %v691
        %v728 = vpack.c.bf16 %v692, %v692
        %v729 = vpack.c.bf16 %v693, %v693
        %v730 = vpack.c.bf16 %v694, %v694
        %v731 = vpack.c.bf16 %v695, %v695
        %v732 = vpack.c.bf16 %v696, %v696
        %v733 = vpack.c.bf16 %v697, %v697
        %v734 = vpack.c.bf16 %v698, %v698
        %v735 = vpack.c.bf16 %v699, %v699
        %v736 = vpack.c.bf16 %v700, %v700
        %v737 = vpack.c.bf16 %v701, %v701
        %v738 = vpack.c.bf16 %v702, %v702
        %v739 = vpack.c.bf16 %v703, %v703
        %v740 = vpack.c.bf16 %v704, %v704
        %v741 = vpack.c.bf16 %v705, %v705
        %v742 = vpack.c.bf16 %v706, %v706
        %v743 = vpack.c.bf16 %v707, %v707
        %v744 = vpack.c.bf16 %v708, %v708
        %v745 = vpack.c.bf16 %v709, %v709
        %v746 = vpack.c.bf16 %v710, %v710
        %v747 = vpack.c.bf16 %v711, %v711
        %v748 = vpack.c.bf16 %v712, %v712
        %v749 = vpack.c.bf16 %v713, %v713
        %v750 = vpack.c.bf16 %v714, %v714
        %v751 = vpack.c.bf16 %v715, %v715
        %v752 = vpack.c.bf16 %v716, %v716
        %v753 = vpack.c.bf16 %v717, %v717
        %v754 = vpack.c.bf16 %v718, %v718
        %v755 = vpack.c.bf16 %v719, %v719
        %v756 = vpack.c.bf16 %v720, %v720
        %v757 = vpack.c.bf16 %v721, %v721
        %v758 = vpack.c.bf16 %v722, %v722
        %v759 = vld [vmem:[%s369 + $0x2] sm:$0xff]
        %v760 = vld [vmem:[%s369 + $0xa] sm:$0xff]
        %v761 = vld [vmem:[%s369 + $0x1a] sm:$0xff]
        %v762 = vld [vmem:[%s369 + $0x22] sm:$0xff]
        %v763 = vld [vmem:[%s369 + $0x32] sm:$0xff]
        %v764 = vld [vmem:[%s369 + $0x3a] sm:$0xff]
        %v765 = vld [vmem:[%s369 + $0x4a] sm:$0xff]
        %v766 = vld [vmem:[%s369 + $0x52] sm:$0xff]
        %v767 = vld [vmem:[%s369 + $0x62] sm:$0xff]
        %v768 = vld [vmem:[%s369 + $0x6a] sm:$0xff]
        %v769 = vld [vmem:[%s369 + $0x7a] sm:$0xff]
        %v770 = vld [vmem:[%s369 + $0x82] sm:$0xff]
        %v771 = vld [vmem:[%s369 + $0x92] sm:$0xff]
        %v772 = vld [vmem:[%s369 + $0x9a] sm:$0xff]
        %v773 = vld [vmem:[%s369 + $0xaa] sm:$0xff]
        %v774 = vld [vmem:[%s369 + $0xb2] sm:$0xff]
        %v775 = vld [vmem:[%s369 + $0xc2] sm:$0xff]
        %v776 = vld [vmem:[%s369 + $0xca] sm:$0xff]
        %v777 = vld [vmem:[%s369 + $0xda] sm:$0xff]
        %v778 = vld [vmem:[%s369 + $0xe2] sm:$0xff]
        %v779 = vld [vmem:[%s369 + $0xf2] sm:$0xff]
        %v780 = vld [vmem:[%s369 + $0xfa] sm:$0xff]
        %v781 = vld [vmem:[%s369 + $0x10a] sm:$0xff]
        %v782 = vld [vmem:[%s369 + $0x112] sm:$0xff]
        %v783 = vld [vmem:[%s369 + $0x122] sm:$0xff]
        %v784 = vld [vmem:[%s369 + $0x12a] sm:$0xff]
        %v785 = vld [vmem:[%s369 + $0x13a] sm:$0xff]
        %v786 = vld [vmem:[%s369 + $0x142] sm:$0xff]
        %v787 = vld [vmem:[%s369 + $0x152] sm:$0xff]
        %v788 = vld [vmem:[%s369 + $0x15a] sm:$0xff]
        %v789 = vld [vmem:[%s369 + $0x16a] sm:$0xff]
        %v790 = vld [vmem:[%s369 + $0x172] sm:$0xff]
        %v791 = vld [vmem:[%s369 + $0x182] sm:$0xff]
        %v792 = vld [vmem:[%s369 + $0x18a] sm:$0xff]
        %v793 = vld [vmem:[%s369 + $0x19a] sm:$0xff]
        %v794 = vld [vmem:[%s369 + $0x1a2] sm:$0xff]
        %v795 = vpack.c.bf16 %v759, %v759
        %v796 = vpack.c.bf16 %v760, %v760
        %v797 = vpack.c.bf16 %v761, %v761
        %v798 = vpack.c.bf16 %v762, %v762
        %v799 = vpack.c.bf16 %v763, %v763
        %v800 = vpack.c.bf16 %v764, %v764
        %v801 = vpack.c.bf16 %v765, %v765
        %v802 = vpack.c.bf16 %v766, %v766
        %v803 = vpack.c.bf16 %v767, %v767
        %v804 = vpack.c.bf16 %v768, %v768
        %v805 = vpack.c.bf16 %v769, %v769
        %v806 = vpack.c.bf16 %v770, %v770
        %v807 = vpack.c.bf16 %v771, %v771
        %v808 = vpack.c.bf16 %v772, %v772
        %v809 = vpack.c.bf16 %v773, %v773
        %v810 = vpack.c.bf16 %v774, %v774
        %v811 = vpack.c.bf16 %v775, %v775
        %v812 = vpack.c.bf16 %v776, %v776
        %v813 = vpack.c.bf16 %v777, %v777
        %v814 = vpack.c.bf16 %v778, %v778
        %v815 = vpack.c.bf16 %v779, %v779
        %v816 = vpack.c.bf16 %v780, %v780
        %v817 = vpack.c.bf16 %v781, %v781
        %v818 = vpack.c.bf16 %v782, %v782
        %v819 = vpack.c.bf16 %v783, %v783
        %v820 = vpack.c.bf16 %v784, %v784
        %v821 = vpack.c.bf16 %v785, %v785
        %v822 = vpack.c.bf16 %v786, %v786
        %v823 = vpack.c.bf16 %v787, %v787
        %v824 = vpack.c.bf16 %v788, %v788
        %v825 = vpack.c.bf16 %v789, %v789
        %v826 = vpack.c.bf16 %v790, %v790
        %v827 = vpack.c.bf16 %v791, %v791
        %v828 = vpack.c.bf16 %v792, %v792
        %v829 = vpack.c.bf16 %v793, %v793
        %v830 = vpack.c.bf16 %v794, %v794
        %v867 = vunpack.c.l.b16 %v651
        %v868 = vunpack.c.l.b16 %v652
        %v869 = vunpack.c.l.b16 %v653
        %v870 = vunpack.c.l.b16 %v654
        %v871 = vunpack.c.l.b16 %v655
        %v872 = vunpack.c.l.b16 %v656
        %v873 = vunpack.c.l.b16 %v657
        %v874 = vunpack.c.l.b16 %v658
        %v875 = vunpack.c.l.b16 %v659
        %v876 = vunpack.c.l.b16 %v660
        %v877 = vunpack.c.l.b16 %v661
        %v878 = vunpack.c.l.b16 %v662
        %v879 = vunpack.c.l.b16 %v663
        %v880 = vunpack.c.l.b16 %v664
        %v881 = vunpack.c.l.b16 %v665
        %v882 = vunpack.c.l.b16 %v666
        %v883 = vunpack.c.l.b16 %v667
        %v884 = vunpack.c.l.b16 %v668
        %v885 = vunpack.c.l.b16 %v669
        %v886 = vunpack.c.l.b16 %v670
        %v887 = vunpack.c.l.b16 %v671
        %v888 = vunpack.c.l.b16 %v672
        %v889 = vunpack.c.l.b16 %v673
        %v890 = vunpack.c.l.b16 %v674
        %v891 = vunpack.c.l.b16 %v675
        %v892 = vunpack.c.l.b16 %v676
        %v893 = vunpack.c.l.b16 %v677
        %v894 = vunpack.c.l.b16 %v678
        %v895 = vunpack.c.l.b16 %v679
        %v896 = vunpack.c.l.b16 %v680
        %v897 = vunpack.c.l.b16 %v681
        %v898 = vunpack.c.l.b16 %v682
        %v899 = vunpack.c.l.b16 %v683
        %v900 = vunpack.c.l.b16 %v684
        %v901 = vunpack.c.l.b16 %v685
        %v902 = vunpack.c.l.b16 %v686
        %v903 = vpack.c.b16 %v868, %v867
        %v904 = vpack.c.b16 %v870, %v869
        %v905 = vpack.c.b16 %v872, %v871
        %v906 = vpack.c.b16 %v874, %v873
        %v907 = vpack.c.b16 %v876, %v875
        %v908 = vpack.c.b16 %v878, %v877
        %v909 = vpack.c.b16 %v880, %v879
        %v910 = vpack.c.b16 %v882, %v881
        %v911 = vpack.c.b16 %v884, %v883
        %v912 = vpack.c.b16 %v886, %v885
        %v913 = vpack.c.b16 %v888, %v887
        %v914 = vpack.c.b16 %v890, %v889
        %v915 = vpack.c.b16 %v892, %v891
        %v916 = vpack.c.b16 %v894, %v893
        %v917 = vpack.c.b16 %v896, %v895
        %v918 = vpack.c.b16 %v898, %v897
        %v919 = vpack.c.b16 %v900, %v899
        %v920 = vpack.c.b16 %v902, %v901
        %v957 = vunpack.c.l.b16 %v723
        %v958 = vunpack.c.l.b16 %v724
        %v959 = vunpack.c.l.b16 %v725
        %v960 = vunpack.c.l.b16 %v726
        %v961 = vunpack.c.l.b16 %v727
        %v962 = vunpack.c.l.b16 %v728
        %v963 = vunpack.c.l.b16 %v729
        %v964 = vunpack.c.l.b16 %v730
        %v965 = vunpack.c.l.b16 %v731
        %v966 = vunpack.c.l.b16 %v732
        %v967 = vunpack.c.l.b16 %v733
        %v968 = vunpack.c.l.b16 %v734
        %v969 = vunpack.c.l.b16 %v735
        %v970 = vunpack.c.l.b16 %v736
        %v971 = vunpack.c.l.b16 %v737
        %v972 = vunpack.c.l.b16 %v738
        %v973 = vunpack.c.l.b16 %v739
        %v974 = vunpack.c.l.b16 %v740
        %v975 = vunpack.c.l.b16 %v741
        %v976 = vunpack.c.l.b16 %v742
        %v977 = vunpack.c.l.b16 %v743
        %v978 = vunpack.c.l.b16 %v744
        %v979 = vunpack.c.l.b16 %v745
        %v980 = vunpack.c.l.b16 %v746
        %v981 = vunpack.c.l.b16 %v747
        %v982 = vunpack.c.l.b16 %v748
        %v983 = vunpack.c.l.b16 %v749
        %v984 = vunpack.c.l.b16 %v750
        %v985 = vunpack.c.l.b16 %v751
        %v986 = vunpack.c.l.b16 %v752
        %v987 = vunpack.c.l.b16 %v753
        %v988 = vunpack.c.l.b16 %v754
        %v989 = vunpack.c.l.b16 %v755
        %v990 = vunpack.c.l.b16 %v756
        %v991 = vunpack.c.l.b16 %v757
        %v992 = vunpack.c.l.b16 %v758
        %v993 = vpack.c.b16 %v958, %v957
        %v994 = vpack.c.b16 %v960, %v959
        %v995 = vpack.c.b16 %v962, %v961
        %v996 = vpack.c.b16 %v964, %v963
        %v997 = vpack.c.b16 %v966, %v965
        %v998 = vpack.c.b16 %v968, %v967
        %v999 = vpack.c.b16 %v970, %v969
        %v1000 = vpack.c.b16 %v972, %v971
        %v1001 = vpack.c.b16 %v974, %v973
        %v1002 = vpack.c.b16 %v976, %v975
        %v1003 = vpack.c.b16 %v978, %v977
        %v1004 = vpack.c.b16 %v980, %v979
        %v1005 = vpack.c.b16 %v982, %v981
        %v1006 = vpack.c.b16 %v984, %v983
        %v1007 = vpack.c.b16 %v986, %v985
        %v1008 = vpack.c.b16 %v988, %v987
        %v1009 = vpack.c.b16 %v990, %v989
        %v1010 = vpack.c.b16 %v992, %v991
        %1011 = vrot.lane.b32.xlu0 %v993, 3
        %v1012 = vpop.permute.xlu0 %1011
        %1013 = vrot.lane.b32.xlu0 %v994, 3
        %v1014 = vpop.permute.xlu0 %1013
        %1015 = vrot.lane.b32.xlu0 %v995, 3
        %v1016 = vpop.permute.xlu0 %1015
        %1017 = vrot.lane.b32.xlu0 %v996, 3
        %v1018 = vpop.permute.xlu0 %1017
        %1019 = vrot.lane.b32.xlu0 %v997, 3
        %v1020 = vpop.permute.xlu0 %1019
        %1021 = vrot.lane.b32.xlu0 %v998, 3
        %v1022 = vpop.permute.xlu0 %1021
        %1023 = vrot.lane.b32.xlu0 %v999, 3
        %v1024 = vpop.permute.xlu0 %1023
        %1025 = vrot.lane.b32.xlu0 %v1000, 3
        %v1026 = vpop.permute.xlu0 %1025
        %1027 = vrot.lane.b32.xlu0 %v1001, 3
        %v1028 = vpop.permute.xlu0 %1027
        %1029 = vrot.lane.b32.xlu0 %v1002, 3
        %v1030 = vpop.permute.xlu0 %1029
        %1031 = vrot.lane.b32.xlu0 %v1003, 3
        %v1032 = vpop.permute.xlu0 %1031
        %1033 = vrot.lane.b32.xlu0 %v1004, 3
        %v1034 = vpop.permute.xlu0 %1033
        %1035 = vrot.lane.b32.xlu0 %v1005, 3
        %v1036 = vpop.permute.xlu0 %1035
        %1037 = vrot.lane.b32.xlu0 %v1006, 3
        %v1038 = vpop.permute.xlu0 %1037
        %1039 = vrot.lane.b32.xlu0 %v1007, 3
        %v1040 = vpop.permute.xlu0 %1039
        %1041 = vrot.lane.b32.xlu0 %v1008, 3
        %v1042 = vpop.permute.xlu0 %1041
        %1043 = vrot.lane.b32.xlu0 %v1009, 3
        %v1044 = vpop.permute.xlu0 %1043
        %1045 = vrot.lane.b32.xlu0 %v1010, 3
        %v1046 = vpop.permute.xlu0 %1045
        %v1083 = vunpack.c.l.b16 %v795
        %v1084 = vunpack.c.l.b16 %v796
        %v1085 = vunpack.c.l.b16 %v797
        %v1086 = vunpack.c.l.b16 %v798
        %v1087 = vunpack.c.l.b16 %v799
        %v1088 = vunpack.c.l.b16 %v800
        %v1089 = vunpack.c.l.b16 %v801
        %v1090 = vunpack.c.l.b16 %v802
        %v1091 = vunpack.c.l.b16 %v803
        %v1092 = vunpack.c.l.b16 %v804
        %v1093 = vunpack.c.l.b16 %v805
        %v1094 = vunpack.c.l.b16 %v806
        %v1095 = vunpack.c.l.b16 %v807
        %v1096 = vunpack.c.l.b16 %v808
        %v1097 = vunpack.c.l.b16 %v809
        %v1098 = vunpack.c.l.b16 %v810
        %v1099 = vunpack.c.l.b16 %v811
        %v1100 = vunpack.c.l.b16 %v812
        %v1101 = vunpack.c.l.b16 %v813
        %v1102 = vunpack.c.l.b16 %v814
        %v1103 = vunpack.c.l.b16 %v815
        %v1104 = vunpack.c.l.b16 %v816
        %v1105 = vunpack.c.l.b16 %v817
        %v1106 = vunpack.c.l.b16 %v818
        %v1107 = vunpack.c.l.b16 %v819
        %v1108 = vunpack.c.l.b16 %v820
        %v1109 = vunpack.c.l.b16 %v821
        %v1110 = vunpack.c.l.b16 %v822
        %v1111 = vunpack.c.l.b16 %v823
        %v1112 = vunpack.c.l.b16 %v824
        %v1113 = vunpack.c.l.b16 %v825
        %v1114 = vunpack.c.l.b16 %v826
        %v1115 = vunpack.c.l.b16 %v827
        %v1116 = vunpack.c.l.b16 %v828
        %v1117 = vunpack.c.l.b16 %v829
        %v1118 = vunpack.c.l.b16 %v830
        %v1119 = vpack.c.b16 %v1084, %v1083
        %v1120 = vpack.c.b16 %v1086, %v1085
        %v1121 = vpack.c.b16 %v1088, %v1087
        %v1122 = vpack.c.b16 %v1090, %v1089
        %v1123 = vpack.c.b16 %v1092, %v1091
        %v1124 = vpack.c.b16 %v1094, %v1093
        %v1125 = vpack.c.b16 %v1096, %v1095
        %v1126 = vpack.c.b16 %v1098, %v1097
        %v1127 = vpack.c.b16 %v1100, %v1099
        %v1128 = vpack.c.b16 %v1102, %v1101
        %v1129 = vpack.c.b16 %v1104, %v1103
        %v1130 = vpack.c.b16 %v1106, %v1105
        %v1131 = vpack.c.b16 %v1108, %v1107
        %v1132 = vpack.c.b16 %v1110, %v1109
        %v1133 = vpack.c.b16 %v1112, %v1111
        %v1134 = vpack.c.b16 %v1114, %v1113
        %v1135 = vpack.c.b16 %v1116, %v1115
        %v1136 = vpack.c.b16 %v1118, %v1117
        %1137 = vrot.lane.b32.xlu0 %v1119, 6
        %v1138 = vpop.permute.xlu0 %1137
        %1139 = vrot.lane.b32.xlu0 %v1120, 6
        %v1140 = vpop.permute.xlu0 %1139
        %1141 = vrot.lane.b32.xlu0 %v1121, 6
        %v1142 = vpop.permute.xlu0 %1141
        %1143 = vrot.lane.b32.xlu0 %v1122, 6
        %v1144 = vpop.permute.xlu0 %1143
        %1145 = vrot.lane.b32.xlu0 %v1123, 6
        %v1146 = vpop.permute.xlu0 %1145
        %1147 = vrot.lane.b32.xlu0 %v1124, 6
        %v1148 = vpop.permute.xlu0 %1147
        %1149 = vrot.lane.b32.xlu0 %v1125, 6
        %v1150 = vpop.permute.xlu0 %1149
        %1151 = vrot.lane.b32.xlu0 %v1126, 6
        %v1152 = vpop.permute.xlu0 %1151
        %1153 = vrot.lane.b32.xlu0 %v1127, 6
        %v1154 = vpop.permute.xlu0 %1153
        %1155 = vrot.lane.b32.xlu0 %v1128, 6
        %v1156 = vpop.permute.xlu0 %1155
        %1157 = vrot.lane.b32.xlu0 %v1129, 6
        %v1158 = vpop.permute.xlu0 %1157
        %1159 = vrot.lane.b32.xlu0 %v1130, 6
        %v1160 = vpop.permute.xlu0 %1159
        %1161 = vrot.lane.b32.xlu0 %v1131, 6
        %v1162 = vpop.permute.xlu0 %1161
        %1163 = vrot.lane.b32.xlu0 %v1132, 6
        %v1164 = vpop.permute.xlu0 %1163
        %1165 = vrot.lane.b32.xlu0 %v1133, 6
        %v1166 = vpop.permute.xlu0 %1165
        %1167 = vrot.lane.b32.xlu0 %v1134, 6
        %v1168 = vpop.permute.xlu0 %1167
        %1169 = vrot.lane.b32.xlu0 %v1135, 6
        %v1170 = vpop.permute.xlu0 %1169
        %1171 = vrot.lane.b32.xlu0 %v1136, 6
        %v1172 = vpop.permute.xlu0 %1171
        %vm1173 = vcmask 23552
        %v1176 = vsel %vm1173, %v903, %v1012
        %v1179 = vsel %vm1173, %v904, %v1014
        %v1182 = vsel %vm1173, %v905, %v1016
        %v1185 = vsel %vm1173, %v906, %v1018
        %v1188 = vsel %vm1173, %v907, %v1020
        %v1191 = vsel %vm1173, %v908, %v1022
        %v1194 = vsel %vm1173, %v909, %v1024
        %v1197 = vsel %vm1173, %v910, %v1026
        %v1200 = vsel %vm1173, %v911, %v1028
        %v1203 = vsel %vm1173, %v912, %v1030
        %v1206 = vsel %vm1173, %v913, %v1032
        %v1209 = vsel %vm1173, %v914, %v1034
        %v1212 = vsel %vm1173, %v915, %v1036
        %v1215 = vsel %vm1173, %v916, %v1038
        %v1218 = vsel %vm1173, %v917, %v1040
        %v1221 = vsel %vm1173, %v918, %v1042
        %v1224 = vsel %vm1173, %v919, %v1044
        %v1227 = vsel %vm1173, %v920, %v1046
        %vm1228 = vcmask 48128
        %v1230 = vsel %vm1228, %v1176, %v1138
        %v1232 = vsel %vm1228, %v1179, %v1140
        %v1234 = vsel %vm1228, %v1182, %v1142
        %v1236 = vsel %vm1228, %v1185, %v1144
        %v1238 = vsel %vm1228, %v1188, %v1146
        %v1240 = vsel %vm1228, %v1191, %v1148
        %v1242 = vsel %vm1228, %v1194, %v1150
        %v1244 = vsel %vm1228, %v1197, %v1152
        %v1246 = vsel %vm1228, %v1200, %v1154
        %v1248 = vsel %vm1228, %v1203, %v1156
        %v1250 = vsel %vm1228, %v1206, %v1158
        %v1252 = vsel %vm1228, %v1209, %v1160
        %v1254 = vsel %vm1228, %v1212, %v1162
        %v1256 = vsel %vm1228, %v1215, %v1164
        %v1258 = vsel %vm1228, %v1218, %v1166
        %v1260 = vsel %vm1228, %v1221, %v1168
        %v1262 = vsel %vm1228, %v1224, %v1170
        %v1264 = vsel %vm1228, %v1227, %v1172
        %v1267 = vunpack.c.l.b16 %v612
        %v1268 = vunpack.c.h.b16 %v612
        %v1269 = vunpack.c.l.b16 %v613
        %v1270 = vunpack.c.h.b16 %v613
        %v1271 = vpack.c.b16 %v1269, %v1267
        %v1272 = vpack.c.b16 %v1270, %v1268
        %vm1273 = vcmask 72704
        %v1274 = vsel %vm1273, %v1230, 0
        %v1276 = vsel %vm1273, %v1232, 0
        %v1278 = vsel %vm1273, %v1234, 0
        %v1280 = vsel %vm1273, %v1236, 0
        %v1282 = vsel %vm1273, %v1238, 0
        %v1284 = vsel %vm1273, %v1240, 0
        %v1286 = vsel %vm1273, %v1242, 0
        %v1288 = vsel %vm1273, %v1244, 0
        %v1290 = vsel %vm1273, %v1246, 0
        %v1292 = vsel %vm1273, %v1248, 0
        %v1294 = vsel %vm1273, %v1250, 0
        %v1296 = vsel %vm1273, %v1252, 0
        %v1298 = vsel %vm1273, %v1254, 0
        %v1300 = vsel %vm1273, %v1256, 0
        %v1302 = vsel %vm1273, %v1258, 0
        %v1304 = vsel %vm1273, %v1260, 0
        %v1306 = vsel %vm1273, %v1262, 0
        %v1308 = vsel %vm1273, %v1264, 0
        %vm1310 = vcmask 1043456
        %vm1311 = vcmask 1044480
        %v1312 = vsel %vm1310, 4294967295, 65535
        %v1313 = vsel %vm1311, %v1312, 0
        %v1315 = vand.u32 %v1271, %v1313
        %v1318 = vand.u32 %v1272, %v1313
        %1320 = vmatpush.bf16.msra.mxu0 0
        %1321 = vmatpush.bf16.msra.mxu0 0
        %1322 = vmatpush.bf16.msra.mxu0 0
        %1323 = vmatpush.bf16.msra.mxu0 0
        %1324 = vmatpush.bf16.msra.mxu0 0
        %1325 = vmatpush.bf16.msra.mxu0 0
        %1326 = vmatpush.bf16.msra.mxu0 0
        %1327 = vmatpush.bf16.msra.mxu0 %v1315
        %1328 = vmatmul.bf16.gmra.mxu0 %v1274
        %v1329 = vpop.f32.mrf.mxu0
        %v1330 = vadd.f32 0.0, %v1329
        %v1331 = vpop.f32.mrf.mxu0
        %v1332 = vadd.f32 0.0, %v1331
        %1333 = vmatmul.bf16.gmra.mxu0 %v1276
        %v1334 = vpop.f32.mrf.mxu0
        %v1335 = vadd.f32 0.0, %v1334
        %v1336 = vpop.f32.mrf.mxu0
        %v1337 = vadd.f32 0.0, %v1336
        %1338 = vmatmul.bf16.gmra.mxu0 %v1278
        %v1339 = vpop.f32.mrf.mxu0
        %v1340 = vadd.f32 0.0, %v1339
        %v1341 = vpop.f32.mrf.mxu0
        %v1342 = vadd.f32 0.0, %v1341
        %1343 = vmatmul.bf16.gmra.mxu0 %v1280
        %v1344 = vpop.f32.mrf.mxu0
        %v1345 = vadd.f32 0.0, %v1344
        %v1346 = vpop.f32.mrf.mxu0
        %v1347 = vadd.f32 0.0, %v1346
        %1348 = vmatmul.bf16.gmra.mxu0 %v1282
        %v1349 = vpop.f32.mrf.mxu0
        %v1350 = vadd.f32 0.0, %v1349
        %v1351 = vpop.f32.mrf.mxu0
        %v1352 = vadd.f32 0.0, %v1351
        %1353 = vmatmul.bf16.gmra.mxu0 %v1284
        %v1354 = vpop.f32.mrf.mxu0
        %v1355 = vadd.f32 0.0, %v1354
        %v1356 = vpop.f32.mrf.mxu0
        %v1357 = vadd.f32 0.0, %v1356
        %1358 = vmatmul.bf16.gmra.mxu0 %v1286
        %v1359 = vpop.f32.mrf.mxu0
        %v1360 = vadd.f32 0.0, %v1359
        %v1361 = vpop.f32.mrf.mxu0
        %v1362 = vadd.f32 0.0, %v1361
        %1363 = vmatmul.bf16.gmra.mxu0 %v1288
        %v1364 = vpop.f32.mrf.mxu0
        %v1365 = vadd.f32 0.0, %v1364
        %v1366 = vpop.f32.mrf.mxu0
        %v1367 = vadd.f32 0.0, %v1366
        %1368 = vmatmul.bf16.gmra.mxu0 %v1290
        %v1369 = vpop.f32.mrf.mxu0
        %v1370 = vadd.f32 0.0, %v1369
        %v1371 = vpop.f32.mrf.mxu0
        %v1372 = vadd.f32 0.0, %v1371
        %1373 = vmatmul.bf16.gmra.mxu0 %v1292
        %v1374 = vpop.f32.mrf.mxu0
        %v1375 = vadd.f32 0.0, %v1374
        %v1376 = vpop.f32.mrf.mxu0
        %v1377 = vadd.f32 0.0, %v1376
        %1378 = vmatmul.bf16.gmra.mxu0 %v1294
        %v1379 = vpop.f32.mrf.mxu0
        %v1380 = vadd.f32 0.0, %v1379
        %v1381 = vpop.f32.mrf.mxu0
        %v1382 = vadd.f32 0.0, %v1381
        %1383 = vmatmul.bf16.gmra.mxu0 %v1296
        %v1384 = vpop.f32.mrf.mxu0
        %v1385 = vadd.f32 0.0, %v1384
        %v1386 = vpop.f32.mrf.mxu0
        %v1387 = vadd.f32 0.0, %v1386
        %1388 = vmatmul.bf16.gmra.mxu0 %v1298
        %v1389 = vpop.f32.mrf.mxu0
        %v1390 = vadd.f32 0.0, %v1389
        %v1391 = vpop.f32.mrf.mxu0
        %v1392 = vadd.f32 0.0, %v1391
        %1393 = vmatmul.bf16.gmra.mxu0 %v1300
        %v1394 = vpop.f32.mrf.mxu0
        %v1395 = vadd.f32 0.0, %v1394
        %v1396 = vpop.f32.mrf.mxu0
        %v1397 = vadd.f32 0.0, %v1396
        %1398 = vmatmul.bf16.gmra.mxu0 %v1302
        %v1399 = vpop.f32.mrf.mxu0
        %v1400 = vadd.f32 0.0, %v1399
        %v1401 = vpop.f32.mrf.mxu0
        %v1402 = vadd.f32 0.0, %v1401
        %1403 = vmatmul.bf16.gmra.mxu0 %v1304
        %v1404 = vpop.f32.mrf.mxu0
        %v1405 = vadd.f32 0.0, %v1404
        %v1406 = vpop.f32.mrf.mxu0
        %v1407 = vadd.f32 0.0, %v1406
        %1408 = vmatmul.bf16.gmra.mxu0 %v1306
        %v1409 = vpop.f32.mrf.mxu0
        %v1410 = vadd.f32 0.0, %v1409
        %v1411 = vpop.f32.mrf.mxu0
        %v1412 = vadd.f32 0.0, %v1411
        %1413 = vmatmul.bf16.gmra.mxu0 %v1308
        %v1414 = vpop.f32.mrf.mxu0
        %v1415 = vpop.f32.mrf.mxu0
        %1416 = vdwg.mxu0
        %1417 = vmatpush.bf16.msra.mxu0 0
        %1418 = vmatpush.bf16.msra.mxu0 0
        %1419 = vmatpush.bf16.msra.mxu0 0
        %1420 = vmatpush.bf16.msra.mxu0 0
        %1421 = vmatpush.bf16.msra.mxu0 0
        %1422 = vmatpush.bf16.msra.mxu0 0
        %1423 = vmatpush.bf16.msra.mxu0 0
        %1424 = vmatpush.bf16.msra.mxu0 %v1318
        %1425 = vmatmul.bf16.gmra.mxu0 %v1274
        %v1426 = vpop.f32.mrf.mxu0
        %v1427 = vpop.f32.mrf.mxu0
        %1428 = vmatmul.bf16.gmra.mxu0 %v1276
        %v1429 = vpop.f32.mrf.mxu0
        %v1430 = vpop.f32.mrf.mxu0
        %1431 = vmatmul.bf16.gmra.mxu0 %v1278
        %v1432 = vpop.f32.mrf.mxu0
        %v1433 = vadd.f32 0.0, %v1432
        %v1434 = vpop.f32.mrf.mxu0
        %v1435 = vadd.f32 0.0, %v1434
        %1436 = vmatmul.bf16.gmra.mxu0 %v1280
        %v1437 = vpop.f32.mrf.mxu0
        %v1438 = vadd.f32 0.0, %v1437
        %v1439 = vpop.f32.mrf.mxu0
        %v1440 = vadd.f32 0.0, %v1439
        %1441 = vmatmul.bf16.gmra.mxu0 %v1282
        %v1442 = vpop.f32.mrf.mxu0
        %v1443 = vadd.f32 0.0, %v1442
        %v1444 = vpop.f32.mrf.mxu0
        %v1445 = vadd.f32 0.0, %v1444
        %1446 = vmatmul.bf16.gmra.mxu0 %v1284
        %v1447 = vpop.f32.mrf.mxu0
        %v1448 = vadd.f32 0.0, %v1447
        %v1449 = vpop.f32.mrf.mxu0
        %v1450 = vadd.f32 0.0, %v1449
        %1451 = vmatmul.bf16.gmra.mxu0 %v1286
        %v1452 = vpop.f32.mrf.mxu0
        %v1453 = vadd.f32 0.0, %v1452
        %v1454 = vpop.f32.mrf.mxu0
        %v1455 = vadd.f32 0.0, %v1454
        %1456 = vmatmul.bf16.gmra.mxu0 %v1288
        %v1457 = vpop.f32.mrf.mxu0
        %v1458 = vadd.f32 0.0, %v1457
        %v1459 = vpop.f32.mrf.mxu0
        %v1460 = vadd.f32 0.0, %v1459
        %1461 = vmatmul.bf16.gmra.mxu0 %v1290
        %v1462 = vpop.f32.mrf.mxu0
        %v1463 = vadd.f32 0.0, %v1462
        %v1464 = vpop.f32.mrf.mxu0
        %v1465 = vadd.f32 0.0, %v1464
        %1466 = vmatmul.bf16.gmra.mxu0 %v1292
        %v1467 = vpop.f32.mrf.mxu0
        %v1468 = vadd.f32 0.0, %v1467
        %v1469 = vpop.f32.mrf.mxu0
        %v1470 = vadd.f32 0.0, %v1469
        %1471 = vmatmul.bf16.gmra.mxu0 %v1294
        %v1472 = vpop.f32.mrf.mxu0
        %v1473 = vadd.f32 0.0, %v1472
        %v1474 = vpop.f32.mrf.mxu0
        %v1475 = vadd.f32 0.0, %v1474
        %1476 = vmatmul.bf16.gmra.mxu0 %v1296
        %v1477 = vpop.f32.mrf.mxu0
        %v1478 = vadd.f32 0.0, %v1477
        %v1479 = vpop.f32.mrf.mxu0
        %v1480 = vadd.f32 0.0, %v1479
        %1481 = vmatmul.bf16.gmra.mxu0 %v1298
        %v1482 = vpop.f32.mrf.mxu0
        %v1483 = vadd.f32 0.0, %v1482
        %v1484 = vpop.f32.mrf.mxu0
        %v1485 = vadd.f32 0.0, %v1484
        %1486 = vmatmul.bf16.gmra.mxu0 %v1300
        %v1487 = vpop.f32.mrf.mxu0
        %v1488 = vadd.f32 0.0, %v1487
        %v1489 = vpop.f32.mrf.mxu0
        %v1490 = vadd.f32 0.0, %v1489
        %1491 = vmatmul.bf16.gmra.mxu0 %v1302
        %v1492 = vpop.f32.mrf.mxu0
        %v1493 = vadd.f32 0.0, %v1492
        %v1494 = vpop.f32.mrf.mxu0
        %v1495 = vadd.f32 0.0, %v1494
        %1496 = vmatmul.bf16.gmra.mxu0 %v1304
        %v1497 = vpop.f32.mrf.mxu0
        %v1498 = vadd.f32 0.0, %v1497
        %v1499 = vpop.f32.mrf.mxu0
        %v1500 = vadd.f32 0.0, %v1499
        %1501 = vmatmul.bf16.gmra.mxu0 %v1306
        %v1502 = vpop.f32.mrf.mxu0
        %v1503 = vadd.f32 0.0, %v1502
        %v1504 = vpop.f32.mrf.mxu0
        %v1505 = vadd.f32 0.0, %v1504
        %1506 = vmatmul.bf16.gmra.mxu0 %v1308
        %v1507 = vpop.f32.mrf.mxu0
        %v1508 = vadd.f32 0.0, %v1507
        %v1509 = vpop.f32.mrf.mxu0
        %v1510 = vadd.f32 0.0, %v1509
        %1511 = vdwg.mxu0
        %1544 = vrot.lane.b32.xlu0 %v1335, 64
        %v1545 = vpop.permute.xlu0 %1544
        %1546 = vrot.lane.b32.xlu0 %v1337, 64
        %v1547 = vpop.permute.xlu0 %1546
        %1548 = vrot.lane.b32.xlu0 %v1340, 64
        %v1549 = vpop.permute.xlu0 %1548
        %1550 = vrot.lane.b32.xlu0 %v1342, 64
        %v1551 = vpop.permute.xlu0 %1550
        %1552 = vrot.lane.b32.xlu0 %v1345, 64
        %v1553 = vpop.permute.xlu0 %1552
        %1554 = vrot.lane.b32.xlu0 %v1347, 64
        %v1555 = vpop.permute.xlu0 %1554
        %1556 = vrot.lane.b32.xlu0 %v1350, 64
        %v1557 = vpop.permute.xlu0 %1556
        %1558 = vrot.lane.b32.xlu0 %v1352, 64
        %v1559 = vpop.permute.xlu0 %1558
        %1560 = vrot.lane.b32.xlu0 %v1355, 64
        %v1561 = vpop.permute.xlu0 %1560
        %1562 = vrot.lane.b32.xlu0 %v1357, 64
        %v1563 = vpop.permute.xlu0 %1562
        %1564 = vrot.lane.b32.xlu0 %v1360, 64
        %v1565 = vpop.permute.xlu0 %1564
        %1566 = vrot.lane.b32.xlu0 %v1362, 64
        %v1567 = vpop.permute.xlu0 %1566
        %1568 = vrot.lane.b32.xlu0 %v1365, 64
        %v1569 = vpop.permute.xlu0 %1568
        %1570 = vrot.lane.b32.xlu0 %v1367, 64
        %v1571 = vpop.permute.xlu0 %1570
        %1572 = vrot.lane.b32.xlu0 %v1370, 64
        %v1573 = vpop.permute.xlu0 %1572
        %1574 = vrot.lane.b32.xlu0 %v1372, 64
        %v1575 = vpop.permute.xlu0 %1574
        %1576 = vrot.lane.b32.xlu0 %v1375, 64
        %v1577 = vpop.permute.xlu0 %1576
        %1578 = vrot.lane.b32.xlu0 %v1377, 64
        %v1579 = vpop.permute.xlu0 %1578
        %1580 = vrot.lane.b32.xlu0 %v1380, 64
        %v1581 = vpop.permute.xlu0 %1580
        %1582 = vrot.lane.b32.xlu0 %v1382, 64
        %v1583 = vpop.permute.xlu0 %1582
        %1584 = vrot.lane.b32.xlu0 %v1385, 64
        %v1585 = vpop.permute.xlu0 %1584
        %1586 = vrot.lane.b32.xlu0 %v1387, 64
        %v1587 = vpop.permute.xlu0 %1586
        %1588 = vrot.lane.b32.xlu0 %v1390, 64
        %v1589 = vpop.permute.xlu0 %1588
        %1590 = vrot.lane.b32.xlu0 %v1392, 64
        %v1591 = vpop.permute.xlu0 %1590
        %1592 = vrot.lane.b32.xlu0 %v1395, 64
        %v1593 = vpop.permute.xlu0 %1592
        %1594 = vrot.lane.b32.xlu0 %v1397, 64
        %v1595 = vpop.permute.xlu0 %1594
        %1596 = vrot.lane.b32.xlu0 %v1400, 64
        %v1597 = vpop.permute.xlu0 %1596
        %1598 = vrot.lane.b32.xlu0 %v1402, 64
        %v1599 = vpop.permute.xlu0 %1598
        %1600 = vrot.lane.b32.xlu0 %v1405, 64
        %v1601 = vpop.permute.xlu0 %1600
        %1602 = vrot.lane.b32.xlu0 %v1407, 64
        %v1603 = vpop.permute.xlu0 %1602
        %1604 = vrot.lane.b32.xlu0 %v1410, 64
        %v1605 = vpop.permute.xlu0 %1604
        %1606 = vrot.lane.b32.xlu0 %v1412, 64
        %v1607 = vpop.permute.xlu0 %1606
        %v1640 = vadd.f32 %v1330, %v1545
        %v1641 = vadd.f32 %v1332, %v1547
        %v1642 = vadd.f32 %v1335, %v1549
        %v1643 = vadd.f32 %v1337, %v1551
        %v1644 = vadd.f32 %v1340, %v1553
        %v1645 = vadd.f32 %v1342, %v1555
        %v1646 = vadd.f32 %v1345, %v1557
        %v1647 = vadd.f32 %v1347, %v1559
        %v1648 = vadd.f32 %v1350, %v1561
        %v1649 = vadd.f32 %v1352, %v1563
        %v1650 = vadd.f32 %v1355, %v1565
        %v1651 = vadd.f32 %v1357, %v1567
        %v1652 = vadd.f32 %v1360, %v1569
        %v1653 = vadd.f32 %v1362, %v1571
        %v1654 = vadd.f32 %v1365, %v1573
        %v1655 = vadd.f32 %v1367, %v1575
        %v1656 = vadd.f32 %v1370, %v1577
        %v1657 = vadd.f32 %v1372, %v1579
        %v1658 = vadd.f32 %v1375, %v1581
        %v1659 = vadd.f32 %v1377, %v1583
        %v1660 = vadd.f32 %v1380, %v1585
        %v1661 = vadd.f32 %v1382, %v1587
        %v1662 = vadd.f32 %v1385, %v1589
        %v1663 = vadd.f32 %v1387, %v1591
        %v1664 = vadd.f32 %v1390, %v1593
        %v1665 = vadd.f32 %v1392, %v1595
        %v1666 = vadd.f32 %v1395, %v1597
        %v1667 = vadd.f32 %v1397, %v1599
        %v1668 = vadd.f32 %v1400, %v1601
        %v1669 = vadd.f32 %v1402, %v1603
        %v1670 = vadd.f32 %v1405, %v1605
        %v1671 = vadd.f32 %v1407, %v1607
        %v1672 = vadd.f32 %v1640, %v1433
        %v1673 = vadd.f32 %v1641, %v1435
        %v1674 = vadd.f32 %v1642, %v1438
        %v1675 = vadd.f32 %v1643, %v1440
        %v1676 = vadd.f32 %v1644, %v1443
        %v1677 = vadd.f32 %v1645, %v1445
        %v1678 = vadd.f32 %v1646, %v1448
        %v1679 = vadd.f32 %v1647, %v1450
        %v1680 = vadd.f32 %v1648, %v1453
        %v1681 = vadd.f32 %v1649, %v1455
        %v1682 = vadd.f32 %v1650, %v1458
        %v1683 = vadd.f32 %v1651, %v1460
        %v1684 = vadd.f32 %v1652, %v1463
        %v1685 = vadd.f32 %v1653, %v1465
        %v1686 = vadd.f32 %v1654, %v1468
        %v1687 = vadd.f32 %v1655, %v1470
        %v1688 = vadd.f32 %v1656, %v1473
        %v1689 = vadd.f32 %v1657, %v1475
        %v1690 = vadd.f32 %v1658, %v1478
        %v1691 = vadd.f32 %v1659, %v1480
        %v1692 = vadd.f32 %v1660, %v1483
        %v1693 = vadd.f32 %v1661, %v1485
        %v1694 = vadd.f32 %v1662, %v1488
        %v1695 = vadd.f32 %v1663, %v1490
        %v1696 = vadd.f32 %v1664, %v1493
        %v1697 = vadd.f32 %v1665, %v1495
        %v1698 = vadd.f32 %v1666, %v1498
        %v1699 = vadd.f32 %v1667, %v1500
        %v1700 = vadd.f32 %v1668, %v1503
        %v1701 = vadd.f32 %v1669, %v1505
        %v1702 = vadd.f32 %v1670, %v1508
        %v1703 = vadd.f32 %v1671, %v1510
        %v1705 = vperm.slane %v614, 0
        %v1707 = vadd.f32 %v1672, %v1705
        %v1708 = vadd.f32 %v1673, %v1705
        %v1709 = vadd.f32 %v1674, %v1705
        %v1710 = vadd.f32 %v1675, %v1705
        %v1711 = vadd.f32 %v1676, %v1705
        %v1712 = vadd.f32 %v1677, %v1705
        %v1713 = vadd.f32 %v1678, %v1705
        %v1714 = vadd.f32 %v1679, %v1705
        %v1715 = vadd.f32 %v1680, %v1705
        %v1716 = vadd.f32 %v1681, %v1705
        %v1717 = vadd.f32 %v1682, %v1705
        %v1718 = vadd.f32 %v1683, %v1705
        %v1719 = vadd.f32 %v1684, %v1705
        %v1720 = vadd.f32 %v1685, %v1705
        %v1721 = vadd.f32 %v1686, %v1705
        %v1722 = vadd.f32 %v1687, %v1705
        %v1723 = vadd.f32 %v1688, %v1705
        %v1724 = vadd.f32 %v1689, %v1705
        %v1725 = vadd.f32 %v1690, %v1705
        %v1726 = vadd.f32 %v1691, %v1705
        %v1727 = vadd.f32 %v1692, %v1705
        %v1728 = vadd.f32 %v1693, %v1705
        %v1729 = vadd.f32 %v1694, %v1705
        %v1730 = vadd.f32 %v1695, %v1705
        %v1731 = vadd.f32 %v1696, %v1705
        %v1732 = vadd.f32 %v1697, %v1705
        %v1733 = vadd.f32 %v1698, %v1705
        %v1734 = vadd.f32 %v1699, %v1705
        %v1735 = vadd.f32 %v1700, %v1705
        %v1736 = vadd.f32 %v1701, %v1705
        %v1737 = vadd.f32 %v1702, %v1705
        %v1738 = vadd.f32 %v1703, %v1705
        %v1739 = vmax.f32 %v1707, 0.0
        %v1740 = vmax.f32 %v1708, 0.0
        %v1741 = vmax.f32 %v1709, 0.0
        %v1742 = vmax.f32 %v1710, 0.0
        %v1743 = vmax.f32 %v1711, 0.0
        %v1744 = vmax.f32 %v1712, 0.0
        %v1745 = vmax.f32 %v1713, 0.0
        %v1746 = vmax.f32 %v1714, 0.0
        %v1747 = vmax.f32 %v1715, 0.0
        %v1748 = vmax.f32 %v1716, 0.0
        %v1749 = vmax.f32 %v1717, 0.0
        %v1750 = vmax.f32 %v1718, 0.0
        %v1751 = vmax.f32 %v1719, 0.0
        %v1752 = vmax.f32 %v1720, 0.0
        %v1753 = vmax.f32 %v1721, 0.0
        %v1754 = vmax.f32 %v1722, 0.0
        %v1755 = vmax.f32 %v1723, 0.0
        %v1756 = vmax.f32 %v1724, 0.0
        %v1757 = vmax.f32 %v1725, 0.0
        %v1758 = vmax.f32 %v1726, 0.0
        %v1759 = vmax.f32 %v1727, 0.0
        %v1760 = vmax.f32 %v1728, 0.0
        %v1761 = vmax.f32 %v1729, 0.0
        %v1762 = vmax.f32 %v1730, 0.0
        %v1763 = vmax.f32 %v1731, 0.0
        %v1764 = vmax.f32 %v1732, 0.0
        %v1765 = vmax.f32 %v1733, 0.0
        %v1766 = vmax.f32 %v1734, 0.0
        %v1767 = vmax.f32 %v1735, 0.0
        %v1768 = vmax.f32 %v1736, 0.0
        %v1769 = vmax.f32 %v1737, 0.0
        %v1770 = vmax.f32 %v1738, 0.0
        %v1771 = vpack.c.bf16 %v1739, %v1739
        %v1772 = vpack.c.bf16 %v1740, %v1740
        %v1773 = vpack.c.bf16 %v1741, %v1741
        %v1774 = vpack.c.bf16 %v1742, %v1742
        %v1775 = vpack.c.bf16 %v1743, %v1743
        %v1776 = vpack.c.bf16 %v1744, %v1744
        %v1777 = vpack.c.bf16 %v1745, %v1745
        %v1778 = vpack.c.bf16 %v1746, %v1746
        %v1779 = vpack.c.bf16 %v1747, %v1747
        %v1780 = vpack.c.bf16 %v1748, %v1748
        %v1781 = vpack.c.bf16 %v1749, %v1749
        %v1782 = vpack.c.bf16 %v1750, %v1750
        %v1783 = vpack.c.bf16 %v1751, %v1751
        %v1784 = vpack.c.bf16 %v1752, %v1752
        %v1785 = vpack.c.bf16 %v1753, %v1753
        %v1786 = vpack.c.bf16 %v1754, %v1754
        %v1787 = vpack.c.bf16 %v1755, %v1755
        %v1788 = vpack.c.bf16 %v1756, %v1756
        %v1789 = vpack.c.bf16 %v1757, %v1757
        %v1790 = vpack.c.bf16 %v1758, %v1758
        %v1791 = vpack.c.bf16 %v1759, %v1759
        %v1792 = vpack.c.bf16 %v1760, %v1760
        %v1793 = vpack.c.bf16 %v1761, %v1761
        %v1794 = vpack.c.bf16 %v1762, %v1762
        %v1795 = vpack.c.bf16 %v1763, %v1763
        %v1796 = vpack.c.bf16 %v1764, %v1764
        %v1797 = vpack.c.bf16 %v1765, %v1765
        %v1798 = vpack.c.bf16 %v1766, %v1766
        %v1799 = vpack.c.bf16 %v1767, %v1767
        %v1800 = vpack.c.bf16 %v1768, %v1768
        %v1801 = vpack.c.bf16 %v1769, %v1769
        %v1802 = vpack.c.bf16 %v1770, %v1770
        %vm1803 = vsmask.f32 4368
        %vm1804 = vmor %vm392, %vm1803
        %v1806 = vshrl.u32 %v1771, 16
        %v1808 = vrot.slane %v1806, 7
        %v1809 = vshll.u32 %v1771, 16
        %v1811 = vor.u32 %v1808, %v1809
        %v1812 = vrot.slane %v1808, 4
        %v1814 = vshrl.u32 %v1772, 16
        %v1816 = vrot.slane %v1814, 7
        %v1817 = vshll.u32 %v1772, 16
        %v1819 = vor.u32 %v1816, %v1817
        %v1820 = vsel %vm1804, %v1812, %v1819
        %v1821 = vrot.slane %v1816, 4
        %v1823 = vshrl.u32 %v1773, 16
        %v1825 = vrot.slane %v1823, 7
        %v1826 = vshll.u32 %v1773, 16
        %v1828 = vor.u32 %v1825, %v1826
        %v1829 = vrot.slane %v1825, 4
        %v1831 = vshrl.u32 %v1774, 16
        %v1833 = vrot.slane %v1831, 7
        %v1834 = vshll.u32 %v1774, 16
        %v1836 = vor.u32 %v1833, %v1834
        %v1837 = vsel %vm1804, %v1829, %v1836
        %v1838 = vrot.slane %v1833, 4
        %v1840 = vshrl.u32 %v1775, 16
        %v1842 = vrot.slane %v1840, 7
        %v1843 = vshll.u32 %v1775, 16
        %v1845 = vor.u32 %v1842, %v1843
        %v1846 = vrot.slane %v1842, 4
        %v1848 = vshrl.u32 %v1776, 16
        %v1850 = vrot.slane %v1848, 7
        %v1851 = vshll.u32 %v1776, 16
        %v1853 = vor.u32 %v1850, %v1851
        %v1854 = vsel %vm1804, %v1846, %v1853
        %v1855 = vrot.slane %v1850, 4
        %v1857 = vshrl.u32 %v1777, 16
        %v1859 = vrot.slane %v1857, 7
        %v1860 = vshll.u32 %v1777, 16
        %v1862 = vor.u32 %v1859, %v1860
        %v1863 = vrot.slane %v1859, 4
        %v1865 = vshrl.u32 %v1778, 16
        %v1867 = vrot.slane %v1865, 7
        %v1868 = vshll.u32 %v1778, 16
        %v1870 = vor.u32 %v1867, %v1868
        %v1871 = vsel %vm1804, %v1863, %v1870
        %v1872 = vrot.slane %v1867, 4
        %v1874 = vshrl.u32 %v1779, 16
        %v1876 = vrot.slane %v1874, 7
        %v1877 = vshll.u32 %v1779, 16
        %v1879 = vor.u32 %v1876, %v1877
        %v1880 = vrot.slane %v1876, 4
        %v1882 = vshrl.u32 %v1780, 16
        %v1884 = vrot.slane %v1882, 7
        %v1885 = vshll.u32 %v1780, 16
        %v1887 = vor.u32 %v1884, %v1885
        %v1888 = vsel %vm1804, %v1880, %v1887
        %v1889 = vrot.slane %v1884, 4
        %v1891 = vshrl.u32 %v1781, 16
        %v1893 = vrot.slane %v1891, 7
        %v1894 = vshll.u32 %v1781, 16
        %v1896 = vor.u32 %v1893, %v1894
        %v1897 = vrot.slane %v1893, 4
        %v1899 = vshrl.u32 %v1782, 16
        %v1901 = vrot.slane %v1899, 7
        %v1902 = vshll.u32 %v1782, 16
        %v1904 = vor.u32 %v1901, %v1902
        %v1905 = vsel %vm1804, %v1897, %v1904
        %v1906 = vrot.slane %v1901, 4
        %v1908 = vshrl.u32 %v1783, 16
        %v1910 = vrot.slane %v1908, 7
        %v1911 = vshll.u32 %v1783, 16
        %v1913 = vor.u32 %v1910, %v1911
        %v1914 = vrot.slane %v1910, 4
        %v1916 = vshrl.u32 %v1784, 16
        %v1918 = vrot.slane %v1916, 7
        %v1919 = vshll.u32 %v1784, 16
        %v1921 = vor.u32 %v1918, %v1919
        %v1922 = vsel %vm1804, %v1914, %v1921
        %v1923 = vrot.slane %v1918, 4
        %v1925 = vshrl.u32 %v1785, 16
        %v1927 = vrot.slane %v1925, 7
        %v1928 = vshll.u32 %v1785, 16
        %v1930 = vor.u32 %v1927, %v1928
        %v1931 = vrot.slane %v1927, 4
        %v1933 = vshrl.u32 %v1786, 16
        %v1935 = vrot.slane %v1933, 7
        %v1936 = vshll.u32 %v1786, 16
        %v1938 = vor.u32 %v1935, %v1936
        %v1939 = vsel %vm1804, %v1931, %v1938
        %v1940 = vrot.slane %v1935, 4
        %v1942 = vshrl.u32 %v1787, 16
        %v1944 = vrot.slane %v1942, 7
        %v1945 = vshll.u32 %v1787, 16
        %v1947 = vor.u32 %v1944, %v1945
        %v1948 = vrot.slane %v1944, 4
        %v1950 = vshrl.u32 %v1788, 16
        %v1952 = vrot.slane %v1950, 7
        %v1953 = vshll.u32 %v1788, 16
        %v1955 = vor.u32 %v1952, %v1953
        %v1956 = vsel %vm1804, %v1948, %v1955
        %v1957 = vrot.slane %v1952, 4
        %v1959 = vshrl.u32 %v1789, 16
        %v1961 = vrot.slane %v1959, 7
        %v1962 = vshll.u32 %v1789, 16
        %v1964 = vor.u32 %v1961, %v1962
        %v1965 = vrot.slane %v1961, 4
        %v1967 = vshrl.u32 %v1790, 16
        %v1969 = vrot.slane %v1967, 7
        %v1970 = vshll.u32 %v1790, 16
        %v1972 = vor.u32 %v1969, %v1970
        %v1973 = vsel %vm1804, %v1965, %v1972
        %v1974 = vrot.slane %v1969, 4
        %v1976 = vshrl.u32 %v1791, 16
        %v1978 = vrot.slane %v1976, 7
        %v1979 = vshll.u32 %v1791, 16
        %v1981 = vor.u32 %v1978, %v1979
        %v1982 = vrot.slane %v1978, 4
        %v1984 = vshrl.u32 %v1792, 16
        %v1986 = vrot.slane %v1984, 7
        %v1987 = vshll.u32 %v1792, 16
        %v1989 = vor.u32 %v1986, %v1987
        %v1990 = vsel %vm1804, %v1982, %v1989
        %v1991 = vrot.slane %v1986, 4
        %v1993 = vshrl.u32 %v1793, 16
        %v1995 = vrot.slane %v1993, 7
        %v1996 = vshll.u32 %v1793, 16
        %v1998 = vor.u32 %v1995, %v1996
        %v1999 = vrot.slane %v1995, 4
        %v2001 = vshrl.u32 %v1794, 16
        %v2003 = vrot.slane %v2001, 7
        %v2004 = vshll.u32 %v1794, 16
        %v2006 = vor.u32 %v2003, %v2004
        %v2007 = vsel %vm1804, %v1999, %v2006
        %v2008 = vrot.slane %v2003, 4
        %v2010 = vshrl.u32 %v1795, 16
        %v2012 = vrot.slane %v2010, 7
        %v2013 = vshll.u32 %v1795, 16
        %v2015 = vor.u32 %v2012, %v2013
        %v2016 = vrot.slane %v2012, 4
        %v2018 = vshrl.u32 %v1796, 16
        %v2020 = vrot.slane %v2018, 7
        %v2021 = vshll.u32 %v1796, 16
        %v2023 = vor.u32 %v2020, %v2021
        %v2024 = vsel %vm1804, %v2016, %v2023
        %v2025 = vrot.slane %v2020, 4
        %v2027 = vshrl.u32 %v1797, 16
        %v2029 = vrot.slane %v2027, 7
        %v2030 = vshll.u32 %v1797, 16
        %v2032 = vor.u32 %v2029, %v2030
        %v2033 = vrot.slane %v2029, 4
        %v2035 = vshrl.u32 %v1798, 16
        %v2037 = vrot.slane %v2035, 7
        %v2038 = vshll.u32 %v1798, 16
        %v2040 = vor.u32 %v2037, %v2038
        %v2041 = vsel %vm1804, %v2033, %v2040
        %v2042 = vrot.slane %v2037, 4
        %v2044 = vshrl.u32 %v1799, 16
        %v2046 = vrot.slane %v2044, 7
        %v2047 = vshll.u32 %v1799, 16
        %v2049 = vor.u32 %v2046, %v2047
        %v2050 = vrot.slane %v2046, 4
        %v2052 = vshrl.u32 %v1800, 16
        %v2054 = vrot.slane %v2052, 7
        %v2055 = vshll.u32 %v1800, 16
        %v2057 = vor.u32 %v2054, %v2055
        %v2058 = vsel %vm1804, %v2050, %v2057
        %v2059 = vrot.slane %v2054, 4
        %v2061 = vshrl.u32 %v1801, 16
        %v2063 = vrot.slane %v2061, 7
        %v2064 = vshll.u32 %v1801, 16
        %v2066 = vor.u32 %v2063, %v2064
        %v2067 = vrot.slane %v2063, 4
        %v2069 = vshrl.u32 %v1802, 16
        %v2071 = vrot.slane %v2069, 7
        %v2072 = vshll.u32 %v1802, 16
        %v2074 = vor.u32 %v2071, %v2072
        %v2075 = vsel %vm1804, %v2067, %v2074
        %v2076 = vrot.slane %v2071, 4
        %s2125 = scalar_lea.vmem [#allocation2], 12
        %vm2126 = vcmask 519168
        %vm2127 = vmand %vm2126, %vm502
        %v2128 = vld [vmem:[%s2125] sm:$0xf]
        %v2129 = vsel %vm2127, %v1811, %v2128
        %2130 = vst [vmem:[%s2125] sm:$0xf] %v2129
        %2131 = vst.msk [vmem:[%s2125 + $0x4] sm:$0xf] %vm376, %v1820
        %v2132 = vld [vmem:[%s2125 + $0x8] sm:$0x1]
        %v2133 = vsel %vm393, %v1821, %v2132
        %2134 = vst [vmem:[%s2125 + $0x8] sm:$0x1] %v2133
        %v2135 = vld [vmem:[%s2125 + $0xc] sm:$0xf]
        %v2136 = vsel %vm2127, %v1828, %v2135
        %2137 = vst [vmem:[%s2125 + $0xc] sm:$0xf] %v2136
        %2138 = vst.msk [vmem:[%s2125 + $0x10] sm:$0xf] %vm376, %v1837
        %v2139 = vld [vmem:[%s2125 + $0x14] sm:$0x1]
        %v2140 = vsel %vm393, %v1838, %v2139
        %2141 = vst [vmem:[%s2125 + $0x14] sm:$0x1] %v2140
        %v2142 = vld [vmem:[%s2125 + $0x18] sm:$0xf]
        %v2143 = vsel %vm2127, %v1845, %v2142
        %2144 = vst [vmem:[%s2125 + $0x18] sm:$0xf] %v2143
        %2145 = vst.msk [vmem:[%s2125 + $0x1c] sm:$0xf] %vm376, %v1854
        %v2146 = vld [vmem:[%s2125 + $0x20] sm:$0x1]
        %v2147 = vsel %vm393, %v1855, %v2146
        %2148 = vst [vmem:[%s2125 + $0x20] sm:$0x1] %v2147
        %v2149 = vld [vmem:[%s2125 + $0x24] sm:$0xf]
        %v2150 = vsel %vm2127, %v1862, %v2149
        %2151 = vst [vmem:[%s2125 + $0x24] sm:$0xf] %v2150
        %2152 = vst.msk [vmem:[%s2125 + $0x28] sm:$0xf] %vm376, %v1871
        %v2153 = vld [vmem:[%s2125 + $0x2c] sm:$0x1]
        %v2154 = vsel %vm393, %v1872, %v2153
        %2155 = vst [vmem:[%s2125 + $0x2c] sm:$0x1] %v2154
        %v2156 = vld [vmem:[%s2125 + $0x30] sm:$0xf]
        %v2157 = vsel %vm2127, %v1879, %v2156
        %2158 = vst [vmem:[%s2125 + $0x30] sm:$0xf] %v2157
        %2159 = vst.msk [vmem:[%s2125 + $0x34] sm:$0xf] %vm376, %v1888
        %v2160 = vld [vmem:[%s2125 + $0x38] sm:$0x1]
        %v2161 = vsel %vm393, %v1889, %v2160
        %2162 = vst [vmem:[%s2125 + $0x38] sm:$0x1] %v2161
        %v2163 = vld [vmem:[%s2125 + $0x3c] sm:$0xf]
        %v2164 = vsel %vm2127, %v1896, %v2163
        %2165 = vst [vmem:[%s2125 + $0x3c] sm:$0xf] %v2164
        %2166 = vst.msk [vmem:[%s2125 + $0x40] sm:$0xf] %vm376, %v1905
        %v2167 = vld [vmem:[%s2125 + $0x44] sm:$0x1]
        %v2168 = vsel %vm393, %v1906, %v2167
        %2169 = vst [vmem:[%s2125 + $0x44] sm:$0x1] %v2168
        %v2170 = vld [vmem:[%s2125 + $0x48] sm:$0xf]
        %v2171 = vsel %vm2127, %v1913, %v2170
        %2172 = vst [vmem:[%s2125 + $0x48] sm:$0xf] %v2171
        %2173 = vst.msk [vmem:[%s2125 + $0x4c] sm:$0xf] %vm376, %v1922
        %v2174 = vld [vmem:[%s2125 + $0x50] sm:$0x1]
        %v2175 = vsel %vm393, %v1923, %v2174
        %2176 = vst [vmem:[%s2125 + $0x50] sm:$0x1] %v2175
        %v2177 = vld [vmem:[%s2125 + $0x54] sm:$0xf]
        %v2178 = vsel %vm2127, %v1930, %v2177
        %2179 = vst [vmem:[%s2125 + $0x54] sm:$0xf] %v2178
        %2180 = vst.msk [vmem:[%s2125 + $0x58] sm:$0xf] %vm376, %v1939
        %v2181 = vld [vmem:[%s2125 + $0x5c] sm:$0x1]
        %v2182 = vsel %vm393, %v1940, %v2181
        %2183 = vst [vmem:[%s2125 + $0x5c] sm:$0x1] %v2182
        %v2184 = vld [vmem:[%s2125 + $0x60] sm:$0xf]
        %v2185 = vsel %vm2127, %v1947, %v2184
        %2186 = vst [vmem:[%s2125 + $0x60] sm:$0xf] %v2185
        %2187 = vst.msk [vmem:[%s2125 + $0x64] sm:$0xf] %vm376, %v1956
        %v2188 = vld [vmem:[%s2125 + $0x68] sm:$0x1]
        %v2189 = vsel %vm393, %v1957, %v2188
        %2190 = vst [vmem:[%s2125 + $0x68] sm:$0x1] %v2189
        %v2191 = vld [vmem:[%s2125 + $0x6c] sm:$0xf]
        %v2192 = vsel %vm2127, %v1964, %v2191
        %2193 = vst [vmem:[%s2125 + $0x6c] sm:$0xf] %v2192
        %2194 = vst.msk [vmem:[%s2125 + $0x70] sm:$0xf] %vm376, %v1973
        %v2195 = vld [vmem:[%s2125 + $0x74] sm:$0x1]
        %v2196 = vsel %vm393, %v1974, %v2195
        %2197 = vst [vmem:[%s2125 + $0x74] sm:$0x1] %v2196
        %v2198 = vld [vmem:[%s2125 + $0x78] sm:$0xf]
        %v2199 = vsel %vm2127, %v1981, %v2198
        %2200 = vst [vmem:[%s2125 + $0x78] sm:$0xf] %v2199
        %2201 = vst.msk [vmem:[%s2125 + $0x7c] sm:$0xf] %vm376, %v1990
        %v2202 = vld [vmem:[%s2125 + $0x80] sm:$0x1]
        %v2203 = vsel %vm393, %v1991, %v2202
        %2204 = vst [vmem:[%s2125 + $0x80] sm:$0x1] %v2203
        %v2205 = vld [vmem:[%s2125 + $0x84] sm:$0xf]
        %v2206 = vsel %vm2127, %v1998, %v2205
        %2207 = vst [vmem:[%s2125 + $0x84] sm:$0xf] %v2206
        %2208 = vst.msk [vmem:[%s2125 + $0x88] sm:$0xf] %vm376, %v2007
        %v2209 = vld [vmem:[%s2125 + $0x8c] sm:$0x1]
        %v2210 = vsel %vm393, %v2008, %v2209
        %2211 = vst [vmem:[%s2125 + $0x8c] sm:$0x1] %v2210
        %v2212 = vld [vmem:[%s2125 + $0x90] sm:$0xf]
        %v2213 = vsel %vm2127, %v2015, %v2212
        %2214 = vst [vmem:[%s2125 + $0x90] sm:$0xf] %v2213
        %2215 = vst.msk [vmem:[%s2125 + $0x94] sm:$0xf] %vm376, %v2024
        %v2216 = vld [vmem:[%s2125 + $0x98] sm:$0x1]
        %v2217 = vsel %vm393, %v2025, %v2216
        %2218 = vst [vmem:[%s2125 + $0x98] sm:$0x1] %v2217
        %v2219 = vld [vmem:[%s2125 + $0x9c] sm:$0xf]
        %v2220 = vsel %vm2127, %v2032, %v2219
        %2221 = vst [vmem:[%s2125 + $0x9c] sm:$0xf] %v2220
        %2222 = vst.msk [vmem:[%s2125 + $0xa0] sm:$0xf] %vm376, %v2041
        %v2223 = vld [vmem:[%s2125 + $0xa4] sm:$0x1]
        %v2224 = vsel %vm393, %v2042, %v2223
        %2225 = vst [vmem:[%s2125 + $0xa4] sm:$0x1] %v2224
        %v2226 = vld [vmem:[%s2125 + $0xa8] sm:$0xf]
        %v2227 = vsel %vm2127, %v2049, %v2226
        %2228 = vst [vmem:[%s2125 + $0xa8] sm:$0xf] %v2227
        %2229 = vst.msk [vmem:[%s2125 + $0xac] sm:$0xf] %vm376, %v2058
        %v2230 = vld [vmem:[%s2125 + $0xb0] sm:$0x1]
        %v2231 = vsel %vm393, %v2059, %v2230
        %2232 = vst [vmem:[%s2125 + $0xb0] sm:$0x1] %v2231
        %v2233 = vld [vmem:[%s2125 + $0xb4] sm:$0xf]
        %v2234 = vsel %vm2127, %v2066, %v2233
        %2235 = vst [vmem:[%s2125 + $0xb4] sm:$0xf] %v2234
        %2236 = vst.msk [vmem:[%s2125 + $0xb8] sm:$0xf] %vm376, %v2075
        %v2237 = vld [vmem:[%s2125 + $0xbc] sm:$0x1]
        %v2238 = vsel %vm393, %v2076, %v2237
        %2239 = vst [vmem:[%s2125 + $0xbc] sm:$0x1] %v2238
        loop: start=0, step=1, limit=10
        $region73: #{edsr_forward.1} parent=47 // loop_pre_header
          _
        $region74: #{edsr_forward.1} parent=47 // loop_header
          %s2241 = sphi 0, %s2245
          %p2242 = scmp.ge.s32.totalorder %s2241, 10
        $region75: #{edsr_forward.1} parent=47 // loop_header_branch
          %2244 = sbr.rel (%p2242) target = $region79
        $region76: #{edsr_forward.1} parent=47 // loop_body
          %s2246 = smul.u32 %s2241, 2
          %s2247 = smul.u32 %s2246, 48
          %s2248 = smul.addr %s2247, 4
          %s2249 = scalar_lea.vmem [#allocation7], %s2248
          %v2250 = vld [vmem:[%s2249] sm:$0xff]
          %v2251 = vld [vmem:[%s2249 + $0x8] sm:$0xff]
          %v2252 = vld [vmem:[%s2249 + $0x10] sm:$0xff]
          %v2253 = vld [vmem:[%s2249 + $0x18] sm:$0xff]
          %v2254 = vld [vmem:[%s2249 + $0x20] sm:$0xff]
          %v2255 = vld [vmem:[%s2249 + $0x28] sm:$0xff]
          %v2256 = vld [vmem:[%s2249 + $0x30] sm:$0xff]
          %v2257 = vld [vmem:[%s2249 + $0x38] sm:$0xff]
          %v2258 = vld [vmem:[%s2249 + $0x40] sm:$0xff]
          %v2259 = vld [vmem:[%s2249 + $0x48] sm:$0xff]
          %v2260 = vld [vmem:[%s2249 + $0x50] sm:$0xff]
          %v2261 = vld [vmem:[%s2249 + $0x58] sm:$0xff]
          %v2262 = vld [vmem:[%s2249 + $0x60] sm:$0xff]
          %v2263 = vld [vmem:[%s2249 + $0x68] sm:$0xff]
          %v2264 = vld [vmem:[%s2249 + $0x70] sm:$0xff]
          %v2265 = vld [vmem:[%s2249 + $0x78] sm:$0xff]
          %v2266 = vld [vmem:[%s2249 + $0x80] sm:$0xff]
          %v2267 = vld [vmem:[%s2249 + $0x88] sm:$0xff]
          %v2268 = vld [vmem:[%s2249 + $0x90] sm:$0xff]
          %v2269 = vld [vmem:[%s2249 + $0x98] sm:$0xff]
          %v2270 = vld [vmem:[%s2249 + $0xa0] sm:$0xff]
          %v2271 = vld [vmem:[%s2249 + $0xa8] sm:$0xff]
          %v2272 = vld [vmem:[%s2249 + $0xb0] sm:$0xff]
          %v2273 = vld [vmem:[%s2249 + $0xb8] sm:$0xff]
          %s2274 = scalar_lea.vmem [#allocation8], %s2246
          %v2275 = vld [vmem:[%s2274] sm:$0x1]
          %v2276 = vld [vmem:[#allocation2] sm:$0xf]
          %v2277 = vld [vmem:[#allocation2 + $0x4] sm:$0xf]
          %v2278 = vld [vmem:[#allocation2 + $0xc] sm:$0xf]
          %v2279 = vld [vmem:[#allocation2 + $0x10] sm:$0xf]
          %v2280 = vld [vmem:[#allocation2 + $0x18] sm:$0xf]
          %v2281 = vld [vmem:[#allocation2 + $0x1c] sm:$0xf]
          %v2282 = vld [vmem:[#allocation2 + $0x24] sm:$0xf]
          %v2283 = vld [vmem:[#allocation2 + $0x28] sm:$0xf]
          %v2284 = vld [vmem:[#allocation2 + $0x30] sm:$0xf]
          %v2285 = vld [vmem:[#allocation2 + $0x34] sm:$0xf]
          %v2286 = vld [vmem:[#allocation2 + $0x3c] sm:$0xf]
          %v2287 = vld [vmem:[#allocation2 + $0x40] sm:$0xf]
          %v2288 = vld [vmem:[#allocation2 + $0x48] sm:$0xf]
          %v2289 = vld [vmem:[#allocation2 + $0x4c] sm:$0xf]
          %v2290 = vld [vmem:[#allocation2 + $0x54] sm:$0xf]
          %v2291 = vld [vmem:[#allocation2 + $0x58] sm:$0xf]
          %v2292 = vld [vmem:[#allocation2 + $0x60] sm:$0xf]
          %v2293 = vld [vmem:[#allocation2 + $0x64] sm:$0xf]
          %v2294 = vld [vmem:[#allocation2 + $0x6c] sm:$0xf]
          %v2295 = vld [vmem:[#allocation2 + $0x70] sm:$0xf]
          %v2296 = vld [vmem:[#allocation2 + $0x78] sm:$0xf]
          %v2297 = vld [vmem:[#allocation2 + $0x7c] sm:$0xf]
          %v2298 = vld [vmem:[#allocation2 + $0x84] sm:$0xf]
          %v2299 = vld [vmem:[#allocation2 + $0x88] sm:$0xf]
          %v2300 = vld [vmem:[#allocation2 + $0x90] sm:$0xf]
          %v2301 = vld [vmem:[#allocation2 + $0x94] sm:$0xf]
          %v2302 = vld [vmem:[#allocation2 + $0x9c] sm:$0xf]
          %v2303 = vld [vmem:[#allocation2 + $0xa0] sm:$0xf]
          %v2304 = vld [vmem:[#allocation2 + $0xa8] sm:$0xf]
          %v2305 = vld [vmem:[#allocation2 + $0xac] sm:$0xf]
          %v2306 = vld [vmem:[#allocation2 + $0xb4] sm:$0xf]
          %v2307 = vld [vmem:[#allocation2 + $0xb8] sm:$0xf]
          %v2308 = vld [vmem:[#allocation2 + $0xc0] sm:$0xf]
          %v2309 = vld [vmem:[#allocation2 + $0xc4] sm:$0xf]
          %v2310 = vld [vmem:[#allocation2 + $0xcc] sm:$0xf]
          %v2311 = vld [vmem:[#allocation2 + $0xd0] sm:$0xf]
          %v2312 = vld [vmem:[#allocation2 + $0x8] sm:$0x1]
          %v2313 = vld [vmem:[#allocation2 + $0x14] sm:$0x1]
          %v2314 = vld [vmem:[#allocation2 + $0x20] sm:$0x1]
          %v2315 = vld [vmem:[#allocation2 + $0x2c] sm:$0x1]
          %v2316 = vld [vmem:[#allocation2 + $0x38] sm:$0x1]
          %v2317 = vld [vmem:[#allocation2 + $0x44] sm:$0x1]
          %v2318 = vld [vmem:[#allocation2 + $0x50] sm:$0x1]
          %v2319 = vld [vmem:[#allocation2 + $0x5c] sm:$0x1]
          %v2320 = vld [vmem:[#allocation2 + $0x68] sm:$0x1]
          %v2321 = vld [vmem:[#allocation2 + $0x74] sm:$0x1]
          %v2322 = vld [vmem:[#allocation2 + $0x80] sm:$0x1]
          %v2323 = vld [vmem:[#allocation2 + $0x8c] sm:$0x1]
          %v2324 = vld [vmem:[#allocation2 + $0x98] sm:$0x1]
          %v2325 = vld [vmem:[#allocation2 + $0xa4] sm:$0x1]
          %v2326 = vld [vmem:[#allocation2 + $0xb0] sm:$0x1]
          %v2327 = vld [vmem:[#allocation2 + $0xbc] sm:$0x1]
          %v2328 = vld [vmem:[#allocation2 + $0xc8] sm:$0x1]
          %v2329 = vld [vmem:[#allocation2 + $0xd4] sm:$0x1]
          %v2330 = vld [vmem:[#allocation2] sm:$0xe]
          %v2331 = vld [vmem:[#allocation2 + $0xc] sm:$0xe]
          %v2332 = vld [vmem:[#allocation2 + $0x18] sm:$0xe]
          %v2333 = vld [vmem:[#allocation2 + $0x24] sm:$0xe]
          %v2334 = vld [vmem:[#allocation2 + $0x30] sm:$0xe]
          %v2335 = vld [vmem:[#allocation2 + $0x3c] sm:$0xe]
          %v2336 = vld [vmem:[#allocation2 + $0x48] sm:$0xe]
          %v2337 = vld [vmem:[#allocation2 + $0x54] sm:$0xe]
          %v2338 = vld [vmem:[#allocation2 + $0x60] sm:$0xe]
          %v2339 = vld [vmem:[#allocation2 + $0x6c] sm:$0xe]
          %v2340 = vld [vmem:[#allocation2 + $0x78] sm:$0xe]
          %v2341 = vld [vmem:[#allocation2 + $0x84] sm:$0xe]
          %v2342 = vld [vmem:[#allocation2 + $0x90] sm:$0xe]
          %v2343 = vld [vmem:[#allocation2 + $0x9c] sm:$0xe]
          %v2344 = vld [vmem:[#allocation2 + $0xa8] sm:$0xe]
          %v2345 = vld [vmem:[#allocation2 + $0xb4] sm:$0xe]
          %v2346 = vld [vmem:[#allocation2 + $0xc0] sm:$0xe]
          %v2347 = vld [vmem:[#allocation2 + $0xcc] sm:$0xe]
          %v2384 = vunpack.c.l.b16 %v2276
          %v2385 = vunpack.c.l.b16 %v2277
          %v2386 = vunpack.c.l.b16 %v2278
          %v2387 = vunpack.c.l.b16 %v2279
          %v2388 = vunpack.c.l.b16 %v2280
          %v2389 = vunpack.c.l.b16 %v2281
          %v2390 = vunpack.c.l.b16 %v2282
          %v2391 = vunpack.c.l.b16 %v2283
          %v2392 = vunpack.c.l.b16 %v2284
          %v2393 = vunpack.c.l.b16 %v2285
          %v2394 = vunpack.c.l.b16 %v2286
          %v2395 = vunpack.c.l.b16 %v2287
          %v2396 = vunpack.c.l.b16 %v2288
          %v2397 = vunpack.c.l.b16 %v2289
          %v2398 = vunpack.c.l.b16 %v2290
          %v2399 = vunpack.c.l.b16 %v2291
          %v2400 = vunpack.c.l.b16 %v2292
          %v2401 = vunpack.c.l.b16 %v2293
          %v2402 = vunpack.c.l.b16 %v2294
          %v2403 = vunpack.c.l.b16 %v2295
          %v2404 = vunpack.c.l.b16 %v2296
          %v2405 = vunpack.c.l.b16 %v2297
          %v2406 = vunpack.c.l.b16 %v2298
          %v2407 = vunpack.c.l.b16 %v2299
          %v2408 = vunpack.c.l.b16 %v2300
          %v2409 = vunpack.c.l.b16 %v2301
          %v2410 = vunpack.c.l.b16 %v2302
          %v2411 = vunpack.c.l.b16 %v2303
          %v2412 = vunpack.c.l.b16 %v2304
          %v2413 = vunpack.c.l.b16 %v2305
          %v2414 = vunpack.c.l.b16 %v2306
          %v2415 = vunpack.c.l.b16 %v2307
          %v2416 = vunpack.c.l.b16 %v2308
          %v2417 = vunpack.c.l.b16 %v2309
          %v2418 = vunpack.c.l.b16 %v2310
          %v2419 = vunpack.c.l.b16 %v2311
          %v2420 = vpack.c.b16 %v2385, %v2384
          %v2421 = vpack.c.b16 %v2387, %v2386
          %v2422 = vpack.c.b16 %v2389, %v2388
          %v2423 = vpack.c.b16 %v2391, %v2390
          %v2424 = vpack.c.b16 %v2393, %v2392
          %v2425 = vpack.c.b16 %v2395, %v2394
          %v2426 = vpack.c.b16 %v2397, %v2396
          %v2427 = vpack.c.b16 %v2399, %v2398
          %v2428 = vpack.c.b16 %v2401, %v2400
          %v2429 = vpack.c.b16 %v2403, %v2402
          %v2430 = vpack.c.b16 %v2405, %v2404
          %v2431 = vpack.c.b16 %v2407, %v2406
          %v2432 = vpack.c.b16 %v2409, %v2408
          %v2433 = vpack.c.b16 %v2411, %v2410
          %v2434 = vpack.c.b16 %v2413, %v2412
          %v2435 = vpack.c.b16 %v2415, %v2414
          %v2436 = vpack.c.b16 %v2417, %v2416
          %v2437 = vpack.c.b16 %v2419, %v2418
          %v2456 = vunpack.c.l.b16 %v2312
          %v2457 = vunpack.c.l.b16 %v2313
          %v2458 = vunpack.c.l.b16 %v2314
          %v2459 = vunpack.c.l.b16 %v2315
          %v2460 = vunpack.c.l.b16 %v2316
          %v2461 = vunpack.c.l.b16 %v2317
          %v2462 = vunpack.c.l.b16 %v2318
          %v2463 = vunpack.c.l.b16 %v2319
          %v2464 = vunpack.c.l.b16 %v2320
          %v2465 = vunpack.c.l.b16 %v2321
          %v2466 = vunpack.c.l.b16 %v2322
          %v2467 = vunpack.c.l.b16 %v2323
          %v2468 = vunpack.c.l.b16 %v2324
          %v2469 = vunpack.c.l.b16 %v2325
          %v2470 = vunpack.c.l.b16 %v2326
          %v2471 = vunpack.c.l.b16 %v2327
          %v2472 = vunpack.c.l.b16 %v2328
          %v2473 = vunpack.c.l.b16 %v2329
          %v2474 = vpack.c.b16 %v2456, %v2456
          %v2475 = vpack.c.b16 %v2457, %v2457
          %v2476 = vpack.c.b16 %v2458, %v2458
          %v2477 = vpack.c.b16 %v2459, %v2459
          %v2478 = vpack.c.b16 %v2460, %v2460
          %v2479 = vpack.c.b16 %v2461, %v2461
          %v2480 = vpack.c.b16 %v2462, %v2462
          %v2481 = vpack.c.b16 %v2463, %v2463
          %v2482 = vpack.c.b16 %v2464, %v2464
          %v2483 = vpack.c.b16 %v2465, %v2465
          %v2484 = vpack.c.b16 %v2466, %v2466
          %v2485 = vpack.c.b16 %v2467, %v2467
          %v2486 = vpack.c.b16 %v2468, %v2468
          %v2487 = vpack.c.b16 %v2469, %v2469
          %v2488 = vpack.c.b16 %v2470, %v2470
          %v2489 = vpack.c.b16 %v2471, %v2471
          %v2490 = vpack.c.b16 %v2472, %v2472
          %v2491 = vpack.c.b16 %v2473, %v2473
          %vm2492 = vsmask.f32 7424
          %v2494 = vshrl.u32 %v2420, 16
          %v2496 = vshll.u32 %v2420, 16
          %v2498 = vrot.slane %v2496, 1
          %v2499 = vor.u32 %v2494, %v2498
          %v2501 = vshll.u32 %v2474, 16
          %v2503 = vrot.slane %v2501, 1
          %v2504 = vsel %vm2492, %v2499, %v2503
          %v2506 = vshrl.u32 %v2421, 16
          %v2508 = vshll.u32 %v2421, 16
          %v2510 = vrot.slane %v2508, 1
          %v2511 = vor.u32 %v2506, %v2510
          %v2513 = vshll.u32 %v2475, 16
          %v2515 = vrot.slane %v2513, 1
          %v2516 = vsel %vm2492, %v2511, %v2515
          %v2518 = vshrl.u32 %v2422, 16
          %v2520 = vshll.u32 %v2422, 16
          %v2522 = vrot.slane %v2520, 1
          %v2523 = vor.u32 %v2518, %v2522
          %v2525 = vshll.u32 %v2476, 16
          %v2527 = vrot.slane %v2525, 1
          %v2528 = vsel %vm2492, %v2523, %v2527
          %v2530 = vshrl.u32 %v2423, 16
          %v2532 = vshll.u32 %v2423, 16
          %v2534 = vrot.slane %v2532, 1
          %v2535 = vor.u32 %v2530, %v2534
          %v2537 = vshll.u32 %v2477, 16
          %v2539 = vrot.slane %v2537, 1
          %v2540 = vsel %vm2492, %v2535, %v2539
          %v2542 = vshrl.u32 %v2424, 16
          %v2544 = vshll.u32 %v2424, 16
          %v2546 = vrot.slane %v2544, 1
          %v2547 = vor.u32 %v2542, %v2546
          %v2549 = vshll.u32 %v2478, 16
          %v2551 = vrot.slane %v2549, 1
          %v2552 = vsel %vm2492, %v2547, %v2551
          %v2554 = vshrl.u32 %v2425, 16
          %v2556 = vshll.u32 %v2425, 16
          %v2558 = vrot.slane %v2556, 1
          %v2559 = vor.u32 %v2554, %v2558
          %v2561 = vshll.u32 %v2479, 16
          %v2563 = vrot.slane %v2561, 1
          %v2564 = vsel %vm2492, %v2559, %v2563
          %v2566 = vshrl.u32 %v2426, 16
          %v2568 = vshll.u32 %v2426, 16
          %v2570 = vrot.slane %v2568, 1
          %v2571 = vor.u32 %v2566, %v2570
          %v2573 = vshll.u32 %v2480, 16
          %v2575 = vrot.slane %v2573, 1
          %v2576 = vsel %vm2492, %v2571, %v2575
          %v2578 = vshrl.u32 %v2427, 16
          %v2580 = vshll.u32 %v2427, 16
          %v2582 = vrot.slane %v2580, 1
          %v2583 = vor.u32 %v2578, %v2582
          %v2585 = vshll.u32 %v2481, 16
          %v2587 = vrot.slane %v2585, 1
          %v2588 = vsel %vm2492, %v2583, %v2587
          %v2590 = vshrl.u32 %v2428, 16
          %v2592 = vshll.u32 %v2428, 16
          %v2594 = vrot.slane %v2592, 1
          %v2595 = vor.u32 %v2590, %v2594
          %v2597 = vshll.u32 %v2482, 16
          %v2599 = vrot.slane %v2597, 1
          %v2600 = vsel %vm2492, %v2595, %v2599
          %v2602 = vshrl.u32 %v2429, 16
          %v2604 = vshll.u32 %v2429, 16
          %v2606 = vrot.slane %v2604, 1
          %v2607 = vor.u32 %v2602, %v2606
          %v2609 = vshll.u32 %v2483, 16
          %v2611 = vrot.slane %v2609, 1
          %v2612 = vsel %vm2492, %v2607, %v2611
          %v2614 = vshrl.u32 %v2430, 16
          %v2616 = vshll.u32 %v2430, 16
          %v2618 = vrot.slane %v2616, 1
          %v2619 = vor.u32 %v2614, %v2618
          %v2621 = vshll.u32 %v2484, 16
          %v2623 = vrot.slane %v2621, 1
          %v2624 = vsel %vm2492, %v2619, %v2623
          %v2626 = vshrl.u32 %v2431, 16
          %v2628 = vshll.u32 %v2431, 16
          %v2630 = vrot.slane %v2628, 1
          %v2631 = vor.u32 %v2626, %v2630
          %v2633 = vshll.u32 %v2485, 16
          %v2635 = vrot.slane %v2633, 1
          %v2636 = vsel %vm2492, %v2631, %v2635
          %v2638 = vshrl.u32 %v2432, 16
          %v2640 = vshll.u32 %v2432, 16
          %v2642 = vrot.slane %v2640, 1
          %v2643 = vor.u32 %v2638, %v2642
          %v2645 = vshll.u32 %v2486, 16
          %v2647 = vrot.slane %v2645, 1
          %v2648 = vsel %vm2492, %v2643, %v2647
          %v2650 = vshrl.u32 %v2433, 16
          %v2652 = vshll.u32 %v2433, 16
          %v2654 = vrot.slane %v2652, 1
          %v2655 = vor.u32 %v2650, %v2654
          %v2657 = vshll.u32 %v2487, 16
          %v2659 = vrot.slane %v2657, 1
          %v2660 = vsel %vm2492, %v2655, %v2659
          %v2662 = vshrl.u32 %v2434, 16
          %v2664 = vshll.u32 %v2434, 16
          %v2666 = vrot.slane %v2664, 1
          %v2667 = vor.u32 %v2662, %v2666
          %v2669 = vshll.u32 %v2488, 16
          %v2671 = vrot.slane %v2669, 1
          %v2672 = vsel %vm2492, %v2667, %v2671
          %v2674 = vshrl.u32 %v2435, 16
          %v2676 = vshll.u32 %v2435, 16
          %v2678 = vrot.slane %v2676, 1
          %v2679 = vor.u32 %v2674, %v2678
          %v2681 = vshll.u32 %v2489, 16
          %v2683 = vrot.slane %v2681, 1
          %v2684 = vsel %vm2492, %v2679, %v2683
          %v2686 = vshrl.u32 %v2436, 16
          %v2688 = vshll.u32 %v2436, 16
          %v2690 = vrot.slane %v2688, 1
          %v2691 = vor.u32 %v2686, %v2690
          %v2693 = vshll.u32 %v2490, 16
          %v2695 = vrot.slane %v2693, 1
          %v2696 = vsel %vm2492, %v2691, %v2695
          %v2698 = vshrl.u32 %v2437, 16
          %v2700 = vshll.u32 %v2437, 16
          %v2702 = vrot.slane %v2700, 1
          %v2703 = vor.u32 %v2698, %v2702
          %v2705 = vshll.u32 %v2491, 16
          %v2707 = vrot.slane %v2705, 1
          %v2708 = vsel %vm2492, %v2703, %v2707
          %2709 = vrot.lane.b32.xlu0 %v2504, 64
          %v2710 = vpop.permute.xlu0 %2709
          %2711 = vrot.lane.b32.xlu0 %v2516, 64
          %v2712 = vpop.permute.xlu0 %2711
          %2713 = vrot.lane.b32.xlu0 %v2528, 64
          %v2714 = vpop.permute.xlu0 %2713
          %2715 = vrot.lane.b32.xlu0 %v2540, 64
          %v2716 = vpop.permute.xlu0 %2715
          %2717 = vrot.lane.b32.xlu0 %v2552, 64
          %v2718 = vpop.permute.xlu0 %2717
          %2719 = vrot.lane.b32.xlu0 %v2564, 64
          %v2720 = vpop.permute.xlu0 %2719
          %2721 = vrot.lane.b32.xlu0 %v2576, 64
          %v2722 = vpop.permute.xlu0 %2721
          %2723 = vrot.lane.b32.xlu0 %v2588, 64
          %v2724 = vpop.permute.xlu0 %2723
          %2725 = vrot.lane.b32.xlu0 %v2600, 64
          %v2726 = vpop.permute.xlu0 %2725
          %2727 = vrot.lane.b32.xlu0 %v2612, 64
          %v2728 = vpop.permute.xlu0 %2727
          %2729 = vrot.lane.b32.xlu0 %v2624, 64
          %v2730 = vpop.permute.xlu0 %2729
          %2731 = vrot.lane.b32.xlu0 %v2636, 64
          %v2732 = vpop.permute.xlu0 %2731
          %2733 = vrot.lane.b32.xlu0 %v2648, 64
          %v2734 = vpop.permute.xlu0 %2733
          %2735 = vrot.lane.b32.xlu0 %v2660, 64
          %v2736 = vpop.permute.xlu0 %2735
          %2737 = vrot.lane.b32.xlu0 %v2672, 64
          %v2738 = vpop.permute.xlu0 %2737
          %2739 = vrot.lane.b32.xlu0 %v2684, 64
          %v2740 = vpop.permute.xlu0 %2739
          %2741 = vrot.lane.b32.xlu0 %v2696, 64
          %v2742 = vpop.permute.xlu0 %2741
          %2743 = vrot.lane.b32.xlu0 %v2708, 64
          %v2744 = vpop.permute.xlu0 %2743
          %v2763 = vunpack.c.l.b16 %v2330
          %v2764 = vunpack.c.l.b16 %v2331
          %v2765 = vunpack.c.l.b16 %v2332
          %v2766 = vunpack.c.l.b16 %v2333
          %v2767 = vunpack.c.l.b16 %v2334
          %v2768 = vunpack.c.l.b16 %v2335
          %v2769 = vunpack.c.l.b16 %v2336
          %v2770 = vunpack.c.l.b16 %v2337
          %v2771 = vunpack.c.l.b16 %v2338
          %v2772 = vunpack.c.l.b16 %v2339
          %v2773 = vunpack.c.l.b16 %v2340
          %v2774 = vunpack.c.l.b16 %v2341
          %v2775 = vunpack.c.l.b16 %v2342
          %v2776 = vunpack.c.l.b16 %v2343
          %v2777 = vunpack.c.l.b16 %v2344
          %v2778 = vunpack.c.l.b16 %v2345
          %v2779 = vunpack.c.l.b16 %v2346
          %v2780 = vunpack.c.l.b16 %v2347
          %v2781 = vpack.c.b16 %v2385, %v2763
          %v2782 = vpack.c.b16 %v2387, %v2764
          %v2783 = vpack.c.b16 %v2389, %v2765
          %v2784 = vpack.c.b16 %v2391, %v2766
          %v2785 = vpack.c.b16 %v2393, %v2767
          %v2786 = vpack.c.b16 %v2395, %v2768
          %v2787 = vpack.c.b16 %v2397, %v2769
          %v2788 = vpack.c.b16 %v2399, %v2770
          %v2789 = vpack.c.b16 %v2401, %v2771
          %v2790 = vpack.c.b16 %v2403, %v2772
          %v2791 = vpack.c.b16 %v2405, %v2773
          %v2792 = vpack.c.b16 %v2407, %v2774
          %v2793 = vpack.c.b16 %v2409, %v2775
          %v2794 = vpack.c.b16 %v2411, %v2776
          %v2795 = vpack.c.b16 %v2413, %v2777
          %v2796 = vpack.c.b16 %v2415, %v2778
          %v2797 = vpack.c.b16 %v2417, %v2779
          %v2798 = vpack.c.b16 %v2419, %v2780
          %vm2799 = vcmask 1046528
          %v2800 = vrot.slane %v2781, 1
          %v2801 = vrot.slane %v2474, 1
          %v2802 = vsel %vm2799, %v2800, %v2801
          %v2803 = vrot.slane %v2782, 1
          %v2804 = vrot.slane %v2475, 1
          %v2805 = vsel %vm2799, %v2803, %v2804
          %v2806 = vrot.slane %v2783, 1
          %v2807 = vrot.slane %v2476, 1
          %v2808 = vsel %vm2799, %v2806, %v2807
          %v2809 = vrot.slane %v2784, 1
          %v2810 = vrot.slane %v2477, 1
          %v2811 = vsel %vm2799, %v2809, %v2810
          %v2812 = vrot.slane %v2785, 1
          %v2813 = vrot.slane %v2478, 1
          %v2814 = vsel %vm2799, %v2812, %v2813
          %v2815 = vrot.slane %v2786, 1
          %v2816 = vrot.slane %v2479, 1
          %v2817 = vsel %vm2799, %v2815, %v2816
          %v2818 = vrot.slane %v2787, 1
          %v2819 = vrot.slane %v2480, 1
          %v2820 = vsel %vm2799, %v2818, %v2819
          %v2821 = vrot.slane %v2788, 1
          %v2822 = vrot.slane %v2481, 1
          %v2823 = vsel %vm2799, %v2821, %v2822
          %v2824 = vrot.slane %v2789, 1
          %v2825 = vrot.slane %v2482, 1
          %v2826 = vsel %vm2799, %v2824, %v2825
          %v2827 = vrot.slane %v2790, 1
          %v2828 = vrot.slane %v2483, 1
          %v2829 = vsel %vm2799, %v2827, %v2828
          %v2830 = vrot.slane %v2791, 1
          %v2831 = vrot.slane %v2484, 1
          %v2832 = vsel %vm2799, %v2830, %v2831
          %v2833 = vrot.slane %v2792, 1
          %v2834 = vrot.slane %v2485, 1
          %v2835 = vsel %vm2799, %v2833, %v2834
          %v2836 = vrot.slane %v2793, 1
          %v2837 = vrot.slane %v2486, 1
          %v2838 = vsel %vm2799, %v2836, %v2837
          %v2839 = vrot.slane %v2794, 1
          %v2840 = vrot.slane %v2487, 1
          %v2841 = vsel %vm2799, %v2839, %v2840
          %v2842 = vrot.slane %v2795, 1
          %v2843 = vrot.slane %v2488, 1
          %v2844 = vsel %vm2799, %v2842, %v2843
          %v2845 = vrot.slane %v2796, 1
          %v2846 = vrot.slane %v2489, 1
          %v2847 = vsel %vm2799, %v2845, %v2846
          %v2848 = vrot.slane %v2797, 1
          %v2849 = vrot.slane %v2490, 1
          %v2850 = vsel %vm2799, %v2848, %v2849
          %v2851 = vrot.slane %v2798, 1
          %v2852 = vrot.slane %v2491, 1
          %v2853 = vsel %vm2799, %v2851, %v2852
          %vm2854 = vcmask 523264
          %v2856 = vsel %vm2854, %v2420, %v2710
          %v2859 = vsel %vm2854, %v2421, %v2712
          %v2862 = vsel %vm2854, %v2422, %v2714
          %v2865 = vsel %vm2854, %v2423, %v2716
          %v2868 = vsel %vm2854, %v2424, %v2718
          %v2871 = vsel %vm2854, %v2425, %v2720
          %v2874 = vsel %vm2854, %v2426, %v2722
          %v2877 = vsel %vm2854, %v2427, %v2724
          %v2880 = vsel %vm2854, %v2428, %v2726
          %v2883 = vsel %vm2854, %v2429, %v2728
          %v2886 = vsel %vm2854, %v2430, %v2730
          %v2889 = vsel %vm2854, %v2431, %v2732
          %v2892 = vsel %vm2854, %v2432, %v2734
          %v2895 = vsel %vm2854, %v2433, %v2736
          %v2898 = vsel %vm2854, %v2434, %v2738
          %v2901 = vsel %vm2854, %v2435, %v2740
          %v2904 = vsel %vm2854, %v2436, %v2742
          %v2907 = vsel %vm2854, %v2437, %v2744
          %v2933 = vunpack.c.l.b16 %v2250
          %v2934 = vunpack.c.h.b16 %v2250
          %v2935 = vunpack.c.l.b16 %v2251
          %v2936 = vunpack.c.h.b16 %v2251
          %v2937 = vunpack.c.l.b16 %v2252
          %v2938 = vunpack.c.h.b16 %v2252
          %v2939 = vunpack.c.l.b16 %v2253
          %v2940 = vunpack.c.h.b16 %v2253
          %v2941 = vunpack.c.l.b16 %v2254
          %v2942 = vunpack.c.h.b16 %v2254
          %v2943 = vunpack.c.l.b16 %v2255
          %v2944 = vunpack.c.h.b16 %v2255
          %v2945 = vunpack.c.l.b16 %v2256
          %v2946 = vunpack.c.h.b16 %v2256
          %v2947 = vunpack.c.l.b16 %v2257
          %v2948 = vunpack.c.h.b16 %v2257
          %v2949 = vunpack.c.l.b16 %v2258
          %v2950 = vunpack.c.h.b16 %v2258
          %v2951 = vunpack.c.l.b16 %v2259
          %v2952 = vunpack.c.h.b16 %v2259
          %v2953 = vunpack.c.l.b16 %v2260
          %v2954 = vunpack.c.h.b16 %v2260
          %v2955 = vunpack.c.l.b16 %v2261
          %v2956 = vunpack.c.h.b16 %v2261
          %v2957 = vunpack.c.l.b16 %v2262
          %v2958 = vunpack.c.h.b16 %v2262
          %v2959 = vunpack.c.l.b16 %v2263
          %v2960 = vunpack.c.h.b16 %v2263
          %v2961 = vunpack.c.l.b16 %v2264
          %v2962 = vunpack.c.h.b16 %v2264
          %v2963 = vunpack.c.l.b16 %v2265
          %v2964 = vunpack.c.h.b16 %v2265
          %v2965 = vunpack.c.l.b16 %v2266
          %v2966 = vunpack.c.h.b16 %v2266
          %v2967 = vunpack.c.l.b16 %v2267
          %v2968 = vunpack.c.h.b16 %v2267
          %v2969 = vunpack.c.l.b16 %v2268
          %v2970 = vunpack.c.h.b16 %v2268
          %v2971 = vunpack.c.l.b16 %v2269
          %v2972 = vunpack.c.h.b16 %v2269
          %v2973 = vunpack.c.l.b16 %v2270
          %v2974 = vunpack.c.h.b16 %v2270
          %v2975 = vunpack.c.l.b16 %v2271
          %v2976 = vunpack.c.h.b16 %v2271
          %v2977 = vunpack.c.l.b16 %v2272
          %v2978 = vunpack.c.h.b16 %v2272
          %v2979 = vunpack.c.l.b16 %v2273
          %v2980 = vunpack.c.h.b16 %v2273
          %v2981 = vpack.c.b16 %v2935, %v2933
          %v2982 = vpack.c.b16 %v2936, %v2934
          %v2983 = vpack.c.b16 %v2939, %v2937
          %v2984 = vpack.c.b16 %v2940, %v2938
          %v2985 = vpack.c.b16 %v2943, %v2941
          %v2986 = vpack.c.b16 %v2944, %v2942
          %v2987 = vpack.c.b16 %v2947, %v2945
          %v2988 = vpack.c.b16 %v2948, %v2946
          %v2989 = vpack.c.b16 %v2951, %v2949
          %v2990 = vpack.c.b16 %v2952, %v2950
          %v2991 = vpack.c.b16 %v2955, %v2953
          %v2992 = vpack.c.b16 %v2956, %v2954
          %v2993 = vpack.c.b16 %v2959, %v2957
          %v2994 = vpack.c.b16 %v2960, %v2958
          %v2995 = vpack.c.b16 %v2963, %v2961
          %v2996 = vpack.c.b16 %v2964, %v2962
          %v2997 = vpack.c.b16 %v2967, %v2965
          %v2998 = vpack.c.b16 %v2968, %v2966
          %v2999 = vpack.c.b16 %v2971, %v2969
          %v3000 = vpack.c.b16 %v2972, %v2970
          %v3001 = vpack.c.b16 %v2975, %v2973
          %v3002 = vpack.c.b16 %v2976, %v2974
          %v3003 = vpack.c.b16 %v2979, %v2977
          %v3004 = vpack.c.b16 %v2980, %v2978
          %v3030 = vsel %vm2854, %v2802, 0
          %v3033 = vsel %vm2854, %v2805, 0
          %v3036 = vsel %vm2854, %v2808, 0
          %v3039 = vsel %vm2854, %v2811, 0
          %v3042 = vsel %vm2854, %v2814, 0
          %v3045 = vsel %vm2854, %v2817, 0
          %v3048 = vsel %vm2854, %v2820, 0
          %v3051 = vsel %vm2854, %v2823, 0
          %v3054 = vsel %vm2854, %v2826, 0
          %v3057 = vsel %vm2854, %v2829, 0
          %v3060 = vsel %vm2854, %v2832, 0
          %v3063 = vsel %vm2854, %v2835, 0
          %v3066 = vsel %vm2854, %v2838, 0
          %v3069 = vsel %vm2854, %v2841, 0
          %v3072 = vsel %vm2854, %v2844, 0
          %v3075 = vsel %vm2854, %v2847, 0
          %v3078 = vsel %vm2854, %v2850, 0
          %v3081 = vsel %vm2854, %v2853, 0
          %3083 = vmatpush.bf16.msra.mxu0 %v2995
          %3084 = vmatpush.bf16.msra.mxu0 %v2993
          %3085 = vmatpush.bf16.msra.mxu0 %v2991
          %3086 = vmatpush.bf16.msra.mxu0 %v2989
          %3087 = vmatpush.bf16.msra.mxu0 %v2987
          %3088 = vmatpush.bf16.msra.mxu0 %v2985
          %3089 = vmatpush.bf16.msra.mxu0 %v2983
          %3090 = vmatpush.bf16.msra.mxu0 %v2981
          %3091 = vmatmul.bf16.gmra.mxu0 %v2856
          %v3092 = vpop.f32.mrf.mxu0
          %v3093 = vadd.f32 0.0, %v3092
          %v3094 = vpop.f32.mrf.mxu0
          %v3095 = vadd.f32 0.0, %v3094
          %3096 = vmatmul.bf16.gmra.mxu0 %v2859
          %v3097 = vpop.f32.mrf.mxu0
          %v3098 = vadd.f32 0.0, %v3097
          %v3099 = vpop.f32.mrf.mxu0
          %v3100 = vadd.f32 0.0, %v3099
          %3101 = vmatmul.bf16.gmra.mxu0 %v2862
          %v3102 = vpop.f32.mrf.mxu0
          %v3103 = vadd.f32 0.0, %v3102
          %v3104 = vpop.f32.mrf.mxu0
          %v3105 = vadd.f32 0.0, %v3104
          %3106 = vmatmul.bf16.gmra.mxu0 %v2865
          %v3107 = vpop.f32.mrf.mxu0
          %v3108 = vadd.f32 0.0, %v3107
          %v3109 = vpop.f32.mrf.mxu0
          %v3110 = vadd.f32 0.0, %v3109
          %3111 = vmatmul.bf16.gmra.mxu0 %v2868
          %v3112 = vpop.f32.mrf.mxu0
          %v3113 = vadd.f32 0.0, %v3112
          %v3114 = vpop.f32.mrf.mxu0
          %v3115 = vadd.f32 0.0, %v3114
          %3116 = vmatmul.bf16.gmra.mxu0 %v2871
          %v3117 = vpop.f32.mrf.mxu0
          %v3118 = vadd.f32 0.0, %v3117
          %v3119 = vpop.f32.mrf.mxu0
          %v3120 = vadd.f32 0.0, %v3119
          %3121 = vmatmul.bf16.gmra.mxu0 %v2874
          %v3122 = vpop.f32.mrf.mxu0
          %v3123 = vadd.f32 0.0, %v3122
          %v3124 = vpop.f32.mrf.mxu0
          %v3125 = vadd.f32 0.0, %v3124
          %3126 = vmatmul.bf16.gmra.mxu0 %v2877
          %v3127 = vpop.f32.mrf.mxu0
          %v3128 = vadd.f32 0.0, %v3127
          %v3129 = vpop.f32.mrf.mxu0
          %v3130 = vadd.f32 0.0, %v3129
          %3131 = vmatmul.bf16.gmra.mxu0 %v2880
          %v3132 = vpop.f32.mrf.mxu0
          %v3133 = vadd.f32 0.0, %v3132
          %v3134 = vpop.f32.mrf.mxu0
          %v3135 = vadd.f32 0.0, %v3134
          %3136 = vmatmul.bf16.gmra.mxu0 %v2883
          %v3137 = vpop.f32.mrf.mxu0
          %v3138 = vadd.f32 0.0, %v3137
          %v3139 = vpop.f32.mrf.mxu0
          %v3140 = vadd.f32 0.0, %v3139
          %3141 = vmatmul.bf16.gmra.mxu0 %v2886
          %v3142 = vpop.f32.mrf.mxu0
          %v3143 = vadd.f32 0.0, %v3142
          %v3144 = vpop.f32.mrf.mxu0
          %v3145 = vadd.f32 0.0, %v3144
          %3146 = vmatmul.bf16.gmra.mxu0 %v2889
          %v3147 = vpop.f32.mrf.mxu0
          %v3148 = vadd.f32 0.0, %v3147
          %v3149 = vpop.f32.mrf.mxu0
          %v3150 = vadd.f32 0.0, %v3149
          %3151 = vmatmul.bf16.gmra.mxu0 %v2892
          %v3152 = vpop.f32.mrf.mxu0
          %v3153 = vadd.f32 0.0, %v3152
          %v3154 = vpop.f32.mrf.mxu0
          %v3155 = vadd.f32 0.0, %v3154
          %3156 = vmatmul.bf16.gmra.mxu0 %v2895
          %v3157 = vpop.f32.mrf.mxu0
          %v3158 = vadd.f32 0.0, %v3157
          %v3159 = vpop.f32.mrf.mxu0
          %v3160 = vadd.f32 0.0, %v3159
          %3161 = vmatmul.bf16.gmra.mxu0 %v2898
          %v3162 = vpop.f32.mrf.mxu0
          %v3163 = vadd.f32 0.0, %v3162
          %v3164 = vpop.f32.mrf.mxu0
          %v3165 = vadd.f32 0.0, %v3164
          %3166 = vmatmul.bf16.gmra.mxu0 %v2901
          %v3167 = vpop.f32.mrf.mxu0
          %v3168 = vadd.f32 0.0, %v3167
          %v3169 = vpop.f32.mrf.mxu0
          %v3170 = vadd.f32 0.0, %v3169
          %3171 = vmatmul.bf16.gmra.mxu0 %v2904
          %v3172 = vpop.f32.mrf.mxu0
          %v3173 = vadd.f32 0.0, %v3172
          %v3174 = vpop.f32.mrf.mxu0
          %v3175 = vadd.f32 0.0, %v3174
          %3176 = vmatmul.bf16.gmra.mxu0 %v2907
          %v3177 = vpop.f32.mrf.mxu0
          %v3178 = vpop.f32.mrf.mxu0
          %3179 = vdwg.mxu0
          %3180 = vmatpush.bf16.msra.mxu0 0
          %3181 = vmatpush.bf16.msra.mxu0 0
          %3182 = vmatpush.bf16.msra.mxu0 0
          %3183 = vmatpush.bf16.msra.mxu0 0
          %3184 = vmatpush.bf16.msra.mxu0 %v3003
          %3185 = vmatpush.bf16.msra.mxu0 %v3001
          %3186 = vmatpush.bf16.msra.mxu0 %v2999
          %3187 = vmatpush.bf16.msra.mxu0 %v2997
          %3188 = vmatmul.bf16.gmra.mxu0 %v3030
          %v3189 = vpop.f32.mrf.mxu0
          %v3190 = vadd.f32 %v3093, %v3189
          %v3191 = vpop.f32.mrf.mxu0
          %v3192 = vadd.f32 %v3095, %v3191
          %3193 = vmatmul.bf16.gmra.mxu0 %v3033
          %v3194 = vpop.f32.mrf.mxu0
          %v3195 = vadd.f32 %v3098, %v3194
          %v3196 = vpop.f32.mrf.mxu0
          %v3197 = vadd.f32 %v3100, %v3196
          %3198 = vmatmul.bf16.gmra.mxu0 %v3036
          %v3199 = vpop.f32.mrf.mxu0
          %v3200 = vadd.f32 %v3103, %v3199
          %v3201 = vpop.f32.mrf.mxu0
          %v3202 = vadd.f32 %v3105, %v3201
          %3203 = vmatmul.bf16.gmra.mxu0 %v3039
          %v3204 = vpop.f32.mrf.mxu0
          %v3205 = vadd.f32 %v3108, %v3204
          %v3206 = vpop.f32.mrf.mxu0
          %v3207 = vadd.f32 %v3110, %v3206
          %3208 = vmatmul.bf16.gmra.mxu0 %v3042
          %v3209 = vpop.f32.mrf.mxu0
          %v3210 = vadd.f32 %v3113, %v3209
          %v3211 = vpop.f32.mrf.mxu0
          %v3212 = vadd.f32 %v3115, %v3211
          %3213 = vmatmul.bf16.gmra.mxu0 %v3045
          %v3214 = vpop.f32.mrf.mxu0
          %v3215 = vadd.f32 %v3118, %v3214
          %v3216 = vpop.f32.mrf.mxu0
          %v3217 = vadd.f32 %v3120, %v3216
          %3218 = vmatmul.bf16.gmra.mxu0 %v3048
          %v3219 = vpop.f32.mrf.mxu0
          %v3220 = vadd.f32 %v3123, %v3219
          %v3221 = vpop.f32.mrf.mxu0
          %v3222 = vadd.f32 %v3125, %v3221
          %3223 = vmatmul.bf16.gmra.mxu0 %v3051
          %v3224 = vpop.f32.mrf.mxu0
          %v3225 = vadd.f32 %v3128, %v3224
          %v3226 = vpop.f32.mrf.mxu0
          %v3227 = vadd.f32 %v3130, %v3226
          %3228 = vmatmul.bf16.gmra.mxu0 %v3054
          %v3229 = vpop.f32.mrf.mxu0
          %v3230 = vadd.f32 %v3133, %v3229
          %v3231 = vpop.f32.mrf.mxu0
          %v3232 = vadd.f32 %v3135, %v3231
          %3233 = vmatmul.bf16.gmra.mxu0 %v3057
          %v3234 = vpop.f32.mrf.mxu0
          %v3235 = vadd.f32 %v3138, %v3234
          %v3236 = vpop.f32.mrf.mxu0
          %v3237 = vadd.f32 %v3140, %v3236
          %3238 = vmatmul.bf16.gmra.mxu0 %v3060
          %v3239 = vpop.f32.mrf.mxu0
          %v3240 = vadd.f32 %v3143, %v3239
          %v3241 = vpop.f32.mrf.mxu0
          %v3242 = vadd.f32 %v3145, %v3241
          %3243 = vmatmul.bf16.gmra.mxu0 %v3063
          %v3244 = vpop.f32.mrf.mxu0
          %v3245 = vadd.f32 %v3148, %v3244
          %v3246 = vpop.f32.mrf.mxu0
          %v3247 = vadd.f32 %v3150, %v3246
          %3248 = vmatmul.bf16.gmra.mxu0 %v3066
          %v3249 = vpop.f32.mrf.mxu0
          %v3250 = vadd.f32 %v3153, %v3249
          %v3251 = vpop.f32.mrf.mxu0
          %v3252 = vadd.f32 %v3155, %v3251
          %3253 = vmatmul.bf16.gmra.mxu0 %v3069
          %v3254 = vpop.f32.mrf.mxu0
          %v3255 = vadd.f32 %v3158, %v3254
          %v3256 = vpop.f32.mrf.mxu0
          %v3257 = vadd.f32 %v3160, %v3256
          %3258 = vmatmul.bf16.gmra.mxu0 %v3072
          %v3259 = vpop.f32.mrf.mxu0
          %v3260 = vadd.f32 %v3163, %v3259
          %v3261 = vpop.f32.mrf.mxu0
          %v3262 = vadd.f32 %v3165, %v3261
          %3263 = vmatmul.bf16.gmra.mxu0 %v3075
          %v3264 = vpop.f32.mrf.mxu0
          %v3265 = vadd.f32 %v3168, %v3264
          %v3266 = vpop.f32.mrf.mxu0
          %v3267 = vadd.f32 %v3170, %v3266
          %3268 = vmatmul.bf16.gmra.mxu0 %v3078
          %v3269 = vpop.f32.mrf.mxu0
          %v3270 = vadd.f32 %v3173, %v3269
          %v3271 = vpop.f32.mrf.mxu0
          %v3272 = vadd.f32 %v3175, %v3271
          %3273 = vmatmul.bf16.gmra.mxu0 %v3081
          %v3274 = vpop.f32.mrf.mxu0
          %v3275 = vpop.f32.mrf.mxu0
          %3276 = vdwg.mxu0
          %3277 = vmatpush.bf16.msra.mxu0 %v2996
          %3278 = vmatpush.bf16.msra.mxu0 %v2994
          %3279 = vmatpush.bf16.msra.mxu0 %v2992
          %3280 = vmatpush.bf16.msra.mxu0 %v2990
          %3281 = vmatpush.bf16.msra.mxu0 %v2988
          %3282 = vmatpush.bf16.msra.mxu0 %v2986
          %3283 = vmatpush.bf16.msra.mxu0 %v2984
          %3284 = vmatpush.bf16.msra.mxu0 %v2982
          %3285 = vmatmul.bf16.gmra.mxu0 %v2856
          %v3286 = vpop.f32.mrf.mxu0
          %v3287 = vpop.f32.mrf.mxu0
          %3288 = vmatmul.bf16.gmra.mxu0 %v2859
          %v3289 = vpop.f32.mrf.mxu0
          %v3290 = vpop.f32.mrf.mxu0
          %3291 = vmatmul.bf16.gmra.mxu0 %v2862
          %v3292 = vpop.f32.mrf.mxu0
          %v3293 = vadd.f32 0.0, %v3292
          %v3294 = vpop.f32.mrf.mxu0
          %v3295 = vadd.f32 0.0, %v3294
          %3296 = vmatmul.bf16.gmra.mxu0 %v2865
          %v3297 = vpop.f32.mrf.mxu0
          %v3298 = vadd.f32 0.0, %v3297
          %v3299 = vpop.f32.mrf.mxu0
          %v3300 = vadd.f32 0.0, %v3299
          %3301 = vmatmul.bf16.gmra.mxu0 %v2868
          %v3302 = vpop.f32.mrf.mxu0
          %v3303 = vadd.f32 0.0, %v3302
          %v3304 = vpop.f32.mrf.mxu0
          %v3305 = vadd.f32 0.0, %v3304
          %3306 = vmatmul.bf16.gmra.mxu0 %v2871
          %v3307 = vpop.f32.mrf.mxu0
          %v3308 = vadd.f32 0.0, %v3307
          %v3309 = vpop.f32.mrf.mxu0
          %v3310 = vadd.f32 0.0, %v3309
          %3311 = vmatmul.bf16.gmra.mxu0 %v2874
          %v3312 = vpop.f32.mrf.mxu0
          %v3313 = vadd.f32 0.0, %v3312
          %v3314 = vpop.f32.mrf.mxu0
          %v3315 = vadd.f32 0.0, %v3314
          %3316 = vmatmul.bf16.gmra.mxu0 %v2877
          %v3317 = vpop.f32.mrf.mxu0
          %v3318 = vadd.f32 0.0, %v3317
          %v3319 = vpop.f32.mrf.mxu0
          %v3320 = vadd.f32 0.0, %v3319
          %3321 = vmatmul.bf16.gmra.mxu0 %v2880
          %v3322 = vpop.f32.mrf.mxu0
          %v3323 = vadd.f32 0.0, %v3322
          %v3324 = vpop.f32.mrf.mxu0
          %v3325 = vadd.f32 0.0, %v3324
          %3326 = vmatmul.bf16.gmra.mxu0 %v2883
          %v3327 = vpop.f32.mrf.mxu0
          %v3328 = vadd.f32 0.0, %v3327
          %v3329 = vpop.f32.mrf.mxu0
          %v3330 = vadd.f32 0.0, %v3329
          %3331 = vmatmul.bf16.gmra.mxu0 %v2886
          %v3332 = vpop.f32.mrf.mxu0
          %v3333 = vadd.f32 0.0, %v3332
          %v3334 = vpop.f32.mrf.mxu0
          %v3335 = vadd.f32 0.0, %v3334
          %3336 = vmatmul.bf16.gmra.mxu0 %v2889
          %v3337 = vpop.f32.mrf.mxu0
          %v3338 = vadd.f32 0.0, %v3337
          %v3339 = vpop.f32.mrf.mxu0
          %v3340 = vadd.f32 0.0, %v3339
          %3341 = vmatmul.bf16.gmra.mxu0 %v2892
          %v3342 = vpop.f32.mrf.mxu0
          %v3343 = vadd.f32 0.0, %v3342
          %v3344 = vpop.f32.mrf.mxu0
          %v3345 = vadd.f32 0.0, %v3344
          %3346 = vmatmul.bf16.gmra.mxu0 %v2895
          %v3347 = vpop.f32.mrf.mxu0
          %v3348 = vadd.f32 0.0, %v3347
          %v3349 = vpop.f32.mrf.mxu0
          %v3350 = vadd.f32 0.0, %v3349
          %3351 = vmatmul.bf16.gmra.mxu0 %v2898
          %v3352 = vpop.f32.mrf.mxu0
          %v3353 = vadd.f32 0.0, %v3352
          %v3354 = vpop.f32.mrf.mxu0
          %v3355 = vadd.f32 0.0, %v3354
          %3356 = vmatmul.bf16.gmra.mxu0 %v2901
          %v3357 = vpop.f32.mrf.mxu0
          %v3358 = vadd.f32 0.0, %v3357
          %v3359 = vpop.f32.mrf.mxu0
          %v3360 = vadd.f32 0.0, %v3359
          %3361 = vmatmul.bf16.gmra.mxu0 %v2904
          %v3362 = vpop.f32.mrf.mxu0
          %v3363 = vadd.f32 0.0, %v3362
          %v3364 = vpop.f32.mrf.mxu0
          %v3365 = vadd.f32 0.0, %v3364
          %3366 = vmatmul.bf16.gmra.mxu0 %v2907
          %v3367 = vpop.f32.mrf.mxu0
          %v3368 = vadd.f32 0.0, %v3367
          %v3369 = vpop.f32.mrf.mxu0
          %v3370 = vadd.f32 0.0, %v3369
          %3371 = vdwg.mxu0
          %3372 = vmatpush.bf16.msra.mxu0 0
          %3373 = vmatpush.bf16.msra.mxu0 0
          %3374 = vmatpush.bf16.msra.mxu0 0
          %3375 = vmatpush.bf16.msra.mxu0 0
          %3376 = vmatpush.bf16.msra.mxu0 %v3004
          %3377 = vmatpush.bf16.msra.mxu0 %v3002
          %3378 = vmatpush.bf16.msra.mxu0 %v3000
          %3379 = vmatpush.bf16.msra.mxu0 %v2998
          %3380 = vmatmul.bf16.gmra.mxu0 %v3030
          %v3381 = vpop.f32.mrf.mxu0
          %v3382 = vpop.f32.mrf.mxu0
          %3383 = vmatmul.bf16.gmra.mxu0 %v3033
          %v3384 = vpop.f32.mrf.mxu0
          %v3385 = vpop.f32.mrf.mxu0
          %3386 = vmatmul.bf16.gmra.mxu0 %v3036
          %v3387 = vpop.f32.mrf.mxu0
          %v3388 = vadd.f32 %v3293, %v3387
          %v3389 = vpop.f32.mrf.mxu0
          %v3390 = vadd.f32 %v3295, %v3389
          %3391 = vmatmul.bf16.gmra.mxu0 %v3039
          %v3392 = vpop.f32.mrf.mxu0
          %v3393 = vadd.f32 %v3298, %v3392
          %v3394 = vpop.f32.mrf.mxu0
          %v3395 = vadd.f32 %v3300, %v3394
          %3396 = vmatmul.bf16.gmra.mxu0 %v3042
          %v3397 = vpop.f32.mrf.mxu0
          %v3398 = vadd.f32 %v3303, %v3397
          %v3399 = vpop.f32.mrf.mxu0
          %v3400 = vadd.f32 %v3305, %v3399
          %3401 = vmatmul.bf16.gmra.mxu0 %v3045
          %v3402 = vpop.f32.mrf.mxu0
          %v3403 = vadd.f32 %v3308, %v3402
          %v3404 = vpop.f32.mrf.mxu0
          %v3405 = vadd.f32 %v3310, %v3404
          %3406 = vmatmul.bf16.gmra.mxu0 %v3048
          %v3407 = vpop.f32.mrf.mxu0
          %v3408 = vadd.f32 %v3313, %v3407
          %v3409 = vpop.f32.mrf.mxu0
          %v3410 = vadd.f32 %v3315, %v3409
          %3411 = vmatmul.bf16.gmra.mxu0 %v3051
          %v3412 = vpop.f32.mrf.mxu0
          %v3413 = vadd.f32 %v3318, %v3412
          %v3414 = vpop.f32.mrf.mxu0
          %v3415 = vadd.f32 %v3320, %v3414
          %3416 = vmatmul.bf16.gmra.mxu0 %v3054
          %v3417 = vpop.f32.mrf.mxu0
          %v3418 = vadd.f32 %v3323, %v3417
          %v3419 = vpop.f32.mrf.mxu0
          %v3420 = vadd.f32 %v3325, %v3419
          %3421 = vmatmul.bf16.gmra.mxu0 %v3057
          %v3422 = vpop.f32.mrf.mxu0
          %v3423 = vadd.f32 %v3328, %v3422
          %v3424 = vpop.f32.mrf.mxu0
          %v3425 = vadd.f32 %v3330, %v3424
          %3426 = vmatmul.bf16.gmra.mxu0 %v3060
          %v3427 = vpop.f32.mrf.mxu0
          %v3428 = vadd.f32 %v3333, %v3427
          %v3429 = vpop.f32.mrf.mxu0
          %v3430 = vadd.f32 %v3335, %v3429
          %3431 = vmatmul.bf16.gmra.mxu0 %v3063
          %v3432 = vpop.f32.mrf.mxu0
          %v3433 = vadd.f32 %v3338, %v3432
          %v3434 = vpop.f32.mrf.mxu0
          %v3435 = vadd.f32 %v3340, %v3434
          %3436 = vmatmul.bf16.gmra.mxu0 %v3066
          %v3437 = vpop.f32.mrf.mxu0
          %v3438 = vadd.f32 %v3343, %v3437
          %v3439 = vpop.f32.mrf.mxu0
          %v3440 = vadd.f32 %v3345, %v3439
          %3441 = vmatmul.bf16.gmra.mxu0 %v3069
          %v3442 = vpop.f32.mrf.mxu0
          %v3443 = vadd.f32 %v3348, %v3442
          %v3444 = vpop.f32.mrf.mxu0
          %v3445 = vadd.f32 %v3350, %v3444
          %3446 = vmatmul.bf16.gmra.mxu0 %v3072
          %v3447 = vpop.f32.mrf.mxu0
          %v3448 = vadd.f32 %v3353, %v3447
          %v3449 = vpop.f32.mrf.mxu0
          %v3450 = vadd.f32 %v3355, %v3449
          %3451 = vmatmul.bf16.gmra.mxu0 %v3075
          %v3452 = vpop.f32.mrf.mxu0
          %v3453 = vadd.f32 %v3358, %v3452
          %v3454 = vpop.f32.mrf.mxu0
          %v3455 = vadd.f32 %v3360, %v3454
          %3456 = vmatmul.bf16.gmra.mxu0 %v3078
          %v3457 = vpop.f32.mrf.mxu0
          %v3458 = vadd.f32 %v3363, %v3457
          %v3459 = vpop.f32.mrf.mxu0
          %v3460 = vadd.f32 %v3365, %v3459
          %3461 = vmatmul.bf16.gmra.mxu0 %v3081
          %v3462 = vpop.f32.mrf.mxu0
          %v3463 = vadd.f32 %v3368, %v3462
          %v3464 = vpop.f32.mrf.mxu0
          %v3465 = vadd.f32 %v3370, %v3464
          %3466 = vdwg.mxu0
          %3499 = vrot.lane.b32.xlu0 %v3195, 64
          %v3500 = vpop.permute.xlu0 %3499
          %3501 = vrot.lane.b32.xlu0 %v3197, 64
          %v3502 = vpop.permute.xlu0 %3501
          %3503 = vrot.lane.b32.xlu0 %v3200, 64
          %v3504 = vpop.permute.xlu0 %3503
          %3505 = vrot.lane.b32.xlu0 %v3202, 64
          %v3506 = vpop.permute.xlu0 %3505
          %3507 = vrot.lane.b32.xlu0 %v3205, 64
          %v3508 = vpop.permute.xlu0 %3507
          %3509 = vrot.lane.b32.xlu0 %v3207, 64
          %v3510 = vpop.permute.xlu0 %3509
          %3511 = vrot.lane.b32.xlu0 %v3210, 64
          %v3512 = vpop.permute.xlu0 %3511
          %3513 = vrot.lane.b32.xlu0 %v3212, 64
          %v3514 = vpop.permute.xlu0 %3513
          %3515 = vrot.lane.b32.xlu0 %v3215, 64
          %v3516 = vpop.permute.xlu0 %3515
          %3517 = vrot.lane.b32.xlu0 %v3217, 64
          %v3518 = vpop.permute.xlu0 %3517
          %3519 = vrot.lane.b32.xlu0 %v3220, 64
          %v3520 = vpop.permute.xlu0 %3519
          %3521 = vrot.lane.b32.xlu0 %v3222, 64
          %v3522 = vpop.permute.xlu0 %3521
          %3523 = vrot.lane.b32.xlu0 %v3225, 64
          %v3524 = vpop.permute.xlu0 %3523
          %3525 = vrot.lane.b32.xlu0 %v3227, 64
          %v3526 = vpop.permute.xlu0 %3525
          %3527 = vrot.lane.b32.xlu0 %v3230, 64
          %v3528 = vpop.permute.xlu0 %3527
          %3529 = vrot.lane.b32.xlu0 %v3232, 64
          %v3530 = vpop.permute.xlu0 %3529
          %3531 = vrot.lane.b32.xlu0 %v3235, 64
          %v3532 = vpop.permute.xlu0 %3531
          %3533 = vrot.lane.b32.xlu0 %v3237, 64
          %v3534 = vpop.permute.xlu0 %3533
          %3535 = vrot.lane.b32.xlu0 %v3240, 64
          %v3536 = vpop.permute.xlu0 %3535
          %3537 = vrot.lane.b32.xlu0 %v3242, 64
          %v3538 = vpop.permute.xlu0 %3537
          %3539 = vrot.lane.b32.xlu0 %v3245, 64
          %v3540 = vpop.permute.xlu0 %3539
          %3541 = vrot.lane.b32.xlu0 %v3247, 64
          %v3542 = vpop.permute.xlu0 %3541
          %3543 = vrot.lane.b32.xlu0 %v3250, 64
          %v3544 = vpop.permute.xlu0 %3543
          %3545 = vrot.lane.b32.xlu0 %v3252, 64
          %v3546 = vpop.permute.xlu0 %3545
          %3547 = vrot.lane.b32.xlu0 %v3255, 64
          %v3548 = vpop.permute.xlu0 %3547
          %3549 = vrot.lane.b32.xlu0 %v3257, 64
          %v3550 = vpop.permute.xlu0 %3549
          %3551 = vrot.lane.b32.xlu0 %v3260, 64
          %v3552 = vpop.permute.xlu0 %3551
          %3553 = vrot.lane.b32.xlu0 %v3262, 64
          %v3554 = vpop.permute.xlu0 %3553
          %3555 = vrot.lane.b32.xlu0 %v3265, 64
          %v3556 = vpop.permute.xlu0 %3555
          %3557 = vrot.lane.b32.xlu0 %v3267, 64
          %v3558 = vpop.permute.xlu0 %3557
          %3559 = vrot.lane.b32.xlu0 %v3270, 64
          %v3560 = vpop.permute.xlu0 %3559
          %3561 = vrot.lane.b32.xlu0 %v3272, 64
          %v3562 = vpop.permute.xlu0 %3561
          %v3595 = vadd.f32 %v3190, %v3500
          %v3596 = vadd.f32 %v3192, %v3502
          %v3597 = vadd.f32 %v3195, %v3504
          %v3598 = vadd.f32 %v3197, %v3506
          %v3599 = vadd.f32 %v3200, %v3508
          %v3600 = vadd.f32 %v3202, %v3510
          %v3601 = vadd.f32 %v3205, %v3512
          %v3602 = vadd.f32 %v3207, %v3514
          %v3603 = vadd.f32 %v3210, %v3516
          %v3604 = vadd.f32 %v3212, %v3518
          %v3605 = vadd.f32 %v3215, %v3520
          %v3606 = vadd.f32 %v3217, %v3522
          %v3607 = vadd.f32 %v3220, %v3524
          %v3608 = vadd.f32 %v3222, %v3526
          %v3609 = vadd.f32 %v3225, %v3528
          %v3610 = vadd.f32 %v3227, %v3530
          %v3611 = vadd.f32 %v3230, %v3532
          %v3612 = vadd.f32 %v3232, %v3534
          %v3613 = vadd.f32 %v3235, %v3536
          %v3614 = vadd.f32 %v3237, %v3538
          %v3615 = vadd.f32 %v3240, %v3540
          %v3616 = vadd.f32 %v3242, %v3542
          %v3617 = vadd.f32 %v3245, %v3544
          %v3618 = vadd.f32 %v3247, %v3546
          %v3619 = vadd.f32 %v3250, %v3548
          %v3620 = vadd.f32 %v3252, %v3550
          %v3621 = vadd.f32 %v3255, %v3552
          %v3622 = vadd.f32 %v3257, %v3554
          %v3623 = vadd.f32 %v3260, %v3556
          %v3624 = vadd.f32 %v3262, %v3558
          %v3625 = vadd.f32 %v3265, %v3560
          %v3626 = vadd.f32 %v3267, %v3562
          %v3627 = vadd.f32 %v3595, %v3388
          %v3628 = vadd.f32 %v3596, %v3390
          %v3629 = vadd.f32 %v3597, %v3393
          %v3630 = vadd.f32 %v3598, %v3395
          %v3631 = vadd.f32 %v3599, %v3398
          %v3632 = vadd.f32 %v3600, %v3400
          %v3633 = vadd.f32 %v3601, %v3403
          %v3634 = vadd.f32 %v3602, %v3405
          %v3635 = vadd.f32 %v3603, %v3408
          %v3636 = vadd.f32 %v3604, %v3410
          %v3637 = vadd.f32 %v3605, %v3413
          %v3638 = vadd.f32 %v3606, %v3415
          %v3639 = vadd.f32 %v3607, %v3418
          %v3640 = vadd.f32 %v3608, %v3420
          %v3641 = vadd.f32 %v3609, %v3423
          %v3642 = vadd.f32 %v3610, %v3425
          %v3643 = vadd.f32 %v3611, %v3428
          %v3644 = vadd.f32 %v3612, %v3430
          %v3645 = vadd.f32 %v3613, %v3433
          %v3646 = vadd.f32 %v3614, %v3435
          %v3647 = vadd.f32 %v3615, %v3438
          %v3648 = vadd.f32 %v3616, %v3440
          %v3649 = vadd.f32 %v3617, %v3443
          %v3650 = vadd.f32 %v3618, %v3445
          %v3651 = vadd.f32 %v3619, %v3448
          %v3652 = vadd.f32 %v3620, %v3450
          %v3653 = vadd.f32 %v3621, %v3453
          %v3654 = vadd.f32 %v3622, %v3455
          %v3655 = vadd.f32 %v3623, %v3458
          %v3656 = vadd.f32 %v3624, %v3460
          %v3657 = vadd.f32 %v3625, %v3463
          %v3658 = vadd.f32 %v3626, %v3465
          %v3660 = vperm.slane %v2275, 0
          %v3662 = vadd.f32 %v3627, %v3660
          %v3663 = vadd.f32 %v3628, %v3660
          %v3664 = vadd.f32 %v3629, %v3660
          %v3665 = vadd.f32 %v3630, %v3660
          %v3666 = vadd.f32 %v3631, %v3660
          %v3667 = vadd.f32 %v3632, %v3660
          %v3668 = vadd.f32 %v3633, %v3660
          %v3669 = vadd.f32 %v3634, %v3660
          %v3670 = vadd.f32 %v3635, %v3660
          %v3671 = vadd.f32 %v3636, %v3660
          %v3672 = vadd.f32 %v3637, %v3660
          %v3673 = vadd.f32 %v3638, %v3660
          %v3674 = vadd.f32 %v3639, %v3660
          %v3675 = vadd.f32 %v3640, %v3660
          %v3676 = vadd.f32 %v3641, %v3660
          %v3677 = vadd.f32 %v3642, %v3660
          %v3678 = vadd.f32 %v3643, %v3660
          %v3679 = vadd.f32 %v3644, %v3660
          %v3680 = vadd.f32 %v3645, %v3660
          %v3681 = vadd.f32 %v3646, %v3660
          %v3682 = vadd.f32 %v3647, %v3660
          %v3683 = vadd.f32 %v3648, %v3660
          %v3684 = vadd.f32 %v3649, %v3660
          %v3685 = vadd.f32 %v3650, %v3660
          %v3686 = vadd.f32 %v3651, %v3660
          %v3687 = vadd.f32 %v3652, %v3660
          %v3688 = vadd.f32 %v3653, %v3660
          %v3689 = vadd.f32 %v3654, %v3660
          %v3690 = vadd.f32 %v3655, %v3660
          %v3691 = vadd.f32 %v3656, %v3660
          %v3692 = vadd.f32 %v3657, %v3660
          %v3693 = vadd.f32 %v3658, %v3660
          %v3694 = vmax.f32 %v3662, 0.0
          %v3695 = vmax.f32 %v3663, 0.0
          %v3696 = vmax.f32 %v3664, 0.0
          %v3697 = vmax.f32 %v3665, 0.0
          %v3698 = vmax.f32 %v3666, 0.0
          %v3699 = vmax.f32 %v3667, 0.0
          %v3700 = vmax.f32 %v3668, 0.0
          %v3701 = vmax.f32 %v3669, 0.0
          %v3702 = vmax.f32 %v3670, 0.0
          %v3703 = vmax.f32 %v3671, 0.0
          %v3704 = vmax.f32 %v3672, 0.0
          %v3705 = vmax.f32 %v3673, 0.0
          %v3706 = vmax.f32 %v3674, 0.0
          %v3707 = vmax.f32 %v3675, 0.0
          %v3708 = vmax.f32 %v3676, 0.0
          %v3709 = vmax.f32 %v3677, 0.0
          %v3710 = vmax.f32 %v3678, 0.0
          %v3711 = vmax.f32 %v3679, 0.0
          %v3712 = vmax.f32 %v3680, 0.0
          %v3713 = vmax.f32 %v3681, 0.0
          %v3714 = vmax.f32 %v3682, 0.0
          %v3715 = vmax.f32 %v3683, 0.0
          %v3716 = vmax.f32 %v3684, 0.0
          %v3717 = vmax.f32 %v3685, 0.0
          %v3718 = vmax.f32 %v3686, 0.0
          %v3719 = vmax.f32 %v3687, 0.0
          %v3720 = vmax.f32 %v3688, 0.0
          %v3721 = vmax.f32 %v3689, 0.0
          %v3722 = vmax.f32 %v3690, 0.0
          %v3723 = vmax.f32 %v3691, 0.0
          %v3724 = vmax.f32 %v3692, 0.0
          %v3725 = vmax.f32 %v3693, 0.0
          %v3726 = vpack.c.bf16 %v3694, %v3694
          %v3727 = vpack.c.bf16 %v3695, %v3695
          %v3728 = vpack.c.bf16 %v3696, %v3696
          %v3729 = vpack.c.bf16 %v3697, %v3697
          %v3730 = vpack.c.bf16 %v3698, %v3698
          %v3731 = vpack.c.bf16 %v3699, %v3699
          %v3732 = vpack.c.bf16 %v3700, %v3700
          %v3733 = vpack.c.bf16 %v3701, %v3701
          %v3734 = vpack.c.bf16 %v3702, %v3702
          %v3735 = vpack.c.bf16 %v3703, %v3703
          %v3736 = vpack.c.bf16 %v3704, %v3704
          %v3737 = vpack.c.bf16 %v3705, %v3705
          %v3738 = vpack.c.bf16 %v3706, %v3706
          %v3739 = vpack.c.bf16 %v3707, %v3707
          %v3740 = vpack.c.bf16 %v3708, %v3708
          %v3741 = vpack.c.bf16 %v3709, %v3709
          %v3742 = vpack.c.bf16 %v3710, %v3710
          %v3743 = vpack.c.bf16 %v3711, %v3711
          %v3744 = vpack.c.bf16 %v3712, %v3712
          %v3745 = vpack.c.bf16 %v3713, %v3713
          %v3746 = vpack.c.bf16 %v3714, %v3714
          %v3747 = vpack.c.bf16 %v3715, %v3715
          %v3748 = vpack.c.bf16 %v3716, %v3716
          %v3749 = vpack.c.bf16 %v3717, %v3717
          %v3750 = vpack.c.bf16 %v3718, %v3718
          %v3751 = vpack.c.bf16 %v3719, %v3719
          %v3752 = vpack.c.bf16 %v3720, %v3720
          %v3753 = vpack.c.bf16 %v3721, %v3721
          %v3754 = vpack.c.bf16 %v3722, %v3722
          %v3755 = vpack.c.bf16 %v3723, %v3723
          %v3756 = vpack.c.bf16 %v3724, %v3724
          %v3757 = vpack.c.bf16 %v3725, %v3725
          %v3759 = vshrl.u32 %v3726, 16
          %v3761 = vrot.slane %v3759, 7
          %v3762 = vshll.u32 %v3726, 16
          %v3764 = vor.u32 %v3761, %v3762
          %v3765 = vrot.slane %v3761, 4
          %v3767 = vshrl.u32 %v3727, 16
          %v3769 = vrot.slane %v3767, 7
          %v3770 = vshll.u32 %v3727, 16
          %v3772 = vor.u32 %v3769, %v3770
          %v3773 = vsel %vm1804, %v3765, %v3772
          %v3774 = vrot.slane %v3769, 4
          %v3776 = vshrl.u32 %v3728, 16
          %v3778 = vrot.slane %v3776, 7
          %v3779 = vshll.u32 %v3728, 16
          %v3781 = vor.u32 %v3778, %v3779
          %v3782 = vrot.slane %v3778, 4
          %v3784 = vshrl.u32 %v3729, 16
          %v3786 = vrot.slane %v3784, 7
          %v3787 = vshll.u32 %v3729, 16
          %v3789 = vor.u32 %v3786, %v3787
          %v3790 = vsel %vm1804, %v3782, %v3789
          %v3791 = vrot.slane %v3786, 4
          %v3793 = vshrl.u32 %v3730, 16
          %v3795 = vrot.slane %v3793, 7
          %v3796 = vshll.u32 %v3730, 16
          %v3798 = vor.u32 %v3795, %v3796
          %v3799 = vrot.slane %v3795, 4
          %v3801 = vshrl.u32 %v3731, 16
          %v3803 = vrot.slane %v3801, 7
          %v3804 = vshll.u32 %v3731, 16
          %v3806 = vor.u32 %v3803, %v3804
          %v3807 = vsel %vm1804, %v3799, %v3806
          %v3808 = vrot.slane %v3803, 4
          %v3810 = vshrl.u32 %v3732, 16
          %v3812 = vrot.slane %v3810, 7
          %v3813 = vshll.u32 %v3732, 16
          %v3815 = vor.u32 %v3812, %v3813
          %v3816 = vrot.slane %v3812, 4
          %v3818 = vshrl.u32 %v3733, 16
          %v3820 = vrot.slane %v3818, 7
          %v3821 = vshll.u32 %v3733, 16
          %v3823 = vor.u32 %v3820, %v3821
          %v3824 = vsel %vm1804, %v3816, %v3823
          %v3825 = vrot.slane %v3820, 4
          %v3827 = vshrl.u32 %v3734, 16
          %v3829 = vrot.slane %v3827, 7
          %v3830 = vshll.u32 %v3734, 16
          %v3832 = vor.u32 %v3829, %v3830
          %v3833 = vrot.slane %v3829, 4
          %v3835 = vshrl.u32 %v3735, 16
          %v3837 = vrot.slane %v3835, 7
          %v3838 = vshll.u32 %v3735, 16
          %v3840 = vor.u32 %v3837, %v3838
          %v3841 = vsel %vm1804, %v3833, %v3840
          %v3842 = vrot.slane %v3837, 4
          %v3844 = vshrl.u32 %v3736, 16
          %v3846 = vrot.slane %v3844, 7
          %v3847 = vshll.u32 %v3736, 16
          %v3849 = vor.u32 %v3846, %v3847
          %v3850 = vrot.slane %v3846, 4
          %v3852 = vshrl.u32 %v3737, 16
          %v3854 = vrot.slane %v3852, 7
          %v3855 = vshll.u32 %v3737, 16
          %v3857 = vor.u32 %v3854, %v3855
          %v3858 = vsel %vm1804, %v3850, %v3857
          %v3859 = vrot.slane %v3854, 4
          %v3861 = vshrl.u32 %v3738, 16
          %v3863 = vrot.slane %v3861, 7
          %v3864 = vshll.u32 %v3738, 16
          %v3866 = vor.u32 %v3863, %v3864
          %v3867 = vrot.slane %v3863, 4
          %v3869 = vshrl.u32 %v3739, 16
          %v3871 = vrot.slane %v3869, 7
          %v3872 = vshll.u32 %v3739, 16
          %v3874 = vor.u32 %v3871, %v3872
          %v3875 = vsel %vm1804, %v3867, %v3874
          %v3876 = vrot.slane %v3871, 4
          %v3878 = vshrl.u32 %v3740, 16
          %v3880 = vrot.slane %v3878, 7
          %v3881 = vshll.u32 %v3740, 16
          %v3883 = vor.u32 %v3880, %v3881
          %v3884 = vrot.slane %v3880, 4
          %v3886 = vshrl.u32 %v3741, 16
          %v3888 = vrot.slane %v3886, 7
          %v3889 = vshll.u32 %v3741, 16
          %v3891 = vor.u32 %v3888, %v3889
          %v3892 = vsel %vm1804, %v3884, %v3891
          %v3893 = vrot.slane %v3888, 4
          %v3895 = vshrl.u32 %v3742, 16
          %v3897 = vrot.slane %v3895, 7
          %v3898 = vshll.u32 %v3742, 16
          %v3900 = vor.u32 %v3897, %v3898
          %v3901 = vrot.slane %v3897, 4
          %v3903 = vshrl.u32 %v3743, 16
          %v3905 = vrot.slane %v3903, 7
          %v3906 = vshll.u32 %v3743, 16
          %v3908 = vor.u32 %v3905, %v3906
          %v3909 = vsel %vm1804, %v3901, %v3908
          %v3910 = vrot.slane %v3905, 4
          %v3912 = vshrl.u32 %v3744, 16
          %v3914 = vrot.slane %v3912, 7
          %v3915 = vshll.u32 %v3744, 16
          %v3917 = vor.u32 %v3914, %v3915
          %v3918 = vrot.slane %v3914, 4
          %v3920 = vshrl.u32 %v3745, 16
          %v3922 = vrot.slane %v3920, 7
          %v3923 = vshll.u32 %v3745, 16
          %v3925 = vor.u32 %v3922, %v3923
          %v3926 = vsel %vm1804, %v3918, %v3925
          %v3927 = vrot.slane %v3922, 4
          %v3929 = vshrl.u32 %v3746, 16
          %v3931 = vrot.slane %v3929, 7
          %v3932 = vshll.u32 %v3746, 16
          %v3934 = vor.u32 %v3931, %v3932
          %v3935 = vrot.slane %v3931, 4
          %v3937 = vshrl.u32 %v3747, 16
          %v3939 = vrot.slane %v3937, 7
          %v3940 = vshll.u32 %v3747, 16
          %v3942 = vor.u32 %v3939, %v3940
          %v3943 = vsel %vm1804, %v3935, %v3942
          %v3944 = vrot.slane %v3939, 4
          %v3946 = vshrl.u32 %v3748, 16
          %v3948 = vrot.slane %v3946, 7
          %v3949 = vshll.u32 %v3748, 16
          %v3951 = vor.u32 %v3948, %v3949
          %v3952 = vrot.slane %v3948, 4
          %v3954 = vshrl.u32 %v3749, 16
          %v3956 = vrot.slane %v3954, 7
          %v3957 = vshll.u32 %v3749, 16
          %v3959 = vor.u32 %v3956, %v3957
          %v3960 = vsel %vm1804, %v3952, %v3959
          %v3961 = vrot.slane %v3956, 4
          %v3963 = vshrl.u32 %v3750, 16
          %v3965 = vrot.slane %v3963, 7
          %v3966 = vshll.u32 %v3750, 16
          %v3968 = vor.u32 %v3965, %v3966
          %v3969 = vrot.slane %v3965, 4
          %v3971 = vshrl.u32 %v3751, 16
          %v3973 = vrot.slane %v3971, 7
          %v3974 = vshll.u32 %v3751, 16
          %v3976 = vor.u32 %v3973, %v3974
          %v3977 = vsel %vm1804, %v3969, %v3976
          %v3978 = vrot.slane %v3973, 4
          %v3980 = vshrl.u32 %v3752, 16
          %v3982 = vrot.slane %v3980, 7
          %v3983 = vshll.u32 %v3752, 16
          %v3985 = vor.u32 %v3982, %v3983
          %v3986 = vrot.slane %v3982, 4
          %v3988 = vshrl.u32 %v3753, 16
          %v3990 = vrot.slane %v3988, 7
          %v3991 = vshll.u32 %v3753, 16
          %v3993 = vor.u32 %v3990, %v3991
          %v3994 = vsel %vm1804, %v3986, %v3993
          %v3995 = vrot.slane %v3990, 4
          %v3997 = vshrl.u32 %v3754, 16
          %v3999 = vrot.slane %v3997, 7
          %v4000 = vshll.u32 %v3754, 16
          %v4002 = vor.u32 %v3999, %v4000
          %v4003 = vrot.slane %v3999, 4
          %v4005 = vshrl.u32 %v3755, 16
          %v4007 = vrot.slane %v4005, 7
          %v4008 = vshll.u32 %v3755, 16
          %v4010 = vor.u32 %v4007, %v4008
          %v4011 = vsel %vm1804, %v4003, %v4010
          %v4012 = vrot.slane %v4007, 4
          %v4014 = vshrl.u32 %v3756, 16
          %v4016 = vrot.slane %v4014, 7
          %v4017 = vshll.u32 %v3756, 16
          %v4019 = vor.u32 %v4016, %v4017
          %v4020 = vrot.slane %v4016, 4
          %v4022 = vshrl.u32 %v3757, 16
          %v4024 = vrot.slane %v4022, 7
          %v4025 = vshll.u32 %v3757, 16
          %v4027 = vor.u32 %v4024, %v4025
          %v4028 = vsel %vm1804, %v4020, %v4027
          %v4029 = vrot.slane %v4024, 4
          %s4078 = scalar_lea.vmem [#allocation2], 228
          %v4079 = vld [vmem:[%s4078] sm:$0xf]
          %v4080 = vsel %vm2127, %v3764, %v4079
          %4081 = vst [vmem:[%s4078] sm:$0xf] %v4080
          %4082 = vst.msk [vmem:[%s4078 + $0x4] sm:$0xf] %vm376, %v3773
          %v4083 = vld [vmem:[%s4078 + $0x8] sm:$0x1]
          %v4084 = vsel %vm393, %v3774, %v4083
          %4085 = vst [vmem:[%s4078 + $0x8] sm:$0x1] %v4084
          %v4086 = vld [vmem:[%s4078 + $0xc] sm:$0xf]
          %v4087 = vsel %vm2127, %v3781, %v4086
          %4088 = vst [vmem:[%s4078 + $0xc] sm:$0xf] %v4087
          %4089 = vst.msk [vmem:[%s4078 + $0x10] sm:$0xf] %vm376, %v3790
          %v4090 = vld [vmem:[%s4078 + $0x14] sm:$0x1]
          %v4091 = vsel %vm393, %v3791, %v4090
          %4092 = vst [vmem:[%s4078 + $0x14] sm:$0x1] %v4091
          %v4093 = vld [vmem:[%s4078 + $0x18] sm:$0xf]
          %v4094 = vsel %vm2127, %v3798, %v4093
          %4095 = vst [vmem:[%s4078 + $0x18] sm:$0xf] %v4094
          %4096 = vst.msk [vmem:[%s4078 + $0x1c] sm:$0xf] %vm376, %v3807
          %v4097 = vld [vmem:[%s4078 + $0x20] sm:$0x1]
          %v4098 = vsel %vm393, %v3808, %v4097
          %4099 = vst [vmem:[%s4078 + $0x20] sm:$0x1] %v4098
          %v4100 = vld [vmem:[%s4078 + $0x24] sm:$0xf]
          %v4101 = vsel %vm2127, %v3815, %v4100
          %4102 = vst [vmem:[%s4078 + $0x24] sm:$0xf] %v4101
          %4103 = vst.msk [vmem:[%s4078 + $0x28] sm:$0xf] %vm376, %v3824
          %v4104 = vld [vmem:[%s4078 + $0x2c] sm:$0x1]
          %v4105 = vsel %vm393, %v3825, %v4104
          %4106 = vst [vmem:[%s4078 + $0x2c] sm:$0x1] %v4105
          %v4107 = vld [vmem:[%s4078 + $0x30] sm:$0xf]
          %v4108 = vsel %vm2127, %v3832, %v4107
          %4109 = vst [vmem:[%s4078 + $0x30] sm:$0xf] %v4108
          %4110 = vst.msk [vmem:[%s4078 + $0x34] sm:$0xf] %vm376, %v3841
          %v4111 = vld [vmem:[%s4078 + $0x38] sm:$0x1]
          %v4112 = vsel %vm393, %v3842, %v4111
          %4113 = vst [vmem:[%s4078 + $0x38] sm:$0x1] %v4112
          %v4114 = vld [vmem:[%s4078 + $0x3c] sm:$0xf]
          %v4115 = vsel %vm2127, %v3849, %v4114
          %4116 = vst [vmem:[%s4078 + $0x3c] sm:$0xf] %v4115
          %4117 = vst.msk [vmem:[%s4078 + $0x40] sm:$0xf] %vm376, %v3858
          %v4118 = vld [vmem:[%s4078 + $0x44] sm:$0x1]
          %v4119 = vsel %vm393, %v3859, %v4118
          %4120 = vst [vmem:[%s4078 + $0x44] sm:$0x1] %v4119
          %v4121 = vld [vmem:[%s4078 + $0x48] sm:$0xf]
          %v4122 = vsel %vm2127, %v3866, %v4121
          %4123 = vst [vmem:[%s4078 + $0x48] sm:$0xf] %v4122
          %4124 = vst.msk [vmem:[%s4078 + $0x4c] sm:$0xf] %vm376, %v3875
          %v4125 = vld [vmem:[%s4078 + $0x50] sm:$0x1]
          %v4126 = vsel %vm393, %v3876, %v4125
          %4127 = vst [vmem:[%s4078 + $0x50] sm:$0x1] %v4126
          %v4128 = vld [vmem:[%s4078 + $0x54] sm:$0xf]
          %v4129 = vsel %vm2127, %v3883, %v4128
          %4130 = vst [vmem:[%s4078 + $0x54] sm:$0xf] %v4129
          %4131 = vst.msk [vmem:[%s4078 + $0x58] sm:$0xf] %vm376, %v3892
          %v4132 = vld [vmem:[%s4078 + $0x5c] sm:$0x1]
          %v4133 = vsel %vm393, %v3893, %v4132
          %4134 = vst [vmem:[%s4078 + $0x5c] sm:$0x1] %v4133
          %v4135 = vld [vmem:[%s4078 + $0x60] sm:$0xf]
          %v4136 = vsel %vm2127, %v3900, %v4135
          %4137 = vst [vmem:[%s4078 + $0x60] sm:$0xf] %v4136
          %4138 = vst.msk [vmem:[%s4078 + $0x64] sm:$0xf] %vm376, %v3909
          %v4139 = vld [vmem:[%s4078 + $0x68] sm:$0x1]
          %v4140 = vsel %vm393, %v3910, %v4139
          %4141 = vst [vmem:[%s4078 + $0x68] sm:$0x1] %v4140
          %v4142 = vld [vmem:[%s4078 + $0x6c] sm:$0xf]
          %v4143 = vsel %vm2127, %v3917, %v4142
          %4144 = vst [vmem:[%s4078 + $0x6c] sm:$0xf] %v4143
          %4145 = vst.msk [vmem:[%s4078 + $0x70] sm:$0xf] %vm376, %v3926
          %v4146 = vld [vmem:[%s4078 + $0x74] sm:$0x1]
          %v4147 = vsel %vm393, %v3927, %v4146
          %4148 = vst [vmem:[%s4078 + $0x74] sm:$0x1] %v4147
          %v4149 = vld [vmem:[%s4078 + $0x78] sm:$0xf]
          %v4150 = vsel %vm2127, %v3934, %v4149
          %4151 = vst [vmem:[%s4078 + $0x78] sm:$0xf] %v4150
          %4152 = vst.msk [vmem:[%s4078 + $0x7c] sm:$0xf] %vm376, %v3943
          %v4153 = vld [vmem:[%s4078 + $0x80] sm:$0x1]
          %v4154 = vsel %vm393, %v3944, %v4153
          %4155 = vst [vmem:[%s4078 + $0x80] sm:$0x1] %v4154
          %v4156 = vld [vmem:[%s4078 + $0x84] sm:$0xf]
          %v4157 = vsel %vm2127, %v3951, %v4156
          %4158 = vst [vmem:[%s4078 + $0x84] sm:$0xf] %v4157
          %4159 = vst.msk [vmem:[%s4078 + $0x88] sm:$0xf] %vm376, %v3960
          %v4160 = vld [vmem:[%s4078 + $0x8c] sm:$0x1]
          %v4161 = vsel %vm393, %v3961, %v4160
          %4162 = vst [vmem:[%s4078 + $0x8c] sm:$0x1] %v4161
          %v4163 = vld [vmem:[%s4078 + $0x90] sm:$0xf]
          %v4164 = vsel %vm2127, %v3968, %v4163
          %4165 = vst [vmem:[%s4078 + $0x90] sm:$0xf] %v4164
          %4166 = vst.msk [vmem:[%s4078 + $0x94] sm:$0xf] %vm376, %v3977
          %v4167 = vld [vmem:[%s4078 + $0x98] sm:$0x1]
          %v4168 = vsel %vm393, %v3978, %v4167
          %4169 = vst [vmem:[%s4078 + $0x98] sm:$0x1] %v4168
          %v4170 = vld [vmem:[%s4078 + $0x9c] sm:$0xf]
          %v4171 = vsel %vm2127, %v3985, %v4170
          %4172 = vst [vmem:[%s4078 + $0x9c] sm:$0xf] %v4171
          %4173 = vst.msk [vmem:[%s4078 + $0xa0] sm:$0xf] %vm376, %v3994
          %v4174 = vld [vmem:[%s4078 + $0xa4] sm:$0x1]
          %v4175 = vsel %vm393, %v3995, %v4174
          %4176 = vst [vmem:[%s4078 + $0xa4] sm:$0x1] %v4175
          %v4177 = vld [vmem:[%s4078 + $0xa8] sm:$0xf]
          %v4178 = vsel %vm2127, %v4002, %v4177
          %4179 = vst [vmem:[%s4078 + $0xa8] sm:$0xf] %v4178
          %4180 = vst.msk [vmem:[%s4078 + $0xac] sm:$0xf] %vm376, %v4011
          %v4181 = vld [vmem:[%s4078 + $0xb0] sm:$0x1]
          %v4182 = vsel %vm393, %v4012, %v4181
          %4183 = vst [vmem:[%s4078 + $0xb0] sm:$0x1] %v4182
          %v4184 = vld [vmem:[%s4078 + $0xb4] sm:$0xf]
          %v4185 = vsel %vm2127, %v4019, %v4184
          %4186 = vst [vmem:[%s4078 + $0xb4] sm:$0xf] %v4185
          %4187 = vst.msk [vmem:[%s4078 + $0xb8] sm:$0xf] %vm376, %v4028
          %v4188 = vld [vmem:[%s4078 + $0xbc] sm:$0x1]
          %v4189 = vsel %vm393, %v4029, %v4188
          %4190 = vst [vmem:[%s4078 + $0xbc] sm:$0x1] %v4189
          %s4191 = sadd.s32 %s2246, 1
          %s4192 = smul.u32 %s4191, 48
          %s4193 = smul.addr %s4192, 4
          %s4194 = scalar_lea.vmem [#allocation7], %s4193
          %v4195 = vld [vmem:[%s4194] sm:$0xff]
          %v4196 = vld [vmem:[%s4194 + $0x8] sm:$0xff]
          %v4197 = vld [vmem:[%s4194 + $0x10] sm:$0xff]
          %v4198 = vld [vmem:[%s4194 + $0x18] sm:$0xff]
          %v4199 = vld [vmem:[%s4194 + $0x20] sm:$0xff]
          %v4200 = vld [vmem:[%s4194 + $0x28] sm:$0xff]
          %v4201 = vld [vmem:[%s4194 + $0x30] sm:$0xff]
          %v4202 = vld [vmem:[%s4194 + $0x38] sm:$0xff]
          %v4203 = vld [vmem:[%s4194 + $0x40] sm:$0xff]
          %v4204 = vld [vmem:[%s4194 + $0x48] sm:$0xff]
          %v4205 = vld [vmem:[%s4194 + $0x50] sm:$0xff]
          %v4206 = vld [vmem:[%s4194 + $0x58] sm:$0xff]
          %v4207 = vld [vmem:[%s4194 + $0x60] sm:$0xff]
          %v4208 = vld [vmem:[%s4194 + $0x68] sm:$0xff]
          %v4209 = vld [vmem:[%s4194 + $0x70] sm:$0xff]
          %v4210 = vld [vmem:[%s4194 + $0x78] sm:$0xff]
          %v4211 = vld [vmem:[%s4194 + $0x80] sm:$0xff]
          %v4212 = vld [vmem:[%s4194 + $0x88] sm:$0xff]
          %v4213 = vld [vmem:[%s4194 + $0x90] sm:$0xff]
          %v4214 = vld [vmem:[%s4194 + $0x98] sm:$0xff]
          %v4215 = vld [vmem:[%s4194 + $0xa0] sm:$0xff]
          %v4216 = vld [vmem:[%s4194 + $0xa8] sm:$0xff]
          %v4217 = vld [vmem:[%s4194 + $0xb0] sm:$0xff]
          %v4218 = vld [vmem:[%s4194 + $0xb8] sm:$0xff]
          %s4219 = scalar_lea.vmem [#allocation8], %s4191
          %v4220 = vld [vmem:[%s4219] sm:$0x1]
          %s4221 = scalar_lea.vmem [#allocation2], 216
          %v4222 = vld [vmem:[%s4221] sm:$0xf]
          %v4223 = vld [vmem:[%s4221 + $0x4] sm:$0xf]
          %v4224 = vld [vmem:[%s4221 + $0xc] sm:$0xf]
          %v4225 = vld [vmem:[%s4221 + $0x10] sm:$0xf]
          %v4226 = vld [vmem:[%s4221 + $0x18] sm:$0xf]
          %v4227 = vld [vmem:[%s4221 + $0x1c] sm:$0xf]
          %v4228 = vld [vmem:[%s4221 + $0x24] sm:$0xf]
          %v4229 = vld [vmem:[%s4221 + $0x28] sm:$0xf]
          %v4230 = vld [vmem:[%s4221 + $0x30] sm:$0xf]
          %v4231 = vld [vmem:[%s4221 + $0x34] sm:$0xf]
          %v4232 = vld [vmem:[%s4221 + $0x3c] sm:$0xf]
          %v4233 = vld [vmem:[%s4221 + $0x40] sm:$0xf]
          %v4234 = vld [vmem:[%s4221 + $0x48] sm:$0xf]
          %v4235 = vld [vmem:[%s4221 + $0x4c] sm:$0xf]
          %v4236 = vld [vmem:[%s4221 + $0x54] sm:$0xf]
          %v4237 = vld [vmem:[%s4221 + $0x58] sm:$0xf]
          %v4238 = vld [vmem:[%s4221 + $0x60] sm:$0xf]
          %v4239 = vld [vmem:[%s4221 + $0x64] sm:$0xf]
          %v4240 = vld [vmem:[%s4221 + $0x6c] sm:$0xf]
          %v4241 = vld [vmem:[%s4221 + $0x70] sm:$0xf]
          %v4242 = vld [vmem:[%s4221 + $0x78] sm:$0xf]
          %v4243 = vld [vmem:[%s4221 + $0x7c] sm:$0xf]
          %v4244 = vld [vmem:[%s4221 + $0x84] sm:$0xf]
          %v4245 = vld [vmem:[%s4221 + $0x88] sm:$0xf]
          %v4246 = vld [vmem:[%s4221 + $0x90] sm:$0xf]
          %v4247 = vld [vmem:[%s4221 + $0x94] sm:$0xf]
          %v4248 = vld [vmem:[%s4221 + $0x9c] sm:$0xf]
          %v4249 = vld [vmem:[%s4221 + $0xa0] sm:$0xf]
          %v4250 = vld [vmem:[%s4221 + $0xa8] sm:$0xf]
          %v4251 = vld [vmem:[%s4221 + $0xac] sm:$0xf]
          %v4252 = vld [vmem:[%s4221 + $0xb4] sm:$0xf]
          %v4253 = vld [vmem:[%s4221 + $0xb8] sm:$0xf]
          %v4254 = vld [vmem:[%s4221 + $0xc0] sm:$0xf]
          %v4255 = vld [vmem:[%s4221 + $0xc4] sm:$0xf]
          %v4256 = vld [vmem:[%s4221 + $0xcc] sm:$0xf]
          %v4257 = vld [vmem:[%s4221 + $0xd0] sm:$0xf]
          %v4258 = vld [vmem:[%s4221 + $0x8] sm:$0x1]
          %v4259 = vld [vmem:[%s4221 + $0x14] sm:$0x1]
          %v4260 = vld [vmem:[%s4221 + $0x20] sm:$0x1]
          %v4261 = vld [vmem:[%s4221 + $0x2c] sm:$0x1]
          %v4262 = vld [vmem:[%s4221 + $0x38] sm:$0x1]
          %v4263 = vld [vmem:[%s4221 + $0x44] sm:$0x1]
          %v4264 = vld [vmem:[%s4221 + $0x50] sm:$0x1]
          %v4265 = vld [vmem:[%s4221 + $0x5c] sm:$0x1]
          %v4266 = vld [vmem:[%s4221 + $0x68] sm:$0x1]
          %v4267 = vld [vmem:[%s4221 + $0x74] sm:$0x1]
          %v4268 = vld [vmem:[%s4221 + $0x80] sm:$0x1]
          %v4269 = vld [vmem:[%s4221 + $0x8c] sm:$0x1]
          %v4270 = vld [vmem:[%s4221 + $0x98] sm:$0x1]
          %v4271 = vld [vmem:[%s4221 + $0xa4] sm:$0x1]
          %v4272 = vld [vmem:[%s4221 + $0xb0] sm:$0x1]
          %v4273 = vld [vmem:[%s4221 + $0xbc] sm:$0x1]
          %v4274 = vld [vmem:[%s4221 + $0xc8] sm:$0x1]
          %v4275 = vld [vmem:[%s4221 + $0xd4] sm:$0x1]
          %v4276 = vld [vmem:[%s4221] sm:$0xe]
          %v4277 = vld [vmem:[%s4221 + $0xc] sm:$0xe]
          %v4278 = vld [vmem:[%s4221 + $0x18] sm:$0xe]
          %v4279 = vld [vmem:[%s4221 + $0x24] sm:$0xe]
          %v4280 = vld [vmem:[%s4221 + $0x30] sm:$0xe]
          %v4281 = vld [vmem:[%s4221 + $0x3c] sm:$0xe]
          %v4282 = vld [vmem:[%s4221 + $0x48] sm:$0xe]
          %v4283 = vld [vmem:[%s4221 + $0x54] sm:$0xe]
          %v4284 = vld [vmem:[%s4221 + $0x60] sm:$0xe]
          %v4285 = vld [vmem:[%s4221 + $0x6c] sm:$0xe]
          %v4286 = vld [vmem:[%s4221 + $0x78] sm:$0xe]
          %v4287 = vld [vmem:[%s4221 + $0x84] sm:$0xe]
          %v4288 = vld [vmem:[%s4221 + $0x90] sm:$0xe]
          %v4289 = vld [vmem:[%s4221 + $0x9c] sm:$0xe]
          %v4290 = vld [vmem:[%s4221 + $0xa8] sm:$0xe]
          %v4291 = vld [vmem:[%s4221 + $0xb4] sm:$0xe]
          %v4292 = vld [vmem:[%s4221 + $0xc0] sm:$0xe]
          %v4293 = vld [vmem:[%s4221 + $0xcc] sm:$0xe]
          %v4330 = vunpack.c.l.b16 %v4222
          %v4331 = vunpack.c.l.b16 %v4223
          %v4332 = vunpack.c.l.b16 %v4224
          %v4333 = vunpack.c.l.b16 %v4225
          %v4334 = vunpack.c.l.b16 %v4226
          %v4335 = vunpack.c.l.b16 %v4227
          %v4336 = vunpack.c.l.b16 %v4228
          %v4337 = vunpack.c.l.b16 %v4229
          %v4338 = vunpack.c.l.b16 %v4230
          %v4339 = vunpack.c.l.b16 %v4231
          %v4340 = vunpack.c.l.b16 %v4232
          %v4341 = vunpack.c.l.b16 %v4233
          %v4342 = vunpack.c.l.b16 %v4234
          %v4343 = vunpack.c.l.b16 %v4235
          %v4344 = vunpack.c.l.b16 %v4236
          %v4345 = vunpack.c.l.b16 %v4237
          %v4346 = vunpack.c.l.b16 %v4238
          %v4347 = vunpack.c.l.b16 %v4239
          %v4348 = vunpack.c.l.b16 %v4240
          %v4349 = vunpack.c.l.b16 %v4241
          %v4350 = vunpack.c.l.b16 %v4242
          %v4351 = vunpack.c.l.b16 %v4243
          %v4352 = vunpack.c.l.b16 %v4244
          %v4353 = vunpack.c.l.b16 %v4245
          %v4354 = vunpack.c.l.b16 %v4246
          %v4355 = vunpack.c.l.b16 %v4247
          %v4356 = vunpack.c.l.b16 %v4248
          %v4357 = vunpack.c.l.b16 %v4249
          %v4358 = vunpack.c.l.b16 %v4250
          %v4359 = vunpack.c.l.b16 %v4251
          %v4360 = vunpack.c.l.b16 %v4252
          %v4361 = vunpack.c.l.b16 %v4253
          %v4362 = vunpack.c.l.b16 %v4254
          %v4363 = vunpack.c.l.b16 %v4255
          %v4364 = vunpack.c.l.b16 %v4256
          %v4365 = vunpack.c.l.b16 %v4257
          %v4366 = vpack.c.b16 %v4331, %v4330
          %v4367 = vpack.c.b16 %v4333, %v4332
          %v4368 = vpack.c.b16 %v4335, %v4334
          %v4369 = vpack.c.b16 %v4337, %v4336
          %v4370 = vpack.c.b16 %v4339, %v4338
          %v4371 = vpack.c.b16 %v4341, %v4340
          %v4372 = vpack.c.b16 %v4343, %v4342
          %v4373 = vpack.c.b16 %v4345, %v4344
          %v4374 = vpack.c.b16 %v4347, %v4346
          %v4375 = vpack.c.b16 %v4349, %v4348
          %v4376 = vpack.c.b16 %v4351, %v4350
          %v4377 = vpack.c.b16 %v4353, %v4352
          %v4378 = vpack.c.b16 %v4355, %v4354
          %v4379 = vpack.c.b16 %v4357, %v4356
          %v4380 = vpack.c.b16 %v4359, %v4358
          %v4381 = vpack.c.b16 %v4361, %v4360
          %v4382 = vpack.c.b16 %v4363, %v4362
          %v4383 = vpack.c.b16 %v4365, %v4364
          %v4402 = vunpack.c.l.b16 %v4258
          %v4403 = vunpack.c.l.b16 %v4259
          %v4404 = vunpack.c.l.b16 %v4260
          %v4405 = vunpack.c.l.b16 %v4261
          %v4406 = vunpack.c.l.b16 %v4262
          %v4407 = vunpack.c.l.b16 %v4263
          %v4408 = vunpack.c.l.b16 %v4264
          %v4409 = vunpack.c.l.b16 %v4265
          %v4410 = vunpack.c.l.b16 %v4266
          %v4411 = vunpack.c.l.b16 %v4267
          %v4412 = vunpack.c.l.b16 %v4268
          %v4413 = vunpack.c.l.b16 %v4269
          %v4414 = vunpack.c.l.b16 %v4270
          %v4415 = vunpack.c.l.b16 %v4271
          %v4416 = vunpack.c.l.b16 %v4272
          %v4417 = vunpack.c.l.b16 %v4273
          %v4418 = vunpack.c.l.b16 %v4274
          %v4419 = vunpack.c.l.b16 %v4275
          %v4420 = vpack.c.b16 %v4402, %v4402
          %v4421 = vpack.c.b16 %v4403, %v4403
          %v4422 = vpack.c.b16 %v4404, %v4404
          %v4423 = vpack.c.b16 %v4405, %v4405
          %v4424 = vpack.c.b16 %v4406, %v4406
          %v4425 = vpack.c.b16 %v4407, %v4407
          %v4426 = vpack.c.b16 %v4408, %v4408
          %v4427 = vpack.c.b16 %v4409, %v4409
          %v4428 = vpack.c.b16 %v4410, %v4410
          %v4429 = vpack.c.b16 %v4411, %v4411
          %v4430 = vpack.c.b16 %v4412, %v4412
          %v4431 = vpack.c.b16 %v4413, %v4413
          %v4432 = vpack.c.b16 %v4414, %v4414
          %v4433 = vpack.c.b16 %v4415, %v4415
          %v4434 = vpack.c.b16 %v4416, %v4416
          %v4435 = vpack.c.b16 %v4417, %v4417
          %v4436 = vpack.c.b16 %v4418, %v4418
          %v4437 = vpack.c.b16 %v4419, %v4419
          %v4439 = vshrl.u32 %v4366, 16
          %v4441 = vshll.u32 %v4366, 16
          %v4443 = vrot.slane %v4441, 1
          %v4444 = vor.u32 %v4439, %v4443
          %v4446 = vshll.u32 %v4420, 16
          %v4448 = vrot.slane %v4446, 1
          %v4449 = vsel %vm2492, %v4444, %v4448
          %v4451 = vshrl.u32 %v4367, 16
          %v4453 = vshll.u32 %v4367, 16
          %v4455 = vrot.slane %v4453, 1
          %v4456 = vor.u32 %v4451, %v4455
          %v4458 = vshll.u32 %v4421, 16
          %v4460 = vrot.slane %v4458, 1
          %v4461 = vsel %vm2492, %v4456, %v4460
          %v4463 = vshrl.u32 %v4368, 16
          %v4465 = vshll.u32 %v4368, 16
          %v4467 = vrot.slane %v4465, 1
          %v4468 = vor.u32 %v4463, %v4467
          %v4470 = vshll.u32 %v4422, 16
          %v4472 = vrot.slane %v4470, 1
          %v4473 = vsel %vm2492, %v4468, %v4472
          %v4475 = vshrl.u32 %v4369, 16
          %v4477 = vshll.u32 %v4369, 16
          %v4479 = vrot.slane %v4477, 1
          %v4480 = vor.u32 %v4475, %v4479
          %v4482 = vshll.u32 %v4423, 16
          %v4484 = vrot.slane %v4482, 1
          %v4485 = vsel %vm2492, %v4480, %v4484
          %v4487 = vshrl.u32 %v4370, 16
          %v4489 = vshll.u32 %v4370, 16
          %v4491 = vrot.slane %v4489, 1
          %v4492 = vor.u32 %v4487, %v4491
          %v4494 = vshll.u32 %v4424, 16
          %v4496 = vrot.slane %v4494, 1
          %v4497 = vsel %vm2492, %v4492, %v4496
          %v4499 = vshrl.u32 %v4371, 16
          %v4501 = vshll.u32 %v4371, 16
          %v4503 = vrot.slane %v4501, 1
          %v4504 = vor.u32 %v4499, %v4503
          %v4506 = vshll.u32 %v4425, 16
          %v4508 = vrot.slane %v4506, 1
          %v4509 = vsel %vm2492, %v4504, %v4508
          %v4511 = vshrl.u32 %v4372, 16
          %v4513 = vshll.u32 %v4372, 16
          %v4515 = vrot.slane %v4513, 1
          %v4516 = vor.u32 %v4511, %v4515
          %v4518 = vshll.u32 %v4426, 16
          %v4520 = vrot.slane %v4518, 1
          %v4521 = vsel %vm2492, %v4516, %v4520
          %v4523 = vshrl.u32 %v4373, 16
          %v4525 = vshll.u32 %v4373, 16
          %v4527 = vrot.slane %v4525, 1
          %v4528 = vor.u32 %v4523, %v4527
          %v4530 = vshll.u32 %v4427, 16
          %v4532 = vrot.slane %v4530, 1
          %v4533 = vsel %vm2492, %v4528, %v4532
          %v4535 = vshrl.u32 %v4374, 16
          %v4537 = vshll.u32 %v4374, 16
          %v4539 = vrot.slane %v4537, 1
          %v4540 = vor.u32 %v4535, %v4539
          %v4542 = vshll.u32 %v4428, 16
          %v4544 = vrot.slane %v4542, 1
          %v4545 = vsel %vm2492, %v4540, %v4544
          %v4547 = vshrl.u32 %v4375, 16
          %v4549 = vshll.u32 %v4375, 16
          %v4551 = vrot.slane %v4549, 1
          %v4552 = vor.u32 %v4547, %v4551
          %v4554 = vshll.u32 %v4429, 16
          %v4556 = vrot.slane %v4554, 1
          %v4557 = vsel %vm2492, %v4552, %v4556
          %v4559 = vshrl.u32 %v4376, 16
          %v4561 = vshll.u32 %v4376, 16
          %v4563 = vrot.slane %v4561, 1
          %v4564 = vor.u32 %v4559, %v4563
          %v4566 = vshll.u32 %v4430, 16
          %v4568 = vrot.slane %v4566, 1
          %v4569 = vsel %vm2492, %v4564, %v4568
          %v4571 = vshrl.u32 %v4377, 16
          %v4573 = vshll.u32 %v4377, 16
          %v4575 = vrot.slane %v4573, 1
          %v4576 = vor.u32 %v4571, %v4575
          %v4578 = vshll.u32 %v4431, 16
          %v4580 = vrot.slane %v4578, 1
          %v4581 = vsel %vm2492, %v4576, %v4580
          %v4583 = vshrl.u32 %v4378, 16
          %v4585 = vshll.u32 %v4378, 16
          %v4587 = vrot.slane %v4585, 1
          %v4588 = vor.u32 %v4583, %v4587
          %v4590 = vshll.u32 %v4432, 16
          %v4592 = vrot.slane %v4590, 1
          %v4593 = vsel %vm2492, %v4588, %v4592
          %v4595 = vshrl.u32 %v4379, 16
          %v4597 = vshll.u32 %v4379, 16
          %v4599 = vrot.slane %v4597, 1
          %v4600 = vor.u32 %v4595, %v4599
          %v4602 = vshll.u32 %v4433, 16
          %v4604 = vrot.slane %v4602, 1
          %v4605 = vsel %vm2492, %v4600, %v4604
          %v4607 = vshrl.u32 %v4380, 16
          %v4609 = vshll.u32 %v4380, 16
          %v4611 = vrot.slane %v4609, 1
          %v4612 = vor.u32 %v4607, %v4611
          %v4614 = vshll.u32 %v4434, 16
          %v4616 = vrot.slane %v4614, 1
          %v4617 = vsel %vm2492, %v4612, %v4616
          %v4619 = vshrl.u32 %v4381, 16
          %v4621 = vshll.u32 %v4381, 16
          %v4623 = vrot.slane %v4621, 1
          %v4624 = vor.u32 %v4619, %v4623
          %v4626 = vshll.u32 %v4435, 16
          %v4628 = vrot.slane %v4626, 1
          %v4629 = vsel %vm2492, %v4624, %v4628
          %v4631 = vshrl.u32 %v4382, 16
          %v4633 = vshll.u32 %v4382, 16
          %v4635 = vrot.slane %v4633, 1
          %v4636 = vor.u32 %v4631, %v4635
          %v4638 = vshll.u32 %v4436, 16
          %v4640 = vrot.slane %v4638, 1
          %v4641 = vsel %vm2492, %v4636, %v4640
          %v4643 = vshrl.u32 %v4383, 16
          %v4645 = vshll.u32 %v4383, 16
          %v4647 = vrot.slane %v4645, 1
          %v4648 = vor.u32 %v4643, %v4647
          %v4650 = vshll.u32 %v4437, 16
          %v4652 = vrot.slane %v4650, 1
          %v4653 = vsel %vm2492, %v4648, %v4652
          %4654 = vrot.lane.b32.xlu0 %v4449, 64
          %v4655 = vpop.permute.xlu0 %4654
          %4656 = vrot.lane.b32.xlu0 %v4461, 64
          %v4657 = vpop.permute.xlu0 %4656
          %4658 = vrot.lane.b32.xlu0 %v4473, 64
          %v4659 = vpop.permute.xlu0 %4658
          %4660 = vrot.lane.b32.xlu0 %v4485, 64
          %v4661 = vpop.permute.xlu0 %4660
          %4662 = vrot.lane.b32.xlu0 %v4497, 64
          %v4663 = vpop.permute.xlu0 %4662
          %4664 = vrot.lane.b32.xlu0 %v4509, 64
          %v4665 = vpop.permute.xlu0 %4664
          %4666 = vrot.lane.b32.xlu0 %v4521, 64
          %v4667 = vpop.permute.xlu0 %4666
          %4668 = vrot.lane.b32.xlu0 %v4533, 64
          %v4669 = vpop.permute.xlu0 %4668
          %4670 = vrot.lane.b32.xlu0 %v4545, 64
          %v4671 = vpop.permute.xlu0 %4670
          %4672 = vrot.lane.b32.xlu0 %v4557, 64
          %v4673 = vpop.permute.xlu0 %4672
          %4674 = vrot.lane.b32.xlu0 %v4569, 64
          %v4675 = vpop.permute.xlu0 %4674
          %4676 = vrot.lane.b32.xlu0 %v4581, 64
          %v4677 = vpop.permute.xlu0 %4676
          %4678 = vrot.lane.b32.xlu0 %v4593, 64
          %v4679 = vpop.permute.xlu0 %4678
          %4680 = vrot.lane.b32.xlu0 %v4605, 64
          %v4681 = vpop.permute.xlu0 %4680
          %4682 = vrot.lane.b32.xlu0 %v4617, 64
          %v4683 = vpop.permute.xlu0 %4682
          %4684 = vrot.lane.b32.xlu0 %v4629, 64
          %v4685 = vpop.permute.xlu0 %4684
          %4686 = vrot.lane.b32.xlu0 %v4641, 64
          %v4687 = vpop.permute.xlu0 %4686
          %4688 = vrot.lane.b32.xlu0 %v4653, 64
          %v4689 = vpop.permute.xlu0 %4688
          %v4708 = vunpack.c.l.b16 %v4276
          %v4709 = vunpack.c.l.b16 %v4277
          %v4710 = vunpack.c.l.b16 %v4278
          %v4711 = vunpack.c.l.b16 %v4279
          %v4712 = vunpack.c.l.b16 %v4280
          %v4713 = vunpack.c.l.b16 %v4281
          %v4714 = vunpack.c.l.b16 %v4282
          %v4715 = vunpack.c.l.b16 %v4283
          %v4716 = vunpack.c.l.b16 %v4284
          %v4717 = vunpack.c.l.b16 %v4285
          %v4718 = vunpack.c.l.b16 %v4286
          %v4719 = vunpack.c.l.b16 %v4287
          %v4720 = vunpack.c.l.b16 %v4288
          %v4721 = vunpack.c.l.b16 %v4289
          %v4722 = vunpack.c.l.b16 %v4290
          %v4723 = vunpack.c.l.b16 %v4291
          %v4724 = vunpack.c.l.b16 %v4292
          %v4725 = vunpack.c.l.b16 %v4293
          %v4726 = vpack.c.b16 %v4331, %v4708
          %v4727 = vpack.c.b16 %v4333, %v4709
          %v4728 = vpack.c.b16 %v4335, %v4710
          %v4729 = vpack.c.b16 %v4337, %v4711
          %v4730 = vpack.c.b16 %v4339, %v4712
          %v4731 = vpack.c.b16 %v4341, %v4713
          %v4732 = vpack.c.b16 %v4343, %v4714
          %v4733 = vpack.c.b16 %v4345, %v4715
          %v4734 = vpack.c.b16 %v4347, %v4716
          %v4735 = vpack.c.b16 %v4349, %v4717
          %v4736 = vpack.c.b16 %v4351, %v4718
          %v4737 = vpack.c.b16 %v4353, %v4719
          %v4738 = vpack.c.b16 %v4355, %v4720
          %v4739 = vpack.c.b16 %v4357, %v4721
          %v4740 = vpack.c.b16 %v4359, %v4722
          %v4741 = vpack.c.b16 %v4361, %v4723
          %v4742 = vpack.c.b16 %v4363, %v4724
          %v4743 = vpack.c.b16 %v4365, %v4725
          %v4744 = vrot.slane %v4726, 1
          %v4745 = vrot.slane %v4420, 1
          %v4746 = vsel %vm2799, %v4744, %v4745
          %v4747 = vrot.slane %v4727, 1
          %v4748 = vrot.slane %v4421, 1
          %v4749 = vsel %vm2799, %v4747, %v4748
          %v4750 = vrot.slane %v4728, 1
          %v4751 = vrot.slane %v4422, 1
          %v4752 = vsel %vm2799, %v4750, %v4751
          %v4753 = vrot.slane %v4729, 1
          %v4754 = vrot.slane %v4423, 1
          %v4755 = vsel %vm2799, %v4753, %v4754
          %v4756 = vrot.slane %v4730, 1
          %v4757 = vrot.slane %v4424, 1
          %v4758 = vsel %vm2799, %v4756, %v4757
          %v4759 = vrot.slane %v4731, 1
          %v4760 = vrot.slane %v4425, 1
          %v4761 = vsel %vm2799, %v4759, %v4760
          %v4762 = vrot.slane %v4732, 1
          %v4763 = vrot.slane %v4426, 1
          %v4764 = vsel %vm2799, %v4762, %v4763
          %v4765 = vrot.slane %v4733, 1
          %v4766 = vrot.slane %v4427, 1
          %v4767 = vsel %vm2799, %v4765, %v4766
          %v4768 = vrot.slane %v4734, 1
          %v4769 = vrot.slane %v4428, 1
          %v4770 = vsel %vm2799, %v4768, %v4769
          %v4771 = vrot.slane %v4735, 1
          %v4772 = vrot.slane %v4429, 1
          %v4773 = vsel %vm2799, %v4771, %v4772
          %v4774 = vrot.slane %v4736, 1
          %v4775 = vrot.slane %v4430, 1
          %v4776 = vsel %vm2799, %v4774, %v4775
          %v4777 = vrot.slane %v4737, 1
          %v4778 = vrot.slane %v4431, 1
          %v4779 = vsel %vm2799, %v4777, %v4778
          %v4780 = vrot.slane %v4738, 1
          %v4781 = vrot.slane %v4432, 1
          %v4782 = vsel %vm2799, %v4780, %v4781
          %v4783 = vrot.slane %v4739, 1
          %v4784 = vrot.slane %v4433, 1
          %v4785 = vsel %vm2799, %v4783, %v4784
          %v4786 = vrot.slane %v4740, 1
          %v4787 = vrot.slane %v4434, 1
          %v4788 = vsel %vm2799, %v4786, %v4787
          %v4789 = vrot.slane %v4741, 1
          %v4790 = vrot.slane %v4435, 1
          %v4791 = vsel %vm2799, %v4789, %v4790
          %v4792 = vrot.slane %v4742, 1
          %v4793 = vrot.slane %v4436, 1
          %v4794 = vsel %vm2799, %v4792, %v4793
          %v4795 = vrot.slane %v4743, 1
          %v4796 = vrot.slane %v4437, 1
          %v4797 = vsel %vm2799, %v4795, %v4796
          %v4799 = vsel %vm2854, %v4366, %v4655
          %v4802 = vsel %vm2854, %v4367, %v4657
          %v4805 = vsel %vm2854, %v4368, %v4659
          %v4808 = vsel %vm2854, %v4369, %v4661
          %v4811 = vsel %vm2854, %v4370, %v4663
          %v4814 = vsel %vm2854, %v4371, %v4665
          %v4817 = vsel %vm2854, %v4372, %v4667
          %v4820 = vsel %vm2854, %v4373, %v4669
          %v4823 = vsel %vm2854, %v4374, %v4671
          %v4826 = vsel %vm2854, %v4375, %v4673
          %v4829 = vsel %vm2854, %v4376, %v4675
          %v4832 = vsel %vm2854, %v4377, %v4677
          %v4835 = vsel %vm2854, %v4378, %v4679
          %v4838 = vsel %vm2854, %v4379, %v4681
          %v4841 = vsel %vm2854, %v4380, %v4683
          %v4844 = vsel %vm2854, %v4381, %v4685
          %v4847 = vsel %vm2854, %v4382, %v4687
          %v4850 = vsel %vm2854, %v4383, %v4689
          %v4876 = vunpack.c.l.b16 %v4195
          %v4877 = vunpack.c.h.b16 %v4195
          %v4878 = vunpack.c.l.b16 %v4196
          %v4879 = vunpack.c.h.b16 %v4196
          %v4880 = vunpack.c.l.b16 %v4197
          %v4881 = vunpack.c.h.b16 %v4197
          %v4882 = vunpack.c.l.b16 %v4198
          %v4883 = vunpack.c.h.b16 %v4198
          %v4884 = vunpack.c.l.b16 %v4199
          %v4885 = vunpack.c.h.b16 %v4199
          %v4886 = vunpack.c.l.b16 %v4200
          %v4887 = vunpack.c.h.b16 %v4200
          %v4888 = vunpack.c.l.b16 %v4201
          %v4889 = vunpack.c.h.b16 %v4201
          %v4890 = vunpack.c.l.b16 %v4202
          %v4891 = vunpack.c.h.b16 %v4202
          %v4892 = vunpack.c.l.b16 %v4203
          %v4893 = vunpack.c.h.b16 %v4203
          %v4894 = vunpack.c.l.b16 %v4204
          %v4895 = vunpack.c.h.b16 %v4204
          %v4896 = vunpack.c.l.b16 %v4205
          %v4897 = vunpack.c.h.b16 %v4205
          %v4898 = vunpack.c.l.b16 %v4206
          %v4899 = vunpack.c.h.b16 %v4206
          %v4900 = vunpack.c.l.b16 %v4207
          %v4901 = vunpack.c.h.b16 %v4207
          %v4902 = vunpack.c.l.b16 %v4208
          %v4903 = vunpack.c.h.b16 %v4208
          %v4904 = vunpack.c.l.b16 %v4209
          %v4905 = vunpack.c.h.b16 %v4209
          %v4906 = vunpack.c.l.b16 %v4210
          %v4907 = vunpack.c.h.b16 %v4210
          %v4908 = vunpack.c.l.b16 %v4211
          %v4909 = vunpack.c.h.b16 %v4211
          %v4910 = vunpack.c.l.b16 %v4212
          %v4911 = vunpack.c.h.b16 %v4212
          %v4912 = vunpack.c.l.b16 %v4213
          %v4913 = vunpack.c.h.b16 %v4213
          %v4914 = vunpack.c.l.b16 %v4214
          %v4915 = vunpack.c.h.b16 %v4214
          %v4916 = vunpack.c.l.b16 %v4215
          %v4917 = vunpack.c.h.b16 %v4215
          %v4918 = vunpack.c.l.b16 %v4216
          %v4919 = vunpack.c.h.b16 %v4216
          %v4920 = vunpack.c.l.b16 %v4217
          %v4921 = vunpack.c.h.b16 %v4217
          %v4922 = vunpack.c.l.b16 %v4218
          %v4923 = vunpack.c.h.b16 %v4218
          %v4924 = vpack.c.b16 %v4878, %v4876
          %v4925 = vpack.c.b16 %v4879, %v4877
          %v4926 = vpack.c.b16 %v4882, %v4880
          %v4927 = vpack.c.b16 %v4883, %v4881
          %v4928 = vpack.c.b16 %v4886, %v4884
          %v4929 = vpack.c.b16 %v4887, %v4885
          %v4930 = vpack.c.b16 %v4890, %v4888
          %v4931 = vpack.c.b16 %v4891, %v4889
          %v4932 = vpack.c.b16 %v4894, %v4892
          %v4933 = vpack.c.b16 %v4895, %v4893
          %v4934 = vpack.c.b16 %v4898, %v4896
          %v4935 = vpack.c.b16 %v4899, %v4897
          %v4936 = vpack.c.b16 %v4902, %v4900
          %v4937 = vpack.c.b16 %v4903, %v4901
          %v4938 = vpack.c.b16 %v4906, %v4904
          %v4939 = vpack.c.b16 %v4907, %v4905
          %v4940 = vpack.c.b16 %v4910, %v4908
          %v4941 = vpack.c.b16 %v4911, %v4909
          %v4942 = vpack.c.b16 %v4914, %v4912
          %v4943 = vpack.c.b16 %v4915, %v4913
          %v4944 = vpack.c.b16 %v4918, %v4916
          %v4945 = vpack.c.b16 %v4919, %v4917
          %v4946 = vpack.c.b16 %v4922, %v4920
          %v4947 = vpack.c.b16 %v4923, %v4921
          %v4973 = vsel %vm2854, %v4746, 0
          %v4976 = vsel %vm2854, %v4749, 0
          %v4979 = vsel %vm2854, %v4752, 0
          %v4982 = vsel %vm2854, %v4755, 0
          %v4985 = vsel %vm2854, %v4758, 0
          %v4988 = vsel %vm2854, %v4761, 0
          %v4991 = vsel %vm2854, %v4764, 0
          %v4994 = vsel %vm2854, %v4767, 0
          %v4997 = vsel %vm2854, %v4770, 0
          %v5000 = vsel %vm2854, %v4773, 0
          %v5003 = vsel %vm2854, %v4776, 0
          %v5006 = vsel %vm2854, %v4779, 0
          %v5009 = vsel %vm2854, %v4782, 0
          %v5012 = vsel %vm2854, %v4785, 0
          %v5015 = vsel %vm2854, %v4788, 0
          %v5018 = vsel %vm2854, %v4791, 0
          %v5021 = vsel %vm2854, %v4794, 0
          %v5024 = vsel %vm2854, %v4797, 0
          %5026 = vmatpush.bf16.msra.mxu0 %v4938
          %5027 = vmatpush.bf16.msra.mxu0 %v4936
          %5028 = vmatpush.bf16.msra.mxu0 %v4934
          %5029 = vmatpush.bf16.msra.mxu0 %v4932
          %5030 = vmatpush.bf16.msra.mxu0 %v4930
          %5031 = vmatpush.bf16.msra.mxu0 %v4928
          %5032 = vmatpush.bf16.msra.mxu0 %v4926
          %5033 = vmatpush.bf16.msra.mxu0 %v4924
          %5034 = vmatmul.bf16.gmra.mxu0 %v4799
          %v5035 = vpop.f32.mrf.mxu0
          %v5036 = vadd.f32 0.0, %v5035
          %v5037 = vpop.f32.mrf.mxu0
          %v5038 = vadd.f32 0.0, %v5037
          %5039 = vmatmul.bf16.gmra.mxu0 %v4802
          %v5040 = vpop.f32.mrf.mxu0
          %v5041 = vadd.f32 0.0, %v5040
          %v5042 = vpop.f32.mrf.mxu0
          %v5043 = vadd.f32 0.0, %v5042
          %5044 = vmatmul.bf16.gmra.mxu0 %v4805
          %v5045 = vpop.f32.mrf.mxu0
          %v5046 = vadd.f32 0.0, %v5045
          %v5047 = vpop.f32.mrf.mxu0
          %v5048 = vadd.f32 0.0, %v5047
          %5049 = vmatmul.bf16.gmra.mxu0 %v4808
          %v5050 = vpop.f32.mrf.mxu0
          %v5051 = vadd.f32 0.0, %v5050
          %v5052 = vpop.f32.mrf.mxu0
          %v5053 = vadd.f32 0.0, %v5052
          %5054 = vmatmul.bf16.gmra.mxu0 %v4811
          %v5055 = vpop.f32.mrf.mxu0
          %v5056 = vadd.f32 0.0, %v5055
          %v5057 = vpop.f32.mrf.mxu0
          %v5058 = vadd.f32 0.0, %v5057
          %5059 = vmatmul.bf16.gmra.mxu0 %v4814
          %v5060 = vpop.f32.mrf.mxu0
          %v5061 = vadd.f32 0.0, %v5060
          %v5062 = vpop.f32.mrf.mxu0
          %v5063 = vadd.f32 0.0, %v5062
          %5064 = vmatmul.bf16.gmra.mxu0 %v4817
          %v5065 = vpop.f32.mrf.mxu0
          %v5066 = vadd.f32 0.0, %v5065
          %v5067 = vpop.f32.mrf.mxu0
          %v5068 = vadd.f32 0.0, %v5067
          %5069 = vmatmul.bf16.gmra.mxu0 %v4820
          %v5070 = vpop.f32.mrf.mxu0
          %v5071 = vadd.f32 0.0, %v5070
          %v5072 = vpop.f32.mrf.mxu0
          %v5073 = vadd.f32 0.0, %v5072
          %5074 = vmatmul.bf16.gmra.mxu0 %v4823
          %v5075 = vpop.f32.mrf.mxu0
          %v5076 = vadd.f32 0.0, %v5075
          %v5077 = vpop.f32.mrf.mxu0
          %v5078 = vadd.f32 0.0, %v5077
          %5079 = vmatmul.bf16.gmra.mxu0 %v4826
          %v5080 = vpop.f32.mrf.mxu0
          %v5081 = vadd.f32 0.0, %v5080
          %v5082 = vpop.f32.mrf.mxu0
          %v5083 = vadd.f32 0.0, %v5082
          %5084 = vmatmul.bf16.gmra.mxu0 %v4829
          %v5085 = vpop.f32.mrf.mxu0
          %v5086 = vadd.f32 0.0, %v5085
          %v5087 = vpop.f32.mrf.mxu0
          %v5088 = vadd.f32 0.0, %v5087
          %5089 = vmatmul.bf16.gmra.mxu0 %v4832
          %v5090 = vpop.f32.mrf.mxu0
          %v5091 = vadd.f32 0.0, %v5090
          %v5092 = vpop.f32.mrf.mxu0
          %v5093 = vadd.f32 0.0, %v5092
          %5094 = vmatmul.bf16.gmra.mxu0 %v4835
          %v5095 = vpop.f32.mrf.mxu0
          %v5096 = vadd.f32 0.0, %v5095
          %v5097 = vpop.f32.mrf.mxu0
          %v5098 = vadd.f32 0.0, %v5097
          %5099 = vmatmul.bf16.gmra.mxu0 %v4838
          %v5100 = vpop.f32.mrf.mxu0
          %v5101 = vadd.f32 0.0, %v5100
          %v5102 = vpop.f32.mrf.mxu0
          %v5103 = vadd.f32 0.0, %v5102
          %5104 = vmatmul.bf16.gmra.mxu0 %v4841
          %v5105 = vpop.f32.mrf.mxu0
          %v5106 = vadd.f32 0.0, %v5105
          %v5107 = vpop.f32.mrf.mxu0
          %v5108 = vadd.f32 0.0, %v5107
          %5109 = vmatmul.bf16.gmra.mxu0 %v4844
          %v5110 = vpop.f32.mrf.mxu0
          %v5111 = vadd.f32 0.0, %v5110
          %v5112 = vpop.f32.mrf.mxu0
          %v5113 = vadd.f32 0.0, %v5112
          %5114 = vmatmul.bf16.gmra.mxu0 %v4847
          %v5115 = vpop.f32.mrf.mxu0
          %v5116 = vadd.f32 0.0, %v5115
          %v5117 = vpop.f32.mrf.mxu0
          %v5118 = vadd.f32 0.0, %v5117
          %5119 = vmatmul.bf16.gmra.mxu0 %v4850
          %v5120 = vpop.f32.mrf.mxu0
          %v5121 = vpop.f32.mrf.mxu0
          %5122 = vdwg.mxu0
          %5123 = vmatpush.bf16.msra.mxu0 0
          %5124 = vmatpush.bf16.msra.mxu0 0
          %5125 = vmatpush.bf16.msra.mxu0 0
          %5126 = vmatpush.bf16.msra.mxu0 0
          %5127 = vmatpush.bf16.msra.mxu0 %v4946
          %5128 = vmatpush.bf16.msra.mxu0 %v4944
          %5129 = vmatpush.bf16.msra.mxu0 %v4942
          %5130 = vmatpush.bf16.msra.mxu0 %v4940
          %5131 = vmatmul.bf16.gmra.mxu0 %v4973
          %v5132 = vpop.f32.mrf.mxu0
          %v5133 = vadd.f32 %v5036, %v5132
          %v5134 = vpop.f32.mrf.mxu0
          %v5135 = vadd.f32 %v5038, %v5134
          %5136 = vmatmul.bf16.gmra.mxu0 %v4976
          %v5137 = vpop.f32.mrf.mxu0
          %v5138 = vadd.f32 %v5041, %v5137
          %v5139 = vpop.f32.mrf.mxu0
          %v5140 = vadd.f32 %v5043, %v5139
          %5141 = vmatmul.bf16.gmra.mxu0 %v4979
          %v5142 = vpop.f32.mrf.mxu0
          %v5143 = vadd.f32 %v5046, %v5142
          %v5144 = vpop.f32.mrf.mxu0
          %v5145 = vadd.f32 %v5048, %v5144
          %5146 = vmatmul.bf16.gmra.mxu0 %v4982
          %v5147 = vpop.f32.mrf.mxu0
          %v5148 = vadd.f32 %v5051, %v5147
          %v5149 = vpop.f32.mrf.mxu0
          %v5150 = vadd.f32 %v5053, %v5149
          %5151 = vmatmul.bf16.gmra.mxu0 %v4985
          %v5152 = vpop.f32.mrf.mxu0
          %v5153 = vadd.f32 %v5056, %v5152
          %v5154 = vpop.f32.mrf.mxu0
          %v5155 = vadd.f32 %v5058, %v5154
          %5156 = vmatmul.bf16.gmra.mxu0 %v4988
          %v5157 = vpop.f32.mrf.mxu0
          %v5158 = vadd.f32 %v5061, %v5157
          %v5159 = vpop.f32.mrf.mxu0
          %v5160 = vadd.f32 %v5063, %v5159
          %5161 = vmatmul.bf16.gmra.mxu0 %v4991
          %v5162 = vpop.f32.mrf.mxu0
          %v5163 = vadd.f32 %v5066, %v5162
          %v5164 = vpop.f32.mrf.mxu0
          %v5165 = vadd.f32 %v5068, %v5164
          %5166 = vmatmul.bf16.gmra.mxu0 %v4994
          %v5167 = vpop.f32.mrf.mxu0
          %v5168 = vadd.f32 %v5071, %v5167
          %v5169 = vpop.f32.mrf.mxu0
          %v5170 = vadd.f32 %v5073, %v5169
          %5171 = vmatmul.bf16.gmra.mxu0 %v4997
          %v5172 = vpop.f32.mrf.mxu0
          %v5173 = vadd.f32 %v5076, %v5172
          %v5174 = vpop.f32.mrf.mxu0
          %v5175 = vadd.f32 %v5078, %v5174
          %5176 = vmatmul.bf16.gmra.mxu0 %v5000
          %v5177 = vpop.f32.mrf.mxu0
          %v5178 = vadd.f32 %v5081, %v5177
          %v5179 = vpop.f32.mrf.mxu0
          %v5180 = vadd.f32 %v5083, %v5179
          %5181 = vmatmul.bf16.gmra.mxu0 %v5003
          %v5182 = vpop.f32.mrf.mxu0
          %v5183 = vadd.f32 %v5086, %v5182
          %v5184 = vpop.f32.mrf.mxu0
          %v5185 = vadd.f32 %v5088, %v5184
          %5186 = vmatmul.bf16.gmra.mxu0 %v5006
          %v5187 = vpop.f32.mrf.mxu0
          %v5188 = vadd.f32 %v5091, %v5187
          %v5189 = vpop.f32.mrf.mxu0
          %v5190 = vadd.f32 %v5093, %v5189
          %5191 = vmatmul.bf16.gmra.mxu0 %v5009
          %v5192 = vpop.f32.mrf.mxu0
          %v5193 = vadd.f32 %v5096, %v5192
          %v5194 = vpop.f32.mrf.mxu0
          %v5195 = vadd.f32 %v5098, %v5194
          %5196 = vmatmul.bf16.gmra.mxu0 %v5012
          %v5197 = vpop.f32.mrf.mxu0
          %v5198 = vadd.f32 %v5101, %v5197
          %v5199 = vpop.f32.mrf.mxu0
          %v5200 = vadd.f32 %v5103, %v5199
          %5201 = vmatmul.bf16.gmra.mxu0 %v5015
          %v5202 = vpop.f32.mrf.mxu0
          %v5203 = vadd.f32 %v5106, %v5202
          %v5204 = vpop.f32.mrf.mxu0
          %v5205 = vadd.f32 %v5108, %v5204
          %5206 = vmatmul.bf16.gmra.mxu0 %v5018
          %v5207 = vpop.f32.mrf.mxu0
          %v5208 = vadd.f32 %v5111, %v5207
          %v5209 = vpop.f32.mrf.mxu0
          %v5210 = vadd.f32 %v5113, %v5209
          %5211 = vmatmul.bf16.gmra.mxu0 %v5021
          %v5212 = vpop.f32.mrf.mxu0
          %v5213 = vadd.f32 %v5116, %v5212
          %v5214 = vpop.f32.mrf.mxu0
          %v5215 = vadd.f32 %v5118, %v5214
          %5216 = vmatmul.bf16.gmra.mxu0 %v5024
          %v5217 = vpop.f32.mrf.mxu0
          %v5218 = vpop.f32.mrf.mxu0
          %5219 = vdwg.mxu0
          %5220 = vmatpush.bf16.msra.mxu0 %v4939
          %5221 = vmatpush.bf16.msra.mxu0 %v4937
          %5222 = vmatpush.bf16.msra.mxu0 %v4935
          %5223 = vmatpush.bf16.msra.mxu0 %v4933
          %5224 = vmatpush.bf16.msra.mxu0 %v4931
          %5225 = vmatpush.bf16.msra.mxu0 %v4929
          %5226 = vmatpush.bf16.msra.mxu0 %v4927
          %5227 = vmatpush.bf16.msra.mxu0 %v4925
          %5228 = vmatmul.bf16.gmra.mxu0 %v4799
          %v5229 = vpop.f32.mrf.mxu0
          %v5230 = vpop.f32.mrf.mxu0
          %5231 = vmatmul.bf16.gmra.mxu0 %v4802
          %v5232 = vpop.f32.mrf.mxu0
          %v5233 = vpop.f32.mrf.mxu0
          %5234 = vmatmul.bf16.gmra.mxu0 %v4805
          %v5235 = vpop.f32.mrf.mxu0
          %v5236 = vadd.f32 0.0, %v5235
          %v5237 = vpop.f32.mrf.mxu0
          %v5238 = vadd.f32 0.0, %v5237
          %5239 = vmatmul.bf16.gmra.mxu0 %v4808
          %v5240 = vpop.f32.mrf.mxu0
          %v5241 = vadd.f32 0.0, %v5240
          %v5242 = vpop.f32.mrf.mxu0
          %v5243 = vadd.f32 0.0, %v5242
          %5244 = vmatmul.bf16.gmra.mxu0 %v4811
          %v5245 = vpop.f32.mrf.mxu0
          %v5246 = vadd.f32 0.0, %v5245
          %v5247 = vpop.f32.mrf.mxu0
          %v5248 = vadd.f32 0.0, %v5247
          %5249 = vmatmul.bf16.gmra.mxu0 %v4814
          %v5250 = vpop.f32.mrf.mxu0
          %v5251 = vadd.f32 0.0, %v5250
          %v5252 = vpop.f32.mrf.mxu0
          %v5253 = vadd.f32 0.0, %v5252
          %5254 = vmatmul.bf16.gmra.mxu0 %v4817
          %v5255 = vpop.f32.mrf.mxu0
          %v5256 = vadd.f32 0.0, %v5255
          %v5257 = vpop.f32.mrf.mxu0
          %v5258 = vadd.f32 0.0, %v5257
          %5259 = vmatmul.bf16.gmra.mxu0 %v4820
          %v5260 = vpop.f32.mrf.mxu0
          %v5261 = vadd.f32 0.0, %v5260
          %v5262 = vpop.f32.mrf.mxu0
          %v5263 = vadd.f32 0.0, %v5262
          %5264 = vmatmul.bf16.gmra.mxu0 %v4823
          %v5265 = vpop.f32.mrf.mxu0
          %v5266 = vadd.f32 0.0, %v5265
          %v5267 = vpop.f32.mrf.mxu0
          %v5268 = vadd.f32 0.0, %v5267
          %5269 = vmatmul.bf16.gmra.mxu0 %v4826
          %v5270 = vpop.f32.mrf.mxu0
          %v5271 = vadd.f32 0.0, %v5270
          %v5272 = vpop.f32.mrf.mxu0
          %v5273 = vadd.f32 0.0, %v5272
          %5274 = vmatmul.bf16.gmra.mxu0 %v4829
          %v5275 = vpop.f32.mrf.mxu0
          %v5276 = vadd.f32 0.0, %v5275
          %v5277 = vpop.f32.mrf.mxu0
          %v5278 = vadd.f32 0.0, %v5277
          %5279 = vmatmul.bf16.gmra.mxu0 %v4832
          %v5280 = vpop.f32.mrf.mxu0
          %v5281 = vadd.f32 0.0, %v5280
          %v5282 = vpop.f32.mrf.mxu0
          %v5283 = vadd.f32 0.0, %v5282
          %5284 = vmatmul.bf16.gmra.mxu0 %v4835
          %v5285 = vpop.f32.mrf.mxu0
          %v5286 = vadd.f32 0.0, %v5285
          %v5287 = vpop.f32.mrf.mxu0
          %v5288 = vadd.f32 0.0, %v5287
          %5289 = vmatmul.bf16.gmra.mxu0 %v4838
          %v5290 = vpop.f32.mrf.mxu0
          %v5291 = vadd.f32 0.0, %v5290
          %v5292 = vpop.f32.mrf.mxu0
          %v5293 = vadd.f32 0.0, %v5292
          %5294 = vmatmul.bf16.gmra.mxu0 %v4841
          %v5295 = vpop.f32.mrf.mxu0
          %v5296 = vadd.f32 0.0, %v5295
          %v5297 = vpop.f32.mrf.mxu0
          %v5298 = vadd.f32 0.0, %v5297
          %5299 = vmatmul.bf16.gmra.mxu0 %v4844
          %v5300 = vpop.f32.mrf.mxu0
          %v5301 = vadd.f32 0.0, %v5300
          %v5302 = vpop.f32.mrf.mxu0
          %v5303 = vadd.f32 0.0, %v5302
          %5304 = vmatmul.bf16.gmra.mxu0 %v4847
          %v5305 = vpop.f32.mrf.mxu0
          %v5306 = vadd.f32 0.0, %v5305
          %v5307 = vpop.f32.mrf.mxu0
          %v5308 = vadd.f32 0.0, %v5307
          %5309 = vmatmul.bf16.gmra.mxu0 %v4850
          %v5310 = vpop.f32.mrf.mxu0
          %v5311 = vadd.f32 0.0, %v5310
          %v5312 = vpop.f32.mrf.mxu0
          %v5313 = vadd.f32 0.0, %v5312
          %5314 = vdwg.mxu0
          %5315 = vmatpush.bf16.msra.mxu0 0
          %5316 = vmatpush.bf16.msra.mxu0 0
          %5317 = vmatpush.bf16.msra.mxu0 0
          %5318 = vmatpush.bf16.msra.mxu0 0
          %5319 = vmatpush.bf16.msra.mxu0 %v4947
          %5320 = vmatpush.bf16.msra.mxu0 %v4945
          %5321 = vmatpush.bf16.msra.mxu0 %v4943
          %5322 = vmatpush.bf16.msra.mxu0 %v4941
          %5323 = vmatmul.bf16.gmra.mxu0 %v4973
          %v5324 = vpop.f32.mrf.mxu0
          %v5325 = vpop.f32.mrf.mxu0
          %5326 = vmatmul.bf16.gmra.mxu0 %v4976
          %v5327 = vpop.f32.mrf.mxu0
          %v5328 = vpop.f32.mrf.mxu0
          %5329 = vmatmul.bf16.gmra.mxu0 %v4979
          %v5330 = vpop.f32.mrf.mxu0
          %v5331 = vadd.f32 %v5236, %v5330
          %v5332 = vpop.f32.mrf.mxu0
          %v5333 = vadd.f32 %v5238, %v5332
          %5334 = vmatmul.bf16.gmra.mxu0 %v4982
          %v5335 = vpop.f32.mrf.mxu0
          %v5336 = vadd.f32 %v5241, %v5335
          %v5337 = vpop.f32.mrf.mxu0
          %v5338 = vadd.f32 %v5243, %v5337
          %5339 = vmatmul.bf16.gmra.mxu0 %v4985
          %v5340 = vpop.f32.mrf.mxu0
          %v5341 = vadd.f32 %v5246, %v5340
          %v5342 = vpop.f32.mrf.mxu0
          %v5343 = vadd.f32 %v5248, %v5342
          %5344 = vmatmul.bf16.gmra.mxu0 %v4988
          %v5345 = vpop.f32.mrf.mxu0
          %v5346 = vadd.f32 %v5251, %v5345
          %v5347 = vpop.f32.mrf.mxu0
          %v5348 = vadd.f32 %v5253, %v5347
          %5349 = vmatmul.bf16.gmra.mxu0 %v4991
          %v5350 = vpop.f32.mrf.mxu0
          %v5351 = vadd.f32 %v5256, %v5350
          %v5352 = vpop.f32.mrf.mxu0
          %v5353 = vadd.f32 %v5258, %v5352
          %5354 = vmatmul.bf16.gmra.mxu0 %v4994
          %v5355 = vpop.f32.mrf.mxu0
          %v5356 = vadd.f32 %v5261, %v5355
          %v5357 = vpop.f32.mrf.mxu0
          %v5358 = vadd.f32 %v5263, %v5357
          %5359 = vmatmul.bf16.gmra.mxu0 %v4997
          %v5360 = vpop.f32.mrf.mxu0
          %v5361 = vadd.f32 %v5266, %v5360
          %v5362 = vpop.f32.mrf.mxu0
          %v5363 = vadd.f32 %v5268, %v5362
          %5364 = vmatmul.bf16.gmra.mxu0 %v5000
          %v5365 = vpop.f32.mrf.mxu0
          %v5366 = vadd.f32 %v5271, %v5365
          %v5367 = vpop.f32.mrf.mxu0
          %v5368 = vadd.f32 %v5273, %v5367
          %5369 = vmatmul.bf16.gmra.mxu0 %v5003
          %v5370 = vpop.f32.mrf.mxu0
          %v5371 = vadd.f32 %v5276, %v5370
          %v5372 = vpop.f32.mrf.mxu0
          %v5373 = vadd.f32 %v5278, %v5372
          %5374 = vmatmul.bf16.gmra.mxu0 %v5006
          %v5375 = vpop.f32.mrf.mxu0
          %v5376 = vadd.f32 %v5281, %v5375
          %v5377 = vpop.f32.mrf.mxu0
          %v5378 = vadd.f32 %v5283, %v5377
          %5379 = vmatmul.bf16.gmra.mxu0 %v5009
          %v5380 = vpop.f32.mrf.mxu0
          %v5381 = vadd.f32 %v5286, %v5380
          %v5382 = vpop.f32.mrf.mxu0
          %v5383 = vadd.f32 %v5288, %v5382
          %5384 = vmatmul.bf16.gmra.mxu0 %v5012
          %v5385 = vpop.f32.mrf.mxu0
          %v5386 = vadd.f32 %v5291, %v5385
          %v5387 = vpop.f32.mrf.mxu0
          %v5388 = vadd.f32 %v5293, %v5387
          %5389 = vmatmul.bf16.gmra.mxu0 %v5015
          %v5390 = vpop.f32.mrf.mxu0
          %v5391 = vadd.f32 %v5296, %v5390
          %v5392 = vpop.f32.mrf.mxu0
          %v5393 = vadd.f32 %v5298, %v5392
          %5394 = vmatmul.bf16.gmra.mxu0 %v5018
          %v5395 = vpop.f32.mrf.mxu0
          %v5396 = vadd.f32 %v5301, %v5395
          %v5397 = vpop.f32.mrf.mxu0
          %v5398 = vadd.f32 %v5303, %v5397
          %5399 = vmatmul.bf16.gmra.mxu0 %v5021
          %v5400 = vpop.f32.mrf.mxu0
          %v5401 = vadd.f32 %v5306, %v5400
          %v5402 = vpop.f32.mrf.mxu0
          %v5403 = vadd.f32 %v5308, %v5402
          %5404 = vmatmul.bf16.gmra.mxu0 %v5024
          %v5405 = vpop.f32.mrf.mxu0
          %v5406 = vadd.f32 %v5311, %v5405
          %v5407 = vpop.f32.mrf.mxu0
          %v5408 = vadd.f32 %v5313, %v5407
          %5409 = vdwg.mxu0
          %5442 = vrot.lane.b32.xlu0 %v5138, 64
          %v5443 = vpop.permute.xlu0 %5442
          %5444 = vrot.lane.b32.xlu0 %v5140, 64
          %v5445 = vpop.permute.xlu0 %5444
          %5446 = vrot.lane.b32.xlu0 %v5143, 64
          %v5447 = vpop.permute.xlu0 %5446
          %5448 = vrot.lane.b32.xlu0 %v5145, 64
          %v5449 = vpop.permute.xlu0 %5448
          %5450 = vrot.lane.b32.xlu0 %v5148, 64
          %v5451 = vpop.permute.xlu0 %5450
          %5452 = vrot.lane.b32.xlu0 %v5150, 64
          %v5453 = vpop.permute.xlu0 %5452
          %5454 = vrot.lane.b32.xlu0 %v5153, 64
          %v5455 = vpop.permute.xlu0 %5454
          %5456 = vrot.lane.b32.xlu0 %v5155, 64
          %v5457 = vpop.permute.xlu0 %5456
          %5458 = vrot.lane.b32.xlu0 %v5158, 64
          %v5459 = vpop.permute.xlu0 %5458
          %5460 = vrot.lane.b32.xlu0 %v5160, 64
          %v5461 = vpop.permute.xlu0 %5460
          %5462 = vrot.lane.b32.xlu0 %v5163, 64
          %v5463 = vpop.permute.xlu0 %5462
          %5464 = vrot.lane.b32.xlu0 %v5165, 64
          %v5465 = vpop.permute.xlu0 %5464
          %5466 = vrot.lane.b32.xlu0 %v5168, 64
          %v5467 = vpop.permute.xlu0 %5466
          %5468 = vrot.lane.b32.xlu0 %v5170, 64
          %v5469 = vpop.permute.xlu0 %5468
          %5470 = vrot.lane.b32.xlu0 %v5173, 64
          %v5471 = vpop.permute.xlu0 %5470
          %5472 = vrot.lane.b32.xlu0 %v5175, 64
          %v5473 = vpop.permute.xlu0 %5472
          %5474 = vrot.lane.b32.xlu0 %v5178, 64
          %v5475 = vpop.permute.xlu0 %5474
          %5476 = vrot.lane.b32.xlu0 %v5180, 64
          %v5477 = vpop.permute.xlu0 %5476
          %5478 = vrot.lane.b32.xlu0 %v5183, 64
          %v5479 = vpop.permute.xlu0 %5478
          %5480 = vrot.lane.b32.xlu0 %v5185, 64
          %v5481 = vpop.permute.xlu0 %5480
          %5482 = vrot.lane.b32.xlu0 %v5188, 64
          %v5483 = vpop.permute.xlu0 %5482
          %5484 = vrot.lane.b32.xlu0 %v5190, 64
          %v5485 = vpop.permute.xlu0 %5484
          %5486 = vrot.lane.b32.xlu0 %v5193, 64
          %v5487 = vpop.permute.xlu0 %5486
          %5488 = vrot.lane.b32.xlu0 %v5195, 64
          %v5489 = vpop.permute.xlu0 %5488
          %5490 = vrot.lane.b32.xlu0 %v5198, 64
          %v5491 = vpop.permute.xlu0 %5490
          %5492 = vrot.lane.b32.xlu0 %v5200, 64
          %v5493 = vpop.permute.xlu0 %5492
          %5494 = vrot.lane.b32.xlu0 %v5203, 64
          %v5495 = vpop.permute.xlu0 %5494
          %5496 = vrot.lane.b32.xlu0 %v5205, 64
          %v5497 = vpop.permute.xlu0 %5496
          %5498 = vrot.lane.b32.xlu0 %v5208, 64
          %v5499 = vpop.permute.xlu0 %5498
          %5500 = vrot.lane.b32.xlu0 %v5210, 64
          %v5501 = vpop.permute.xlu0 %5500
          %5502 = vrot.lane.b32.xlu0 %v5213, 64
          %v5503 = vpop.permute.xlu0 %5502
          %5504 = vrot.lane.b32.xlu0 %v5215, 64
          %v5505 = vpop.permute.xlu0 %5504
          %v5538 = vadd.f32 %v5133, %v5443
          %v5539 = vadd.f32 %v5135, %v5445
          %v5540 = vadd.f32 %v5138, %v5447
          %v5541 = vadd.f32 %v5140, %v5449
          %v5542 = vadd.f32 %v5143, %v5451
          %v5543 = vadd.f32 %v5145, %v5453
          %v5544 = vadd.f32 %v5148, %v5455
          %v5545 = vadd.f32 %v5150, %v5457
          %v5546 = vadd.f32 %v5153, %v5459
          %v5547 = vadd.f32 %v5155, %v5461
          %v5548 = vadd.f32 %v5158, %v5463
          %v5549 = vadd.f32 %v5160, %v5465
          %v5550 = vadd.f32 %v5163, %v5467
          %v5551 = vadd.f32 %v5165, %v5469
          %v5552 = vadd.f32 %v5168, %v5471
          %v5553 = vadd.f32 %v5170, %v5473
          %v5554 = vadd.f32 %v5173, %v5475
          %v5555 = vadd.f32 %v5175, %v5477
          %v5556 = vadd.f32 %v5178, %v5479
          %v5557 = vadd.f32 %v5180, %v5481
          %v5558 = vadd.f32 %v5183, %v5483
          %v5559 = vadd.f32 %v5185, %v5485
          %v5560 = vadd.f32 %v5188, %v5487
          %v5561 = vadd.f32 %v5190, %v5489
          %v5562 = vadd.f32 %v5193, %v5491
          %v5563 = vadd.f32 %v5195, %v5493
          %v5564 = vadd.f32 %v5198, %v5495
          %v5565 = vadd.f32 %v5200, %v5497
          %v5566 = vadd.f32 %v5203, %v5499
          %v5567 = vadd.f32 %v5205, %v5501
          %v5568 = vadd.f32 %v5208, %v5503
          %v5569 = vadd.f32 %v5210, %v5505
          %v5570 = vadd.f32 %v5538, %v5331
          %v5571 = vadd.f32 %v5539, %v5333
          %v5572 = vadd.f32 %v5540, %v5336
          %v5573 = vadd.f32 %v5541, %v5338
          %v5574 = vadd.f32 %v5542, %v5341
          %v5575 = vadd.f32 %v5543, %v5343
          %v5576 = vadd.f32 %v5544, %v5346
          %v5577 = vadd.f32 %v5545, %v5348
          %v5578 = vadd.f32 %v5546, %v5351
          %v5579 = vadd.f32 %v5547, %v5353
          %v5580 = vadd.f32 %v5548, %v5356
          %v5581 = vadd.f32 %v5549, %v5358
          %v5582 = vadd.f32 %v5550, %v5361
          %v5583 = vadd.f32 %v5551, %v5363
          %v5584 = vadd.f32 %v5552, %v5366
          %v5585 = vadd.f32 %v5553, %v5368
          %v5586 = vadd.f32 %v5554, %v5371
          %v5587 = vadd.f32 %v5555, %v5373
          %v5588 = vadd.f32 %v5556, %v5376
          %v5589 = vadd.f32 %v5557, %v5378
          %v5590 = vadd.f32 %v5558, %v5381
          %v5591 = vadd.f32 %v5559, %v5383
          %v5592 = vadd.f32 %v5560, %v5386
          %v5593 = vadd.f32 %v5561, %v5388
          %v5594 = vadd.f32 %v5562, %v5391
          %v5595 = vadd.f32 %v5563, %v5393
          %v5596 = vadd.f32 %v5564, %v5396
          %v5597 = vadd.f32 %v5565, %v5398
          %v5598 = vadd.f32 %v5566, %v5401
          %v5599 = vadd.f32 %v5567, %v5403
          %v5600 = vadd.f32 %v5568, %v5406
          %v5601 = vadd.f32 %v5569, %v5408
          %v5603 = vperm.slane %v4220, 0
          %v5605 = vadd.f32 %v5570, %v5603
          %v5606 = vadd.f32 %v5571, %v5603
          %v5607 = vadd.f32 %v5572, %v5603
          %v5608 = vadd.f32 %v5573, %v5603
          %v5609 = vadd.f32 %v5574, %v5603
          %v5610 = vadd.f32 %v5575, %v5603
          %v5611 = vadd.f32 %v5576, %v5603
          %v5612 = vadd.f32 %v5577, %v5603
          %v5613 = vadd.f32 %v5578, %v5603
          %v5614 = vadd.f32 %v5579, %v5603
          %v5615 = vadd.f32 %v5580, %v5603
          %v5616 = vadd.f32 %v5581, %v5603
          %v5617 = vadd.f32 %v5582, %v5603
          %v5618 = vadd.f32 %v5583, %v5603
          %v5619 = vadd.f32 %v5584, %v5603
          %v5620 = vadd.f32 %v5585, %v5603
          %v5621 = vadd.f32 %v5586, %v5603
          %v5622 = vadd.f32 %v5587, %v5603
          %v5623 = vadd.f32 %v5588, %v5603
          %v5624 = vadd.f32 %v5589, %v5603
          %v5625 = vadd.f32 %v5590, %v5603
          %v5626 = vadd.f32 %v5591, %v5603
          %v5627 = vadd.f32 %v5592, %v5603
          %v5628 = vadd.f32 %v5593, %v5603
          %v5629 = vadd.f32 %v5594, %v5603
          %v5630 = vadd.f32 %v5595, %v5603
          %v5631 = vadd.f32 %v5596, %v5603
          %v5632 = vadd.f32 %v5597, %v5603
          %v5633 = vadd.f32 %v5598, %v5603
          %v5634 = vadd.f32 %v5599, %v5603
          %v5635 = vadd.f32 %v5600, %v5603
          %v5636 = vadd.f32 %v5601, %v5603
          %v5637 = vmax.f32 %v5605, 0.0
          %v5638 = vmax.f32 %v5606, 0.0
          %v5639 = vmax.f32 %v5607, 0.0
          %v5640 = vmax.f32 %v5608, 0.0
          %v5641 = vmax.f32 %v5609, 0.0
          %v5642 = vmax.f32 %v5610, 0.0
          %v5643 = vmax.f32 %v5611, 0.0
          %v5644 = vmax.f32 %v5612, 0.0
          %v5645 = vmax.f32 %v5613, 0.0
          %v5646 = vmax.f32 %v5614, 0.0
          %v5647 = vmax.f32 %v5615, 0.0
          %v5648 = vmax.f32 %v5616, 0.0
          %v5649 = vmax.f32 %v5617, 0.0
          %v5650 = vmax.f32 %v5618, 0.0
          %v5651 = vmax.f32 %v5619, 0.0
          %v5652 = vmax.f32 %v5620, 0.0
          %v5653 = vmax.f32 %v5621, 0.0
          %v5654 = vmax.f32 %v5622, 0.0
          %v5655 = vmax.f32 %v5623, 0.0
          %v5656 = vmax.f32 %v5624, 0.0
          %v5657 = vmax.f32 %v5625, 0.0
          %v5658 = vmax.f32 %v5626, 0.0
          %v5659 = vmax.f32 %v5627, 0.0
          %v5660 = vmax.f32 %v5628, 0.0
          %v5661 = vmax.f32 %v5629, 0.0
          %v5662 = vmax.f32 %v5630, 0.0
          %v5663 = vmax.f32 %v5631, 0.0
          %v5664 = vmax.f32 %v5632, 0.0
          %v5665 = vmax.f32 %v5633, 0.0
          %v5666 = vmax.f32 %v5634, 0.0
          %v5667 = vmax.f32 %v5635, 0.0
          %v5668 = vmax.f32 %v5636, 0.0
          %v5669 = vpack.c.bf16 %v5637, %v5637
          %v5670 = vpack.c.bf16 %v5638, %v5638
          %v5671 = vpack.c.bf16 %v5639, %v5639
          %v5672 = vpack.c.bf16 %v5640, %v5640
          %v5673 = vpack.c.bf16 %v5641, %v5641
          %v5674 = vpack.c.bf16 %v5642, %v5642
          %v5675 = vpack.c.bf16 %v5643, %v5643
          %v5676 = vpack.c.bf16 %v5644, %v5644
          %v5677 = vpack.c.bf16 %v5645, %v5645
          %v5678 = vpack.c.bf16 %v5646, %v5646
          %v5679 = vpack.c.bf16 %v5647, %v5647
          %v5680 = vpack.c.bf16 %v5648, %v5648
          %v5681 = vpack.c.bf16 %v5649, %v5649
          %v5682 = vpack.c.bf16 %v5650, %v5650
          %v5683 = vpack.c.bf16 %v5651, %v5651
          %v5684 = vpack.c.bf16 %v5652, %v5652
          %v5685 = vpack.c.bf16 %v5653, %v5653
          %v5686 = vpack.c.bf16 %v5654, %v5654
          %v5687 = vpack.c.bf16 %v5655, %v5655
          %v5688 = vpack.c.bf16 %v5656, %v5656
          %v5689 = vpack.c.bf16 %v5657, %v5657
          %v5690 = vpack.c.bf16 %v5658, %v5658
          %v5691 = vpack.c.bf16 %v5659, %v5659
          %v5692 = vpack.c.bf16 %v5660, %v5660
          %v5693 = vpack.c.bf16 %v5661, %v5661
          %v5694 = vpack.c.bf16 %v5662, %v5662
          %v5695 = vpack.c.bf16 %v5663, %v5663
          %v5696 = vpack.c.bf16 %v5664, %v5664
          %v5697 = vpack.c.bf16 %v5665, %v5665
          %v5698 = vpack.c.bf16 %v5666, %v5666
          %v5699 = vpack.c.bf16 %v5667, %v5667
          %v5700 = vpack.c.bf16 %v5668, %v5668
          %v5702 = vshrl.u32 %v5669, 16
          %v5704 = vrot.slane %v5702, 7
          %v5705 = vshll.u32 %v5669, 16
          %v5707 = vor.u32 %v5704, %v5705
          %v5708 = vrot.slane %v5704, 4
          %v5710 = vshrl.u32 %v5670, 16
          %v5712 = vrot.slane %v5710, 7
          %v5713 = vshll.u32 %v5670, 16
          %v5715 = vor.u32 %v5712, %v5713
          %v5716 = vsel %vm1804, %v5708, %v5715
          %v5717 = vrot.slane %v5712, 4
          %v5719 = vshrl.u32 %v5671, 16
          %v5721 = vrot.slane %v5719, 7
          %v5722 = vshll.u32 %v5671, 16
          %v5724 = vor.u32 %v5721, %v5722
          %v5725 = vrot.slane %v5721, 4
          %v5727 = vshrl.u32 %v5672, 16
          %v5729 = vrot.slane %v5727, 7
          %v5730 = vshll.u32 %v5672, 16
          %v5732 = vor.u32 %v5729, %v5730
          %v5733 = vsel %vm1804, %v5725, %v5732
          %v5734 = vrot.slane %v5729, 4
          %v5736 = vshrl.u32 %v5673, 16
          %v5738 = vrot.slane %v5736, 7
          %v5739 = vshll.u32 %v5673, 16
          %v5741 = vor.u32 %v5738, %v5739
          %v5742 = vrot.slane %v5738, 4
          %v5744 = vshrl.u32 %v5674, 16
          %v5746 = vrot.slane %v5744, 7
          %v5747 = vshll.u32 %v5674, 16
          %v5749 = vor.u32 %v5746, %v5747
          %v5750 = vsel %vm1804, %v5742, %v5749
          %v5751 = vrot.slane %v5746, 4
          %v5753 = vshrl.u32 %v5675, 16
          %v5755 = vrot.slane %v5753, 7
          %v5756 = vshll.u32 %v5675, 16
          %v5758 = vor.u32 %v5755, %v5756
          %v5759 = vrot.slane %v5755, 4
          %v5761 = vshrl.u32 %v5676, 16
          %v5763 = vrot.slane %v5761, 7
          %v5764 = vshll.u32 %v5676, 16
          %v5766 = vor.u32 %v5763, %v5764
          %v5767 = vsel %vm1804, %v5759, %v5766
          %v5768 = vrot.slane %v5763, 4
          %v5770 = vshrl.u32 %v5677, 16
          %v5772 = vrot.slane %v5770, 7
          %v5773 = vshll.u32 %v5677, 16
          %v5775 = vor.u32 %v5772, %v5773
          %v5776 = vrot.slane %v5772, 4
          %v5778 = vshrl.u32 %v5678, 16
          %v5780 = vrot.slane %v5778, 7
          %v5781 = vshll.u32 %v5678, 16
          %v5783 = vor.u32 %v5780, %v5781
          %v5784 = vsel %vm1804, %v5776, %v5783
          %v5785 = vrot.slane %v5780, 4
          %v5787 = vshrl.u32 %v5679, 16
          %v5789 = vrot.slane %v5787, 7
          %v5790 = vshll.u32 %v5679, 16
          %v5792 = vor.u32 %v5789, %v5790
          %v5793 = vrot.slane %v5789, 4
          %v5795 = vshrl.u32 %v5680, 16
          %v5797 = vrot.slane %v5795, 7
          %v5798 = vshll.u32 %v5680, 16
          %v5800 = vor.u32 %v5797, %v5798
          %v5801 = vsel %vm1804, %v5793, %v5800
          %v5802 = vrot.slane %v5797, 4
          %v5804 = vshrl.u32 %v5681, 16
          %v5806 = vrot.slane %v5804, 7
          %v5807 = vshll.u32 %v5681, 16
          %v5809 = vor.u32 %v5806, %v5807
          %v5810 = vrot.slane %v5806, 4
          %v5812 = vshrl.u32 %v5682, 16
          %v5814 = vrot.slane %v5812, 7
          %v5815 = vshll.u32 %v5682, 16
          %v5817 = vor.u32 %v5814, %v5815
          %v5818 = vsel %vm1804, %v5810, %v5817
          %v5819 = vrot.slane %v5814, 4
          %v5821 = vshrl.u32 %v5683, 16
          %v5823 = vrot.slane %v5821, 7
          %v5824 = vshll.u32 %v5683, 16
          %v5826 = vor.u32 %v5823, %v5824
          %v5827 = vrot.slane %v5823, 4
          %v5829 = vshrl.u32 %v5684, 16
          %v5831 = vrot.slane %v5829, 7
          %v5832 = vshll.u32 %v5684, 16
          %v5834 = vor.u32 %v5831, %v5832
          %v5835 = vsel %vm1804, %v5827, %v5834
          %v5836 = vrot.slane %v5831, 4
          %v5838 = vshrl.u32 %v5685, 16
          %v5840 = vrot.slane %v5838, 7
          %v5841 = vshll.u32 %v5685, 16
          %v5843 = vor.u32 %v5840, %v5841
          %v5844 = vrot.slane %v5840, 4
          %v5846 = vshrl.u32 %v5686, 16
          %v5848 = vrot.slane %v5846, 7
          %v5849 = vshll.u32 %v5686, 16
          %v5851 = vor.u32 %v5848, %v5849
          %v5852 = vsel %vm1804, %v5844, %v5851
          %v5853 = vrot.slane %v5848, 4
          %v5855 = vshrl.u32 %v5687, 16
          %v5857 = vrot.slane %v5855, 7
          %v5858 = vshll.u32 %v5687, 16
          %v5860 = vor.u32 %v5857, %v5858
          %v5861 = vrot.slane %v5857, 4
          %v5863 = vshrl.u32 %v5688, 16
          %v5865 = vrot.slane %v5863, 7
          %v5866 = vshll.u32 %v5688, 16
          %v5868 = vor.u32 %v5865, %v5866
          %v5869 = vsel %vm1804, %v5861, %v5868
          %v5870 = vrot.slane %v5865, 4
          %v5872 = vshrl.u32 %v5689, 16
          %v5874 = vrot.slane %v5872, 7
          %v5875 = vshll.u32 %v5689, 16
          %v5877 = vor.u32 %v5874, %v5875
          %v5878 = vrot.slane %v5874, 4
          %v5880 = vshrl.u32 %v5690, 16
          %v5882 = vrot.slane %v5880, 7
          %v5883 = vshll.u32 %v5690, 16
          %v5885 = vor.u32 %v5882, %v5883
          %v5886 = vsel %vm1804, %v5878, %v5885
          %v5887 = vrot.slane %v5882, 4
          %v5889 = vshrl.u32 %v5691, 16
          %v5891 = vrot.slane %v5889, 7
          %v5892 = vshll.u32 %v5691, 16
          %v5894 = vor.u32 %v5891, %v5892
          %v5895 = vrot.slane %v5891, 4
          %v5897 = vshrl.u32 %v5692, 16
          %v5899 = vrot.slane %v5897, 7
          %v5900 = vshll.u32 %v5692, 16
          %v5902 = vor.u32 %v5899, %v5900
          %v5903 = vsel %vm1804, %v5895, %v5902
          %v5904 = vrot.slane %v5899, 4
          %v5906 = vshrl.u32 %v5693, 16
          %v5908 = vrot.slane %v5906, 7
          %v5909 = vshll.u32 %v5693, 16
          %v5911 = vor.u32 %v5908, %v5909
          %v5912 = vrot.slane %v5908, 4
          %v5914 = vshrl.u32 %v5694, 16
          %v5916 = vrot.slane %v5914, 7
          %v5917 = vshll.u32 %v5694, 16
          %v5919 = vor.u32 %v5916, %v5917
          %v5920 = vsel %vm1804, %v5912, %v5919
          %v5921 = vrot.slane %v5916, 4
          %v5923 = vshrl.u32 %v5695, 16
          %v5925 = vrot.slane %v5923, 7
          %v5926 = vshll.u32 %v5695, 16
          %v5928 = vor.u32 %v5925, %v5926
          %v5929 = vrot.slane %v5925, 4
          %v5931 = vshrl.u32 %v5696, 16
          %v5933 = vrot.slane %v5931, 7
          %v5934 = vshll.u32 %v5696, 16
          %v5936 = vor.u32 %v5933, %v5934
          %v5937 = vsel %vm1804, %v5929, %v5936
          %v5938 = vrot.slane %v5933, 4
          %v5940 = vshrl.u32 %v5697, 16
          %v5942 = vrot.slane %v5940, 7
          %v5943 = vshll.u32 %v5697, 16
          %v5945 = vor.u32 %v5942, %v5943
          %v5946 = vrot.slane %v5942, 4
          %v5948 = vshrl.u32 %v5698, 16
          %v5950 = vrot.slane %v5948, 7
          %v5951 = vshll.u32 %v5698, 16
          %v5953 = vor.u32 %v5950, %v5951
          %v5954 = vsel %vm1804, %v5946, %v5953
          %v5955 = vrot.slane %v5950, 4
          %v5957 = vshrl.u32 %v5699, 16
          %v5959 = vrot.slane %v5957, 7
          %v5960 = vshll.u32 %v5699, 16
          %v5962 = vor.u32 %v5959, %v5960
          %v5963 = vrot.slane %v5959, 4
          %v5965 = vshrl.u32 %v5700, 16
          %v5967 = vrot.slane %v5965, 7
          %v5968 = vshll.u32 %v5700, 16
          %v5970 = vor.u32 %v5967, %v5968
          %v5971 = vsel %vm1804, %v5963, %v5970
          %v5972 = vrot.slane %v5967, 4
          %v6021 = vld [vmem:[%s2125] sm:$0xf]
          %v6022 = vsel %vm2127, %v5707, %v6021
          %6023 = vst [vmem:[%s2125] sm:$0xf] %v6022
          %6024 = vst.msk [vmem:[%s2125 + $0x4] sm:$0xf] %vm376, %v5716
          %v6025 = vld [vmem:[%s2125 + $0x8] sm:$0x1]
          %v6026 = vsel %vm393, %v5717, %v6025
          %6027 = vst [vmem:[%s2125 + $0x8] sm:$0x1] %v6026
          %v6028 = vld [vmem:[%s2125 + $0xc] sm:$0xf]
          %v6029 = vsel %vm2127, %v5724, %v6028
          %6030 = vst [vmem:[%s2125 + $0xc] sm:$0xf] %v6029
          %6031 = vst.msk [vmem:[%s2125 + $0x10] sm:$0xf] %vm376, %v5733
          %v6032 = vld [vmem:[%s2125 + $0x14] sm:$0x1]
          %v6033 = vsel %vm393, %v5734, %v6032
          %6034 = vst [vmem:[%s2125 + $0x14] sm:$0x1] %v6033
          %v6035 = vld [vmem:[%s2125 + $0x18] sm:$0xf]
          %v6036 = vsel %vm2127, %v5741, %v6035
          %6037 = vst [vmem:[%s2125 + $0x18] sm:$0xf] %v6036
          %6038 = vst.msk [vmem:[%s2125 + $0x1c] sm:$0xf] %vm376, %v5750
          %v6039 = vld [vmem:[%s2125 + $0x20] sm:$0x1]
          %v6040 = vsel %vm393, %v5751, %v6039
          %6041 = vst [vmem:[%s2125 + $0x20] sm:$0x1] %v6040
          %v6042 = vld [vmem:[%s2125 + $0x24] sm:$0xf]
          %v6043 = vsel %vm2127, %v5758, %v6042
          %6044 = vst [vmem:[%s2125 + $0x24] sm:$0xf] %v6043
          %6045 = vst.msk [vmem:[%s2125 + $0x28] sm:$0xf] %vm376, %v5767
          %v6046 = vld [vmem:[%s2125 + $0x2c] sm:$0x1]
          %v6047 = vsel %vm393, %v5768, %v6046
          %6048 = vst [vmem:[%s2125 + $0x2c] sm:$0x1] %v6047
          %v6049 = vld [vmem:[%s2125 + $0x30] sm:$0xf]
          %v6050 = vsel %vm2127, %v5775, %v6049
          %6051 = vst [vmem:[%s2125 + $0x30] sm:$0xf] %v6050
          %6052 = vst.msk [vmem:[%s2125 + $0x34] sm:$0xf] %vm376, %v5784
          %v6053 = vld [vmem:[%s2125 + $0x38] sm:$0x1]
          %v6054 = vsel %vm393, %v5785, %v6053
          %6055 = vst [vmem:[%s2125 + $0x38] sm:$0x1] %v6054
          %v6056 = vld [vmem:[%s2125 + $0x3c] sm:$0xf]
          %v6057 = vsel %vm2127, %v5792, %v6056
          %6058 = vst [vmem:[%s2125 + $0x3c] sm:$0xf] %v6057
          %6059 = vst.msk [vmem:[%s2125 + $0x40] sm:$0xf] %vm376, %v5801
          %v6060 = vld [vmem:[%s2125 + $0x44] sm:$0x1]
          %v6061 = vsel %vm393, %v5802, %v6060
          %6062 = vst [vmem:[%s2125 + $0x44] sm:$0x1] %v6061
          %v6063 = vld [vmem:[%s2125 + $0x48] sm:$0xf]
          %v6064 = vsel %vm2127, %v5809, %v6063
          %6065 = vst [vmem:[%s2125 + $0x48] sm:$0xf] %v6064
          %6066 = vst.msk [vmem:[%s2125 + $0x4c] sm:$0xf] %vm376, %v5818
          %v6067 = vld [vmem:[%s2125 + $0x50] sm:$0x1]
          %v6068 = vsel %vm393, %v5819, %v6067
          %6069 = vst [vmem:[%s2125 + $0x50] sm:$0x1] %v6068
          %v6070 = vld [vmem:[%s2125 + $0x54] sm:$0xf]
          %v6071 = vsel %vm2127, %v5826, %v6070
          %6072 = vst [vmem:[%s2125 + $0x54] sm:$0xf] %v6071
          %6073 = vst.msk [vmem:[%s2125 + $0x58] sm:$0xf] %vm376, %v5835
          %v6074 = vld [vmem:[%s2125 + $0x5c] sm:$0x1]
          %v6075 = vsel %vm393, %v5836, %v6074
          %6076 = vst [vmem:[%s2125 + $0x5c] sm:$0x1] %v6075
          %v6077 = vld [vmem:[%s2125 + $0x60] sm:$0xf]
          %v6078 = vsel %vm2127, %v5843, %v6077
          %6079 = vst [vmem:[%s2125 + $0x60] sm:$0xf] %v6078
          %6080 = vst.msk [vmem:[%s2125 + $0x64] sm:$0xf] %vm376, %v5852
          %v6081 = vld [vmem:[%s2125 + $0x68] sm:$0x1]
          %v6082 = vsel %vm393, %v5853, %v6081
          %6083 = vst [vmem:[%s2125 + $0x68] sm:$0x1] %v6082
          %v6084 = vld [vmem:[%s2125 + $0x6c] sm:$0xf]
          %v6085 = vsel %vm2127, %v5860, %v6084
          %6086 = vst [vmem:[%s2125 + $0x6c] sm:$0xf] %v6085
          %6087 = vst.msk [vmem:[%s2125 + $0x70] sm:$0xf] %vm376, %v5869
          %v6088 = vld [vmem:[%s2125 + $0x74] sm:$0x1]
          %v6089 = vsel %vm393, %v5870, %v6088
          %6090 = vst [vmem:[%s2125 + $0x74] sm:$0x1] %v6089
          %v6091 = vld [vmem:[%s2125 + $0x78] sm:$0xf]
          %v6092 = vsel %vm2127, %v5877, %v6091
          %6093 = vst [vmem:[%s2125 + $0x78] sm:$0xf] %v6092
          %6094 = vst.msk [vmem:[%s2125 + $0x7c] sm:$0xf] %vm376, %v5886
          %v6095 = vld [vmem:[%s2125 + $0x80] sm:$0x1]
          %v6096 = vsel %vm393, %v5887, %v6095
          %6097 = vst [vmem:[%s2125 + $0x80] sm:$0x1] %v6096
          %v6098 = vld [vmem:[%s2125 + $0x84] sm:$0xf]
          %v6099 = vsel %vm2127, %v5894, %v6098
          %6100 = vst [vmem:[%s2125 + $0x84] sm:$0xf] %v6099
          %6101 = vst.msk [vmem:[%s2125 + $0x88] sm:$0xf] %vm376, %v5903
          %v6102 = vld [vmem:[%s2125 + $0x8c] sm:$0x1]
          %v6103 = vsel %vm393, %v5904, %v6102
          %6104 = vst [vmem:[%s2125 + $0x8c] sm:$0x1] %v6103
          %v6105 = vld [vmem:[%s2125 + $0x90] sm:$0xf]
          %v6106 = vsel %vm2127, %v5911, %v6105
          %6107 = vst [vmem:[%s2125 + $0x90] sm:$0xf] %v6106
          %6108 = vst.msk [vmem:[%s2125 + $0x94] sm:$0xf] %vm376, %v5920
          %v6109 = vld [vmem:[%s2125 + $0x98] sm:$0x1]
          %v6110 = vsel %vm393, %v5921, %v6109
          %6111 = vst [vmem:[%s2125 + $0x98] sm:$0x1] %v6110
          %v6112 = vld [vmem:[%s2125 + $0x9c] sm:$0xf]
          %v6113 = vsel %vm2127, %v5928, %v6112
          %6114 = vst [vmem:[%s2125 + $0x9c] sm:$0xf] %v6113
          %6115 = vst.msk [vmem:[%s2125 + $0xa0] sm:$0xf] %vm376, %v5937
          %v6116 = vld [vmem:[%s2125 + $0xa4] sm:$0x1]
          %v6117 = vsel %vm393, %v5938, %v6116
          %6118 = vst [vmem:[%s2125 + $0xa4] sm:$0x1] %v6117
          %v6119 = vld [vmem:[%s2125 + $0xa8] sm:$0xf]
          %v6120 = vsel %vm2127, %v5945, %v6119
          %6121 = vst [vmem:[%s2125 + $0xa8] sm:$0xf] %v6120
          %6122 = vst.msk [vmem:[%s2125 + $0xac] sm:$0xf] %vm376, %v5954
          %v6123 = vld [vmem:[%s2125 + $0xb0] sm:$0x1]
          %v6124 = vsel %vm393, %v5955, %v6123
          %6125 = vst [vmem:[%s2125 + $0xb0] sm:$0x1] %v6124
          %v6126 = vld [vmem:[%s2125 + $0xb4] sm:$0xf]
          %v6127 = vsel %vm2127, %v5962, %v6126
          %6128 = vst [vmem:[%s2125 + $0xb4] sm:$0xf] %v6127
          %6129 = vst.msk [vmem:[%s2125 + $0xb8] sm:$0xf] %vm376, %v5971
          %v6130 = vld [vmem:[%s2125 + $0xbc] sm:$0x1]
          %v6131 = vsel %vm393, %v5972, %v6130
          %6132 = vst [vmem:[%s2125 + $0xbc] sm:$0x1] %v6131
        $region77: #{edsr_forward.1} parent=47 // loop_footer
          %s2245 = sadd.s32 1, %s2241
        $region78: #{edsr_forward.1} parent=47 // loop_footer_branch
          %2240 = sbr.rel target = $region74
        $region79: #{edsr_forward.1} parent=47 // loop_exit
          _
        %v6133 = vld [vmem:[#allocation10] sm:$0xf]
        %v6134 = vld [vmem:[#allocation10 + $0x4] sm:$0xf]
        %v6135 = vld [vmem:[#allocation10 + $0x8] sm:$0xf]
        %v6136 = vld [vmem:[#allocation10 + $0xc] sm:$0xf]
        %v6137 = vld [vmem:[#allocation10 + $0x10] sm:$0xf]
        %v6138 = vld [vmem:[#allocation10 + $0x14] sm:$0xf]
        %v6139 = vld [vmem:[#allocation10 + $0x18] sm:$0xf]
        %v6140 = vld [vmem:[#allocation10 + $0x1c] sm:$0xf]
        %v6141 = vld [vmem:[#allocation10 + $0x20] sm:$0xf]
        %v6142 = vld [vmem:[#allocation10 + $0x24] sm:$0xf]
        %v6143 = vld [vmem:[#allocation10 + $0x28] sm:$0xf]
        %v6144 = vld [vmem:[#allocation10 + $0x2c] sm:$0xf]
        %v6145 = vld [vmem:[#allocation10 + $0x30] sm:$0xf]
        %v6146 = vld [vmem:[#allocation10 + $0x34] sm:$0xf]
        %v6147 = vld [vmem:[#allocation10 + $0x38] sm:$0xf]
        %v6148 = vld [vmem:[#allocation10 + $0x3c] sm:$0xf]
        %v6149 = vld [vmem:[#allocation10 + $0x40] sm:$0xf]
        %v6150 = vld [vmem:[#allocation10 + $0x44] sm:$0xf]
        %v6151 = vld [vmem:[#allocation10 + $0x48] sm:$0xf]
        %v6152 = vld [vmem:[#allocation10 + $0x4c] sm:$0xf]
        %v6153 = vld [vmem:[#allocation10 + $0x50] sm:$0xf]
        %v6154 = vld [vmem:[#allocation10 + $0x54] sm:$0xf]
        %v6155 = vld [vmem:[#allocation10 + $0x58] sm:$0xf]
        %v6156 = vld [vmem:[#allocation10 + $0x5c] sm:$0xf]
        %v6157 = vld [vmem:[#allocation11] sm:$0x1]
        %v6158 = vld [vmem:[#allocation2] sm:$0xf]
        %v6159 = vld [vmem:[#allocation2 + $0x4] sm:$0xf]
        %v6160 = vld [vmem:[#allocation2 + $0xc] sm:$0xf]
        %v6161 = vld [vmem:[#allocation2 + $0x10] sm:$0xf]
        %v6162 = vld [vmem:[#allocation2 + $0x18] sm:$0xf]
        %v6163 = vld [vmem:[#allocation2 + $0x1c] sm:$0xf]
        %v6164 = vld [vmem:[#allocation2 + $0x24] sm:$0xf]
        %v6165 = vld [vmem:[#allocation2 + $0x28] sm:$0xf]
        %v6166 = vld [vmem:[#allocation2 + $0x30] sm:$0xf]
        %v6167 = vld [vmem:[#allocation2 + $0x34] sm:$0xf]
        %v6168 = vld [vmem:[#allocation2 + $0x3c] sm:$0xf]
        %v6169 = vld [vmem:[#allocation2 + $0x40] sm:$0xf]
        %v6170 = vld [vmem:[#allocation2 + $0x48] sm:$0xf]
        %v6171 = vld [vmem:[#allocation2 + $0x4c] sm:$0xf]
        %v6172 = vld [vmem:[#allocation2 + $0x54] sm:$0xf]
        %v6173 = vld [vmem:[#allocation2 + $0x58] sm:$0xf]
        %v6174 = vld [vmem:[#allocation2 + $0x60] sm:$0xf]
        %v6175 = vld [vmem:[#allocation2 + $0x64] sm:$0xf]
        %v6176 = vld [vmem:[#allocation2 + $0x6c] sm:$0xf]
        %v6177 = vld [vmem:[#allocation2 + $0x70] sm:$0xf]
        %v6178 = vld [vmem:[#allocation2 + $0x78] sm:$0xf]
        %v6179 = vld [vmem:[#allocation2 + $0x7c] sm:$0xf]
        %v6180 = vld [vmem:[#allocation2 + $0x84] sm:$0xf]
        %v6181 = vld [vmem:[#allocation2 + $0x88] sm:$0xf]
        %v6182 = vld [vmem:[#allocation2 + $0x90] sm:$0xf]
        %v6183 = vld [vmem:[#allocation2 + $0x94] sm:$0xf]
        %v6184 = vld [vmem:[#allocation2 + $0x9c] sm:$0xf]
        %v6185 = vld [vmem:[#allocation2 + $0xa0] sm:$0xf]
        %v6186 = vld [vmem:[#allocation2 + $0xa8] sm:$0xf]
        %v6187 = vld [vmem:[#allocation2 + $0xac] sm:$0xf]
        %v6188 = vld [vmem:[#allocation2 + $0xb4] sm:$0xf]
        %v6189 = vld [vmem:[#allocation2 + $0xb8] sm:$0xf]
        %v6190 = vld [vmem:[#allocation2 + $0xc0] sm:$0xf]
        %v6191 = vld [vmem:[#allocation2 + $0xc4] sm:$0xf]
        %v6192 = vld [vmem:[#allocation2 + $0xcc] sm:$0xf]
        %v6193 = vld [vmem:[#allocation2 + $0xd0] sm:$0xf]
        %v6194 = vld [vmem:[#allocation2 + $0x8] sm:$0x1]
        %v6195 = vld [vmem:[#allocation2 + $0x14] sm:$0x1]
        %v6196 = vld [vmem:[#allocation2 + $0x20] sm:$0x1]
        %v6197 = vld [vmem:[#allocation2 + $0x2c] sm:$0x1]
        %v6198 = vld [vmem:[#allocation2 + $0x38] sm:$0x1]
        %v6199 = vld [vmem:[#allocation2 + $0x44] sm:$0x1]
        %v6200 = vld [vmem:[#allocation2 + $0x50] sm:$0x1]
        %v6201 = vld [vmem:[#allocation2 + $0x5c] sm:$0x1]
        %v6202 = vld [vmem:[#allocation2 + $0x68] sm:$0x1]
        %v6203 = vld [vmem:[#allocation2 + $0x74] sm:$0x1]
        %v6204 = vld [vmem:[#allocation2 + $0x80] sm:$0x1]
        %v6205 = vld [vmem:[#allocation2 + $0x8c] sm:$0x1]
        %v6206 = vld [vmem:[#allocation2 + $0x98] sm:$0x1]
        %v6207 = vld [vmem:[#allocation2 + $0xa4] sm:$0x1]
        %v6208 = vld [vmem:[#allocation2 + $0xb0] sm:$0x1]
        %v6209 = vld [vmem:[#allocation2 + $0xbc] sm:$0x1]
        %v6210 = vld [vmem:[#allocation2 + $0xc8] sm:$0x1]
        %v6211 = vld [vmem:[#allocation2 + $0xd4] sm:$0x1]
        %v6212 = vld [vmem:[#allocation2] sm:$0xe]
        %v6213 = vld [vmem:[#allocation2 + $0xc] sm:$0xe]
        %v6214 = vld [vmem:[#allocation2 + $0x18] sm:$0xe]
        %v6215 = vld [vmem:[#allocation2 + $0x24] sm:$0xe]
        %v6216 = vld [vmem:[#allocation2 + $0x30] sm:$0xe]
        %v6217 = vld [vmem:[#allocation2 + $0x3c] sm:$0xe]
        %v6218 = vld [vmem:[#allocation2 + $0x48] sm:$0xe]
        %v6219 = vld [vmem:[#allocation2 + $0x54] sm:$0xe]
        %v6220 = vld [vmem:[#allocation2 + $0x60] sm:$0xe]
        %v6221 = vld [vmem:[#allocation2 + $0x6c] sm:$0xe]
        %v6222 = vld [vmem:[#allocation2 + $0x78] sm:$0xe]
        %v6223 = vld [vmem:[#allocation2 + $0x84] sm:$0xe]
        %v6224 = vld [vmem:[#allocation2 + $0x90] sm:$0xe]
        %v6225 = vld [vmem:[#allocation2 + $0x9c] sm:$0xe]
        %v6226 = vld [vmem:[#allocation2 + $0xa8] sm:$0xe]
        %v6227 = vld [vmem:[#allocation2 + $0xb4] sm:$0xe]
        %v6228 = vld [vmem:[#allocation2 + $0xc0] sm:$0xe]
        %v6229 = vld [vmem:[#allocation2 + $0xcc] sm:$0xe]
        %v6266 = vunpack.c.l.b16 %v6158
        %v6267 = vunpack.c.l.b16 %v6159
        %v6268 = vunpack.c.l.b16 %v6160
        %v6269 = vunpack.c.l.b16 %v6161
        %v6270 = vunpack.c.l.b16 %v6162
        %v6271 = vunpack.c.l.b16 %v6163
        %v6272 = vunpack.c.l.b16 %v6164
        %v6273 = vunpack.c.l.b16 %v6165
        %v6274 = vunpack.c.l.b16 %v6166
        %v6275 = vunpack.c.l.b16 %v6167
        %v6276 = vunpack.c.l.b16 %v6168
        %v6277 = vunpack.c.l.b16 %v6169
        %v6278 = vunpack.c.l.b16 %v6170
        %v6279 = vunpack.c.l.b16 %v6171
        %v6280 = vunpack.c.l.b16 %v6172
        %v6281 = vunpack.c.l.b16 %v6173
        %v6282 = vunpack.c.l.b16 %v6174
        %v6283 = vunpack.c.l.b16 %v6175
        %v6284 = vunpack.c.l.b16 %v6176
        %v6285 = vunpack.c.l.b16 %v6177
        %v6286 = vunpack.c.l.b16 %v6178
        %v6287 = vunpack.c.l.b16 %v6179
        %v6288 = vunpack.c.l.b16 %v6180
        %v6289 = vunpack.c.l.b16 %v6181
        %v6290 = vunpack.c.l.b16 %v6182
        %v6291 = vunpack.c.l.b16 %v6183
        %v6292 = vunpack.c.l.b16 %v6184
        %v6293 = vunpack.c.l.b16 %v6185
        %v6294 = vunpack.c.l.b16 %v6186
        %v6295 = vunpack.c.l.b16 %v6187
        %v6296 = vunpack.c.l.b16 %v6188
        %v6297 = vunpack.c.l.b16 %v6189
        %v6298 = vunpack.c.l.b16 %v6190
        %v6299 = vunpack.c.l.b16 %v6191
        %v6300 = vunpack.c.l.b16 %v6192
        %v6301 = vunpack.c.l.b16 %v6193
        %v6302 = vpack.c.b16 %v6267, %v6266
        %v6303 = vpack.c.b16 %v6269, %v6268
        %v6304 = vpack.c.b16 %v6271, %v6270
        %v6305 = vpack.c.b16 %v6273, %v6272
        %v6306 = vpack.c.b16 %v6275, %v6274
        %v6307 = vpack.c.b16 %v6277, %v6276
        %v6308 = vpack.c.b16 %v6279, %v6278
        %v6309 = vpack.c.b16 %v6281, %v6280
        %v6310 = vpack.c.b16 %v6283, %v6282
        %v6311 = vpack.c.b16 %v6285, %v6284
        %v6312 = vpack.c.b16 %v6287, %v6286
        %v6313 = vpack.c.b16 %v6289, %v6288
        %v6314 = vpack.c.b16 %v6291, %v6290
        %v6315 = vpack.c.b16 %v6293, %v6292
        %v6316 = vpack.c.b16 %v6295, %v6294
        %v6317 = vpack.c.b16 %v6297, %v6296
        %v6318 = vpack.c.b16 %v6299, %v6298
        %v6319 = vpack.c.b16 %v6301, %v6300
        %v6338 = vunpack.c.l.b16 %v6194
        %v6339 = vunpack.c.l.b16 %v6195
        %v6340 = vunpack.c.l.b16 %v6196
        %v6341 = vunpack.c.l.b16 %v6197
        %v6342 = vunpack.c.l.b16 %v6198
        %v6343 = vunpack.c.l.b16 %v6199
        %v6344 = vunpack.c.l.b16 %v6200
        %v6345 = vunpack.c.l.b16 %v6201
        %v6346 = vunpack.c.l.b16 %v6202
        %v6347 = vunpack.c.l.b16 %v6203
        %v6348 = vunpack.c.l.b16 %v6204
        %v6349 = vunpack.c.l.b16 %v6205
        %v6350 = vunpack.c.l.b16 %v6206
        %v6351 = vunpack.c.l.b16 %v6207
        %v6352 = vunpack.c.l.b16 %v6208
        %v6353 = vunpack.c.l.b16 %v6209
        %v6354 = vunpack.c.l.b16 %v6210
        %v6355 = vunpack.c.l.b16 %v6211
        %v6356 = vpack.c.b16 %v6338, %v6338
        %v6357 = vpack.c.b16 %v6339, %v6339
        %v6358 = vpack.c.b16 %v6340, %v6340
        %v6359 = vpack.c.b16 %v6341, %v6341
        %v6360 = vpack.c.b16 %v6342, %v6342
        %v6361 = vpack.c.b16 %v6343, %v6343
        %v6362 = vpack.c.b16 %v6344, %v6344
        %v6363 = vpack.c.b16 %v6345, %v6345
        %v6364 = vpack.c.b16 %v6346, %v6346
        %v6365 = vpack.c.b16 %v6347, %v6347
        %v6366 = vpack.c.b16 %v6348, %v6348
        %v6367 = vpack.c.b16 %v6349, %v6349
        %v6368 = vpack.c.b16 %v6350, %v6350
        %v6369 = vpack.c.b16 %v6351, %v6351
        %v6370 = vpack.c.b16 %v6352, %v6352
        %v6371 = vpack.c.b16 %v6353, %v6353
        %v6372 = vpack.c.b16 %v6354, %v6354
        %v6373 = vpack.c.b16 %v6355, %v6355
        %vm6374 = vsmask.f32 7424
        %v6376 = vshrl.u32 %v6302, 16
        %v6378 = vshll.u32 %v6302, 16
        %v6380 = vrot.slane %v6378, 1
        %v6381 = vor.u32 %v6376, %v6380
        %v6383 = vshll.u32 %v6356, 16
        %v6385 = vrot.slane %v6383, 1
        %v6386 = vsel %vm6374, %v6381, %v6385
        %v6388 = vshrl.u32 %v6303, 16
        %v6390 = vshll.u32 %v6303, 16
        %v6392 = vrot.slane %v6390, 1
        %v6393 = vor.u32 %v6388, %v6392
        %v6395 = vshll.u32 %v6357, 16
        %v6397 = vrot.slane %v6395, 1
        %v6398 = vsel %vm6374, %v6393, %v6397
        %v6400 = vshrl.u32 %v6304, 16
        %v6402 = vshll.u32 %v6304, 16
        %v6404 = vrot.slane %v6402, 1
        %v6405 = vor.u32 %v6400, %v6404
        %v6407 = vshll.u32 %v6358, 16
        %v6409 = vrot.slane %v6407, 1
        %v6410 = vsel %vm6374, %v6405, %v6409
        %v6412 = vshrl.u32 %v6305, 16
        %v6414 = vshll.u32 %v6305, 16
        %v6416 = vrot.slane %v6414, 1
        %v6417 = vor.u32 %v6412, %v6416
        %v6419 = vshll.u32 %v6359, 16
        %v6421 = vrot.slane %v6419, 1
        %v6422 = vsel %vm6374, %v6417, %v6421
        %v6424 = vshrl.u32 %v6306, 16
        %v6426 = vshll.u32 %v6306, 16
        %v6428 = vrot.slane %v6426, 1
        %v6429 = vor.u32 %v6424, %v6428
        %v6431 = vshll.u32 %v6360, 16
        %v6433 = vrot.slane %v6431, 1
        %v6434 = vsel %vm6374, %v6429, %v6433
        %v6436 = vshrl.u32 %v6307, 16
        %v6438 = vshll.u32 %v6307, 16
        %v6440 = vrot.slane %v6438, 1
        %v6441 = vor.u32 %v6436, %v6440
        %v6443 = vshll.u32 %v6361, 16
        %v6445 = vrot.slane %v6443, 1
        %v6446 = vsel %vm6374, %v6441, %v6445
        %v6448 = vshrl.u32 %v6308, 16
        %v6450 = vshll.u32 %v6308, 16
        %v6452 = vrot.slane %v6450, 1
        %v6453 = vor.u32 %v6448, %v6452
        %v6455 = vshll.u32 %v6362, 16
        %v6457 = vrot.slane %v6455, 1
        %v6458 = vsel %vm6374, %v6453, %v6457
        %v6460 = vshrl.u32 %v6309, 16
        %v6462 = vshll.u32 %v6309, 16
        %v6464 = vrot.slane %v6462, 1
        %v6465 = vor.u32 %v6460, %v6464
        %v6467 = vshll.u32 %v6363, 16
        %v6469 = vrot.slane %v6467, 1
        %v6470 = vsel %vm6374, %v6465, %v6469
        %v6472 = vshrl.u32 %v6310, 16
        %v6474 = vshll.u32 %v6310, 16
        %v6476 = vrot.slane %v6474, 1
        %v6477 = vor.u32 %v6472, %v6476
        %v6479 = vshll.u32 %v6364, 16
        %v6481 = vrot.slane %v6479, 1
        %v6482 = vsel %vm6374, %v6477, %v6481
        %v6484 = vshrl.u32 %v6311, 16
        %v6486 = vshll.u32 %v6311, 16
        %v6488 = vrot.slane %v6486, 1
        %v6489 = vor.u32 %v6484, %v6488
        %v6491 = vshll.u32 %v6365, 16
        %v6493 = vrot.slane %v6491, 1
        %v6494 = vsel %vm6374, %v6489, %v6493
        %v6496 = vshrl.u32 %v6312, 16
        %v6498 = vshll.u32 %v6312, 16
        %v6500 = vrot.slane %v6498, 1
        %v6501 = vor.u32 %v6496, %v6500
        %v6503 = vshll.u32 %v6366, 16
        %v6505 = vrot.slane %v6503, 1
        %v6506 = vsel %vm6374, %v6501, %v6505
        %v6508 = vshrl.u32 %v6313, 16
        %v6510 = vshll.u32 %v6313, 16
        %v6512 = vrot.slane %v6510, 1
        %v6513 = vor.u32 %v6508, %v6512
        %v6515 = vshll.u32 %v6367, 16
        %v6517 = vrot.slane %v6515, 1
        %v6518 = vsel %vm6374, %v6513, %v6517
        %v6520 = vshrl.u32 %v6314, 16
        %v6522 = vshll.u32 %v6314, 16
        %v6524 = vrot.slane %v6522, 1
        %v6525 = vor.u32 %v6520, %v6524
        %v6527 = vshll.u32 %v6368, 16
        %v6529 = vrot.slane %v6527, 1
        %v6530 = vsel %vm6374, %v6525, %v6529
        %v6532 = vshrl.u32 %v6315, 16
        %v6534 = vshll.u32 %v6315, 16
        %v6536 = vrot.slane %v6534, 1
        %v6537 = vor.u32 %v6532, %v6536
        %v6539 = vshll.u32 %v6369, 16
        %v6541 = vrot.slane %v6539, 1
        %v6542 = vsel %vm6374, %v6537, %v6541
        %v6544 = vshrl.u32 %v6316, 16
        %v6546 = vshll.u32 %v6316, 16
        %v6548 = vrot.slane %v6546, 1
        %v6549 = vor.u32 %v6544, %v6548
        %v6551 = vshll.u32 %v6370, 16
        %v6553 = vrot.slane %v6551, 1
        %v6554 = vsel %vm6374, %v6549, %v6553
        %v6556 = vshrl.u32 %v6317, 16
        %v6558 = vshll.u32 %v6317, 16
        %v6560 = vrot.slane %v6558, 1
        %v6561 = vor.u32 %v6556, %v6560
        %v6563 = vshll.u32 %v6371, 16
        %v6565 = vrot.slane %v6563, 1
        %v6566 = vsel %vm6374, %v6561, %v6565
        %v6568 = vshrl.u32 %v6318, 16
        %v6570 = vshll.u32 %v6318, 16
        %v6572 = vrot.slane %v6570, 1
        %v6573 = vor.u32 %v6568, %v6572
        %v6575 = vshll.u32 %v6372, 16
        %v6577 = vrot.slane %v6575, 1
        %v6578 = vsel %vm6374, %v6573, %v6577
        %v6580 = vshrl.u32 %v6319, 16
        %v6582 = vshll.u32 %v6319, 16
        %v6584 = vrot.slane %v6582, 1
        %v6585 = vor.u32 %v6580, %v6584
        %v6587 = vshll.u32 %v6373, 16
        %v6589 = vrot.slane %v6587, 1
        %v6590 = vsel %vm6374, %v6585, %v6589
        %6591 = vrot.lane.b32.xlu0 %v6386, 64
        %v6592 = vpop.permute.xlu0 %6591
        %6593 = vrot.lane.b32.xlu0 %v6398, 64
        %v6594 = vpop.permute.xlu0 %6593
        %6595 = vrot.lane.b32.xlu0 %v6410, 64
        %v6596 = vpop.permute.xlu0 %6595
        %6597 = vrot.lane.b32.xlu0 %v6422, 64
        %v6598 = vpop.permute.xlu0 %6597
        %6599 = vrot.lane.b32.xlu0 %v6434, 64
        %v6600 = vpop.permute.xlu0 %6599
        %6601 = vrot.lane.b32.xlu0 %v6446, 64
        %v6602 = vpop.permute.xlu0 %6601
        %6603 = vrot.lane.b32.xlu0 %v6458, 64
        %v6604 = vpop.permute.xlu0 %6603
        %6605 = vrot.lane.b32.xlu0 %v6470, 64
        %v6606 = vpop.permute.xlu0 %6605
        %6607 = vrot.lane.b32.xlu0 %v6482, 64
        %v6608 = vpop.permute.xlu0 %6607
        %6609 = vrot.lane.b32.xlu0 %v6494, 64
        %v6610 = vpop.permute.xlu0 %6609
        %6611 = vrot.lane.b32.xlu0 %v6506, 64
        %v6612 = vpop.permute.xlu0 %6611
        %6613 = vrot.lane.b32.xlu0 %v6518, 64
        %v6614 = vpop.permute.xlu0 %6613
        %6615 = vrot.lane.b32.xlu0 %v6530, 64
        %v6616 = vpop.permute.xlu0 %6615
        %6617 = vrot.lane.b32.xlu0 %v6542, 64
        %v6618 = vpop.permute.xlu0 %6617
        %6619 = vrot.lane.b32.xlu0 %v6554, 64
        %v6620 = vpop.permute.xlu0 %6619
        %6621 = vrot.lane.b32.xlu0 %v6566, 64
        %v6622 = vpop.permute.xlu0 %6621
        %6623 = vrot.lane.b32.xlu0 %v6578, 64
        %v6624 = vpop.permute.xlu0 %6623
        %6625 = vrot.lane.b32.xlu0 %v6590, 64
        %v6626 = vpop.permute.xlu0 %6625
        %v6645 = vunpack.c.l.b16 %v6212
        %v6646 = vunpack.c.l.b16 %v6213
        %v6647 = vunpack.c.l.b16 %v6214
        %v6648 = vunpack.c.l.b16 %v6215
        %v6649 = vunpack.c.l.b16 %v6216
        %v6650 = vunpack.c.l.b16 %v6217
        %v6651 = vunpack.c.l.b16 %v6218
        %v6652 = vunpack.c.l.b16 %v6219
        %v6653 = vunpack.c.l.b16 %v6220
        %v6654 = vunpack.c.l.b16 %v6221
        %v6655 = vunpack.c.l.b16 %v6222
        %v6656 = vunpack.c.l.b16 %v6223
        %v6657 = vunpack.c.l.b16 %v6224
        %v6658 = vunpack.c.l.b16 %v6225
        %v6659 = vunpack.c.l.b16 %v6226
        %v6660 = vunpack.c.l.b16 %v6227
        %v6661 = vunpack.c.l.b16 %v6228
        %v6662 = vunpack.c.l.b16 %v6229
        %v6663 = vpack.c.b16 %v6267, %v6645
        %v6664 = vpack.c.b16 %v6269, %v6646
        %v6665 = vpack.c.b16 %v6271, %v6647
        %v6666 = vpack.c.b16 %v6273, %v6648
        %v6667 = vpack.c.b16 %v6275, %v6649
        %v6668 = vpack.c.b16 %v6277, %v6650
        %v6669 = vpack.c.b16 %v6279, %v6651
        %v6670 = vpack.c.b16 %v6281, %v6652
        %v6671 = vpack.c.b16 %v6283, %v6653
        %v6672 = vpack.c.b16 %v6285, %v6654
        %v6673 = vpack.c.b16 %v6287, %v6655
        %v6674 = vpack.c.b16 %v6289, %v6656
        %v6675 = vpack.c.b16 %v6291, %v6657
        %v6676 = vpack.c.b16 %v6293, %v6658
        %v6677 = vpack.c.b16 %v6295, %v6659
        %v6678 = vpack.c.b16 %v6297, %v6660
        %v6679 = vpack.c.b16 %v6299, %v6661
        %v6680 = vpack.c.b16 %v6301, %v6662
        %vm6681 = vcmask 1046528
        %v6682 = vrot.slane %v6663, 1
        %v6683 = vrot.slane %v6356, 1
        %v6684 = vsel %vm6681, %v6682, %v6683
        %v6685 = vrot.slane %v6664, 1
        %v6686 = vrot.slane %v6357, 1
        %v6687 = vsel %vm6681, %v6685, %v6686
        %v6688 = vrot.slane %v6665, 1
        %v6689 = vrot.slane %v6358, 1
        %v6690 = vsel %vm6681, %v6688, %v6689
        %v6691 = vrot.slane %v6666, 1
        %v6692 = vrot.slane %v6359, 1
        %v6693 = vsel %vm6681, %v6691, %v6692
        %v6694 = vrot.slane %v6667, 1
        %v6695 = vrot.slane %v6360, 1
        %v6696 = vsel %vm6681, %v6694, %v6695
        %v6697 = vrot.slane %v6668, 1
        %v6698 = vrot.slane %v6361, 1
        %v6699 = vsel %vm6681, %v6697, %v6698
        %v6700 = vrot.slane %v6669, 1
        %v6701 = vrot.slane %v6362, 1
        %v6702 = vsel %vm6681, %v6700, %v6701
        %v6703 = vrot.slane %v6670, 1
        %v6704 = vrot.slane %v6363, 1
        %v6705 = vsel %vm6681, %v6703, %v6704
        %v6706 = vrot.slane %v6671, 1
        %v6707 = vrot.slane %v6364, 1
        %v6708 = vsel %vm6681, %v6706, %v6707
        %v6709 = vrot.slane %v6672, 1
        %v6710 = vrot.slane %v6365, 1
        %v6711 = vsel %vm6681, %v6709, %v6710
        %v6712 = vrot.slane %v6673, 1
        %v6713 = vrot.slane %v6366, 1
        %v6714 = vsel %vm6681, %v6712, %v6713
        %v6715 = vrot.slane %v6674, 1
        %v6716 = vrot.slane %v6367, 1
        %v6717 = vsel %vm6681, %v6715, %v6716
        %v6718 = vrot.slane %v6675, 1
        %v6719 = vrot.slane %v6368, 1
        %v6720 = vsel %vm6681, %v6718, %v6719
        %v6721 = vrot.slane %v6676, 1
        %v6722 = vrot.slane %v6369, 1
        %v6723 = vsel %vm6681, %v6721, %v6722
        %v6724 = vrot.slane %v6677, 1
        %v6725 = vrot.slane %v6370, 1
        %v6726 = vsel %vm6681, %v6724, %v6725
        %v6727 = vrot.slane %v6678, 1
        %v6728 = vrot.slane %v6371, 1
        %v6729 = vsel %vm6681, %v6727, %v6728
        %v6730 = vrot.slane %v6679, 1
        %v6731 = vrot.slane %v6372, 1
        %v6732 = vsel %vm6681, %v6730, %v6731
        %v6733 = vrot.slane %v6680, 1
        %v6734 = vrot.slane %v6373, 1
        %v6735 = vsel %vm6681, %v6733, %v6734
        %vm6736 = vcmask 523264
        %v6738 = vsel %vm6736, %v6302, %v6592
        %v6741 = vsel %vm6736, %v6303, %v6594
        %v6744 = vsel %vm6736, %v6304, %v6596
        %v6747 = vsel %vm6736, %v6305, %v6598
        %v6750 = vsel %vm6736, %v6306, %v6600
        %v6753 = vsel %vm6736, %v6307, %v6602
        %v6756 = vsel %vm6736, %v6308, %v6604
        %v6759 = vsel %vm6736, %v6309, %v6606
        %v6762 = vsel %vm6736, %v6310, %v6608
        %v6765 = vsel %vm6736, %v6311, %v6610
        %v6768 = vsel %vm6736, %v6312, %v6612
        %v6771 = vsel %vm6736, %v6313, %v6614
        %v6774 = vsel %vm6736, %v6314, %v6616
        %v6777 = vsel %vm6736, %v6315, %v6618
        %v6780 = vsel %vm6736, %v6316, %v6620
        %v6783 = vsel %vm6736, %v6317, %v6622
        %v6786 = vsel %vm6736, %v6318, %v6624
        %v6789 = vsel %vm6736, %v6319, %v6626
        %v6815 = vunpack.c.l.b16 %v6133
        %v6816 = vunpack.c.l.b16 %v6134
        %v6817 = vunpack.c.l.b16 %v6135
        %v6818 = vunpack.c.l.b16 %v6136
        %v6819 = vunpack.c.l.b16 %v6137
        %v6820 = vunpack.c.l.b16 %v6138
        %v6821 = vunpack.c.l.b16 %v6139
        %v6822 = vunpack.c.l.b16 %v6140
        %v6823 = vunpack.c.l.b16 %v6141
        %v6824 = vunpack.c.l.b16 %v6142
        %v6825 = vunpack.c.l.b16 %v6143
        %v6826 = vunpack.c.l.b16 %v6144
        %v6827 = vunpack.c.l.b16 %v6145
        %v6828 = vunpack.c.l.b16 %v6146
        %v6829 = vunpack.c.l.b16 %v6147
        %v6830 = vunpack.c.l.b16 %v6148
        %v6831 = vunpack.c.l.b16 %v6149
        %v6832 = vunpack.c.l.b16 %v6150
        %v6833 = vunpack.c.l.b16 %v6151
        %v6834 = vunpack.c.l.b16 %v6152
        %v6835 = vunpack.c.l.b16 %v6153
        %v6836 = vunpack.c.l.b16 %v6154
        %v6837 = vunpack.c.l.b16 %v6155
        %v6838 = vunpack.c.l.b16 %v6156
        %v6839 = vpack.c.b16 %v6816, %v6815
        %v6840 = vpack.c.b16 %v6818, %v6817
        %v6841 = vpack.c.b16 %v6820, %v6819
        %v6842 = vpack.c.b16 %v6822, %v6821
        %v6843 = vpack.c.b16 %v6824, %v6823
        %v6844 = vpack.c.b16 %v6826, %v6825
        %v6845 = vpack.c.b16 %v6828, %v6827
        %v6846 = vpack.c.b16 %v6830, %v6829
        %v6847 = vpack.c.b16 %v6832, %v6831
        %v6848 = vpack.c.b16 %v6834, %v6833
        %v6849 = vpack.c.b16 %v6836, %v6835
        %v6850 = vpack.c.b16 %v6838, %v6837
        %v6864 = vsel %vm6736, %v6684, 0
        %v6867 = vsel %vm6736, %v6687, 0
        %v6870 = vsel %vm6736, %v6690, 0
        %v6873 = vsel %vm6736, %v6693, 0
        %v6876 = vsel %vm6736, %v6696, 0
        %v6879 = vsel %vm6736, %v6699, 0
        %v6882 = vsel %vm6736, %v6702, 0
        %v6885 = vsel %vm6736, %v6705, 0
        %v6888 = vsel %vm6736, %v6708, 0
        %v6891 = vsel %vm6736, %v6711, 0
        %v6894 = vsel %vm6736, %v6714, 0
        %v6897 = vsel %vm6736, %v6717, 0
        %v6900 = vsel %vm6736, %v6720, 0
        %v6903 = vsel %vm6736, %v6723, 0
        %v6906 = vsel %vm6736, %v6726, 0
        %v6909 = vsel %vm6736, %v6729, 0
        %v6912 = vsel %vm6736, %v6732, 0
        %v6915 = vsel %vm6736, %v6735, 0
        %6917 = vmatpush.bf16.msra.mxu0 %v6846
        %6918 = vmatpush.bf16.msra.mxu0 %v6845
        %6919 = vmatpush.bf16.msra.mxu0 %v6844
        %6920 = vmatpush.bf16.msra.mxu0 %v6843
        %6921 = vmatpush.bf16.msra.mxu0 %v6842
        %6922 = vmatpush.bf16.msra.mxu0 %v6841
        %6923 = vmatpush.bf16.msra.mxu0 %v6840
        %6924 = vmatpush.bf16.msra.mxu0 %v6839
        %6925 = vmatmul.bf16.gmra.mxu0 %v6738
        %v6926 = vpop.f32.mrf.mxu0
        %v6927 = vadd.f32 0.0, %v6926
        %v6928 = vpop.f32.mrf.mxu0
        %v6929 = vadd.f32 0.0, %v6928
        %6930 = vmatmul.bf16.gmra.mxu0 %v6741
        %v6931 = vpop.f32.mrf.mxu0
        %v6932 = vadd.f32 0.0, %v6931
        %v6933 = vpop.f32.mrf.mxu0
        %v6934 = vadd.f32 0.0, %v6933
        %6935 = vmatmul.bf16.gmra.mxu0 %v6744
        %v6936 = vpop.f32.mrf.mxu0
        %v6937 = vadd.f32 0.0, %v6936
        %v6938 = vpop.f32.mrf.mxu0
        %v6939 = vadd.f32 0.0, %v6938
        %6940 = vmatmul.bf16.gmra.mxu0 %v6747
        %v6941 = vpop.f32.mrf.mxu0
        %v6942 = vadd.f32 0.0, %v6941
        %v6943 = vpop.f32.mrf.mxu0
        %v6944 = vadd.f32 0.0, %v6943
        %6945 = vmatmul.bf16.gmra.mxu0 %v6750
        %v6946 = vpop.f32.mrf.mxu0
        %v6947 = vadd.f32 0.0, %v6946
        %v6948 = vpop.f32.mrf.mxu0
        %v6949 = vadd.f32 0.0, %v6948
        %6950 = vmatmul.bf16.gmra.mxu0 %v6753
        %v6951 = vpop.f32.mrf.mxu0
        %v6952 = vadd.f32 0.0, %v6951
        %v6953 = vpop.f32.mrf.mxu0
        %v6954 = vadd.f32 0.0, %v6953
        %6955 = vmatmul.bf16.gmra.mxu0 %v6756
        %v6956 = vpop.f32.mrf.mxu0
        %v6957 = vadd.f32 0.0, %v6956
        %v6958 = vpop.f32.mrf.mxu0
        %v6959 = vadd.f32 0.0, %v6958
        %6960 = vmatmul.bf16.gmra.mxu0 %v6759
        %v6961 = vpop.f32.mrf.mxu0
        %v6962 = vadd.f32 0.0, %v6961
        %v6963 = vpop.f32.mrf.mxu0
        %v6964 = vadd.f32 0.0, %v6963
        %6965 = vmatmul.bf16.gmra.mxu0 %v6762
        %v6966 = vpop.f32.mrf.mxu0
        %v6967 = vadd.f32 0.0, %v6966
        %v6968 = vpop.f32.mrf.mxu0
        %v6969 = vadd.f32 0.0, %v6968
        %6970 = vmatmul.bf16.gmra.mxu0 %v6765
        %v6971 = vpop.f32.mrf.mxu0
        %v6972 = vadd.f32 0.0, %v6971
        %v6973 = vpop.f32.mrf.mxu0
        %v6974 = vadd.f32 0.0, %v6973
        %6975 = vmatmul.bf16.gmra.mxu0 %v6768
        %v6976 = vpop.f32.mrf.mxu0
        %v6977 = vadd.f32 0.0, %v6976
        %v6978 = vpop.f32.mrf.mxu0
        %v6979 = vadd.f32 0.0, %v6978
        %6980 = vmatmul.bf16.gmra.mxu0 %v6771
        %v6981 = vpop.f32.mrf.mxu0
        %v6982 = vadd.f32 0.0, %v6981
        %v6983 = vpop.f32.mrf.mxu0
        %v6984 = vadd.f32 0.0, %v6983
        %6985 = vmatmul.bf16.gmra.mxu0 %v6774
        %v6986 = vpop.f32.mrf.mxu0
        %v6987 = vadd.f32 0.0, %v6986
        %v6988 = vpop.f32.mrf.mxu0
        %v6989 = vadd.f32 0.0, %v6988
        %6990 = vmatmul.bf16.gmra.mxu0 %v6777
        %v6991 = vpop.f32.mrf.mxu0
        %v6992 = vadd.f32 0.0, %v6991
        %v6993 = vpop.f32.mrf.mxu0
        %v6994 = vadd.f32 0.0, %v6993
        %6995 = vmatmul.bf16.gmra.mxu0 %v6780
        %v6996 = vpop.f32.mrf.mxu0
        %v6997 = vadd.f32 0.0, %v6996
        %v6998 = vpop.f32.mrf.mxu0
        %v6999 = vadd.f32 0.0, %v6998
        %7000 = vmatmul.bf16.gmra.mxu0 %v6783
        %v7001 = vpop.f32.mrf.mxu0
        %v7002 = vadd.f32 0.0, %v7001
        %v7003 = vpop.f32.mrf.mxu0
        %v7004 = vadd.f32 0.0, %v7003
        %7005 = vmatmul.bf16.gmra.mxu0 %v6786
        %v7006 = vpop.f32.mrf.mxu0
        %v7007 = vadd.f32 0.0, %v7006
        %v7008 = vpop.f32.mrf.mxu0
        %v7009 = vadd.f32 0.0, %v7008
        %7010 = vmatmul.bf16.gmra.mxu0 %v6789
        %v7011 = vpop.f32.mrf.mxu0
        %v7012 = vadd.f32 0.0, %v7011
        %v7013 = vpop.f32.mrf.mxu0
        %v7014 = vadd.f32 0.0, %v7013
        %7015 = vdwg.mxu0
        %7016 = vmatpush.bf16.msra.mxu0 0
        %7017 = vmatpush.bf16.msra.mxu0 0
        %7018 = vmatpush.bf16.msra.mxu0 0
        %7019 = vmatpush.bf16.msra.mxu0 0
        %7020 = vmatpush.bf16.msra.mxu0 %v6850
        %7021 = vmatpush.bf16.msra.mxu0 %v6849
        %7022 = vmatpush.bf16.msra.mxu0 %v6848
        %7023 = vmatpush.bf16.msra.mxu0 %v6847
        %7024 = vmatmul.bf16.gmra.mxu0 %v6864
        %v7025 = vpop.f32.mrf.mxu0
        %v7026 = vadd.f32 %v6927, %v7025
        %v7027 = vpop.f32.mrf.mxu0
        %v7028 = vadd.f32 %v6929, %v7027
        %7029 = vmatmul.bf16.gmra.mxu0 %v6867
        %v7030 = vpop.f32.mrf.mxu0
        %v7031 = vadd.f32 %v6932, %v7030
        %v7032 = vpop.f32.mrf.mxu0
        %v7033 = vadd.f32 %v6934, %v7032
        %7034 = vmatmul.bf16.gmra.mxu0 %v6870
        %v7035 = vpop.f32.mrf.mxu0
        %v7036 = vadd.f32 %v6937, %v7035
        %v7037 = vpop.f32.mrf.mxu0
        %v7038 = vadd.f32 %v6939, %v7037
        %7039 = vmatmul.bf16.gmra.mxu0 %v6873
        %v7040 = vpop.f32.mrf.mxu0
        %v7041 = vadd.f32 %v6942, %v7040
        %v7042 = vpop.f32.mrf.mxu0
        %v7043 = vadd.f32 %v6944, %v7042
        %7044 = vmatmul.bf16.gmra.mxu0 %v6876
        %v7045 = vpop.f32.mrf.mxu0
        %v7046 = vadd.f32 %v6947, %v7045
        %v7047 = vpop.f32.mrf.mxu0
        %v7048 = vadd.f32 %v6949, %v7047
        %7049 = vmatmul.bf16.gmra.mxu0 %v6879
        %v7050 = vpop.f32.mrf.mxu0
        %v7051 = vadd.f32 %v6952, %v7050
        %v7052 = vpop.f32.mrf.mxu0
        %v7053 = vadd.f32 %v6954, %v7052
        %7054 = vmatmul.bf16.gmra.mxu0 %v6882
        %v7055 = vpop.f32.mrf.mxu0
        %v7056 = vadd.f32 %v6957, %v7055
        %v7057 = vpop.f32.mrf.mxu0
        %v7058 = vadd.f32 %v6959, %v7057
        %7059 = vmatmul.bf16.gmra.mxu0 %v6885
        %v7060 = vpop.f32.mrf.mxu0
        %v7061 = vadd.f32 %v6962, %v7060
        %v7062 = vpop.f32.mrf.mxu0
        %v7063 = vadd.f32 %v6964, %v7062
        %7064 = vmatmul.bf16.gmra.mxu0 %v6888
        %v7065 = vpop.f32.mrf.mxu0
        %v7066 = vadd.f32 %v6967, %v7065
        %v7067 = vpop.f32.mrf.mxu0
        %v7068 = vadd.f32 %v6969, %v7067
        %7069 = vmatmul.bf16.gmra.mxu0 %v6891
        %v7070 = vpop.f32.mrf.mxu0
        %v7071 = vadd.f32 %v6972, %v7070
        %v7072 = vpop.f32.mrf.mxu0
        %v7073 = vadd.f32 %v6974, %v7072
        %7074 = vmatmul.bf16.gmra.mxu0 %v6894
        %v7075 = vpop.f32.mrf.mxu0
        %v7076 = vadd.f32 %v6977, %v7075
        %v7077 = vpop.f32.mrf.mxu0
        %v7078 = vadd.f32 %v6979, %v7077
        %7079 = vmatmul.bf16.gmra.mxu0 %v6897
        %v7080 = vpop.f32.mrf.mxu0
        %v7081 = vadd.f32 %v6982, %v7080
        %v7082 = vpop.f32.mrf.mxu0
        %v7083 = vadd.f32 %v6984, %v7082
        %7084 = vmatmul.bf16.gmra.mxu0 %v6900
        %v7085 = vpop.f32.mrf.mxu0
        %v7086 = vadd.f32 %v6987, %v7085
        %v7087 = vpop.f32.mrf.mxu0
        %v7088 = vadd.f32 %v6989, %v7087
        %7089 = vmatmul.bf16.gmra.mxu0 %v6903
        %v7090 = vpop.f32.mrf.mxu0
        %v7091 = vadd.f32 %v6992, %v7090
        %v7092 = vpop.f32.mrf.mxu0
        %v7093 = vadd.f32 %v6994, %v7092
        %7094 = vmatmul.bf16.gmra.mxu0 %v6906
        %v7095 = vpop.f32.mrf.mxu0
        %v7096 = vadd.f32 %v6997, %v7095
        %v7097 = vpop.f32.mrf.mxu0
        %v7098 = vadd.f32 %v6999, %v7097
        %7099 = vmatmul.bf16.gmra.mxu0 %v6909
        %v7100 = vpop.f32.mrf.mxu0
        %v7101 = vadd.f32 %v7002, %v7100
        %v7102 = vpop.f32.mrf.mxu0
        %v7103 = vadd.f32 %v7004, %v7102
        %7104 = vmatmul.bf16.gmra.mxu0 %v6912
        %v7105 = vpop.f32.mrf.mxu0
        %v7106 = vadd.f32 %v7007, %v7105
        %v7107 = vpop.f32.mrf.mxu0
        %v7108 = vadd.f32 %v7009, %v7107
        %7109 = vmatmul.bf16.gmra.mxu0 %v6915
        %v7110 = vpop.f32.mrf.mxu0
        %v7111 = vadd.f32 %v7012, %v7110
        %v7112 = vpop.f32.mrf.mxu0
        %v7113 = vadd.f32 %v7014, %v7112
        %7114 = vdwg.mxu0
        %7147 = vrot.lane.b32.xlu0 %v7031, 125
        %v7148 = vpop.permute.xlu0 %7147
        %7149 = vrot.lane.b32.xlu0 %v7033, 125
        %v7150 = vpop.permute.xlu0 %7149
        %7151 = vrot.lane.b32.xlu0 %v7036, 125
        %v7152 = vpop.permute.xlu0 %7151
        %7153 = vrot.lane.b32.xlu0 %v7038, 125
        %v7154 = vpop.permute.xlu0 %7153
        %7155 = vrot.lane.b32.xlu0 %v7041, 125
        %v7156 = vpop.permute.xlu0 %7155
        %7157 = vrot.lane.b32.xlu0 %v7043, 125
        %v7158 = vpop.permute.xlu0 %7157
        %7159 = vrot.lane.b32.xlu0 %v7046, 125
        %v7160 = vpop.permute.xlu0 %7159
        %7161 = vrot.lane.b32.xlu0 %v7048, 125
        %v7162 = vpop.permute.xlu0 %7161
        %7163 = vrot.lane.b32.xlu0 %v7051, 125
        %v7164 = vpop.permute.xlu0 %7163
        %7165 = vrot.lane.b32.xlu0 %v7053, 125
        %v7166 = vpop.permute.xlu0 %7165
        %7167 = vrot.lane.b32.xlu0 %v7056, 125
        %v7168 = vpop.permute.xlu0 %7167
        %7169 = vrot.lane.b32.xlu0 %v7058, 125
        %v7170 = vpop.permute.xlu0 %7169
        %7171 = vrot.lane.b32.xlu0 %v7061, 125
        %v7172 = vpop.permute.xlu0 %7171
        %7173 = vrot.lane.b32.xlu0 %v7063, 125
        %v7174 = vpop.permute.xlu0 %7173
        %7175 = vrot.lane.b32.xlu0 %v7066, 125
        %v7176 = vpop.permute.xlu0 %7175
        %7177 = vrot.lane.b32.xlu0 %v7068, 125
        %v7178 = vpop.permute.xlu0 %7177
        %7179 = vrot.lane.b32.xlu0 %v7071, 125
        %v7180 = vpop.permute.xlu0 %7179
        %7181 = vrot.lane.b32.xlu0 %v7073, 125
        %v7182 = vpop.permute.xlu0 %7181
        %7183 = vrot.lane.b32.xlu0 %v7076, 125
        %v7184 = vpop.permute.xlu0 %7183
        %7185 = vrot.lane.b32.xlu0 %v7078, 125
        %v7186 = vpop.permute.xlu0 %7185
        %7187 = vrot.lane.b32.xlu0 %v7081, 125
        %v7188 = vpop.permute.xlu0 %7187
        %7189 = vrot.lane.b32.xlu0 %v7083, 125
        %v7190 = vpop.permute.xlu0 %7189
        %7191 = vrot.lane.b32.xlu0 %v7086, 125
        %v7192 = vpop.permute.xlu0 %7191
        %7193 = vrot.lane.b32.xlu0 %v7088, 125
        %v7194 = vpop.permute.xlu0 %7193
        %7195 = vrot.lane.b32.xlu0 %v7091, 125
        %v7196 = vpop.permute.xlu0 %7195
        %7197 = vrot.lane.b32.xlu0 %v7093, 125
        %v7198 = vpop.permute.xlu0 %7197
        %7199 = vrot.lane.b32.xlu0 %v7096, 125
        %v7200 = vpop.permute.xlu0 %7199
        %7201 = vrot.lane.b32.xlu0 %v7098, 125
        %v7202 = vpop.permute.xlu0 %7201
        %7203 = vrot.lane.b32.xlu0 %v7101, 125
        %v7204 = vpop.permute.xlu0 %7203
        %7205 = vrot.lane.b32.xlu0 %v7103, 125
        %v7206 = vpop.permute.xlu0 %7205
        %7207 = vrot.lane.b32.xlu0 %v7106, 125
        %v7208 = vpop.permute.xlu0 %7207
        %7209 = vrot.lane.b32.xlu0 %v7108, 125
        %v7210 = vpop.permute.xlu0 %7209
        %v7243 = vadd.f32 %v7026, %v7148
        %v7244 = vadd.f32 %v7028, %v7150
        %v7245 = vadd.f32 %v7031, %v7152
        %v7246 = vadd.f32 %v7033, %v7154
        %v7247 = vadd.f32 %v7036, %v7156
        %v7248 = vadd.f32 %v7038, %v7158
        %v7249 = vadd.f32 %v7041, %v7160
        %v7250 = vadd.f32 %v7043, %v7162
        %v7251 = vadd.f32 %v7046, %v7164
        %v7252 = vadd.f32 %v7048, %v7166
        %v7253 = vadd.f32 %v7051, %v7168
        %v7254 = vadd.f32 %v7053, %v7170
        %v7255 = vadd.f32 %v7056, %v7172
        %v7256 = vadd.f32 %v7058, %v7174
        %v7257 = vadd.f32 %v7061, %v7176
        %v7258 = vadd.f32 %v7063, %v7178
        %v7259 = vadd.f32 %v7066, %v7180
        %v7260 = vadd.f32 %v7068, %v7182
        %v7261 = vadd.f32 %v7071, %v7184
        %v7262 = vadd.f32 %v7073, %v7186
        %v7263 = vadd.f32 %v7076, %v7188
        %v7264 = vadd.f32 %v7078, %v7190
        %v7265 = vadd.f32 %v7081, %v7192
        %v7266 = vadd.f32 %v7083, %v7194
        %v7267 = vadd.f32 %v7086, %v7196
        %v7268 = vadd.f32 %v7088, %v7198
        %v7269 = vadd.f32 %v7091, %v7200
        %v7270 = vadd.f32 %v7093, %v7202
        %v7271 = vadd.f32 %v7096, %v7204
        %v7272 = vadd.f32 %v7098, %v7206
        %v7273 = vadd.f32 %v7101, %v7208
        %v7274 = vadd.f32 %v7103, %v7210
        %7277 = vrot.lane.b32.xlu0 %v7036, 122
        %v7278 = vpop.permute.xlu0 %7277
        %7279 = vrot.lane.b32.xlu0 %v7038, 122
        %v7280 = vpop.permute.xlu0 %7279
        %7281 = vrot.lane.b32.xlu0 %v7041, 122
        %v7282 = vpop.permute.xlu0 %7281
        %7283 = vrot.lane.b32.xlu0 %v7043, 122
        %v7284 = vpop.permute.xlu0 %7283
        %7285 = vrot.lane.b32.xlu0 %v7046, 122
        %v7286 = vpop.permute.xlu0 %7285
        %7287 = vrot.lane.b32.xlu0 %v7048, 122
        %v7288 = vpop.permute.xlu0 %7287
        %7289 = vrot.lane.b32.xlu0 %v7051, 122
        %v7290 = vpop.permute.xlu0 %7289
        %7291 = vrot.lane.b32.xlu0 %v7053, 122
        %v7292 = vpop.permute.xlu0 %7291
        %7293 = vrot.lane.b32.xlu0 %v7056, 122
        %v7294 = vpop.permute.xlu0 %7293
        %7295 = vrot.lane.b32.xlu0 %v7058, 122
        %v7296 = vpop.permute.xlu0 %7295
        %7297 = vrot.lane.b32.xlu0 %v7061, 122
        %v7298 = vpop.permute.xlu0 %7297
        %7299 = vrot.lane.b32.xlu0 %v7063, 122
        %v7300 = vpop.permute.xlu0 %7299
        %7301 = vrot.lane.b32.xlu0 %v7066, 122
        %v7302 = vpop.permute.xlu0 %7301
        %7303 = vrot.lane.b32.xlu0 %v7068, 122
        %v7304 = vpop.permute.xlu0 %7303
        %7305 = vrot.lane.b32.xlu0 %v7071, 122
        %v7306 = vpop.permute.xlu0 %7305
        %7307 = vrot.lane.b32.xlu0 %v7073, 122
        %v7308 = vpop.permute.xlu0 %7307
        %7309 = vrot.lane.b32.xlu0 %v7076, 122
        %v7310 = vpop.permute.xlu0 %7309
        %7311 = vrot.lane.b32.xlu0 %v7078, 122
        %v7312 = vpop.permute.xlu0 %7311
        %7313 = vrot.lane.b32.xlu0 %v7081, 122
        %v7314 = vpop.permute.xlu0 %7313
        %7315 = vrot.lane.b32.xlu0 %v7083, 122
        %v7316 = vpop.permute.xlu0 %7315
        %7317 = vrot.lane.b32.xlu0 %v7086, 122
        %v7318 = vpop.permute.xlu0 %7317
        %7319 = vrot.lane.b32.xlu0 %v7088, 122
        %v7320 = vpop.permute.xlu0 %7319
        %7321 = vrot.lane.b32.xlu0 %v7091, 122
        %v7322 = vpop.permute.xlu0 %7321
        %7323 = vrot.lane.b32.xlu0 %v7093, 122
        %v7324 = vpop.permute.xlu0 %7323
        %7325 = vrot.lane.b32.xlu0 %v7096, 122
        %v7326 = vpop.permute.xlu0 %7325
        %7327 = vrot.lane.b32.xlu0 %v7098, 122
        %v7328 = vpop.permute.xlu0 %7327
        %7329 = vrot.lane.b32.xlu0 %v7101, 122
        %v7330 = vpop.permute.xlu0 %7329
        %7331 = vrot.lane.b32.xlu0 %v7103, 122
        %v7332 = vpop.permute.xlu0 %7331
        %7333 = vrot.lane.b32.xlu0 %v7106, 122
        %v7334 = vpop.permute.xlu0 %7333
        %7335 = vrot.lane.b32.xlu0 %v7108, 122
        %v7336 = vpop.permute.xlu0 %7335
        %7337 = vrot.lane.b32.xlu0 %v7111, 122
        %v7338 = vpop.permute.xlu0 %7337
        %7339 = vrot.lane.b32.xlu0 %v7113, 122
        %v7340 = vpop.permute.xlu0 %7339
        %v7373 = vadd.f32 %v7243, %v7278
        %v7374 = vadd.f32 %v7244, %v7280
        %v7375 = vadd.f32 %v7245, %v7282
        %v7376 = vadd.f32 %v7246, %v7284
        %v7377 = vadd.f32 %v7247, %v7286
        %v7378 = vadd.f32 %v7248, %v7288
        %v7379 = vadd.f32 %v7249, %v7290
        %v7380 = vadd.f32 %v7250, %v7292
        %v7381 = vadd.f32 %v7251, %v7294
        %v7382 = vadd.f32 %v7252, %v7296
        %v7383 = vadd.f32 %v7253, %v7298
        %v7384 = vadd.f32 %v7254, %v7300
        %v7385 = vadd.f32 %v7255, %v7302
        %v7386 = vadd.f32 %v7256, %v7304
        %v7387 = vadd.f32 %v7257, %v7306
        %v7388 = vadd.f32 %v7258, %v7308
        %v7389 = vadd.f32 %v7259, %v7310
        %v7390 = vadd.f32 %v7260, %v7312
        %v7391 = vadd.f32 %v7261, %v7314
        %v7392 = vadd.f32 %v7262, %v7316
        %v7393 = vadd.f32 %v7263, %v7318
        %v7394 = vadd.f32 %v7264, %v7320
        %v7395 = vadd.f32 %v7265, %v7322
        %v7396 = vadd.f32 %v7266, %v7324
        %v7397 = vadd.f32 %v7267, %v7326
        %v7398 = vadd.f32 %v7268, %v7328
        %v7399 = vadd.f32 %v7269, %v7330
        %v7400 = vadd.f32 %v7270, %v7332
        %v7401 = vadd.f32 %v7271, %v7334
        %v7402 = vadd.f32 %v7272, %v7336
        %v7403 = vadd.f32 %v7273, %v7338
        %v7404 = vadd.f32 %v7274, %v7340
        %v7406 = vperm.slane %v6157, 0
        %v7408 = vadd.f32 %v7373, %v7406
        %v7409 = vadd.f32 %v7374, %v7406
        %v7410 = vadd.f32 %v7375, %v7406
        %v7411 = vadd.f32 %v7376, %v7406
        %v7412 = vadd.f32 %v7377, %v7406
        %v7413 = vadd.f32 %v7378, %v7406
        %v7414 = vadd.f32 %v7379, %v7406
        %v7415 = vadd.f32 %v7380, %v7406
        %v7416 = vadd.f32 %v7381, %v7406
        %v7417 = vadd.f32 %v7382, %v7406
        %v7418 = vadd.f32 %v7383, %v7406
        %v7419 = vadd.f32 %v7384, %v7406
        %v7420 = vadd.f32 %v7385, %v7406
        %v7421 = vadd.f32 %v7386, %v7406
        %v7422 = vadd.f32 %v7387, %v7406
        %v7423 = vadd.f32 %v7388, %v7406
        %v7424 = vadd.f32 %v7389, %v7406
        %v7425 = vadd.f32 %v7390, %v7406
        %v7426 = vadd.f32 %v7391, %v7406
        %v7427 = vadd.f32 %v7392, %v7406
        %v7428 = vadd.f32 %v7393, %v7406
        %v7429 = vadd.f32 %v7394, %v7406
        %v7430 = vadd.f32 %v7395, %v7406
        %v7431 = vadd.f32 %v7396, %v7406
        %v7432 = vadd.f32 %v7397, %v7406
        %v7433 = vadd.f32 %v7398, %v7406
        %v7434 = vadd.f32 %v7399, %v7406
        %v7435 = vadd.f32 %v7400, %v7406
        %v7436 = vadd.f32 %v7401, %v7406
        %v7437 = vadd.f32 %v7402, %v7406
        %v7438 = vadd.f32 %v7403, %v7406
        %v7439 = vadd.f32 %v7404, %v7406
        %s7440 = scalar_lea.vmem %s369, 24
        %v7441 = vld [vmem:[%s7440 + $0x1] sm:$0xff]
        %v7442 = vld [vmem:[%s7440 + $0x9] sm:$0xff]
        %v7443 = vld [vmem:[%s7440 + $0x19] sm:$0xff]
        %v7444 = vld [vmem:[%s7440 + $0x21] sm:$0xff]
        %v7445 = vld [vmem:[%s7440 + $0x31] sm:$0xff]
        %v7446 = vld [vmem:[%s7440 + $0x39] sm:$0xff]
        %v7447 = vld [vmem:[%s7440 + $0x49] sm:$0xff]
        %v7448 = vld [vmem:[%s7440 + $0x51] sm:$0xff]
        %v7449 = vld [vmem:[%s7440 + $0x61] sm:$0xff]
        %v7450 = vld [vmem:[%s7440 + $0x69] sm:$0xff]
        %v7451 = vld [vmem:[%s7440 + $0x79] sm:$0xff]
        %v7452 = vld [vmem:[%s7440 + $0x81] sm:$0xff]
        %v7453 = vld [vmem:[%s7440 + $0x91] sm:$0xff]
        %v7454 = vld [vmem:[%s7440 + $0x99] sm:$0xff]
        %v7455 = vld [vmem:[%s7440 + $0xa9] sm:$0xff]
        %v7456 = vld [vmem:[%s7440 + $0xb1] sm:$0xff]
        %v7457 = vld [vmem:[%s7440 + $0xc1] sm:$0xff]
        %v7458 = vld [vmem:[%s7440 + $0xc9] sm:$0xff]
        %v7459 = vld [vmem:[%s7440 + $0xd9] sm:$0xff]
        %v7460 = vld [vmem:[%s7440 + $0xe1] sm:$0xff]
        %v7461 = vld [vmem:[%s7440 + $0xf1] sm:$0xff]
        %v7462 = vld [vmem:[%s7440 + $0xf9] sm:$0xff]
        %v7463 = vld [vmem:[%s7440 + $0x109] sm:$0xff]
        %v7464 = vld [vmem:[%s7440 + $0x111] sm:$0xff]
        %v7465 = vld [vmem:[%s7440 + $0x121] sm:$0xff]
        %v7466 = vld [vmem:[%s7440 + $0x129] sm:$0xff]
        %v7467 = vld [vmem:[%s7440 + $0x139] sm:$0xff]
        %v7468 = vld [vmem:[%s7440 + $0x141] sm:$0xff]
        %v7469 = vld [vmem:[%s7440 + $0x151] sm:$0xff]
        %v7470 = vld [vmem:[%s7440 + $0x159] sm:$0xff]
        %v7471 = vld [vmem:[%s7440 + $0x169] sm:$0xff]
        %v7472 = vld [vmem:[%s7440 + $0x171] sm:$0xff]
        %v7473 = vadd.f32 %v7408, %v7441
        %v7474 = vadd.f32 %v7409, %v7442
        %v7475 = vadd.f32 %v7410, %v7443
        %v7476 = vadd.f32 %v7411, %v7444
        %v7477 = vadd.f32 %v7412, %v7445
        %v7478 = vadd.f32 %v7413, %v7446
        %v7479 = vadd.f32 %v7414, %v7447
        %v7480 = vadd.f32 %v7415, %v7448
        %v7481 = vadd.f32 %v7416, %v7449
        %v7482 = vadd.f32 %v7417, %v7450
        %v7483 = vadd.f32 %v7418, %v7451
        %v7484 = vadd.f32 %v7419, %v7452
        %v7485 = vadd.f32 %v7420, %v7453
        %v7486 = vadd.f32 %v7421, %v7454
        %v7487 = vadd.f32 %v7422, %v7455
        %v7488 = vadd.f32 %v7423, %v7456
        %v7489 = vadd.f32 %v7424, %v7457
        %v7490 = vadd.f32 %v7425, %v7458
        %v7491 = vadd.f32 %v7426, %v7459
        %v7492 = vadd.f32 %v7427, %v7460
        %v7493 = vadd.f32 %v7428, %v7461
        %v7494 = vadd.f32 %v7429, %v7462
        %v7495 = vadd.f32 %v7430, %v7463
        %v7496 = vadd.f32 %v7431, %v7464
        %v7497 = vadd.f32 %v7432, %v7465
        %v7498 = vadd.f32 %v7433, %v7466
        %v7499 = vadd.f32 %v7434, %v7467
        %v7500 = vadd.f32 %v7435, %v7468
        %v7501 = vadd.f32 %v7436, %v7469
        %v7502 = vadd.f32 %v7437, %v7470
        %v7503 = vadd.f32 %v7438, %v7471
        %v7504 = vadd.f32 %v7439, %v7472
        %7505 = vst.msk [vmem:[%s374] sm:$0xff] %vm1173, %v7473
        %7506 = vst.msk [vmem:[%s374 + $0x8] sm:$0xff] %vm1173, %v7474
        %7507 = vst.msk [vmem:[%s374 + $0x10] sm:$0xff] %vm1173, %v7475
        %7508 = vst.msk [vmem:[%s374 + $0x18] sm:$0xff] %vm1173, %v7476
        %7509 = vst.msk [vmem:[%s374 + $0x20] sm:$0xff] %vm1173, %v7477
        %7510 = vst.msk [vmem:[%s374 + $0x28] sm:$0xff] %vm1173, %v7478
        %7511 = vst.msk [vmem:[%s374 + $0x30] sm:$0xff] %vm1173, %v7479
        %7512 = vst.msk [vmem:[%s374 + $0x38] sm:$0xff] %vm1173, %v7480
        %7513 = vst.msk [vmem:[%s374 + $0x40] sm:$0xff] %vm1173, %v7481
        %7514 = vst.msk [vmem:[%s374 + $0x48] sm:$0xff] %vm1173, %v7482
        %7515 = vst.msk [vmem:[%s374 + $0x50] sm:$0xff] %vm1173, %v7483
        %7516 = vst.msk [vmem:[%s374 + $0x58] sm:$0xff] %vm1173, %v7484
        %7517 = vst.msk [vmem:[%s374 + $0x60] sm:$0xff] %vm1173, %v7485
        %7518 = vst.msk [vmem:[%s374 + $0x68] sm:$0xff] %vm1173, %v7486
        %7519 = vst.msk [vmem:[%s374 + $0x70] sm:$0xff] %vm1173, %v7487
        %7520 = vst.msk [vmem:[%s374 + $0x78] sm:$0xff] %vm1173, %v7488
        %7521 = vst.msk [vmem:[%s374 + $0x80] sm:$0xff] %vm1173, %v7489
        %7522 = vst.msk [vmem:[%s374 + $0x88] sm:$0xff] %vm1173, %v7490
        %7523 = vst.msk [vmem:[%s374 + $0x90] sm:$0xff] %vm1173, %v7491
        %7524 = vst.msk [vmem:[%s374 + $0x98] sm:$0xff] %vm1173, %v7492
        %7525 = vst.msk [vmem:[%s374 + $0xa0] sm:$0xff] %vm1173, %v7493
        %7526 = vst.msk [vmem:[%s374 + $0xa8] sm:$0xff] %vm1173, %v7494
        %7527 = vst.msk [vmem:[%s374 + $0xb0] sm:$0xff] %vm1173, %v7495
        %7528 = vst.msk [vmem:[%s374 + $0xb8] sm:$0xff] %vm1173, %v7496
        %7529 = vst.msk [vmem:[%s374 + $0xc0] sm:$0xff] %vm1173, %v7497
        %7530 = vst.msk [vmem:[%s374 + $0xc8] sm:$0xff] %vm1173, %v7498
        %7531 = vst.msk [vmem:[%s374 + $0xd0] sm:$0xff] %vm1173, %v7499
        %7532 = vst.msk [vmem:[%s374 + $0xd8] sm:$0xff] %vm1173, %v7500
        %7533 = vst.msk [vmem:[%s374 + $0xe0] sm:$0xff] %vm1173, %v7501
        %7534 = vst.msk [vmem:[%s374 + $0xe8] sm:$0xff] %vm1173, %v7502
        %7535 = vst.msk [vmem:[%s374 + $0xf0] sm:$0xff] %vm1173, %v7503
        %7536 = vst.msk [vmem:[%s374 + $0xf8] sm:$0xff] %vm1173, %v7504
        %p7537 = scmp.lt.s32.totalorder %s22, 1
        %s7538 = scalar_select %p7537, %s22, 1
        %s7539 = smul.addr %s7538, 32
        %s7540 = smul.addr %s7539, 8
        %s7541 = scalar_lea.vmem %s7, %s7540
        // Predicated region
        $region80: #{edsr_forward.1} parent=47 // pred_check
          %p7542 = pneg %p192
        $region81: #{edsr_forward.1} parent=47 // pred_check_branch
          %7544 = sbr.rel (%p7542) target = $region83
        $region82: #{edsr_forward.1} parent=47 // pred_region
          _
        $region83: #{edsr_forward.1} parent=47 // pred_fallthru
          _
      $region48: #{edsr_forward.1} parent=5 // pred_fallthru
        _
      %p7545 = scmp.le.s32.totalorder 2, %s17
      // Predicated region
      $region84: #{edsr_forward.1} parent=5 // pred_check
        %p7546 = pneg %p7545
      $region85: #{edsr_forward.1} parent=5 // pred_check_branch
        %7548 = sbr.rel (%p7546) target = $region87
      $region86: #{edsr_forward.1} parent=5 // pred_region
        %s7549 = ssub.s32 %s17, 2
        // Predicated region
        $region88: #{edsr_forward.1} parent=86 // pred_check
          %p7550 = pneg %p198
        $region89: #{edsr_forward.1} parent=86 // pred_check_branch
          %7552 = sbr.rel (%p7550) target = $region91
        $region90: #{edsr_forward.1} parent=86 // pred_region
          %p7553 = scmp.lt.s32.totalorder %s23, 1
          %s7554 = scalar_select %p7553, %s23, 1
          %s7555 = smul.addr %s7554, 32
          %s7556 = smul.addr %s7555, 8
          %s7557 = scalar_lea.vmem %s7, %s7556
        $region91: #{edsr_forward.1} parent=86 // pred_fallthru
          _
      $region87: #{edsr_forward.1} parent=5 // pred_fallthru
        _
    $region6: #{edsr_forward.1} parent=1 // loop_footer
      %s21 = sadd.s32 1, %s17
    $region7: #{edsr_forward.1} parent=1 // loop_footer_branch
      %16 = sbr.rel target = $region3
    $region8: #{edsr_forward.1} parent=1 // loop_exit
      _
    %7558 = vsyncpa [#allocation4], 1
    %s7559 = scalar_lea.sflag [#allocation4], 1
    %7560 = vsyncpa %s7559, 1
    %7561 = vsyncpa [#allocation6], 1
    %7562 = vsyncpa [#allocation9], 1
    %7563 = vsyncpa [#allocation12], 1

</llo_original>
